<compile_context>
chip_gen: v7x
topology: tpu7x:2x2x1
jax: 0.10.0
libtpu: 0.0.40
codegen_flags: <defaults>
</compile_context>

<pallas_src>
import functools

import jax
import jax.numpy as jnp
from jax import lax
from jax.experimental import pallas as pl
from jax.experimental.pallas import tpu as pltpu


# ------------------------------------------------------------------ helpers
def _round_up(x, m):
    return ((x + m - 1) // m) * m


def _sigmoid(x):
    # exact sigmoid (exp on the EUP is essentially free here; no approx reciprocal).
    return 1.0 / (1.0 + jnp.exp(-x))


def get_conv_mp_out_size(in_size, last_layer, mps):
    size = in_size
    for mp in mps:
        size = round((size - mp['kernel_size']) / mp['stride'] + 1)
    size = size + 1 if size % 2 != 0 else size
    return int(size * last_layer['out_channels'])


def _pool_dims(L):
    """Lengths after conv1(k=3,p=1)+pool1(k=3,s=2) and conv2(k=2,p=1)+pool2(k=2,s=2)."""
    L_c1 = L + 2 - 3 + 1          # == L
    L_p1 = (L_c1 - 3) // 2 + 1
    L_c2 = L_p1 + 2 - 2 + 1       # == L_p1 + 1
    L_p2 = (L_c2 - 2) // 2 + 1
    return L_p1, L_p2


# ------------------------------------------------------------------ fused Net kernel
def _net_kernel(x_ref, src_ref, dst_ref, wcat_ref, wi_ref, bi_ref, bh_ref,
                c1w_ref, c1b_ref, c2w_ref, c2b_ref,
                m1w_ref, m1b_ref, m2w_ref, m2b_ref,
                o_ref,
                h_sc, adj_sc, cin_sc, stage_sc, p1z_sc, p1y_sc,
                *, hidden, emb, max_nodes, batch):
    N = x_ref.shape[0]
    EMB_P = x_ref.shape[1]
    E_PAD = src_ref.shape[0]
    HP = wi_ref.shape[0]
    C1P = c1b_ref.shape[1]
    C2P = c2b_ref.shape[1]
    MN = max_nodes
    L_z = hidden + emb
    L_y = hidden
    layer = pl.program_id(0)

    # ------------- one-time init: hidden state, adjacency, output block ----------
    @pl.when(layer == 0)
    def _init():
        # GatedGraphConv zero-pads x up to out_channels for the initial hidden state.
        h_sc[...] = jnp.zeros_like(h_sc)
        h_sc[:, :EMB_P] = x_ref[...]
        o_ref[...] = jnp.zeros_like(o_ref)
        # Dense adjacency from the (-1 padded) edge list:
        #   adj[i, j] = #edges with src == j and dst == i   (aggr='add', source->target)
        src_oh = (lax.broadcasted_iota(jnp.int32, (E_PAD, N), 1)
                  == src_ref[...]).astype(jnp.float32)               # (E_PAD, N)
        dst_oh = (lax.broadcasted_iota(jnp.int32, (N, E_PAD), 0)
                  == dst_ref[...]).astype(jnp.float32)               # (N, E_PAD)
        adj_sc[...] = jnp.dot(dst_oh, src_oh, preferred_element_type=jnp.float32)

    # ------------- GatedGraphConv layer (every grid step) ------------------------
    h = h_sc[...]                                                     # (N, HP) f32
    # Fused [ W[l] | W_hr | W_hz | W_hn ] matmul: one MXU pass for both the message
    # projection and the three hidden-gate projections (w_cat streamed per layer, bf16).
    hw = jnp.dot(h.astype(jnp.bfloat16), wcat_ref[...],
                 preferred_element_type=jnp.float32)                  # (N, 4*HP)
    m = hw[:, :HP]
    gh = hw[:, HP:] + bh_ref[...]
    agg = jnp.dot(adj_sc[...], m, preferred_element_type=jnp.float32)  # scatter-add
    gi = jnp.dot(agg.astype(jnp.bfloat16), wi_ref[...],
                 preferred_element_type=jnp.float32) + bi_ref[...]
    # NOTE: gate weights use the x @ W convention; to import real PyTorch nn.GRUCell
    # weights (x @ weight_ih.T) each (H, H) gate block must be transposed first.
    r = _sigmoid(gi[:, :HP] + gh[:, :HP])
    z = _sigmoid(gi[:, HP:2 * HP] + gh[:, HP:2 * HP])
    n = jnp.tanh(gi[:, 2 * HP:] + r * gh[:, 2 * HP:])
    h_sc[...] = (1.0 - z) * n + z * h

    # ------------- Readout, fused into the final grid step -----------------------
    @pl.when(layer == pl.num_programs(0) - 1)
    def _readout():
        W1 = c1w_ref[...]                      # (3, MN, C1P)
        b1 = c1b_ref[...]                      # (1, C1P)
        W2 = c2w_ref[...]                      # (2, C1P, C2P)
        b2 = c2b_ref[...]                      # (1, C2P)

        def conv_pool_mlp(L, p1_ref, mlp_wT, mlp_b):
            L_p1, L_p2 = _pool_dims(L)
            L_c2 = L_p1 + 1
            # conv1 (k=3, pad=1; pad rows already staged in cin_sc) — full output once.
            c1 = jnp.dot(cin_sc[pl.ds(0, L), :], W1[0], preferred_element_type=jnp.float32)
            c1 = c1 + jnp.dot(cin_sc[pl.ds(1, L), :], W1[1], preferred_element_type=jnp.float32)
            c1 = c1 + jnp.dot(cin_sc[pl.ds(2, L), :], W1[2], preferred_element_type=jnp.float32)
            c1 = jnp.maximum(c1 + b1, 0.0)
            stage_sc[pl.ds(0, L), :] = c1
            # maxpool1 (k=3, s=2): three stride-2 sublane reads of the staged conv1.
            pooled1 = jnp.maximum(
                jnp.maximum(stage_sc[pl.ds(0, L_p1, 2), :], stage_sc[pl.ds(1, L_p1, 2), :]),
                stage_sc[pl.ds(2, L_p1, 2), :])
            # Stage with one zero boundary row on each side (conv2 padding=1).
            p1_ref[0:1, :] = jnp.zeros((1, C1P), jnp.float32)
            p1_ref[L_p1 + 1:L_p1 + 2, :] = jnp.zeros((1, C1P), jnp.float32)
            p1_ref[pl.ds(1, L_p1), :] = pooled1
            # conv2 (k=2, pad=1) + ReLU.
            c2 = jnp.dot(p1_ref[pl.ds(0, L_c2), :], W2[0], preferred_element_type=jnp.float32)
            c2 = c2 + jnp.dot(p1_ref[pl.ds(1, L_c2), :], W2[1], preferred_element_type=jnp.float32)
            c2 = jnp.maximum(c2 + b2, 0.0)
            # maxpool2 (k=2, s=2): two stride-2 reads (conv1 staging is no longer needed).
            stage_sc[pl.ds(0, L_c2), :] = c2
            pooled2 = jnp.maximum(stage_sc[pl.ds(0, L_p2, 2), :],
                                  stage_sc[pl.ds(1, L_p2, 2), :])      # (L_p2, C2P)
            # Flatten in PyTorch (C, L) order + Linear; weight pre-laid-out as (L, C).
            s = jnp.sum(pooled2 * mlp_wT, axis=0, keepdims=True)       # (1, C2P)
            s = jnp.sum(s, axis=1, keepdims=True)                      # (1, 1)
            return s + mlp_b

        hF = h_sc[...]
        for b in range(batch):                                         # static loop, B small
            hT = jnp.transpose(hF[b * MN:(b + 1) * MN, :])[:hidden, :]       # (hidden, MN)
            xT = jnp.transpose(x_ref[b * MN:(b + 1) * MN, :])[:emb, :]        # (emb, MN)
            # z = cat([h, x]) in channels-last layout with pad rows at 0 and L_z + 1.
            cin_sc[0:1, :] = jnp.zeros((1, MN), jnp.float32)
            cin_sc[pl.ds(1, hidden), :] = hT
            cin_sc[pl.ds(1 + hidden, emb), :] = xT
            cin_sc[L_z + 1:L_z + 2, :] = jnp.zeros((1, MN), jnp.float32)
            out_z = conv_pool_mlp(L_z, p1z_sc, m1w_ref[...], m1b_ref[...])
            # y path reuses the already-staged hT rows; only its end pad row changes.
            cin_sc[1 + hidden:2 + hidden, :] = jnp.zeros((1, MN), jnp.float32)
            out_y = conv_pool_mlp(L_y, p1y_sc, m2w_ref[...], m2b_ref[...])
            gated = _sigmoid(out_z * out_y)                            # (1, 1)
            o_ref[b:b + 1, :] = jnp.broadcast_to(
                gated, (1, o_ref.shape[1])).astype(o_ref.dtype)


# ------------------------------------------------------------------ forward wrapper
def net_forward(data_x, edge_index, params, *, max_nodes, hidden, num_layers):
    N, EMB = data_x.shape
    assert N % max_nodes == 0
    B = N // max_nodes
    assert EMB <= hidden, "GatedGraphConv requires x.size(-1) <= out_channels"

    HP = params["wi"].shape[0]
    C1P = params["conv1_b"].shape[1]
    C2P = params["conv2_b"].shape[1]
    L_z, L_y = hidden + EMB, hidden
    dz, dy = _pool_dims(L_z), _pool_dims(L_y)
    assert params["mlp1_wT"].shape == (dz[1], C2P), \
        "hard-coded nn.Linear(1200, 1) requires graph_out_chs + emb_size == 300"
    assert params["mlp2_wT"].shape == (dy[1], C2P)

    # Lane-pad node features to 128 so the in-kernel transposes / h init are aligned.
    EMB_P = _round_up(EMB, 128)
    assert EMB_P <= HP
    x_pad = jnp.pad(data_x.astype(jnp.float32), ((0, 0), (0, EMB_P - EMB)))

    # Padded edge list (padding = -1 never matches a node id).
    E = edge_index.shape[1]
    E_PAD = max(8, _round_up(E, 8))
    src = jnp.full((E_PAD, 1), -1, jnp.int32).at[:E, 0].set(edge_index[0].astype(jnp.int32))
    dst = jnp.full((1, E_PAD), -1, jnp.int32).at[0, :E].set(edge_index[1].astype(jnp.int32))

    out_rows = max(8, _round_up(B, 8))
    kernel = functools.partial(_net_kernel, hidden=hidden, emb=EMB,
                               max_nodes=max_nodes, batch=B)
    out = pl.pallas_call(
        kernel,
        out_shape=jax.ShapeDtypeStruct((out_rows, 128), jnp.float32),
        grid=(num_layers,),
        in_specs=[
            pl.BlockSpec((N, EMB_P), lambda l: (0, 0)),                # x (padded)
            pl.BlockSpec((E_PAD, 1), lambda l: (0, 0)),                # edge src
            pl.BlockSpec((1, E_PAD), lambda l: (0, 0)),                # edge dst
            pl.BlockSpec((None, HP, 4 * HP), lambda l: (l, 0, 0)),     # [W[l] | W_hh] per layer
            pl.BlockSpec((HP, 3 * HP), lambda l: (0, 0)),              # W_ih (fused gates)
            pl.BlockSpec((1, 3 * HP), lambda l: (0, 0)),               # b_ih
            pl.BlockSpec((1, 3 * HP), lambda l: (0, 0)),               # b_hh
            pl.BlockSpec((3, max_nodes, C1P), lambda l: (0, 0, 0)),    # conv1 w
            pl.BlockSpec((1, C1P), lambda l: (0, 0)),                  # conv1 b
            pl.BlockSpec((2, C1P, C2P), lambda l: (0, 0, 0)),          # conv2 w
            pl.BlockSpec((1, C2P), lambda l: (0, 0)),                  # conv2 b
            pl.BlockSpec((dz[1], C2P), lambda l: (0, 0)),              # mlp1 w (L, C layout)
            pl.BlockSpec((1, 1), lambda l: (0, 0)),                    # mlp1 b
            pl.BlockSpec((dy[1], C2P), lambda l: (0, 0)),              # mlp2 w
            pl.BlockSpec((1, 1), lambda l: (0, 0)),                    # mlp2 b
        ],
        out_specs=pl.BlockSpec((out_rows, 128), lambda l: (0, 0)),
        scratch_shapes=[
            pltpu.VMEM((N, HP), jnp.float32),                # layer-resident hidden state
            pltpu.VMEM((N, N), jnp.float32),                 # dense adjacency
            pltpu.VMEM((L_z + 2, max_nodes), jnp.float32),   # channels-last conv input
            pltpu.VMEM((L_z, C1P), jnp.float32),             # conv1 / conv2 output staging
            pltpu.VMEM((dz[0] + 2, C1P), jnp.float32),       # pooled1 (z) + pad rows
            pltpu.VMEM((dy[0] + 2, C1P), jnp.float32),       # pooled1 (y) + pad rows
        ],
        compiler_params=pltpu.CompilerParams(
            dimension_semantics=("arbitrary",)),
    )(x_pad, src, dst,
      params["w_cat"], params["wi"], params["bi"], params["bh"],
      params["conv1_w"], params["conv1_b"], params["conv2_w"], params["conv2_b"],
      params["mlp1_wT"], params["mlp1_b"], params["mlp2_wT"], params["mlp2_b"])
    return out[:B, 0]


# ------------------------------------------------------------------ params
def init_params(key, *, hidden, max_nodes, num_layers):
    conv2 = {'in_channels': 64, 'out_channels': 16, 'kernel_size': 2, 'padding': 1}
    mp1 = {'kernel_size': 3, 'stride': 2}
    mp2 = {'kernel_size': 2, 'stride': 2}
    mlp2_in = get_conv_mp_out_size(hidden, conv2, [mp1, mp2])

    ks = jax.random.split(key, 13)
    s = 0.05
    return {
        "ggc_weight": s * jax.random.normal(ks[0], (num_layers, hidden, hidden), jnp.float32),
        # Gate weights use the x @ W convention (transpose PyTorch weight_ih/hh to import).
        "gru_wi": s * jax.random.normal(ks[1], (3, hidden, hidden), jnp.float32),
        "gru_wh": s * jax.random.normal(ks[2], (3, hidden, hidden), jnp.float32),
        "gru_bi": s * jax.random.normal(ks[3], (3, hidden), jnp.float32),
        "gru_bh": s * jax.random.normal(ks[4], (3, hidden), jnp.float32),
        # Conv1d weights stored as (K, C_in, C_out)  (PyTorch stores (C_out, C_in, K)).
        "conv1_w": s * jax.random.normal(ks[5], (3, max_nodes, 64), jnp.float32),
        "conv1_b": s * jax.random.normal(ks[6], (1, 64), jnp.float32),
        "conv2_w": s * jax.random.normal(ks[7], (2, 64, 16), jnp.float32),
        "conv2_b": s * jax.random.normal(ks[8], (1, 16), jnp.float32),
        "mlp1_w": s * jax.random.normal(ks[9], (1200, 1), jnp.float32),   # hard-coded 1200
        "mlp1_b": s * jax.random.normal(ks[10], (1, 1), jnp.float32),
        "mlp2_w": s * jax.random.normal(ks[11], (mlp2_in, 1), jnp.float32),
        "mlp2_b": s * jax.random.normal(ks[12], (1, 1), jnp.float32),
    }


def prepare_params(raw, *, hidden, num_layers):
    """Zero-pad / re-lay-out raw parameters into the fused-kernel layouts."""
    H = hidden
    HP = _round_up(H, 128)                               # 200 -> 256 (lane-dense)
    C1 = raw["conv1_w"].shape[-1]
    C2 = raw["conv2_w"].shape[-1]
    C1P = _round_up(C1, 128)                             # 64 -> 128
    C2P = _round_up(C2, 128)                             # 16 -> 128

    # Per-layer fused weight [ W[l] | W_hr | W_hz | W_hn ] in 128-aligned blocks (bf16).
    w_cat = jnp.zeros((num_layers, HP, 4 * HP), jnp.float32)
    w_cat = w_cat.at[:, :H, :H].set(raw["ggc_weight"])
    for g in range(3):
        w_cat = w_cat.at[:, :H, (g + 1) * HP:(g + 1) * HP + H].set(raw["gru_wh"][g])

    wi = jnp.zeros((HP, 3 * HP), jnp.float32)
    bi = jnp.zeros((1, 3 * HP), jnp.float32)
    bh = jnp.zeros((1, 3 * HP), jnp.float32)
    for g in range(3):
        wi = wi.at[:H, g * HP:g * HP + H].set(raw["gru_wi"][g])
        bi = bi.at[0, g * HP:g * HP + H].set(raw["gru_bi"][g])
        bh = bh.at[0, g * HP:g * HP + H].set(raw["gru_bh"][g])

    conv1_w = jnp.zeros((3, raw["conv1_w"].shape[1], C1P), jnp.float32
                        ).at[:, :, :C1].set(raw["conv1_w"])
    conv1_b = jnp.zeros((1, C1P), jnp.float32).at[:, :C1].set(raw["conv1_b"])
    conv2_w = jnp.zeros((2, C1P, C2P), jnp.float32).at[:, :C1, :C2].set(raw["conv2_w"])
    conv2_b = jnp.zeros((1, C2P), jnp.float32).at[:, :C2].set(raw["conv2_b"])

    L_p2z = raw["mlp1_w"].shape[0] // C2
    L_p2y = raw["mlp2_w"].shape[0] // C2
    mlp1_wT = jnp.zeros((L_p2z, C2P), jnp.float32).at[:, :C2].set(
        raw["mlp1_w"][:, 0].reshape(C2, L_p2z).T)        # (L, C) conv-output layout
    mlp2_wT = jnp.zeros((L_p2y, C2P), jnp.float32).at[:, :C2].set(
        raw["mlp2_w"][:, 0].reshape(C2, L_p2y).T)

    return {
        "w_cat": w_cat.astype(jnp.bfloat16),             # streamed per layer -> bf16
        "wi": wi.astype(jnp.bfloat16),
        "bi": bi, "bh": bh,
        "conv1_w": conv1_w, "conv1_b": conv1_b,
        "conv2_w": conv2_w, "conv2_b": conv2_b,
        "mlp1_wT": mlp1_wT, "mlp1_b": raw["mlp1_b"],
        "mlp2_wT": mlp2_wT, "mlp2_b": raw["mlp2_b"],
    }


# ------------------------------------------------------------------ main
if __name__ == "__main__":
    # Shapes constrained by the module's hard-coded nn.Linear(1200, 1):
    # graph_out_chs + emb_size must equal 300 so that 16 * 75 == 1200.
    MAX_NODES = 8
    HIDDEN = 200       # gated_graph_conv_args['out_channels']
    EMB = 100          # node feature dim (emb_size)
    NUM_LAYERS = 3
    BATCH = 2
    N = BATCH * MAX_NODES
    E = 40

    key = jax.random.PRNGKey(0)
    kx, ks, kd, kp = jax.random.split(key, 4)
    data_x = jax.random.normal(kx, (N, EMB), jnp.float32)
    src_ids = jax.random.randint(ks, (E,), 0, N)
    dst_ids = jax.random.randint(kd, (E,), 0, N)
    edge_index = jnp.stack([src_ids, dst_ids]).astype(jnp.int32)

    raw = init_params(kp, hidden=HIDDEN, max_nodes=MAX_NODES, num_layers=NUM_LAYERS)
    params = prepare_params(raw, hidden=HIDDEN, num_layers=NUM_LAYERS)

    fwd = jax.jit(functools.partial(net_forward, max_nodes=MAX_NODES,
                                    hidden=HIDDEN, num_layers=NUM_LAYERS))
    out = fwd(data_x, edge_index, params)
    out = jax.block_until_ready(out)
    assert out.shape == (BATCH,)
    assert bool(jnp.all(jnp.isfinite(out)))
    assert bool(jnp.all((out > 0.0) & (out < 1.0)))      # sigmoid output sanity
    print("KERNEL_OK")
</pallas_src>

<mosaic_0001>
module attributes {stable_mosaic.version = 11 : i64} {
  func.func @_net_kernel(%arg0: i32, %arg1: memref<16x128xf32, #tpu.memory_space<vmem>>, %arg2: memref<40x1xi32, #tpu.memory_space<vmem>>, %arg3: memref<1x40xi32, #tpu.memory_space<vmem>>, %arg4: memref<1x256x1024xbf16, #tpu.memory_space<vmem>>, %arg5: memref<256x768xbf16, #tpu.memory_space<vmem>>, %arg6: memref<1x768xf32, #tpu.memory_space<vmem>>, %arg7: memref<1x768xf32, #tpu.memory_space<vmem>>, %arg8: memref<3x8x128xf32, #tpu.memory_space<vmem>>, %arg9: memref<1x128xf32, #tpu.memory_space<vmem>>, %arg10: memref<2x128x128xf32, #tpu.memory_space<vmem>>, %arg11: memref<1x128xf32, #tpu.memory_space<vmem>>, %arg12: memref<75x128xf32, #tpu.memory_space<vmem>>, %arg13: memref<1x1xf32, #tpu.memory_space<vmem>>, %arg14: memref<50x128xf32, #tpu.memory_space<vmem>>, %arg15: memref<1x1xf32, #tpu.memory_space<vmem>>, %arg16: memref<8x128xf32, #tpu.memory_space<vmem>>, %arg17: memref<16x256xf32, #tpu.memory_space<vmem>>, %arg18: memref<16x16xf32, #tpu.memory_space<vmem>>, %arg19: memref<302x8xf32, #tpu.memory_space<vmem>>, %arg20: memref<300x128xf32, #tpu.memory_space<vmem>>, %arg21: memref<151x128xf32, #tpu.memory_space<vmem>>, %arg22: memref<101x128xf32, #tpu.memory_space<vmem>>) attributes {dimension_semantics = [#tpu.dimension_semantics<arbitrary>], iteration_bounds = array<i64: 3>, scalar_prefetch = 0 : i64, scratch_operands = 6 : i64, tpu.core_type = #tpu.core_type<tc>, window_params = [{pipeline_mode = #tpu.pipeline_mode<synchronous>, transform_indices = @transform_0, window_bounds = array<i64: 16, 128>}, {pipeline_mode = #tpu.pipeline_mode<synchronous>, transform_indices = @transform_1, window_bounds = array<i64: 40, 1>}, {pipeline_mode = #tpu.pipeline_mode<synchronous>, transform_indices = @transform_2, window_bounds = array<i64: 1, 40>}, {transform_indices = @transform_3, window_bounds = array<i64: 1, 256, 1024>}, {pipeline_mode = #tpu.pipeline_mode<synchronous>, transform_indices = @transform_4, window_bounds = array<i64: 256, 768>}, {pipeline_mode = #tpu.pipeline_mode<synchronous>, transform_indices = @transform_5, window_bounds = array<i64: 1, 768>}, {pipeline_mode = #tpu.pipeline_mode<synchronous>, transform_indices = @transform_6, window_bounds = array<i64: 1, 768>}, {pipeline_mode = #tpu.pipeline_mode<synchronous>, transform_indices = @transform_7, window_bounds = array<i64: 3, 8, 128>}, {pipeline_mode = #tpu.pipeline_mode<synchronous>, transform_indices = @transform_8, window_bounds = array<i64: 1, 128>}, {pipeline_mode = #tpu.pipeline_mode<synchronous>, transform_indices = @transform_9, window_bounds = array<i64: 2, 128, 128>}, {pipeline_mode = #tpu.pipeline_mode<synchronous>, transform_indices = @transform_10, window_bounds = array<i64: 1, 128>}, {pipeline_mode = #tpu.pipeline_mode<synchronous>, transform_indices = @transform_11, window_bounds = array<i64: 75, 128>}, {pipeline_mode = #tpu.pipeline_mode<synchronous>, transform_indices = @transform_12, window_bounds = array<i64: 1, 1>}, {pipeline_mode = #tpu.pipeline_mode<synchronous>, transform_indices = @transform_13, window_bounds = array<i64: 50, 128>}, {pipeline_mode = #tpu.pipeline_mode<synchronous>, transform_indices = @transform_14, window_bounds = array<i64: 1, 1>}, {pipeline_mode = #tpu.pipeline_mode<synchronous>, transform_indices = @transform_15, window_bounds = array<i64: 8, 128>}]} {
    %c0_i32 = arith.constant 0 : i32
    %0 = arith.cmpi eq, %arg0, %c0_i32 : i32
    %1 = arith.extui %0 : i1 to i32
    %c0_i32_0 = arith.constant 0 : i32
    %2 = arith.cmpi ne, %1, %c0_i32_0 : i32
    scf.if %2 {
      %cst_25 = arith.constant 0.000000e+00 : f32
      %55 = vector.broadcast %cst_25 : f32 to vector<16x256xf32>
      %c0_26 = arith.constant 0 : index
      %c0_27 = arith.constant 0 : index
      %56 = vector.load %arg17[%c0_26, %c0_27] : memref<16x256xf32, #tpu.memory_space<vmem>>, vector<16x256xf32>
      tpu.vector_store %arg17[%c0_26, %c0_27], %55 {strides = array<i32>} : memref<16x256xf32, #tpu.memory_space<vmem>>, vector<16x256xf32>,
      %c0_28 = arith.constant 0 : index
      %c0_29 = arith.constant 0 : index
      %57 = vector.load %arg1[%c0_28, %c0_29] : memref<16x128xf32, #tpu.memory_space<vmem>>, vector<16x128xf32>
      %c0_30 = arith.constant 0 : index
      %c0_31 = arith.constant 0 : index
      %58 = vector.load %arg17[%c0_30, %c0_31] : memref<16x256xf32, #tpu.memory_space<vmem>>, vector<16x128xf32>
      tpu.vector_store %arg17[%c0_30, %c0_31], %57 {strides = array<i32>} : memref<16x256xf32, #tpu.memory_space<vmem>>, vector<16x128xf32>,
      %cst_32 = arith.constant 0.000000e+00 : f32
      %59 = vector.broadcast %cst_32 : f32 to vector<8x128xf32>
      %c0_33 = arith.constant 0 : index
      %c0_34 = arith.constant 0 : index
      %60 = vector.load %arg16[%c0_33, %c0_34] : memref<8x128xf32, #tpu.memory_space<vmem>>, vector<8x128xf32>
      tpu.vector_store %arg16[%c0_33, %c0_34], %59 {strides = array<i32>} : memref<8x128xf32, #tpu.memory_space<vmem>>, vector<8x128xf32>,
      %61 = tpu.iota {dimensions = array<i32: 1>} : vector<40x16xi32>
      %c0_35 = arith.constant 0 : index
      %c0_36 = arith.constant 0 : index
      %62 = vector.load %arg2[%c0_35, %c0_36] : memref<40x1xi32, #tpu.memory_space<vmem>>, vector<40x1xi32>
      %63 = vector.broadcast %62 : vector<40x1xi32> to vector<40x16xi32>
      %64 = arith.cmpi eq, %61, %63 : vector<40x16xi32>
      %65 = arith.extui %64 : vector<40x16xi1> to vector<40x16xi32>
      %66 = arith.sitofp %65 : vector<40x16xi32> to vector<40x16xf32>
      %67 = tpu.iota {dimensions = array<i32: 0>} : vector<16x40xi32>
      %c0_37 = arith.constant 0 : index
      %c0_38 = arith.constant 0 : index
      %68 = vector.load %arg3[%c0_37, %c0_38] : memref<1x40xi32, #tpu.memory_space<vmem>>, vector<1x40xi32>
      %69 = vector.broadcast %68 : vector<1x40xi32> to vector<16x40xi32>
      %70 = arith.cmpi eq, %67, %69 : vector<16x40xi32>
      %71 = arith.extui %70 : vector<16x40xi1> to vector<16x40xi32>
      %72 = arith.sitofp %71 : vector<16x40xi32> to vector<16x40xf32>
      %cst_39 = arith.constant dense<0.000000e+00> : vector<16x16xf32>
      %73 = tpu.matmul %72, %66, %cst_39 {dimension_numbers = #tpu.dot_dimension_numbers<[1], [0], [0], [1], [0, 0, 1, 1], [], []>} : vector<16x40xf32>, vector<40x16xf32>, vector<16x16xf32> -> vector<16x16xf32>
      %c0_40 = arith.constant 0 : index
      %c0_41 = arith.constant 0 : index
      %74 = vector.load %arg18[%c0_40, %c0_41] : memref<16x16xf32, #tpu.memory_space<vmem>>, vector<16x16xf32>
      tpu.vector_store %arg18[%c0_40, %c0_41], %73 {strides = array<i32>} : memref<16x16xf32, #tpu.memory_space<vmem>>, vector<16x16xf32>,
    } else {
    }
    %c0 = arith.constant 0 : index
    %c0_1 = arith.constant 0 : index
    %3 = vector.load %arg17[%c0, %c0_1] : memref<16x256xf32, #tpu.memory_space<vmem>>, vector<16x256xf32>
    %4 = arith.truncf %3 : vector<16x256xf32> to vector<16x256xbf16>
    %c0_2 = arith.constant 0 : index
    %c0_3 = arith.constant 0 : index
    %c0_4 = arith.constant 0 : index
    %5 = vector.load %arg4[%c0_2, %c0_3, %c0_4] : memref<1x256x1024xbf16, #tpu.memory_space<vmem>>, vector<1x256x1024xbf16>
    %6 = vector.shape_cast %5 : vector<1x256x1024xbf16> to vector<256x1024xbf16>
    %cst = arith.constant dense<0.000000e+00> : vector<16x1024xf32>
    %7 = tpu.matmul %4, %6, %cst {dimension_numbers = #tpu.dot_dimension_numbers<[1], [0], [0], [1], [0, 0, 1, 1], [], []>} : vector<16x256xbf16>, vector<256x1024xbf16>, vector<16x1024xf32> -> vector<16x1024xf32>
    %8 = vector.extract_strided_slice %7 {offsets = [0, 0], sizes = [16, 256], strides = [1, 1]} : vector<16x1024xf32> to vector<16x256xf32>
    %9 = vector.extract_strided_slice %7 {offsets = [0, 256], sizes = [16, 768], strides = [1, 1]} : vector<16x1024xf32> to vector<16x768xf32>
    %c0_5 = arith.constant 0 : index
    %c0_6 = arith.constant 0 : index
    %10 = vector.load %arg7[%c0_5, %c0_6] : memref<1x768xf32, #tpu.memory_space<vmem>>, vector<1x768xf32>
    %11 = vector.broadcast %10 : vector<1x768xf32> to vector<16x768xf32>
    %12 = arith.addf %9, %11 : vector<16x768xf32>
    %c0_7 = arith.constant 0 : index
    %c0_8 = arith.constant 0 : index
    %13 = vector.load %arg18[%c0_7, %c0_8] : memref<16x16xf32, #tpu.memory_space<vmem>>, vector<16x16xf32>
    %cst_9 = arith.constant dense<0.000000e+00> : vector<16x256xf32>
    %14 = tpu.matmul %13, %8, %cst_9 {dimension_numbers = #tpu.dot_dimension_numbers<[1], [0], [0], [1], [0, 0, 1, 1], [], []>} : vector<16x16xf32>, vector<16x256xf32>, vector<16x256xf32> -> vector<16x256xf32>
    %15 = arith.truncf %14 : vector<16x256xf32> to vector<16x256xbf16>
    %c0_10 = arith.constant 0 : index
    %c0_11 = arith.constant 0 : index
    %16 = vector.load %arg5[%c0_10, %c0_11] : memref<256x768xbf16, #tpu.memory_space<vmem>>, vector<256x768xbf16>
    %cst_12 = arith.constant dense<0.000000e+00> : vector<16x768xf32>
    %17 = tpu.matmul %15, %16, %cst_12 {dimension_numbers = #tpu.dot_dimension_numbers<[1], [0], [0], [1], [0, 0, 1, 1], [], []>} : vector<16x256xbf16>, vector<256x768xbf16>, vector<16x768xf32> -> vector<16x768xf32>
    %c0_13 = arith.constant 0 : index
    %c0_14 = arith.constant 0 : index
    %18 = vector.load %arg6[%c0_13, %c0_14] : memref<1x768xf32, #tpu.memory_space<vmem>>, vector<1x768xf32>
    %19 = vector.broadcast %18 : vector<1x768xf32> to vector<16x768xf32>
    %20 = arith.addf %17, %19 : vector<16x768xf32>
    %21 = vector.extract_strided_slice %20 {offsets = [0, 0], sizes = [16, 256], strides = [1, 1]} : vector<16x768xf32> to vector<16x256xf32>
    %22 = vector.extract_strided_slice %12 {offsets = [0, 0], sizes = [16, 256], strides = [1, 1]} : vector<16x768xf32> to vector<16x256xf32>
    %23 = arith.addf %21, %22 : vector<16x256xf32>
    %cst_15 = arith.constant 0.000000e+00 : f32
    %24 = vector.broadcast %cst_15 : f32 to vector<16x256xf32>
    %25 = arith.subf %24, %23 : vector<16x256xf32>
    %26 = math.exp %25 : vector<16x256xf32>
    %cst_16 = arith.constant 1.000000e+00 : f32
    %27 = vector.broadcast %cst_16 : f32 to vector<16x256xf32>
    %28 = arith.addf %27, %26 : vector<16x256xf32>
    %cst_17 = arith.constant 1.000000e+00 : f32
    %29 = vector.broadcast %cst_17 : f32 to vector<16x256xf32>
    %30 = arith.divf %29, %28 : vector<16x256xf32>
    %31 = vector.extract_strided_slice %20 {offsets = [0, 256], sizes = [16, 256], strides = [1, 1]} : vector<16x768xf32> to vector<16x256xf32>
    %32 = vector.extract_strided_slice %12 {offsets = [0, 256], sizes = [16, 256], strides = [1, 1]} : vector<16x768xf32> to vector<16x256xf32>
    %33 = arith.addf %31, %32 : vector<16x256xf32>
    %cst_18 = arith.constant 0.000000e+00 : f32
    %34 = vector.broadcast %cst_18 : f32 to vector<16x256xf32>
    %35 = arith.subf %34, %33 : vector<16x256xf32>
    %36 = math.exp %35 : vector<16x256xf32>
    %cst_19 = arith.constant 1.000000e+00 : f32
    %37 = vector.broadcast %cst_19 : f32 to vector<16x256xf32>
    %38 = arith.addf %37, %36 : vector<16x256xf32>
    %cst_20 = arith.constant 1.000000e+00 : f32
    %39 = vector.broadcast %cst_20 : f32 to vector<16x256xf32>
    %40 = arith.divf %39, %38 : vector<16x256xf32>
    %41 = vector.extract_strided_slice %20 {offsets = [0, 512], sizes = [16, 256], strides = [1, 1]} : vector<16x768xf32> to vector<16x256xf32>
    %42 = vector.extract_strided_slice %12 {offsets = [0, 512], sizes = [16, 256], strides = [1, 1]} : vector<16x768xf32> to vector<16x256xf32>
    %43 = arith.mulf %30, %42 : vector<16x256xf32>
    %44 = arith.addf %41, %43 : vector<16x256xf32>
    %45 = math.tanh %44 : vector<16x256xf32>
    %cst_21 = arith.constant 1.000000e+00 : f32
    %46 = vector.broadcast %cst_21 : f32 to vector<16x256xf32>
    %47 = arith.subf %46, %40 : vector<16x256xf32>
    %48 = arith.mulf %47, %45 : vector<16x256xf32>
    %49 = arith.mulf %40, %3 : vector<16x256xf32>
    %50 = arith.addf %48, %49 : vector<16x256xf32>
    %c0_22 = arith.constant 0 : index
    %c0_23 = arith.constant 0 : index
    %51 = vector.load %arg17[%c0_22, %c0_23] : memref<16x256xf32, #tpu.memory_space<vmem>>, vector<16x256xf32>
    tpu.vector_store %arg17[%c0_22, %c0_23], %50 {strides = array<i32>} : memref<16x256xf32, #tpu.memory_space<vmem>>, vector<16x256xf32>,
    %c2_i32 = arith.constant 2 : i32
    %52 = arith.cmpi eq, %arg0, %c2_i32 : i32
    %53 = arith.extui %52 : i1 to i32
    %c0_i32_24 = arith.constant 0 : i32
    %54 = arith.cmpi ne, %53, %c0_i32_24 : i32
    scf.if %54 {
      %c0_25 = arith.constant 0 : index
      %c0_26 = arith.constant 0 : index
      %c0_27 = arith.constant 0 : index
      %55 = vector.load %arg8[%c0_25, %c0_26, %c0_27] : memref<3x8x128xf32, #tpu.memory_space<vmem>>, vector<3x8x128xf32>
      %c0_28 = arith.constant 0 : index
      %c0_29 = arith.constant 0 : index
      %56 = vector.load %arg9[%c0_28, %c0_29] : memref<1x128xf32, #tpu.memory_space<vmem>>, vector<1x128xf32>
      %c0_30 = arith.constant 0 : index
      %c0_31 = arith.constant 0 : index
      %c0_32 = arith.constant 0 : index
      %57 = vector.load %arg10[%c0_30, %c0_31, %c0_32] : memref<2x128x128xf32, #tpu.memory_space<vmem>>, vector<2x128x128xf32>
      %c0_33 = arith.constant 0 : index
      %c0_34 = arith.constant 0 : index
      %58 = vector.load %arg11[%c0_33, %c0_34] : memref<1x128xf32, #tpu.memory_space<vmem>>, vector<1x128xf32>
      %c0_35 = arith.constant 0 : index
      %c0_36 = arith.constant 0 : index
      %59 = vector.load %arg17[%c0_35, %c0_36] : memref<16x256xf32, #tpu.memory_space<vmem>>, vector<16x256xf32>
      %60 = vector.extract_strided_slice %59 {offsets = [0, 0], sizes = [8, 256], strides = [1, 1]} : vector<16x256xf32> to vector<8x256xf32>
      %61 = tpu.transpose %60, [1, 0] : vector<8x256xf32> -> vector<256x8xf32>
      %62 = vector.extract_strided_slice %61 {offsets = [0, 0], sizes = [200, 8], strides = [1, 1]} : vector<256x8xf32> to vector<200x8xf32>
      %c0_37 = arith.constant 0 : index
      %c0_38 = arith.constant 0 : index
      %63 = vector.load %arg1[%c0_37, %c0_38] : memref<16x128xf32, #tpu.memory_space<vmem>>, vector<8x128xf32>
      %64 = tpu.transpose %63, [1, 0] : vector<8x128xf32> -> vector<128x8xf32>
      %65 = vector.extract_strided_slice %64 {offsets = [0, 0], sizes = [100, 8], strides = [1, 1]} : vector<128x8xf32> to vector<100x8xf32>
      %cst_39 = arith.constant 0.000000e+00 : f32
      %66 = vector.broadcast %cst_39 : f32 to vector<1x8xf32>
      %c0_40 = arith.constant 0 : index
      %c0_41 = arith.constant 0 : index
      %67 = vector.load %arg19[%c0_40, %c0_41] : memref<302x8xf32, #tpu.memory_space<vmem>>, vector<1x8xf32>
      tpu.vector_store %arg19[%c0_40, %c0_41], %66 {strides = array<i32>} : memref<302x8xf32, #tpu.memory_space<vmem>>, vector<1x8xf32>,
      %c1 = arith.constant 1 : index
      %c0_42 = arith.constant 0 : index
      %68 = vector.load %arg19[%c1, %c0_42] : memref<302x8xf32, #tpu.memory_space<vmem>>, vector<200x8xf32>
      tpu.vector_store %arg19[%c1, %c0_42], %62 {strides = array<i32>} : memref<302x8xf32, #tpu.memory_space<vmem>>, vector<200x8xf32>,
      %c201 = arith.constant 201 : index
      %c0_43 = arith.constant 0 : index
      %69 = vector.load %arg19[%c201, %c0_43] : memref<302x8xf32, #tpu.memory_space<vmem>>, vector<100x8xf32>
      tpu.vector_store %arg19[%c201, %c0_43], %65 {strides = array<i32>} : memref<302x8xf32, #tpu.memory_space<vmem>>, vector<100x8xf32>,
      %cst_44 = arith.constant 0.000000e+00 : f32
      %70 = vector.broadcast %cst_44 : f32 to vector<1x8xf32>
      %c301 = arith.constant 301 : index
      %c0_45 = arith.constant 0 : index
      %71 = vector.load %arg19[%c301, %c0_45] : memref<302x8xf32, #tpu.memory_space<vmem>>, vector<1x8xf32>
      tpu.vector_store %arg19[%c301, %c0_45], %70 {strides = array<i32>} : memref<302x8xf32, #tpu.memory_space<vmem>>, vector<1x8xf32>,
      %c0_46 = arith.constant 0 : index
      %c0_47 = arith.constant 0 : index
      %72 = vector.load %arg12[%c0_46, %c0_47] : memref<75x128xf32, #tpu.memory_space<vmem>>, vector<75x128xf32>
      %c0_48 = arith.constant 0 : index
      %c0_49 = arith.constant 0 : index
      %73 = vector.load %arg13[%c0_48, %c0_49] : memref<1x1xf32, #tpu.memory_space<vmem>>, vector<1x1xf32>
      %c0_50 = arith.constant 0 : index
      %c0_51 = arith.constant 0 : index
      %74 = vector.load %arg19[%c0_50, %c0_51] : memref<302x8xf32, #tpu.memory_space<vmem>>, vector<300x8xf32>
      %75 = vector.extract_strided_slice %55 {offsets = [0, 0, 0], sizes = [1, 8, 128], strides = [1, 1, 1]} : vector<3x8x128xf32> to vector<1x8x128xf32>
      %76 = vector.shape_cast %75 : vector<1x8x128xf32> to vector<8x128xf32>
      %cst_52 = arith.constant dense<0.000000e+00> : vector<300x128xf32>
      %77 = tpu.matmul %74, %76, %cst_52 {dimension_numbers = #tpu.dot_dimension_numbers<[1], [0], [0], [1], [0, 0, 1, 1], [], []>} : vector<300x8xf32>, vector<8x128xf32>, vector<300x128xf32> -> vector<300x128xf32>
      %c1_53 = arith.constant 1 : index
      %c0_54 = arith.constant 0 : index
      %78 = vector.load %arg19[%c1_53, %c0_54] : memref<302x8xf32, #tpu.memory_space<vmem>>, vector<300x8xf32>
      %79 = vector.extract_strided_slice %55 {offsets = [1, 0, 0], sizes = [1, 8, 128], strides = [1, 1, 1]} : vector<3x8x128xf32> to vector<1x8x128xf32>
      %80 = vector.shape_cast %79 : vector<1x8x128xf32> to vector<8x128xf32>
      %cst_55 = arith.constant dense<0.000000e+00> : vector<300x128xf32>
      %81 = tpu.matmul %78, %80, %cst_55 {dimension_numbers = #tpu.dot_dimension_numbers<[1], [0], [0], [1], [0, 0, 1, 1], [], []>} : vector<300x8xf32>, vector<8x128xf32>, vector<300x128xf32> -> vector<300x128xf32>
      %82 = arith.addf %77, %81 : vector<300x128xf32>
      %c2 = arith.constant 2 : index
      %c0_56 = arith.constant 0 : index
      %83 = vector.load %arg19[%c2, %c0_56] : memref<302x8xf32, #tpu.memory_space<vmem>>, vector<300x8xf32>
      %84 = vector.extract_strided_slice %55 {offsets = [2, 0, 0], sizes = [1, 8, 128], strides = [1, 1, 1]} : vector<3x8x128xf32> to vector<1x8x128xf32>
      %85 = vector.shape_cast %84 : vector<1x8x128xf32> to vector<8x128xf32>
      %cst_57 = arith.constant dense<0.000000e+00> : vector<300x128xf32>
      %86 = tpu.matmul %83, %85, %cst_57 {dimension_numbers = #tpu.dot_dimension_numbers<[1], [0], [0], [1], [0, 0, 1, 1], [], []>} : vector<300x8xf32>, vector<8x128xf32>, vector<300x128xf32> -> vector<300x128xf32>
      %87 = arith.addf %82, %86 : vector<300x128xf32>
      %88 = vector.broadcast %56 : vector<1x128xf32> to vector<300x128xf32>
      %89 = arith.addf %87, %88 : vector<300x128xf32>
      %cst_58 = arith.constant 0.000000e+00 : f32
      %90 = vector.broadcast %cst_58 : f32 to vector<300x128xf32>
      %91 = arith.maximumf %89, %90 : vector<300x128xf32>
      %c0_59 = arith.constant 0 : index
      %c0_60 = arith.constant 0 : index
      %92 = vector.load %arg20[%c0_59, %c0_60] : memref<300x128xf32, #tpu.memory_space<vmem>>, vector<300x128xf32>
      tpu.vector_store %arg20[%c0_59, %c0_60], %91 {strides = array<i32>} : memref<300x128xf32, #tpu.memory_space<vmem>>, vector<300x128xf32>,
      %c0_61 = arith.constant 0 : index
      %c0_62 = arith.constant 0 : index
      %93 = tpu.strided_load %arg20[%c0_61, %c0_62] {strides = array<i32: 2, 1>} : memref<300x128xf32, #tpu.memory_space<vmem>>, vector<149x128xf32>
      %c1_63 = arith.constant 1 : index
      %c0_64 = arith.constant 0 : index
      %94 = tpu.strided_load %arg20[%c1_63, %c0_64] {strides = array<i32: 2, 1>} : memref<300x128xf32, #tpu.memory_space<vmem>>, vector<149x128xf32>
      %95 = arith.maximumf %93, %94 : vector<149x128xf32>
      %c2_65 = arith.constant 2 : index
      %c0_66 = arith.constant 0 : index
      %96 = tpu.strided_load %arg20[%c2_65, %c0_66] {strides = array<i32: 2, 1>} : memref<300x128xf32, #tpu.memory_space<vmem>>, vector<149x128xf32>
      %97 = arith.maximumf %95, %96 : vector<149x128xf32>
      %cst_67 = arith.constant 0.000000e+00 : f32
      %98 = vector.broadcast %cst_67 : f32 to vector<1x128xf32>
      %c0_68 = arith.constant 0 : index
      %c0_69 = arith.constant 0 : index
      %99 = vector.load %arg21[%c0_68, %c0_69] : memref<151x128xf32, #tpu.memory_space<vmem>>, vector<1x128xf32>
      tpu.vector_store %arg21[%c0_68, %c0_69], %98 {strides = array<i32>} : memref<151x128xf32, #tpu.memory_space<vmem>>, vector<1x128xf32>,
      %cst_70 = arith.constant 0.000000e+00 : f32
      %100 = vector.broadcast %cst_70 : f32 to vector<1x128xf32>
      %c150 = arith.constant 150 : index
      %c0_71 = arith.constant 0 : index
      %101 = vector.load %arg21[%c150, %c0_71] : memref<151x128xf32, #tpu.memory_space<vmem>>, vector<1x128xf32>
      tpu.vector_store %arg21[%c150, %c0_71], %100 {strides = array<i32>} : memref<151x128xf32, #tpu.memory_space<vmem>>, vector<1x128xf32>,
      %c1_72 = arith.constant 1 : index
      %c0_73 = arith.constant 0 : index
      %102 = vector.load %arg21[%c1_72, %c0_73] : memref<151x128xf32, #tpu.memory_space<vmem>>, vector<149x128xf32>
      tpu.vector_store %arg21[%c1_72, %c0_73], %97 {strides = array<i32>} : memref<151x128xf32, #tpu.memory_space<vmem>>, vector<149x128xf32>,
      %c0_74 = arith.constant 0 : index
      %c0_75 = arith.constant 0 : index
      %103 = vector.load %arg21[%c0_74, %c0_75] : memref<151x128xf32, #tpu.memory_space<vmem>>, vector<150x128xf32>
      %104 = vector.extract_strided_slice %57 {offsets = [0, 0, 0], sizes = [1, 128, 128], strides = [1, 1, 1]} : vector<2x128x128xf32> to vector<1x128x128xf32>
      %105 = vector.shape_cast %104 : vector<1x128x128xf32> to vector<128x128xf32>
      %cst_76 = arith.constant dense<0.000000e+00> : vector<150x128xf32>
      %106 = tpu.matmul %103, %105, %cst_76 {dimension_numbers = #tpu.dot_dimension_numbers<[1], [0], [0], [1], [0, 0, 1, 1], [], []>} : vector<150x128xf32>, vector<128x128xf32>, vector<150x128xf32> -> vector<150x128xf32>
      %c1_77 = arith.constant 1 : index
      %c0_78 = arith.constant 0 : index
      %107 = vector.load %arg21[%c1_77, %c0_78] : memref<151x128xf32, #tpu.memory_space<vmem>>, vector<150x128xf32>
      %108 = vector.extract_strided_slice %57 {offsets = [1, 0, 0], sizes = [1, 128, 128], strides = [1, 1, 1]} : vector<2x128x128xf32> to vector<1x128x128xf32>
      %109 = vector.shape_cast %108 : vector<1x128x128xf32> to vector<128x128xf32>
      %cst_79 = arith.constant dense<0.000000e+00> : vector<150x128xf32>
      %110 = tpu.matmul %107, %109, %cst_79 {dimension_numbers = #tpu.dot_dimension_numbers<[1], [0], [0], [1], [0, 0, 1, 1], [], []>} : vector<150x128xf32>, vector<128x128xf32>, vector<150x128xf32> -> vector<150x128xf32>
      %111 = arith.addf %106, %110 : vector<150x128xf32>
      %112 = vector.broadcast %58 : vector<1x128xf32> to vector<150x128xf32>
      %113 = arith.addf %111, %112 : vector<150x128xf32>
      %cst_80 = arith.constant 0.000000e+00 : f32
      %114 = vector.broadcast %cst_80 : f32 to vector<150x128xf32>
      %115 = arith.maximumf %113, %114 : vector<150x128xf32>
      %c0_81 = arith.constant 0 : index
      %c0_82 = arith.constant 0 : index
      %116 = vector.load %arg20[%c0_81, %c0_82] : memref<300x128xf32, #tpu.memory_space<vmem>>, vector<150x128xf32>
      tpu.vector_store %arg20[%c0_81, %c0_82], %115 {strides = array<i32>} : memref<300x128xf32, #tpu.memory_space<vmem>>, vector<150x128xf32>,
      %c0_83 = arith.constant 0 : index
      %c0_84 = arith.constant 0 : index
      %117 = tpu.strided_load %arg20[%c0_83, %c0_84] {strides = array<i32: 2, 1>} : memref<300x128xf32, #tpu.memory_space<vmem>>, vector<75x128xf32>
      %c1_85 = arith.constant 1 : index
      %c0_86 = arith.constant 0 : index
      %118 = tpu.strided_load %arg20[%c1_85, %c0_86] {strides = array<i32: 2, 1>} : memref<300x128xf32, #tpu.memory_space<vmem>>, vector<75x128xf32>
      %119 = arith.maximumf %117, %118 : vector<75x128xf32>
      %120 = arith.mulf %119, %72 : vector<75x128xf32>
      %cst_87 = arith.constant dense<0.000000e+00> : vector<128xf32>
      %121 = vector.multi_reduction <add>, %120, %cst_87 [0] : vector<75x128xf32> to vector<128xf32>
      %122 = vector.shape_cast %121 : vector<128xf32> to vector<1x128xf32>
      %cst_88 = arith.constant dense<0.000000e+00> : vector<1xf32>
      %123 = vector.multi_reduction <add>, %122, %cst_88 [1] : vector<1x128xf32> to vector<1xf32>
      %124 = vector.shape_cast %123 : vector<1xf32> to vector<1x1xf32>
      %125 = arith.addf %124, %73 : vector<1x1xf32>
      %cst_89 = arith.constant 0.000000e+00 : f32
      %126 = vector.broadcast %cst_89 : f32 to vector<1x8xf32>
      %c201_90 = arith.constant 201 : index
      %c0_91 = arith.constant 0 : index
      %127 = vector.load %arg19[%c201_90, %c0_91] : memref<302x8xf32, #tpu.memory_space<vmem>>, vector<1x8xf32>
      tpu.vector_store %arg19[%c201_90, %c0_91], %126 {strides = array<i32>} : memref<302x8xf32, #tpu.memory_space<vmem>>, vector<1x8xf32>,
      %c0_92 = arith.constant 0 : index
      %c0_93 = arith.constant 0 : index
      %128 = vector.load %arg14[%c0_92, %c0_93] : memref<50x128xf32, #tpu.memory_space<vmem>>, vector<50x128xf32>
      %c0_94 = arith.constant 0 : index
      %c0_95 = arith.constant 0 : index
      %129 = vector.load %arg15[%c0_94, %c0_95] : memref<1x1xf32, #tpu.memory_space<vmem>>, vector<1x1xf32>
      %c0_96 = arith.constant 0 : index
      %c0_97 = arith.constant 0 : index
      %130 = vector.load %arg19[%c0_96, %c0_97] : memref<302x8xf32, #tpu.memory_space<vmem>>, vector<200x8xf32>
      %131 = vector.extract_strided_slice %55 {offsets = [0, 0, 0], sizes = [1, 8, 128], strides = [1, 1, 1]} : vector<3x8x128xf32> to vector<1x8x128xf32>
      %132 = vector.shape_cast %131 : vector<1x8x128xf32> to vector<8x128xf32>
      %cst_98 = arith.constant dense<0.000000e+00> : vector<200x128xf32>
      %133 = tpu.matmul %130, %132, %cst_98 {dimension_numbers = #tpu.dot_dimension_numbers<[1], [0], [0], [1], [0, 0, 1, 1], [], []>} : vector<200x8xf32>, vector<8x128xf32>, vector<200x128xf32> -> vector<200x128xf32>
      %c1_99 = arith.constant 1 : index
      %c0_100 = arith.constant 0 : index
      %134 = vector.load %arg19[%c1_99, %c0_100] : memref<302x8xf32, #tpu.memory_space<vmem>>, vector<200x8xf32>
      %135 = vector.extract_strided_slice %55 {offsets = [1, 0, 0], sizes = [1, 8, 128], strides = [1, 1, 1]} : vector<3x8x128xf32> to vector<1x8x128xf32>
      %136 = vector.shape_cast %135 : vector<1x8x128xf32> to vector<8x128xf32>
      %cst_101 = arith.constant dense<0.000000e+00> : vector<200x128xf32>
      %137 = tpu.matmul %134, %136, %cst_101 {dimension_numbers = #tpu.dot_dimension_numbers<[1], [0], [0], [1], [0, 0, 1, 1], [], []>} : vector<200x8xf32>, vector<8x128xf32>, vector<200x128xf32> -> vector<200x128xf32>
      %138 = arith.addf %133, %137 : vector<200x128xf32>
      %c2_102 = arith.constant 2 : index
      %c0_103 = arith.constant 0 : index
      %139 = vector.load %arg19[%c2_102, %c0_103] : memref<302x8xf32, #tpu.memory_space<vmem>>, vector<200x8xf32>
      %140 = vector.extract_strided_slice %55 {offsets = [2, 0, 0], sizes = [1, 8, 128], strides = [1, 1, 1]} : vector<3x8x128xf32> to vector<1x8x128xf32>
      %141 = vector.shape_cast %140 : vector<1x8x128xf32> to vector<8x128xf32>
      %cst_104 = arith.constant dense<0.000000e+00> : vector<200x128xf32>
      %142 = tpu.matmul %139, %141, %cst_104 {dimension_numbers = #tpu.dot_dimension_numbers<[1], [0], [0], [1], [0, 0, 1, 1], [], []>} : vector<200x8xf32>, vector<8x128xf32>, vector<200x128xf32> -> vector<200x128xf32>
      %143 = arith.addf %138, %142 : vector<200x128xf32>
      %144 = vector.broadcast %56 : vector<1x128xf32> to vector<200x128xf32>
      %145 = arith.addf %143, %144 : vector<200x128xf32>
      %cst_105 = arith.constant 0.000000e+00 : f32
      %146 = vector.broadcast %cst_105 : f32 to vector<200x128xf32>
      %147 = arith.maximumf %145, %146 : vector<200x128xf32>
      %c0_106 = arith.constant 0 : index
      %c0_107 = arith.constant 0 : index
      %148 = vector.load %arg20[%c0_106, %c0_107] : memref<300x128xf32, #tpu.memory_space<vmem>>, vector<200x128xf32>
      tpu.vector_store %arg20[%c0_106, %c0_107], %147 {strides = array<i32>} : memref<300x128xf32, #tpu.memory_space<vmem>>, vector<200x128xf32>,
      %c0_108 = arith.constant 0 : index
      %c0_109 = arith.constant 0 : index
      %149 = tpu.strided_load %arg20[%c0_108, %c0_109] {strides = array<i32: 2, 1>} : memref<300x128xf32, #tpu.memory_space<vmem>>, vector<99x128xf32>
      %c1_110 = arith.constant 1 : index
      %c0_111 = arith.constant 0 : index
      %150 = tpu.strided_load %arg20[%c1_110, %c0_111] {strides = array<i32: 2, 1>} : memref<300x128xf32, #tpu.memory_space<vmem>>, vector<99x128xf32>
      %151 = arith.maximumf %149, %150 : vector<99x128xf32>
      %c2_112 = arith.constant 2 : index
      %c0_113 = arith.constant 0 : index
      %152 = tpu.strided_load %arg20[%c2_112, %c0_113] {strides = array<i32: 2, 1>} : memref<300x128xf32, #tpu.memory_space<vmem>>, vector<99x128xf32>
      %153 = arith.maximumf %151, %152 : vector<99x128xf32>
      %cst_114 = arith.constant 0.000000e+00 : f32
      %154 = vector.broadcast %cst_114 : f32 to vector<1x128xf32>
      %c0_115 = arith.constant 0 : index
      %c0_116 = arith.constant 0 : index
      %155 = vector.load %arg22[%c0_115, %c0_116] : memref<101x128xf32, #tpu.memory_space<vmem>>, vector<1x128xf32>
      tpu.vector_store %arg22[%c0_115, %c0_116], %154 {strides = array<i32>} : memref<101x128xf32, #tpu.memory_space<vmem>>, vector<1x128xf32>,
      %cst_117 = arith.constant 0.000000e+00 : f32
      %156 = vector.broadcast %cst_117 : f32 to vector<1x128xf32>
      %c100 = arith.constant 100 : index
      %c0_118 = arith.constant 0 : index
      %157 = vector.load %arg22[%c100, %c0_118] : memref<101x128xf32, #tpu.memory_space<vmem>>, vector<1x128xf32>
      tpu.vector_store %arg22[%c100, %c0_118], %156 {strides = array<i32>} : memref<101x128xf32, #tpu.memory_space<vmem>>, vector<1x128xf32>,
      %c1_119 = arith.constant 1 : index
      %c0_120 = arith.constant 0 : index
      %158 = vector.load %arg22[%c1_119, %c0_120] : memref<101x128xf32, #tpu.memory_space<vmem>>, vector<99x128xf32>
      tpu.vector_store %arg22[%c1_119, %c0_120], %153 {strides = array<i32>} : memref<101x128xf32, #tpu.memory_space<vmem>>, vector<99x128xf32>,
      %c0_121 = arith.constant 0 : index
      %c0_122 = arith.constant 0 : index
      %159 = vector.load %arg22[%c0_121, %c0_122] : memref<101x128xf32, #tpu.memory_space<vmem>>, vector<100x128xf32>
      %160 = vector.extract_strided_slice %57 {offsets = [0, 0, 0], sizes = [1, 128, 128], strides = [1, 1, 1]} : vector<2x128x128xf32> to vector<1x128x128xf32>
      %161 = vector.shape_cast %160 : vector<1x128x128xf32> to vector<128x128xf32>
      %cst_123 = arith.constant dense<0.000000e+00> : vector<100x128xf32>
      %162 = tpu.matmul %159, %161, %cst_123 {dimension_numbers = #tpu.dot_dimension_numbers<[1], [0], [0], [1], [0, 0, 1, 1], [], []>} : vector<100x128xf32>, vector<128x128xf32>, vector<100x128xf32> -> vector<100x128xf32>
      %c1_124 = arith.constant 1 : index
      %c0_125 = arith.constant 0 : index
      %163 = vector.load %arg22[%c1_124, %c0_125] : memref<101x128xf32, #tpu.memory_space<vmem>>, vector<100x128xf32>
      %164 = vector.extract_strided_slice %57 {offsets = [1, 0, 0], sizes = [1, 128, 128], strides = [1, 1, 1]} : vector<2x128x128xf32> to vector<1x128x128xf32>
      %165 = vector.shape_cast %164 : vector<1x128x128xf32> to vector<128x128xf32>
      %cst_126 = arith.constant dense<0.000000e+00> : vector<100x128xf32>
      %166 = tpu.matmul %163, %165, %cst_126 {dimension_numbers = #tpu.dot_dimension_numbers<[1], [0], [0], [1], [0, 0, 1, 1], [], []>} : vector<100x128xf32>, vector<128x128xf32>, vector<100x128xf32> -> vector<100x128xf32>
      %167 = arith.addf %162, %166 : vector<100x128xf32>
      %168 = vector.broadcast %58 : vector<1x128xf32> to vector<100x128xf32>
      %169 = arith.addf %167, %168 : vector<100x128xf32>
      %cst_127 = arith.constant 0.000000e+00 : f32
      %170 = vector.broadcast %cst_127 : f32 to vector<100x128xf32>
      %171 = arith.maximumf %169, %170 : vector<100x128xf32>
      %c0_128 = arith.constant 0 : index
      %c0_129 = arith.constant 0 : index
      %172 = vector.load %arg20[%c0_128, %c0_129] : memref<300x128xf32, #tpu.memory_space<vmem>>, vector<100x128xf32>
      tpu.vector_store %arg20[%c0_128, %c0_129], %171 {strides = array<i32>} : memref<300x128xf32, #tpu.memory_space<vmem>>, vector<100x128xf32>,
      %c0_130 = arith.constant 0 : index
      %c0_131 = arith.constant 0 : index
      %173 = tpu.strided_load %arg20[%c0_130, %c0_131] {strides = array<i32: 2, 1>} : memref<300x128xf32, #tpu.memory_space<vmem>>, vector<50x128xf32>
      %c1_132 = arith.constant 1 : index
      %c0_133 = arith.constant 0 : index
      %174 = tpu.strided_load %arg20[%c1_132, %c0_133] {strides = array<i32: 2, 1>} : memref<300x128xf32, #tpu.memory_space<vmem>>, vector<50x128xf32>
      %175 = arith.maximumf %173, %174 : vector<50x128xf32>
      %176 = arith.mulf %175, %128 : vector<50x128xf32>
      %cst_134 = arith.constant dense<0.000000e+00> : vector<128xf32>
      %177 = vector.multi_reduction <add>, %176, %cst_134 [0] : vector<50x128xf32> to vector<128xf32>
      %178 = vector.shape_cast %177 : vector<128xf32> to vector<1x128xf32>
      %cst_135 = arith.constant dense<0.000000e+00> : vector<1xf32>
      %179 = vector.multi_reduction <add>, %178, %cst_135 [1] : vector<1x128xf32> to vector<1xf32>
      %180 = vector.shape_cast %179 : vector<1xf32> to vector<1x1xf32>
      %181 = arith.addf %180, %129 : vector<1x1xf32>
      %182 = arith.mulf %125, %181 : vector<1x1xf32>
      %cst_136 = arith.constant 0.000000e+00 : f32
      %183 = vector.broadcast %cst_136 : f32 to vector<1x1xf32>
      %184 = arith.subf %183, %182 : vector<1x1xf32>
      %185 = math.exp %184 : vector<1x1xf32>
      %cst_137 = arith.constant 1.000000e+00 : f32
      %186 = vector.broadcast %cst_137 : f32 to vector<1x1xf32>
      %187 = arith.addf %186, %185 : vector<1x1xf32>
      %cst_138 = arith.constant 1.000000e+00 : f32
      %188 = vector.broadcast %cst_138 : f32 to vector<1x1xf32>
      %189 = arith.divf %188, %187 : vector<1x1xf32>
      %190 = vector.shape_cast %189 : vector<1x1xf32> to vector<1x1xf32>
      %191 = vector.broadcast %190 : vector<1x1xf32> to vector<1x128xf32>
      %c0_139 = arith.constant 0 : index
      %c0_140 = arith.constant 0 : index
      %192 = vector.load %arg16[%c0_139, %c0_140] : memref<8x128xf32, #tpu.memory_space<vmem>>, vector<1x128xf32>
      tpu.vector_store %arg16[%c0_139, %c0_140], %191 {strides = array<i32>} : memref<8x128xf32, #tpu.memory_space<vmem>>, vector<1x128xf32>,
      %193 = vector.extract_strided_slice %59 {offsets = [8, 0], sizes = [8, 256], strides = [1, 1]} : vector<16x256xf32> to vector<8x256xf32>
      %194 = tpu.transpose %193, [1, 0] : vector<8x256xf32> -> vector<256x8xf32>
      %195 = vector.extract_strided_slice %194 {offsets = [0, 0], sizes = [200, 8], strides = [1, 1]} : vector<256x8xf32> to vector<200x8xf32>
      %c8 = arith.constant 8 : index
      %c0_141 = arith.constant 0 : index
      %196 = vector.load %arg1[%c8, %c0_141] : memref<16x128xf32, #tpu.memory_space<vmem>>, vector<8x128xf32>
      %197 = tpu.transpose %196, [1, 0] : vector<8x128xf32> -> vector<128x8xf32>
      %198 = vector.extract_strided_slice %197 {offsets = [0, 0], sizes = [100, 8], strides = [1, 1]} : vector<128x8xf32> to vector<100x8xf32>
      %cst_142 = arith.constant 0.000000e+00 : f32
      %199 = vector.broadcast %cst_142 : f32 to vector<1x8xf32>
      %c0_143 = arith.constant 0 : index
      %c0_144 = arith.constant 0 : index
      %200 = vector.load %arg19[%c0_143, %c0_144] : memref<302x8xf32, #tpu.memory_space<vmem>>, vector<1x8xf32>
      tpu.vector_store %arg19[%c0_143, %c0_144], %199 {strides = array<i32>} : memref<302x8xf32, #tpu.memory_space<vmem>>, vector<1x8xf32>,
      %c1_145 = arith.constant 1 : index
      %c0_146 = arith.constant 0 : index
      %201 = vector.load %arg19[%c1_145, %c0_146] : memref<302x8xf32, #tpu.memory_space<vmem>>, vector<200x8xf32>
      tpu.vector_store %arg19[%c1_145, %c0_146], %195 {strides = array<i32>} : memref<302x8xf32, #tpu.memory_space<vmem>>, vector<200x8xf32>,
      %c201_147 = arith.constant 201 : index
      %c0_148 = arith.constant 0 : index
      %202 = vector.load %arg19[%c201_147, %c0_148] : memref<302x8xf32, #tpu.memory_space<vmem>>, vector<100x8xf32>
      tpu.vector_store %arg19[%c201_147, %c0_148], %198 {strides = array<i32>} : memref<302x8xf32, #tpu.memory_space<vmem>>, vector<100x8xf32>,
      %cst_149 = arith.constant 0.000000e+00 : f32
      %203 = vector.broadcast %cst_149 : f32 to vector<1x8xf32>
      %c301_150 = arith.constant 301 : index
      %c0_151 = arith.constant 0 : index
      %204 = vector.load %arg19[%c301_150, %c0_151] : memref<302x8xf32, #tpu.memory_space<vmem>>, vector<1x8xf32>
      tpu.vector_store %arg19[%c301_150, %c0_151], %203 {strides = array<i32>} : memref<302x8xf32, #tpu.memory_space<vmem>>, vector<1x8xf32>,
      %c0_152 = arith.constant 0 : index
      %c0_153 = arith.constant 0 : index
      %205 = vector.load %arg12[%c0_152, %c0_153] : memref<75x128xf32, #tpu.memory_space<vmem>>, vector<75x128xf32>
      %c0_154 = arith.constant 0 : index
      %c0_155 = arith.constant 0 : index
      %206 = vector.load %arg13[%c0_154, %c0_155] : memref<1x1xf32, #tpu.memory_space<vmem>>, vector<1x1xf32>
      %c0_156 = arith.constant 0 : index
      %c0_157 = arith.constant 0 : index
      %207 = vector.load %arg19[%c0_156, %c0_157] : memref<302x8xf32, #tpu.memory_space<vmem>>, vector<300x8xf32>
      %208 = vector.extract_strided_slice %55 {offsets = [0, 0, 0], sizes = [1, 8, 128], strides = [1, 1, 1]} : vector<3x8x128xf32> to vector<1x8x128xf32>
      %209 = vector.shape_cast %208 : vector<1x8x128xf32> to vector<8x128xf32>
      %cst_158 = arith.constant dense<0.000000e+00> : vector<300x128xf32>
      %210 = tpu.matmul %207, %209, %cst_158 {dimension_numbers = #tpu.dot_dimension_numbers<[1], [0], [0], [1], [0, 0, 1, 1], [], []>} : vector<300x8xf32>, vector<8x128xf32>, vector<300x128xf32> -> vector<300x128xf32>
      %c1_159 = arith.constant 1 : index
      %c0_160 = arith.constant 0 : index
      %211 = vector.load %arg19[%c1_159, %c0_160] : memref<302x8xf32, #tpu.memory_space<vmem>>, vector<300x8xf32>
      %212 = vector.extract_strided_slice %55 {offsets = [1, 0, 0], sizes = [1, 8, 128], strides = [1, 1, 1]} : vector<3x8x128xf32> to vector<1x8x128xf32>
      %213 = vector.shape_cast %212 : vector<1x8x128xf32> to vector<8x128xf32>
      %cst_161 = arith.constant dense<0.000000e+00> : vector<300x128xf32>
      %214 = tpu.matmul %211, %213, %cst_161 {dimension_numbers = #tpu.dot_dimension_numbers<[1], [0], [0], [1], [0, 0, 1, 1], [], []>} : vector<300x8xf32>, vector<8x128xf32>, vector<300x128xf32> -> vector<300x128xf32>
      %215 = arith.addf %210, %214 : vector<300x128xf32>
      %c2_162 = arith.constant 2 : index
      %c0_163 = arith.constant 0 : index
      %216 = vector.load %arg19[%c2_162, %c0_163] : memref<302x8xf32, #tpu.memory_space<vmem>>, vector<300x8xf32>
      %217 = vector.extract_strided_slice %55 {offsets = [2, 0, 0], sizes = [1, 8, 128], strides = [1, 1, 1]} : vector<3x8x128xf32> to vector<1x8x128xf32>
      %218 = vector.shape_cast %217 : vector<1x8x128xf32> to vector<8x128xf32>
      %cst_164 = arith.constant dense<0.000000e+00> : vector<300x128xf32>
      %219 = tpu.matmul %216, %218, %cst_164 {dimension_numbers = #tpu.dot_dimension_numbers<[1], [0], [0], [1], [0, 0, 1, 1], [], []>} : vector<300x8xf32>, vector<8x128xf32>, vector<300x128xf32> -> vector<300x128xf32>
      %220 = arith.addf %215, %219 : vector<300x128xf32>
      %221 = vector.broadcast %56 : vector<1x128xf32> to vector<300x128xf32>
      %222 = arith.addf %220, %221 : vector<300x128xf32>
      %cst_165 = arith.constant 0.000000e+00 : f32
      %223 = vector.broadcast %cst_165 : f32 to vector<300x128xf32>
      %224 = arith.maximumf %222, %223 : vector<300x128xf32>
      %c0_166 = arith.constant 0 : index
      %c0_167 = arith.constant 0 : index
      %225 = vector.load %arg20[%c0_166, %c0_167] : memref<300x128xf32, #tpu.memory_space<vmem>>, vector<300x128xf32>
      tpu.vector_store %arg20[%c0_166, %c0_167], %224 {strides = array<i32>} : memref<300x128xf32, #tpu.memory_space<vmem>>, vector<300x128xf32>,
      %c0_168 = arith.constant 0 : index
      %c0_169 = arith.constant 0 : index
      %226 = tpu.strided_load %arg20[%c0_168, %c0_169] {strides = array<i32: 2, 1>} : memref<300x128xf32, #tpu.memory_space<vmem>>, vector<149x128xf32>
      %c1_170 = arith.constant 1 : index
      %c0_171 = arith.constant 0 : index
      %227 = tpu.strided_load %arg20[%c1_170, %c0_171] {strides = array<i32: 2, 1>} : memref<300x128xf32, #tpu.memory_space<vmem>>, vector<149x128xf32>
      %228 = arith.maximumf %226, %227 : vector<149x128xf32>
      %c2_172 = arith.constant 2 : index
      %c0_173 = arith.constant 0 : index
      %229 = tpu.strided_load %arg20[%c2_172, %c0_173] {strides = array<i32: 2, 1>} : memref<300x128xf32, #tpu.memory_space<vmem>>, vector<149x128xf32>
      %230 = arith.maximumf %228, %229 : vector<149x128xf32>
      %cst_174 = arith.constant 0.000000e+00 : f32
      %231 = vector.broadcast %cst_174 : f32 to vector<1x128xf32>
      %c0_175 = arith.constant 0 : index
      %c0_176 = arith.constant 0 : index
      %232 = vector.load %arg21[%c0_175, %c0_176] : memref<151x128xf32, #tpu.memory_space<vmem>>, vector<1x128xf32>
      tpu.vector_store %arg21[%c0_175, %c0_176], %231 {strides = array<i32>} : memref<151x128xf32, #tpu.memory_space<vmem>>, vector<1x128xf32>,
      %cst_177 = arith.constant 0.000000e+00 : f32
      %233 = vector.broadcast %cst_177 : f32 to vector<1x128xf32>
      %c150_178 = arith.constant 150 : index
      %c0_179 = arith.constant 0 : index
      %234 = vector.load %arg21[%c150_178, %c0_179] : memref<151x128xf32, #tpu.memory_space<vmem>>, vector<1x128xf32>
      tpu.vector_store %arg21[%c150_178, %c0_179], %233 {strides = array<i32>} : memref<151x128xf32, #tpu.memory_space<vmem>>, vector<1x128xf32>,
      %c1_180 = arith.constant 1 : index
      %c0_181 = arith.constant 0 : index
      %235 = vector.load %arg21[%c1_180, %c0_181] : memref<151x128xf32, #tpu.memory_space<vmem>>, vector<149x128xf32>
      tpu.vector_store %arg21[%c1_180, %c0_181], %230 {strides = array<i32>} : memref<151x128xf32, #tpu.memory_space<vmem>>, vector<149x128xf32>,
      %c0_182 = arith.constant 0 : index
      %c0_183 = arith.constant 0 : index
      %236 = vector.load %arg21[%c0_182, %c0_183] : memref<151x128xf32, #tpu.memory_space<vmem>>, vector<150x128xf32>
      %237 = vector.extract_strided_slice %57 {offsets = [0, 0, 0], sizes = [1, 128, 128], strides = [1, 1, 1]} : vector<2x128x128xf32> to vector<1x128x128xf32>
      %238 = vector.shape_cast %237 : vector<1x128x128xf32> to vector<128x128xf32>
      %cst_184 = arith.constant dense<0.000000e+00> : vector<150x128xf32>
      %239 = tpu.matmul %236, %238, %cst_184 {dimension_numbers = #tpu.dot_dimension_numbers<[1], [0], [0], [1], [0, 0, 1, 1], [], []>} : vector<150x128xf32>, vector<128x128xf32>, vector<150x128xf32> -> vector<150x128xf32>
      %c1_185 = arith.constant 1 : index
      %c0_186 = arith.constant 0 : index
      %240 = vector.load %arg21[%c1_185, %c0_186] : memref<151x128xf32, #tpu.memory_space<vmem>>, vector<150x128xf32>
      %241 = vector.extract_strided_slice %57 {offsets = [1, 0, 0], sizes = [1, 128, 128], strides = [1, 1, 1]} : vector<2x128x128xf32> to vector<1x128x128xf32>
      %242 = vector.shape_cast %241 : vector<1x128x128xf32> to vector<128x128xf32>
      %cst_187 = arith.constant dense<0.000000e+00> : vector<150x128xf32>
      %243 = tpu.matmul %240, %242, %cst_187 {dimension_numbers = #tpu.dot_dimension_numbers<[1], [0], [0], [1], [0, 0, 1, 1], [], []>} : vector<150x128xf32>, vector<128x128xf32>, vector<150x128xf32> -> vector<150x128xf32>
      %244 = arith.addf %239, %243 : vector<150x128xf32>
      %245 = vector.broadcast %58 : vector<1x128xf32> to vector<150x128xf32>
      %246 = arith.addf %244, %245 : vector<150x128xf32>
      %cst_188 = arith.constant 0.000000e+00 : f32
      %247 = vector.broadcast %cst_188 : f32 to vector<150x128xf32>
      %248 = arith.maximumf %246, %247 : vector<150x128xf32>
      %c0_189 = arith.constant 0 : index
      %c0_190 = arith.constant 0 : index
      %249 = vector.load %arg20[%c0_189, %c0_190] : memref<300x128xf32, #tpu.memory_space<vmem>>, vector<150x128xf32>
      tpu.vector_store %arg20[%c0_189, %c0_190], %248 {strides = array<i32>} : memref<300x128xf32, #tpu.memory_space<vmem>>, vector<150x128xf32>,
      %c0_191 = arith.constant 0 : index
      %c0_192 = arith.constant 0 : index
      %250 = tpu.strided_load %arg20[%c0_191, %c0_192] {strides = array<i32: 2, 1>} : memref<300x128xf32, #tpu.memory_space<vmem>>, vector<75x128xf32>
      %c1_193 = arith.constant 1 : index
      %c0_194 = arith.constant 0 : index
      %251 = tpu.strided_load %arg20[%c1_193, %c0_194] {strides = array<i32: 2, 1>} : memref<300x128xf32, #tpu.memory_space<vmem>>, vector<75x128xf32>
      %252 = arith.maximumf %250, %251 : vector<75x128xf32>
      %253 = arith.mulf %252, %205 : vector<75x128xf32>
      %cst_195 = arith.constant dense<0.000000e+00> : vector<128xf32>
      %254 = vector.multi_reduction <add>, %253, %cst_195 [0] : vector<75x128xf32> to vector<128xf32>
      %255 = vector.shape_cast %254 : vector<128xf32> to vector<1x128xf32>
      %cst_196 = arith.constant dense<0.000000e+00> : vector<1xf32>
      %256 = vector.multi_reduction <add>, %255, %cst_196 [1] : vector<1x128xf32> to vector<1xf32>
      %257 = vector.shape_cast %256 : vector<1xf32> to vector<1x1xf32>
      %258 = arith.addf %257, %206 : vector<1x1xf32>
      %cst_197 = arith.constant 0.000000e+00 : f32
      %259 = vector.broadcast %cst_197 : f32 to vector<1x8xf32>
      %c201_198 = arith.constant 201 : index
      %c0_199 = arith.constant 0 : index
      %260 = vector.load %arg19[%c201_198, %c0_199] : memref<302x8xf32, #tpu.memory_space<vmem>>, vector<1x8xf32>
      tpu.vector_store %arg19[%c201_198, %c0_199], %259 {strides = array<i32>} : memref<302x8xf32, #tpu.memory_space<vmem>>, vector<1x8xf32>,
      %c0_200 = arith.constant 0 : index
      %c0_201 = arith.constant 0 : index
      %261 = vector.load %arg14[%c0_200, %c0_201] : memref<50x128xf32, #tpu.memory_space<vmem>>, vector<50x128xf32>
      %c0_202 = arith.constant 0 : index
      %c0_203 = arith.constant 0 : index
      %262 = vector.load %arg15[%c0_202, %c0_203] : memref<1x1xf32, #tpu.memory_space<vmem>>, vector<1x1xf32>
      %c0_204 = arith.constant 0 : index
      %c0_205 = arith.constant 0 : index
      %263 = vector.load %arg19[%c0_204, %c0_205] : memref<302x8xf32, #tpu.memory_space<vmem>>, vector<200x8xf32>
      %264 = vector.extract_strided_slice %55 {offsets = [0, 0, 0], sizes = [1, 8, 128], strides = [1, 1, 1]} : vector<3x8x128xf32> to vector<1x8x128xf32>
      %265 = vector.shape_cast %264 : vector<1x8x128xf32> to vector<8x128xf32>
      %cst_206 = arith.constant dense<0.000000e+00> : vector<200x128xf32>
      %266 = tpu.matmul %263, %265, %cst_206 {dimension_numbers = #tpu.dot_dimension_numbers<[1], [0], [0], [1], [0, 0, 1, 1], [], []>} : vector<200x8xf32>, vector<8x128xf32>, vector<200x128xf32> -> vector<200x128xf32>
      %c1_207 = arith.constant 1 : index
      %c0_208 = arith.constant 0 : index
      %267 = vector.load %arg19[%c1_207, %c0_208] : memref<302x8xf32, #tpu.memory_space<vmem>>, vector<200x8xf32>
      %268 = vector.extract_strided_slice %55 {offsets = [1, 0, 0], sizes = [1, 8, 128], strides = [1, 1, 1]} : vector<3x8x128xf32> to vector<1x8x128xf32>
      %269 = vector.shape_cast %268 : vector<1x8x128xf32> to vector<8x128xf32>
      %cst_209 = arith.constant dense<0.000000e+00> : vector<200x128xf32>
      %270 = tpu.matmul %267, %269, %cst_209 {dimension_numbers = #tpu.dot_dimension_numbers<[1], [0], [0], [1], [0, 0, 1, 1], [], []>} : vector<200x8xf32>, vector<8x128xf32>, vector<200x128xf32> -> vector<200x128xf32>
      %271 = arith.addf %266, %270 : vector<200x128xf32>
      %c2_210 = arith.constant 2 : index
      %c0_211 = arith.constant 0 : index
      %272 = vector.load %arg19[%c2_210, %c0_211] : memref<302x8xf32, #tpu.memory_space<vmem>>, vector<200x8xf32>
      %273 = vector.extract_strided_slice %55 {offsets = [2, 0, 0], sizes = [1, 8, 128], strides = [1, 1, 1]} : vector<3x8x128xf32> to vector<1x8x128xf32>
      %274 = vector.shape_cast %273 : vector<1x8x128xf32> to vector<8x128xf32>
      %cst_212 = arith.constant dense<0.000000e+00> : vector<200x128xf32>
      %275 = tpu.matmul %272, %274, %cst_212 {dimension_numbers = #tpu.dot_dimension_numbers<[1], [0], [0], [1], [0, 0, 1, 1], [], []>} : vector<200x8xf32>, vector<8x128xf32>, vector<200x128xf32> -> vector<200x128xf32>
      %276 = arith.addf %271, %275 : vector<200x128xf32>
      %277 = vector.broadcast %56 : vector<1x128xf32> to vector<200x128xf32>
      %278 = arith.addf %276, %277 : vector<200x128xf32>
      %cst_213 = arith.constant 0.000000e+00 : f32
      %279 = vector.broadcast %cst_213 : f32 to vector<200x128xf32>
      %280 = arith.maximumf %278, %279 : vector<200x128xf32>
      %c0_214 = arith.constant 0 : index
      %c0_215 = arith.constant 0 : index
      %281 = vector.load %arg20[%c0_214, %c0_215] : memref<300x128xf32, #tpu.memory_space<vmem>>, vector<200x128xf32>
      tpu.vector_store %arg20[%c0_214, %c0_215], %280 {strides = array<i32>} : memref<300x128xf32, #tpu.memory_space<vmem>>, vector<200x128xf32>,
      %c0_216 = arith.constant 0 : index
      %c0_217 = arith.constant 0 : index
      %282 = tpu.strided_load %arg20[%c0_216, %c0_217] {strides = array<i32: 2, 1>} : memref<300x128xf32, #tpu.memory_space<vmem>>, vector<99x128xf32>
      %c1_218 = arith.constant 1 : index
      %c0_219 = arith.constant 0 : index
      %283 = tpu.strided_load %arg20[%c1_218, %c0_219] {strides = array<i32: 2, 1>} : memref<300x128xf32, #tpu.memory_space<vmem>>, vector<99x128xf32>
      %284 = arith.maximumf %282, %283 : vector<99x128xf32>
      %c2_220 = arith.constant 2 : index
      %c0_221 = arith.constant 0 : index
      %285 = tpu.strided_load %arg20[%c2_220, %c0_221] {strides = array<i32: 2, 1>} : memref<300x128xf32, #tpu.memory_space<vmem>>, vector<99x128xf32>
      %286 = arith.maximumf %284, %285 : vector<99x128xf32>
      %cst_222 = arith.constant 0.000000e+00 : f32
      %287 = vector.broadcast %cst_222 : f32 to vector<1x128xf32>
      %c0_223 = arith.constant 0 : index
      %c0_224 = arith.constant 0 : index
      %288 = vector.load %arg22[%c0_223, %c0_224] : memref<101x128xf32, #tpu.memory_space<vmem>>, vector<1x128xf32>
      tpu.vector_store %arg22[%c0_223, %c0_224], %287 {strides = array<i32>} : memref<101x128xf32, #tpu.memory_space<vmem>>, vector<1x128xf32>,
      %cst_225 = arith.constant 0.000000e+00 : f32
      %289 = vector.broadcast %cst_225 : f32 to vector<1x128xf32>
      %c100_226 = arith.constant 100 : index
      %c0_227 = arith.constant 0 : index
      %290 = vector.load %arg22[%c100_226, %c0_227] : memref<101x128xf32, #tpu.memory_space<vmem>>, vector<1x128xf32>
      tpu.vector_store %arg22[%c100_226, %c0_227], %289 {strides = array<i32>} : memref<101x128xf32, #tpu.memory_space<vmem>>, vector<1x128xf32>,
      %c1_228 = arith.constant 1 : index
      %c0_229 = arith.constant 0 : index
      %291 = vector.load %arg22[%c1_228, %c0_229] : memref<101x128xf32, #tpu.memory_space<vmem>>, vector<99x128xf32>
      tpu.vector_store %arg22[%c1_228, %c0_229], %286 {strides = array<i32>} : memref<101x128xf32, #tpu.memory_space<vmem>>, vector<99x128xf32>,
      %c0_230 = arith.constant 0 : index
      %c0_231 = arith.constant 0 : index
      %292 = vector.load %arg22[%c0_230, %c0_231] : memref<101x128xf32, #tpu.memory_space<vmem>>, vector<100x128xf32>
      %293 = vector.extract_strided_slice %57 {offsets = [0, 0, 0], sizes = [1, 128, 128], strides = [1, 1, 1]} : vector<2x128x128xf32> to vector<1x128x128xf32>
      %294 = vector.shape_cast %293 : vector<1x128x128xf32> to vector<128x128xf32>
      %cst_232 = arith.constant dense<0.000000e+00> : vector<100x128xf32>
      %295 = tpu.matmul %292, %294, %cst_232 {dimension_numbers = #tpu.dot_dimension_numbers<[1], [0], [0], [1], [0, 0, 1, 1], [], []>} : vector<100x128xf32>, vector<128x128xf32>, vector<100x128xf32> -> vector<100x128xf32>
      %c1_233 = arith.constant 1 : index
      %c0_234 = arith.constant 0 : index
      %296 = vector.load %arg22[%c1_233, %c0_234] : memref<101x128xf32, #tpu.memory_space<vmem>>, vector<100x128xf32>
      %297 = vector.extract_strided_slice %57 {offsets = [1, 0, 0], sizes = [1, 128, 128], strides = [1, 1, 1]} : vector<2x128x128xf32> to vector<1x128x128xf32>
      %298 = vector.shape_cast %297 : vector<1x128x128xf32> to vector<128x128xf32>
      %cst_235 = arith.constant dense<0.000000e+00> : vector<100x128xf32>
      %299 = tpu.matmul %296, %298, %cst_235 {dimension_numbers = #tpu.dot_dimension_numbers<[1], [0], [0], [1], [0, 0, 1, 1], [], []>} : vector<100x128xf32>, vector<128x128xf32>, vector<100x128xf32> -> vector<100x128xf32>
      %300 = arith.addf %295, %299 : vector<100x128xf32>
      %301 = vector.broadcast %58 : vector<1x128xf32> to vector<100x128xf32>
      %302 = arith.addf %300, %301 : vector<100x128xf32>
      %cst_236 = arith.constant 0.000000e+00 : f32
      %303 = vector.broadcast %cst_236 : f32 to vector<100x128xf32>
      %304 = arith.maximumf %302, %303 : vector<100x128xf32>
      %c0_237 = arith.constant 0 : index
      %c0_238 = arith.constant 0 : index
      %305 = vector.load %arg20[%c0_237, %c0_238] : memref<300x128xf32, #tpu.memory_space<vmem>>, vector<100x128xf32>
      tpu.vector_store %arg20[%c0_237, %c0_238], %304 {strides = array<i32>} : memref<300x128xf32, #tpu.memory_space<vmem>>, vector<100x128xf32>,
      %c0_239 = arith.constant 0 : index
      %c0_240 = arith.constant 0 : index
      %306 = tpu.strided_load %arg20[%c0_239, %c0_240] {strides = array<i32: 2, 1>} : memref<300x128xf32, #tpu.memory_space<vmem>>, vector<50x128xf32>
      %c1_241 = arith.constant 1 : index
      %c0_242 = arith.constant 0 : index
      %307 = tpu.strided_load %arg20[%c1_241, %c0_242] {strides = array<i32: 2, 1>} : memref<300x128xf32, #tpu.memory_space<vmem>>, vector<50x128xf32>
      %308 = arith.maximumf %306, %307 : vector<50x128xf32>
      %309 = arith.mulf %308, %261 : vector<50x128xf32>
      %cst_243 = arith.constant dense<0.000000e+00> : vector<128xf32>
      %310 = vector.multi_reduction <add>, %309, %cst_243 [0] : vector<50x128xf32> to vector<128xf32>
      %311 = vector.shape_cast %310 : vector<128xf32> to vector<1x128xf32>
      %cst_244 = arith.constant dense<0.000000e+00> : vector<1xf32>
      %312 = vector.multi_reduction <add>, %311, %cst_244 [1] : vector<1x128xf32> to vector<1xf32>
      %313 = vector.shape_cast %312 : vector<1xf32> to vector<1x1xf32>
      %314 = arith.addf %313, %262 : vector<1x1xf32>
      %315 = arith.mulf %258, %314 : vector<1x1xf32>
      %cst_245 = arith.constant 0.000000e+00 : f32
      %316 = vector.broadcast %cst_245 : f32 to vector<1x1xf32>
      %317 = arith.subf %316, %315 : vector<1x1xf32>
      %318 = math.exp %317 : vector<1x1xf32>
      %cst_246 = arith.constant 1.000000e+00 : f32
      %319 = vector.broadcast %cst_246 : f32 to vector<1x1xf32>
      %320 = arith.addf %319, %318 : vector<1x1xf32>
      %cst_247 = arith.constant 1.000000e+00 : f32
      %321 = vector.broadcast %cst_247 : f32 to vector<1x1xf32>
      %322 = arith.divf %321, %320 : vector<1x1xf32>
      %323 = vector.shape_cast %322 : vector<1x1xf32> to vector<1x1xf32>
      %324 = vector.broadcast %323 : vector<1x1xf32> to vector<1x128xf32>
      %c1_248 = arith.constant 1 : index
      %c0_249 = arith.constant 0 : index
      %325 = vector.load %arg16[%c1_248, %c0_249] : memref<8x128xf32, #tpu.memory_space<vmem>>, vector<1x128xf32>
      tpu.vector_store %arg16[%c1_248, %c0_249], %324 {strides = array<i32>} : memref<8x128xf32, #tpu.memory_space<vmem>>, vector<1x128xf32>,
    } else {
    }
    return
  }
  func.func @transform_0(%arg0: i32) -> (i32, i32) {
    %c0_i32 = arith.constant 0 : i32
    %c0_i32_0 = arith.constant 0 : i32
    %c0_i32_1 = arith.constant 0 : i32
    return %c0_i32, %c0_i32_0 : i32, i32
  }
  func.func @transform_1(%arg0: i32) -> (i32, i32) {
    %c0_i32 = arith.constant 0 : i32
    %c0_i32_0 = arith.constant 0 : i32
    %c0_i32_1 = arith.constant 0 : i32
    return %c0_i32, %c0_i32_0 : i32, i32
  }
  func.func @transform_2(%arg0: i32) -> (i32, i32) {
    %c0_i32 = arith.constant 0 : i32
    %c0_i32_0 = arith.constant 0 : i32
    %c0_i32_1 = arith.constant 0 : i32
    return %c0_i32, %c0_i32_0 : i32, i32
  }
  func.func @transform_3(%arg0: i32) -> (i32, i32, i32) {
    %c0_i32 = arith.constant 0 : i32
    %c0_i32_0 = arith.constant 0 : i32
    %c0_i32_1 = arith.constant 0 : i32
    return %arg0, %c0_i32, %c0_i32_0 : i32, i32, i32
  }
  func.func @transform_4(%arg0: i32) -> (i32, i32) {
    %c0_i32 = arith.constant 0 : i32
    %c0_i32_0 = arith.constant 0 : i32
    %c0_i32_1 = arith.constant 0 : i32
    return %c0_i32, %c0_i32_0 : i32, i32
  }
  func.func @transform_5(%arg0: i32) -> (i32, i32) {
    %c0_i32 = arith.constant 0 : i32
    %c0_i32_0 = arith.constant 0 : i32
    %c0_i32_1 = arith.constant 0 : i32
    return %c0_i32, %c0_i32_0 : i32, i32
  }
  func.func @transform_6(%arg0: i32) -> (i32, i32) {
    %c0_i32 = arith.constant 0 : i32
    %c0_i32_0 = arith.constant 0 : i32
    %c0_i32_1 = arith.constant 0 : i32
    return %c0_i32, %c0_i32_0 : i32, i32
  }
  func.func @transform_7(%arg0: i32) -> (i32, i32, i32) {
    %c0_i32 = arith.constant 0 : i32
    %c0_i32_0 = arith.constant 0 : i32
    %c0_i32_1 = arith.constant 0 : i32
    %c0_i32_2 = arith.constant 0 : i32
    return %c0_i32, %c0_i32_0, %c0_i32_1 : i32, i32, i32
  }
  func.func @transform_8(%arg0: i32) -> (i32, i32) {
    %c0_i32 = arith.constant 0 : i32
    %c0_i32_0 = arith.constant 0 : i32
    %c0_i32_1 = arith.constant 0 : i32
    return %c0_i32, %c0_i32_0 : i32, i32
  }
  func.func @transform_9(%arg0: i32) -> (i32, i32, i32) {
    %c0_i32 = arith.constant 0 : i32
    %c0_i32_0 = arith.constant 0 : i32
    %c0_i32_1 = arith.constant 0 : i32
    %c0_i32_2 = arith.constant 0 : i32
    return %c0_i32, %c0_i32_0, %c0_i32_1 : i32, i32, i32
  }
  func.func @transform_10(%arg0: i32) -> (i32, i32) {
    %c0_i32 = arith.constant 0 : i32
    %c0_i32_0 = arith.constant 0 : i32
    %c0_i32_1 = arith.constant 0 : i32
    return %c0_i32, %c0_i32_0 : i32, i32
  }
  func.func @transform_11(%arg0: i32) -> (i32, i32) {
    %c0_i32 = arith.constant 0 : i32
    %c0_i32_0 = arith.constant 0 : i32
    %c0_i32_1 = arith.constant 0 : i32
    return %c0_i32, %c0_i32_0 : i32, i32
  }
  func.func @transform_12(%arg0: i32) -> (i32, i32) {
    %c0_i32 = arith.constant 0 : i32
    %c0_i32_0 = arith.constant 0 : i32
    %c0_i32_1 = arith.constant 0 : i32
    return %c0_i32, %c0_i32_0 : i32, i32
  }
  func.func @transform_13(%arg0: i32) -> (i32, i32) {
    %c0_i32 = arith.constant 0 : i32
    %c0_i32_0 = arith.constant 0 : i32
    %c0_i32_1 = arith.constant 0 : i32
    return %c0_i32, %c0_i32_0 : i32, i32
  }
  func.func @transform_14(%arg0: i32) -> (i32, i32) {
    %c0_i32 = arith.constant 0 : i32
    %c0_i32_0 = arith.constant 0 : i32
    %c0_i32_1 = arith.constant 0 : i32
    return %c0_i32, %c0_i32_0 : i32, i32
  }
  func.func @transform_15(%arg0: i32) -> (i32, i32) {
    %c0_i32 = arith.constant 0 : i32
    %c0_i32_0 = arith.constant 0 : i32
    %c0_i32_1 = arith.constant 0 : i32
    return %c0_i32, %c0_i32_0 : i32, i32
  }
}

</mosaic_0001>

<llo_original>
// kernel: net_forward.1
$region0: #{net_forward.1}
  #allocation0 [shape = 'u32[]', space=smem, size = 0x4, offset = 0x4, fixed_abs, tag = 'smem constant byte address 0x4 - core index']
  #allocation1 [shape = 'u32[144,128]{1,0:T(1,128)}', space=vmem, size = 0x12000, scoped, tag = 'internal scratch']
  #allocation2 [shape = 'f32[16,256]{1,0:T(8,128)}', space=vmem, size = 0x4000, scoped, tag = 'scratch operand']
  #allocation3 [shape = 'f32[16,16]{1,0:T(8,128)}', space=vmem, size = 0x2000, scoped, tag = 'scratch operand']
  #allocation4 [shape = 'f32[302,8]{1,0:T(8,128)}', space=vmem, size = 0x26000, scoped, tag = 'scratch operand']
  #allocation5 [shape = 'f32[300,128]{1,0:T(8,128)}', space=vmem, size = 0x26000, scoped, tag = 'scratch operand']
  #allocation6 [shape = 'f32[151,128]{1,0:T(8,128)}', space=vmem, size = 0x13000, scoped, tag = 'scratch operand']
  #allocation7 [shape = 'f32[101,128]{1,0:T(8,128)}', space=vmem, size = 0xd000, scoped, tag = 'scratch operand']
  #allocation8 [shape = 'f32[1,1]{1,0:T(1,128)S(1)}', space=vmem, size = 0x200, scoped, tag = 'scoped memory for net_forward.1']
  #allocation9 [shape = 'f32[1,1]{1,0:T(1,128)S(1)}', space=vmem, size = 0x200, scoped, tag = 'scoped memory for net_forward.1']
  %s0 = inlined_call_operand.vmem [shape: f32[16,128], index: 0, kind: input, shape index: {}]
  %s1 = inlined_call_operand.vmem [shape: s32[40,1], index: 1, kind: input, shape index: {}]
  %s2 = inlined_call_operand.vmem [shape: s32[1,40], index: 2, kind: input, shape index: {}]
  %s3 = inlined_call_operand.hbm [shape: bf16[3,256,1024], index: 3, kind: input, shape index: {}]
  %s4 = inlined_call_operand.hbm [shape: bf16[256,768], index: 4, kind: input, shape index: {}]
  %s5 = inlined_call_operand.hbm [shape: f32[1,768], index: 5, kind: input, shape index: {}]
  %s6 = inlined_call_operand.hbm [shape: f32[1,768], index: 6, kind: input, shape index: {}]
  %s7 = inlined_call_operand.hbm [shape: f32[3,8,128], index: 7, kind: input, shape index: {}]
  %s8 = inlined_call_operand.hbm [shape: f32[1,128], index: 8, kind: input, shape index: {}]
  %s9 = inlined_call_operand.hbm [shape: f32[2,128,128], index: 9, kind: input, shape index: {}]
  %s10 = inlined_call_operand.hbm [shape: f32[1,128], index: 10, kind: input, shape index: {}]
  %s11 = inlined_call_operand.hbm [shape: f32[75,128], index: 11, kind: input, shape index: {}]
  %s12 = inlined_call_operand.<no memory space> [shape: f32[1,1], index: 12, kind: input, shape index: {}]
  %s13 = inlined_call_operand.hbm [shape: f32[50,128], index: 13, kind: input, shape index: {}]
  %s14 = inlined_call_operand.<no memory space> [shape: f32[1,1], index: 14, kind: input, shape index: {}]
  %s15 = inlined_call_operand.vmem [shape: f32[8,128], index: 15, kind: output, shape index: {}]
  %s16 = sld [smem:[#allocation0]]
  $region141: #{net_forward.1} parent=0
    _
  %s18 = ssub.s32 1, %s16
  %s19 = scalar_select 0, %s18, %s16
  %v20 = vstv %s12
  %21 = vst [vmem:[#allocation8] sm:$0x1] %v20
  %v22 = vstv %s14
  %23 = vst [vmem:[#allocation9] sm:$0x1] %v22
  $region1: #{net_forward.1} parent=0
    #allocation10 [shape = 'u8[1048576]{0}', space=vmem, size = 0x100000, scoped, tag = 'input window, operand 3']
    #allocation11 [shape = 's32[2]{0}', space=sflag, size = 0x8, scoped, tag = 'scoped memory for net_forward.1']
    #allocation12 [shape = 'u8[393216]{0}', space=vmem, size = 0x60000, scoped, tag = 'input window, operand 4, single buffered']
    #allocation13 [shape = 's32[1]{0}', space=sflag, size = 0x4, scoped, tag = 'scoped memory for net_forward.1']
    #allocation14 [shape = 'u8[3072]{0}', space=vmem, size = 0xc00, scoped, tag = 'input window, operand 5, single buffered']
    #allocation15 [shape = 'u8[3072]{0}', space=vmem, size = 0xc00, scoped, tag = 'input window, operand 6, single buffered']
    #allocation16 [shape = 's32[1]{0}', space=sflag, size = 0x4, scoped, tag = 'scoped memory for net_forward.1']
    #allocation17 [shape = 'u8[12288]{0}', space=vmem, size = 0x3000, scoped, tag = 'input window, operand 7, single buffered']
    #allocation18 [shape = 'u8[512]{0}', space=vmem, size = 0x400, scoped, tag = 'input window, operand 8, single buffered']
    #allocation19 [shape = 's32[1]{0}', space=sflag, size = 0x4, scoped, tag = 'scoped memory for net_forward.1']
    #allocation20 [shape = 'u8[131072]{0}', space=vmem, size = 0x20000, scoped, tag = 'input window, operand 9, single buffered']
    #allocation21 [shape = 'u8[512]{0}', space=vmem, size = 0x400, scoped, tag = 'input window, operand 10, single buffered']
    #allocation22 [shape = 's32[1]{0}', space=sflag, size = 0x4, scoped, tag = 'scoped memory for net_forward.1']
    #allocation23 [shape = 'u8[40960]{0}', space=vmem, size = 0xa000, scoped, tag = 'input window, operand 11, single buffered']
    #allocation24 [shape = 'u8[28672]{0}', space=vmem, size = 0x7000, scoped, tag = 'input window, operand 13, single buffered']
    #allocation25 [shape = 's32[1]{0}', space=sflag, size = 0x4, scoped, tag = 'scoped memory for net_forward.1']
    %24 = vsyncpa [#allocation11], 0
    %s25 = scalar_lea.sflag [#allocation11], 1
    %26 = vsyncpa %s25, 0
    %27 = vsyncpa [#allocation13], 0
    %28 = vsyncpa [#allocation16], 0
    %29 = vsyncpa [#allocation19], 0
    %30 = vsyncpa [#allocation22], 0
    %31 = vsyncpa [#allocation25], 0
    loop: start=0, step=1, limit=5
    $region2: #{net_forward.1} parent=1 // loop_pre_header
      _
    $region3: #{net_forward.1} parent=1 // loop_header
      %s33 = sphi 0, %s37
      %p34 = scmp.ge.s32.totalorder %s33, 5
      %s41 = sphi 0, %s41
      %s43 = sphi 0, %s41
      %s44 = sphi 0, %s43
      %s58 = sphi 0, %s44
      %s62 = sphi 0, %s62
      %s64 = sphi 0, %s62
      %s65 = sphi 0, %s64
      %s79 = sphi 0, %s65
      %s83 = sphi 0, %s83
      %s85 = sphi 0, %s83
      %s86 = sphi 0, %s85
      %s100 = sphi 0, %s86
      %s106 = sphi 0, %s108
      %s109 = sphi 0, %s106
      %s110 = sphi 0, %s109
      %s126 = sphi 0, %s110
      %s130 = sphi 0, %s130
      %s132 = sphi 0, %s130
      %s133 = sphi 0, %s132
      %s147 = sphi 0, %s133
      %s151 = sphi 0, %s151
      %s153 = sphi 0, %s151
      %s154 = sphi 0, %s153
      %s168 = sphi 0, %s154
      %s172 = sphi 0, %s172
      %s174 = sphi 0, %s172
      %s175 = sphi 0, %s174
      %s189 = sphi 0, %s175
      %s193 = sphi 0, %s193
      %s195 = sphi 0, %s193
      %s196 = sphi 0, %s195
      %s210 = sphi 0, %s196
      %s214 = sphi 0, %s214
      %s216 = sphi 0, %s214
      %s217 = sphi 0, %s216
      %s231 = sphi 0, %s217
      %s235 = sphi 0, %s235
      %s237 = sphi 0, %s235
      %s238 = sphi 0, %s237
      %s252 = sphi 0, %s238
      %s256 = sphi 0, %s256
      %s258 = sphi 0, %s256
      %s259 = sphi 0, %s258
      %s273 = sphi 0, %s259
      %s277 = sphi 0, %s277
      %s279 = sphi 0, %s277
      %s280 = sphi 0, %s279
      %s294 = sphi 0, %s280
      %s298 = sphi 0, %s298
      %s300 = sphi 0, %s298
      %s301 = sphi 0, %s300
      %s315 = sphi 0, %s301
      %s319 = sphi 0, %s319
      %s321 = sphi 0, %s319
      %s322 = sphi 0, %s321
      %s336 = sphi 0, %s322
      %s340 = sphi 0, %s340
      %s342 = sphi 0, %s340
      %s343 = sphi 0, %s342
      %s357 = sphi 0, %s343
      %s361 = sphi 0, %s361
      %s363 = sphi 0, %s361
      %s364 = sphi 0, %s363
      %s378 = sphi 0, %s364
    $region4: #{net_forward.1} parent=1 // loop_header_branch
      %36 = sbr.rel (%p34) target = $region8
    $region5: #{net_forward.1} parent=1 // loop_body
      %s38 = ssub.s32 %s33, 1
      %s39 = ssub.s32 %s33, 2
      %s40 = sadd.s32 %s33, 1
      %s42 = sadd.s32 %s41, 1
      %p45 = scmp.eq.s32.totalorder %s33, 2
      %p46 = scmp.ne.s32.totalorder %s41, %s43
      %p47 = scmp.eq.s32.totalorder %s33, 0
      %p48 = por %p46, %p47
      %p49 = scmp.ne.s32.totalorder %s41, %s43
      %p50 = scmp.eq.s32.totalorder %s38, 2
      %p51 = por %p49, %p50
      %p52 = scmp.ne.s32.totalorder %s43, %s44
      %p53 = scmp.eq.s32.totalorder %s38, 0
      %p54 = por %p52, %p53
      %p55 = scmp.ne.s32.totalorder %s43, %s44
      %p56 = scmp.eq.s32.totalorder %s39, 2
      %p57 = por %p55, %p56
      %p59 = scmp.ne.s32.totalorder %s44, %s58
      %p60 = scmp.eq.s32.totalorder %s39, 0
      %p61 = por %p59, %p60
      %s63 = sadd.s32 %s62, 1
      %p66 = scmp.eq.s32.totalorder %s33, 2
      %p67 = scmp.ne.s32.totalorder %s62, %s64
      %p68 = scmp.eq.s32.totalorder %s33, 0
      %p69 = por %p67, %p68
      %p70 = scmp.ne.s32.totalorder %s62, %s64
      %p71 = scmp.eq.s32.totalorder %s38, 2
      %p72 = por %p70, %p71
      %p73 = scmp.ne.s32.totalorder %s64, %s65
      %p74 = scmp.eq.s32.totalorder %s38, 0
      %p75 = por %p73, %p74
      %p76 = scmp.ne.s32.totalorder %s64, %s65
      %p77 = scmp.eq.s32.totalorder %s39, 2
      %p78 = por %p76, %p77
      %p80 = scmp.ne.s32.totalorder %s65, %s79
      %p81 = scmp.eq.s32.totalorder %s39, 0
      %p82 = por %p80, %p81
      %s84 = sadd.s32 %s83, 1
      %p87 = scmp.eq.s32.totalorder %s33, 2
      %p88 = scmp.ne.s32.totalorder %s83, %s85
      %p89 = scmp.eq.s32.totalorder %s33, 0
      %p90 = por %p88, %p89
      %p91 = scmp.ne.s32.totalorder %s83, %s85
      %p92 = scmp.eq.s32.totalorder %s38, 2
      %p93 = por %p91, %p92
      %p94 = scmp.ne.s32.totalorder %s85, %s86
      %p95 = scmp.eq.s32.totalorder %s38, 0
      %p96 = por %p94, %p95
      %p97 = scmp.ne.s32.totalorder %s85, %s86
      %p98 = scmp.eq.s32.totalorder %s39, 2
      %p99 = por %p97, %p98
      %p101 = scmp.ne.s32.totalorder %s86, %s100
      %p102 = scmp.eq.s32.totalorder %s39, 0
      %p103 = por %p101, %p102
      %s104 = ssub.s32 %s33, %s40
      %p105 = scmp.eq.s32.totalorder %s104, 0
      %s107 = sadd.s32 %s106, 1
      %s108 = scalar_select %p105, %s106, %s107
      %p111 = pneg %p105
      %p112 = scmp.eq.s32.totalorder %s33, 2
      %p113 = por %p111, %p112
      %p114 = scmp.ne.s32.totalorder %s106, %s109
      %p115 = scmp.eq.s32.totalorder %s33, 0
      %p116 = por %p114, %p115
      %p117 = scmp.ne.s32.totalorder %s106, %s109
      %p118 = scmp.eq.s32.totalorder %s38, 2
      %p119 = por %p117, %p118
      %p120 = scmp.ne.s32.totalorder %s109, %s110
      %p121 = scmp.eq.s32.totalorder %s38, 0
      %p122 = por %p120, %p121
      %p123 = scmp.ne.s32.totalorder %s109, %s110
      %p124 = scmp.eq.s32.totalorder %s39, 2
      %p125 = por %p123, %p124
      %p127 = scmp.ne.s32.totalorder %s110, %s126
      %p128 = scmp.eq.s32.totalorder %s39, 0
      %p129 = por %p127, %p128
      %s131 = sadd.s32 %s130, 1
      %p134 = scmp.eq.s32.totalorder %s33, 2
      %p135 = scmp.ne.s32.totalorder %s130, %s132
      %p136 = scmp.eq.s32.totalorder %s33, 0
      %p137 = por %p135, %p136
      %p138 = scmp.ne.s32.totalorder %s130, %s132
      %p139 = scmp.eq.s32.totalorder %s38, 2
      %p140 = por %p138, %p139
      %p141 = scmp.ne.s32.totalorder %s132, %s133
      %p142 = scmp.eq.s32.totalorder %s38, 0
      %p143 = por %p141, %p142
      %p144 = scmp.ne.s32.totalorder %s132, %s133
      %p145 = scmp.eq.s32.totalorder %s39, 2
      %p146 = por %p144, %p145
      %p148 = scmp.ne.s32.totalorder %s133, %s147
      %p149 = scmp.eq.s32.totalorder %s39, 0
      %p150 = por %p148, %p149
      %s152 = sadd.s32 %s151, 1
      %p155 = scmp.eq.s32.totalorder %s33, 2
      %p156 = scmp.ne.s32.totalorder %s151, %s153
      %p157 = scmp.eq.s32.totalorder %s33, 0
      %p158 = por %p156, %p157
      %p159 = scmp.ne.s32.totalorder %s151, %s153
      %p160 = scmp.eq.s32.totalorder %s38, 2
      %p161 = por %p159, %p160
      %p162 = scmp.ne.s32.totalorder %s153, %s154
      %p163 = scmp.eq.s32.totalorder %s38, 0
      %p164 = por %p162, %p163
      %p165 = scmp.ne.s32.totalorder %s153, %s154
      %p166 = scmp.eq.s32.totalorder %s39, 2
      %p167 = por %p165, %p166
      %p169 = scmp.ne.s32.totalorder %s154, %s168
      %p170 = scmp.eq.s32.totalorder %s39, 0
      %p171 = por %p169, %p170
      %s173 = sadd.s32 %s172, 1
      %p176 = scmp.eq.s32.totalorder %s33, 2
      %p177 = scmp.ne.s32.totalorder %s172, %s174
      %p178 = scmp.eq.s32.totalorder %s33, 0
      %p179 = por %p177, %p178
      %p180 = scmp.ne.s32.totalorder %s172, %s174
      %p181 = scmp.eq.s32.totalorder %s38, 2
      %p182 = por %p180, %p181
      %p183 = scmp.ne.s32.totalorder %s174, %s175
      %p184 = scmp.eq.s32.totalorder %s38, 0
      %p185 = por %p183, %p184
      %p186 = scmp.ne.s32.totalorder %s174, %s175
      %p187 = scmp.eq.s32.totalorder %s39, 2
      %p188 = por %p186, %p187
      %p190 = scmp.ne.s32.totalorder %s175, %s189
      %p191 = scmp.eq.s32.totalorder %s39, 0
      %p192 = por %p190, %p191
      %s194 = sadd.s32 %s193, 1
      %p197 = scmp.eq.s32.totalorder %s33, 2
      %p198 = scmp.ne.s32.totalorder %s193, %s195
      %p199 = scmp.eq.s32.totalorder %s33, 0
      %p200 = por %p198, %p199
      %p201 = scmp.ne.s32.totalorder %s193, %s195
      %p202 = scmp.eq.s32.totalorder %s38, 2
      %p203 = por %p201, %p202
      %p204 = scmp.ne.s32.totalorder %s195, %s196
      %p205 = scmp.eq.s32.totalorder %s38, 0
      %p206 = por %p204, %p205
      %p207 = scmp.ne.s32.totalorder %s195, %s196
      %p208 = scmp.eq.s32.totalorder %s39, 2
      %p209 = por %p207, %p208
      %p211 = scmp.ne.s32.totalorder %s196, %s210
      %p212 = scmp.eq.s32.totalorder %s39, 0
      %p213 = por %p211, %p212
      %s215 = sadd.s32 %s214, 1
      %p218 = scmp.eq.s32.totalorder %s33, 2
      %p219 = scmp.ne.s32.totalorder %s214, %s216
      %p220 = scmp.eq.s32.totalorder %s33, 0
      %p221 = por %p219, %p220
      %p222 = scmp.ne.s32.totalorder %s214, %s216
      %p223 = scmp.eq.s32.totalorder %s38, 2
      %p224 = por %p222, %p223
      %p225 = scmp.ne.s32.totalorder %s216, %s217
      %p226 = scmp.eq.s32.totalorder %s38, 0
      %p227 = por %p225, %p226
      %p228 = scmp.ne.s32.totalorder %s216, %s217
      %p229 = scmp.eq.s32.totalorder %s39, 2
      %p230 = por %p228, %p229
      %p232 = scmp.ne.s32.totalorder %s217, %s231
      %p233 = scmp.eq.s32.totalorder %s39, 0
      %p234 = por %p232, %p233
      %s236 = sadd.s32 %s235, 1
      %p239 = scmp.eq.s32.totalorder %s33, 2
      %p240 = scmp.ne.s32.totalorder %s235, %s237
      %p241 = scmp.eq.s32.totalorder %s33, 0
      %p242 = por %p240, %p241
      %p243 = scmp.ne.s32.totalorder %s235, %s237
      %p244 = scmp.eq.s32.totalorder %s38, 2
      %p245 = por %p243, %p244
      %p246 = scmp.ne.s32.totalorder %s237, %s238
      %p247 = scmp.eq.s32.totalorder %s38, 0
      %p248 = por %p246, %p247
      %p249 = scmp.ne.s32.totalorder %s237, %s238
      %p250 = scmp.eq.s32.totalorder %s39, 2
      %p251 = por %p249, %p250
      %p253 = scmp.ne.s32.totalorder %s238, %s252
      %p254 = scmp.eq.s32.totalorder %s39, 0
      %p255 = por %p253, %p254
      %s257 = sadd.s32 %s256, 1
      %p260 = scmp.eq.s32.totalorder %s33, 2
      %p261 = scmp.ne.s32.totalorder %s256, %s258
      %p262 = scmp.eq.s32.totalorder %s33, 0
      %p263 = por %p261, %p262
      %p264 = scmp.ne.s32.totalorder %s256, %s258
      %p265 = scmp.eq.s32.totalorder %s38, 2
      %p266 = por %p264, %p265
      %p267 = scmp.ne.s32.totalorder %s258, %s259
      %p268 = scmp.eq.s32.totalorder %s38, 0
      %p269 = por %p267, %p268
      %p270 = scmp.ne.s32.totalorder %s258, %s259
      %p271 = scmp.eq.s32.totalorder %s39, 2
      %p272 = por %p270, %p271
      %p274 = scmp.ne.s32.totalorder %s259, %s273
      %p275 = scmp.eq.s32.totalorder %s39, 0
      %p276 = por %p274, %p275
      %s278 = sadd.s32 %s277, 1
      %p281 = scmp.eq.s32.totalorder %s33, 2
      %p282 = scmp.ne.s32.totalorder %s277, %s279
      %p283 = scmp.eq.s32.totalorder %s33, 0
      %p284 = por %p282, %p283
      %p285 = scmp.ne.s32.totalorder %s277, %s279
      %p286 = scmp.eq.s32.totalorder %s38, 2
      %p287 = por %p285, %p286
      %p288 = scmp.ne.s32.totalorder %s279, %s280
      %p289 = scmp.eq.s32.totalorder %s38, 0
      %p290 = por %p288, %p289
      %p291 = scmp.ne.s32.totalorder %s279, %s280
      %p292 = scmp.eq.s32.totalorder %s39, 2
      %p293 = por %p291, %p292
      %p295 = scmp.ne.s32.totalorder %s280, %s294
      %p296 = scmp.eq.s32.totalorder %s39, 0
      %p297 = por %p295, %p296
      %s299 = sadd.s32 %s298, 1
      %p302 = scmp.eq.s32.totalorder %s33, 2
      %p303 = scmp.ne.s32.totalorder %s298, %s300
      %p304 = scmp.eq.s32.totalorder %s33, 0
      %p305 = por %p303, %p304
      %p306 = scmp.ne.s32.totalorder %s298, %s300
      %p307 = scmp.eq.s32.totalorder %s38, 2
      %p308 = por %p306, %p307
      %p309 = scmp.ne.s32.totalorder %s300, %s301
      %p310 = scmp.eq.s32.totalorder %s38, 0
      %p311 = por %p309, %p310
      %p312 = scmp.ne.s32.totalorder %s300, %s301
      %p313 = scmp.eq.s32.totalorder %s39, 2
      %p314 = por %p312, %p313
      %p316 = scmp.ne.s32.totalorder %s301, %s315
      %p317 = scmp.eq.s32.totalorder %s39, 0
      %p318 = por %p316, %p317
      %s320 = sadd.s32 %s319, 1
      %p323 = scmp.eq.s32.totalorder %s33, 2
      %p324 = scmp.ne.s32.totalorder %s319, %s321
      %p325 = scmp.eq.s32.totalorder %s33, 0
      %p326 = por %p324, %p325
      %p327 = scmp.ne.s32.totalorder %s319, %s321
      %p328 = scmp.eq.s32.totalorder %s38, 2
      %p329 = por %p327, %p328
      %p330 = scmp.ne.s32.totalorder %s321, %s322
      %p331 = scmp.eq.s32.totalorder %s38, 0
      %p332 = por %p330, %p331
      %p333 = scmp.ne.s32.totalorder %s321, %s322
      %p334 = scmp.eq.s32.totalorder %s39, 2
      %p335 = por %p333, %p334
      %p337 = scmp.ne.s32.totalorder %s322, %s336
      %p338 = scmp.eq.s32.totalorder %s39, 0
      %p339 = por %p337, %p338
      %s341 = sadd.s32 %s340, 1
      %p344 = scmp.eq.s32.totalorder %s33, 2
      %p345 = scmp.ne.s32.totalorder %s340, %s342
      %p346 = scmp.eq.s32.totalorder %s33, 0
      %p347 = por %p345, %p346
      %p348 = scmp.ne.s32.totalorder %s340, %s342
      %p349 = scmp.eq.s32.totalorder %s38, 2
      %p350 = por %p348, %p349
      %p351 = scmp.ne.s32.totalorder %s342, %s343
      %p352 = scmp.eq.s32.totalorder %s38, 0
      %p353 = por %p351, %p352
      %p354 = scmp.ne.s32.totalorder %s342, %s343
      %p355 = scmp.eq.s32.totalorder %s39, 2
      %p356 = por %p354, %p355
      %p358 = scmp.ne.s32.totalorder %s343, %s357
      %p359 = scmp.eq.s32.totalorder %s39, 0
      %p360 = por %p358, %p359
      %s362 = sadd.s32 %s361, 1
      %p365 = scmp.eq.s32.totalorder %s33, 2
      %p366 = scmp.ne.s32.totalorder %s361, %s363
      %p367 = scmp.eq.s32.totalorder %s33, 0
      %p368 = por %p366, %p367
      %p369 = scmp.ne.s32.totalorder %s361, %s363
      %p370 = scmp.eq.s32.totalorder %s38, 2
      %p371 = por %p369, %p370
      %p372 = scmp.ne.s32.totalorder %s363, %s364
      %p373 = scmp.eq.s32.totalorder %s38, 0
      %p374 = por %p372, %p373
      %p375 = scmp.ne.s32.totalorder %s363, %s364
      %p376 = scmp.eq.s32.totalorder %s39, 2
      %p377 = por %p375, %p376
      %p379 = scmp.ne.s32.totalorder %s364, %s378
      %p380 = scmp.eq.s32.totalorder %s39, 0
      %p381 = por %p379, %p380
      %p382 = scmp.le.s32.totalorder 1, %s33
      %p383 = scmp.lt.s32.totalorder %s33, 4
      %p384 = pnand %p382, %p383
      %p385 = pneg %p384
      // Predicated region
      $region9: #{net_forward.1} parent=5 // pred_check
        _
      $region10: #{net_forward.1} parent=5 // pred_check_branch
        %387 = sbr.rel (%p384) target = $region12
      $region11: #{net_forward.1} parent=5 // pred_region
        %s388 = ssub.s32 %s33, 1
        // Predicated region
        $region13: #{net_forward.1} parent=11 // pred_check
          %p389 = pneg %p54
        $region14: #{net_forward.1} parent=11 // pred_check_branch
          %391 = sbr.rel (%p389) target = $region16
        $region15: #{net_forward.1} parent=11 // pred_region
          _
        $region16: #{net_forward.1} parent=11 // pred_fallthru
          _
        // Predicated region
        $region17: #{net_forward.1} parent=11 // pred_check
          %p392 = pneg %p75
        $region18: #{net_forward.1} parent=11 // pred_check_branch
          %394 = sbr.rel (%p392) target = $region20
        $region19: #{net_forward.1} parent=11 // pred_region
          _
        $region20: #{net_forward.1} parent=11 // pred_fallthru
          _
        // Predicated region
        $region21: #{net_forward.1} parent=11 // pred_check
          %p395 = pneg %p96
        $region22: #{net_forward.1} parent=11 // pred_check_branch
          %397 = sbr.rel (%p395) target = $region24
        $region23: #{net_forward.1} parent=11 // pred_region
          _
        $region24: #{net_forward.1} parent=11 // pred_fallthru
          _
        // Predicated region
        $region25: #{net_forward.1} parent=11 // pred_check
          %p398 = pneg %p143
        $region26: #{net_forward.1} parent=11 // pred_check_branch
          %400 = sbr.rel (%p398) target = $region28
        $region27: #{net_forward.1} parent=11 // pred_region
          %s402 = ssub.s32 12288, 12288
          %403 = vsyncadd [#allocation13], %s402
          %s404 = sshll.u32 [#allocation12], 4
          %s405 = int_to_ptr.vmem [resolvable:$true] %s404
          %410 = dma.hbm_to_vmem [thread:$0]  %s4, 12288, %s405, [#allocation13], 384, 384, 24
        $region28: #{net_forward.1} parent=11 // pred_fallthru
          _
        // Predicated region
        $region29: #{net_forward.1} parent=11 // pred_check
          %p411 = pneg %p164
        $region30: #{net_forward.1} parent=11 // pred_check_branch
          %413 = sbr.rel (%p411) target = $region32
        $region31: #{net_forward.1} parent=11 // pred_region
          %s415 = ssub.s32 96, 96
          %416 = vsyncadd [#allocation13], %s415
          %s418 = sshll.u32 [#allocation14], 4
          %s419 = int_to_ptr.vmem [resolvable:$true] %s418
          %421 = dma.hbm_to_vmem [thread:$0]  %s5, 96, %s419, [#allocation13]
        $region32: #{net_forward.1} parent=11 // pred_fallthru
          _
        // Predicated region
        $region33: #{net_forward.1} parent=11 // pred_check
          %p422 = pneg %p185
        $region34: #{net_forward.1} parent=11 // pred_check_branch
          %424 = sbr.rel (%p422) target = $region36
        $region35: #{net_forward.1} parent=11 // pred_region
          %s426 = ssub.s32 96, 96
          %427 = vsyncadd [#allocation16], %s426
          %s429 = sshll.u32 [#allocation15], 4
          %s430 = int_to_ptr.vmem [resolvable:$true] %s429
          %432 = dma.hbm_to_vmem [thread:$0]  %s6, 96, %s430, [#allocation16]
        $region36: #{net_forward.1} parent=11 // pred_fallthru
          _
        // Predicated region
        $region37: #{net_forward.1} parent=11 // pred_check
          %p433 = pneg %p206
        $region38: #{net_forward.1} parent=11 // pred_check_branch
          %435 = sbr.rel (%p433) target = $region40
        $region39: #{net_forward.1} parent=11 // pred_region
          %s437 = ssub.s32 384, 384
          %438 = vsyncadd [#allocation16], %s437
          %s439 = sshll.u32 [#allocation17], 4
          %s440 = int_to_ptr.vmem [resolvable:$true] %s439
          %445 = dma.hbm_to_vmem [thread:$0]  %s7, 384, %s440, [#allocation16], 128, 128, 8
        $region40: #{net_forward.1} parent=11 // pred_fallthru
          _
        // Predicated region
        $region41: #{net_forward.1} parent=11 // pred_check
          %p446 = pneg %p227
        $region42: #{net_forward.1} parent=11 // pred_check_branch
          %448 = sbr.rel (%p446) target = $region44
        $region43: #{net_forward.1} parent=11 // pred_region
          %s450 = ssub.s32 16, 16
          %451 = vsyncadd [#allocation19], %s450
          %s453 = sshll.u32 [#allocation18], 4
          %s454 = int_to_ptr.vmem [resolvable:$true] %s453
          %456 = dma.hbm_to_vmem [thread:$0]  %s8, 16, %s454, [#allocation19]
        $region44: #{net_forward.1} parent=11 // pred_fallthru
          _
        // Predicated region
        $region45: #{net_forward.1} parent=11 // pred_check
          %p457 = pneg %p248
        $region46: #{net_forward.1} parent=11 // pred_check_branch
          %459 = sbr.rel (%p457) target = $region48
        $region47: #{net_forward.1} parent=11 // pred_region
          %s461 = ssub.s32 4096, 4096
          %462 = vsyncadd [#allocation19], %s461
          %s463 = sshll.u32 [#allocation20], 4
          %s464 = int_to_ptr.vmem [resolvable:$true] %s463
          %469 = dma.hbm_to_vmem [thread:$0]  %s9, 4096, %s464, [#allocation19], 128, 128, 8
        $region48: #{net_forward.1} parent=11 // pred_fallthru
          _
        // Predicated region
        $region49: #{net_forward.1} parent=11 // pred_check
          %p470 = pneg %p269
        $region50: #{net_forward.1} parent=11 // pred_check_branch
          %472 = sbr.rel (%p470) target = $region52
        $region51: #{net_forward.1} parent=11 // pred_region
          %s474 = ssub.s32 16, 16
          %475 = vsyncadd [#allocation22], %s474
          %s477 = sshll.u32 [#allocation21], 4
          %s478 = int_to_ptr.vmem [resolvable:$true] %s477
          %480 = dma.hbm_to_vmem [thread:$0]  %s10, 16, %s478, [#allocation22]
        $region52: #{net_forward.1} parent=11 // pred_fallthru
          _
        // Predicated region
        $region53: #{net_forward.1} parent=11 // pred_check
          %p481 = pneg %p290
        $region54: #{net_forward.1} parent=11 // pred_check_branch
          %483 = sbr.rel (%p481) target = $region56
        $region55: #{net_forward.1} parent=11 // pred_region
          %s485 = ssub.s32 1280, 1280
          %486 = vsyncadd [#allocation22], %s485
          %s487 = sshll.u32 [#allocation23], 4
          %s488 = int_to_ptr.vmem [resolvable:$true] %s487
          %493 = dma.hbm_to_vmem [thread:$0]  %s11, 1280, %s488, [#allocation22], 128, 128, 8
        $region56: #{net_forward.1} parent=11 // pred_fallthru
          _
        // Predicated region
        $region57: #{net_forward.1} parent=11 // pred_check
          %p494 = pneg %p311
        $region58: #{net_forward.1} parent=11 // pred_check_branch
          %496 = sbr.rel (%p494) target = $region60
        $region59: #{net_forward.1} parent=11 // pred_region
          _
        $region60: #{net_forward.1} parent=11 // pred_fallthru
          _
        // Predicated region
        $region61: #{net_forward.1} parent=11 // pred_check
          %p497 = pneg %p332
        $region62: #{net_forward.1} parent=11 // pred_check_branch
          %499 = sbr.rel (%p497) target = $region64
        $region63: #{net_forward.1} parent=11 // pred_region
          %s501 = ssub.s32 896, 896
          %502 = vsyncadd [#allocation25], %s501
          %s503 = sshll.u32 [#allocation24], 4
          %s504 = int_to_ptr.vmem [resolvable:$true] %s503
          %509 = dma.hbm_to_vmem [thread:$0]  %s13, 896, %s504, [#allocation25], 128, 128, 8
        $region64: #{net_forward.1} parent=11 // pred_fallthru
          _
        // Predicated region
        $region65: #{net_forward.1} parent=11 // pred_check
          %p510 = pneg %p353
        $region66: #{net_forward.1} parent=11 // pred_check_branch
          %512 = sbr.rel (%p510) target = $region68
        $region67: #{net_forward.1} parent=11 // pred_region
          _
        $region68: #{net_forward.1} parent=11 // pred_fallthru
          _
      $region12: #{net_forward.1} parent=5 // pred_fallthru
        _
      %p513 = scmp.lt.s32.totalorder %s33, 3
      // Predicated region
      $region69: #{net_forward.1} parent=5 // pred_check
        %p514 = pneg %p513
      $region70: #{net_forward.1} parent=5 // pred_check_branch
        %516 = sbr.rel (%p514) target = $region72
      $region71: #{net_forward.1} parent=5 // pred_region
        // Predicated region
        $region73: #{net_forward.1} parent=71 // pred_check
          %p517 = pneg %p116
        $region74: #{net_forward.1} parent=71 // pred_check_branch
          %519 = sbr.rel (%p517) target = $region76
        $region75: #{net_forward.1} parent=71 // pred_region
          %s520 = sand.u32 %s106, 1
          %s521 = scalar_lea.sflag [#allocation11], %s520
          %s522 = sand.u32 %s106, 1
          %s523 = smul.addr %s522, 1024
          %s524 = scalar_lea.vmem [#allocation10], %s523
          %s526 = ssub.s32 16384, 16384
          %527 = vsyncadd %s521, %s526
          %s528 = smul.addr %s33, 256
          %s529 = smul.addr %s528, 64
          %s530 = scalar_lea.hbm %s3, %s529
          %s531 = sshll.u32 %s524, 4
          %s532 = int_to_ptr.vmem [resolvable:$true] %s531
          %537 = dma.hbm_to_vmem [thread:$0]  %s530, 16384, %s532, %s521, 512, 512, 32
        $region76: #{net_forward.1} parent=71 // pred_fallthru
          _
      $region72: #{net_forward.1} parent=5 // pred_fallthru
        _
      %p538 = scmp.le.s32.totalorder 1, %s33
      %p539 = scmp.lt.s32.totalorder %s33, 4
      %p540 = pnand %p538, %p539
      %p541 = pneg %p540
      // Predicated region
      $region77: #{net_forward.1} parent=5 // pred_check
        _
      $region78: #{net_forward.1} parent=5 // pred_check_branch
        %543 = sbr.rel (%p540) target = $region80
      $region79: #{net_forward.1} parent=5 // pred_region
        %s544 = ssub.s32 %s33, 1
        %s545 = sand.u32 %s109, 1
        %s546 = scalar_lea.sflag [#allocation11], %s545
        %s547 = sand.u32 %s109, 1
        %s548 = smul.addr %s547, 1024
        %s549 = scalar_lea.vmem [#allocation10], %s548
        // Predicated region
        $region81: #{net_forward.1} parent=79 // pred_check
          %p550 = pneg %p122
        $region82: #{net_forward.1} parent=79 // pred_check_branch
          %552 = sbr.rel (%p550) target = $region84
        $region83: #{net_forward.1} parent=79 // pred_region
          %553 = dma.done %s546, 16384
        $region84: #{net_forward.1} parent=79 // pred_fallthru
          _
        // Predicated region
        $region85: #{net_forward.1} parent=79 // pred_check
          %p554 = pneg %p143
        $region86: #{net_forward.1} parent=79 // pred_check_branch
          %556 = sbr.rel (%p554) target = $region88
        $region87: #{net_forward.1} parent=79 // pred_region
          %557 = dma.done [#allocation13], 12288
        $region88: #{net_forward.1} parent=79 // pred_fallthru
          _
        // Predicated region
        $region89: #{net_forward.1} parent=79 // pred_check
          %p558 = pneg %p164
        $region90: #{net_forward.1} parent=79 // pred_check_branch
          %560 = sbr.rel (%p558) target = $region92
        $region91: #{net_forward.1} parent=79 // pred_region
          %561 = dma.done [#allocation13], 96
        $region92: #{net_forward.1} parent=79 // pred_fallthru
          _
        // Predicated region
        $region93: #{net_forward.1} parent=79 // pred_check
          %p562 = pneg %p185
        $region94: #{net_forward.1} parent=79 // pred_check_branch
          %564 = sbr.rel (%p562) target = $region96
        $region95: #{net_forward.1} parent=79 // pred_region
          %565 = dma.done [#allocation16], 96
        $region96: #{net_forward.1} parent=79 // pred_fallthru
          _
        // Predicated region
        $region97: #{net_forward.1} parent=79 // pred_check
          %p566 = pneg %p206
        $region98: #{net_forward.1} parent=79 // pred_check_branch
          %568 = sbr.rel (%p566) target = $region100
        $region99: #{net_forward.1} parent=79 // pred_region
          %569 = dma.done [#allocation16], 384
        $region100: #{net_forward.1} parent=79 // pred_fallthru
          _
        // Predicated region
        $region101: #{net_forward.1} parent=79 // pred_check
          %p570 = pneg %p227
        $region102: #{net_forward.1} parent=79 // pred_check_branch
          %572 = sbr.rel (%p570) target = $region104
        $region103: #{net_forward.1} parent=79 // pred_region
          %573 = dma.done [#allocation19], 16
        $region104: #{net_forward.1} parent=79 // pred_fallthru
          _
        // Predicated region
        $region105: #{net_forward.1} parent=79 // pred_check
          %p574 = pneg %p248
        $region106: #{net_forward.1} parent=79 // pred_check_branch
          %576 = sbr.rel (%p574) target = $region108
        $region107: #{net_forward.1} parent=79 // pred_region
          %577 = dma.done [#allocation19], 4096
        $region108: #{net_forward.1} parent=79 // pred_fallthru
          _
        // Predicated region
        $region109: #{net_forward.1} parent=79 // pred_check
          %p578 = pneg %p269
        $region110: #{net_forward.1} parent=79 // pred_check_branch
          %580 = sbr.rel (%p578) target = $region112
        $region111: #{net_forward.1} parent=79 // pred_region
          %581 = dma.done [#allocation22], 16
        $region112: #{net_forward.1} parent=79 // pred_fallthru
          _
        // Predicated region
        $region113: #{net_forward.1} parent=79 // pred_check
          %p582 = pneg %p290
        $region114: #{net_forward.1} parent=79 // pred_check_branch
          %584 = sbr.rel (%p582) target = $region116
        $region115: #{net_forward.1} parent=79 // pred_region
          %585 = dma.done [#allocation22], 1280
        $region116: #{net_forward.1} parent=79 // pred_fallthru
          _
        // Predicated region
        $region117: #{net_forward.1} parent=79 // pred_check
          %p586 = pneg %p332
        $region118: #{net_forward.1} parent=79 // pred_check_branch
          %588 = sbr.rel (%p586) target = $region120
        $region119: #{net_forward.1} parent=79 // pred_region
          %589 = dma.done [#allocation25], 896
        $region120: #{net_forward.1} parent=79 // pred_fallthru
          _
        %p590 = pneg %p54
        %p591 = pneg %p51
        %p592 = pneg %p75
        %p593 = pneg %p72
        %p594 = pneg %p96
        %p595 = pneg %p93
        %s596 = sand.u32 %s109, 1
        %s597 = scalar_lea.sflag [#allocation11], %s596
        %s598 = sand.u32 %s109, 1
        %s599 = smul.addr %s598, 1024
        %s600 = scalar_lea.vmem [#allocation10], %s599
        %p601 = pneg %p122
        %p602 = pneg %p119
        %p603 = pneg %p143
        %p604 = pneg %p140
        %p605 = pneg %p164
        %p606 = pneg %p161
        %p607 = pneg %p185
        %p608 = pneg %p182
        %p609 = pneg %p206
        %p610 = pneg %p203
        %p611 = pneg %p227
        %p612 = pneg %p224
        %p613 = pneg %p248
        %p614 = pneg %p245
        %p615 = pneg %p269
        %p616 = pneg %p266
        %p617 = pneg %p290
        %p618 = pneg %p287
        %p619 = pneg %p311
        %p620 = pneg %p308
        %p621 = pneg %p332
        %p622 = pneg %p329
        %p623 = pneg %p353
        %p624 = pneg %p350
        %p625 = pneg %p374
        %p626 = pneg %p371
        %p627 = scmp.eq.s32.totalorder %s38, 0
        // Predicated region
        $region121: #{net_forward.1} parent=79 // pred_check
          %p628 = pneg %p627
        $region122: #{net_forward.1} parent=79 // pred_check_branch
          %630 = sbr.rel (%p628) target = $region124
        $region123: #{net_forward.1} parent=79 // pred_region
          %631 = vst [vmem:[#allocation2] sm:$0xff] 0.0
          %632 = vst [vmem:[#allocation2 + $0x8] sm:$0xff] 0.0
          %633 = vst [vmem:[#allocation2 + $0x10] sm:$0xff] 0.0
          %634 = vst [vmem:[#allocation2 + $0x18] sm:$0xff] 0.0
          %v635 = vld [vmem:[%s0] sm:$0xff]
          %v636 = vld [vmem:[%s0 + $0x8] sm:$0xff]
          %637 = vst [vmem:[#allocation2] sm:$0xff] %v635
          %638 = vst [vmem:[#allocation2 + $0x10] sm:$0xff] %v636
          %639 = vst [vmem:[%s15] sm:$0xff] 0.0
          %v640 = vlaneseq
          %v641 = vand.u32 %v640, 127
          %v642 = vld [vmem:[%s1] sm:$0xff]
          %v643 = vld [vmem:[%s1 + $0x8] sm:$0xff]
          %v644 = vld [vmem:[%s1 + $0x10] sm:$0xff]
          %v645 = vld [vmem:[%s1 + $0x18] sm:$0xff]
          %v646 = vld [vmem:[%s1 + $0x20] sm:$0xff]
          %647 = vset.pattern.permute.xlu0 0
          %648 = vperm.xlu0 %647, %v642
          %v649 = vpop.permute.xlu0 %648
          %650 = vset.pattern.permute.xlu0 0
          %651 = vperm.xlu0 %650, %v643
          %v652 = vpop.permute.xlu0 %651
          %653 = vset.pattern.permute.xlu0 0
          %654 = vperm.xlu0 %653, %v644
          %v655 = vpop.permute.xlu0 %654
          %656 = vset.pattern.permute.xlu0 0
          %657 = vperm.xlu0 %656, %v645
          %v658 = vpop.permute.xlu0 %657
          %659 = vset.pattern.permute.xlu0 0
          %660 = vperm.xlu0 %659, %v646
          %v661 = vpop.permute.xlu0 %660
          %vm662 = vcmp.eq.s32.totalorder %v641, %v649
          %vm663 = vcmp.eq.s32.totalorder %v641, %v652
          %vm664 = vcmp.eq.s32.totalorder %v641, %v655
          %vm665 = vcmp.eq.s32.totalorder %v641, %v658
          %vm666 = vcmp.eq.s32.totalorder %v641, %v661
          %v667 = vsel %vm662, 1, 0
          %v668 = vsel %vm663, 1, 0
          %v669 = vsel %vm664, 1, 0
          %v670 = vsel %vm665, 1, 0
          %v671 = vsel %vm666, 1, 0
          %v672 = vcvt.s32.f32 %v667
          %v673 = vcvt.s32.f32 %v668
          %v674 = vcvt.s32.f32 %v669
          %v675 = vcvt.s32.f32 %v670
          %v676 = vcvt.s32.f32 %v671
          %v677 = vlaneseq
          %v678 = vshrl.u32 %v677, 7
          %v679 = vadd.s32 %v678, 8
          %v680 = vld [vmem:[%s2] sm:$0x1]
          %v681 = vlaneseq
          %v682 = vshrl.u32 %v681, 7
          %v683 = vsub.s32 0, %v682
          %v684 = vrot.slane %v680, %v683
          %vm685 = vcmp.eq.s32.totalorder %v678, %v684
          %vm686 = vcmp.eq.s32.totalorder %v679, %v684
          %v687 = vsel %vm685, 1, 0
          %v688 = vsel %vm686, 1, 0
          %v689 = vcvt.s32.f32 %v687
          %v690 = vcvt.s32.f32 %v688
          %vm691 = vcmask 326656
          %v693 = vsel %vm691, %v689, 0
          %v696 = vsel %vm691, %v690, 0
          %698 = vmatprep.subr.mxu0 0.0
          %699 = vmatpush1.msra.mxu0 %v672
          %700 = vmatprep.subr.mxu0 0.0
          %701 = vmatpush1.msra.mxu0 %v673
          %702 = vmatprep.subr.mxu0 0.0
          %703 = vmatpush1.msra.mxu0 %v674
          %704 = vmatprep.subr.mxu0 0.0
          %705 = vmatpush1.msra.mxu0 %v675
          %706 = vmatprep.subr.mxu0 0.0
          %707 = vmatpush1.msra.mxu0 %v676
          %708 = vmatprep.subr.mxu0 0.0
          %709 = vmatpush1.msra.mxu0 0.0
          %710 = vmatprep.subr.mxu0 0.0
          %711 = vmatpush1.msra.mxu0 0.0
          %712 = vmatprep.subr.mxu0 0.0
          %713 = vmatpush1.msra.mxu0 0.0
          %714 = vmatprep.subr.mxu0 0.0
          %715 = vmatpush1.msra.mxu0 0.0
          %716 = vmatprep.subr.mxu0 0.0
          %717 = vmatpush1.msra.mxu0 0.0
          %718 = vmatprep.subr.mxu0 0.0
          %719 = vmatpush1.msra.mxu0 0.0
          %720 = vmatprep.subr.mxu0 0.0
          %721 = vmatpush1.msra.mxu0 0.0
          %722 = vmatprep.subr.mxu0 0.0
          %723 = vmatpush1.msra.mxu0 0.0
          %724 = vmatprep.subr.mxu0 0.0
          %725 = vmatpush1.msra.mxu0 0.0
          %726 = vmatprep.subr.mxu0 0.0
          %727 = vmatpush1.msra.mxu0 0.0
          %728 = vmatprep.subr.mxu0 0.0
          %729 = vmatpush1.msra.mxu0 0.0
          %730 = vmatprep.subr.mxu0 0.0
          %731 = vmatpush1.msra.mxu0 0.0
          %732 = vmatprep.subr.mxu0 0.0
          %733 = vmatpush1.msra.mxu0 0.0
          %734 = vmatprep.subr.mxu0 0.0
          %735 = vmatpush1.msra.mxu0 0.0
          %736 = vmatprep.subr.mxu0 0.0
          %737 = vmatpush1.msra.mxu0 0.0
          %738 = vmatprep.subr.mxu0 0.0
          %739 = vmatpush1.msra.mxu0 0.0
          %740 = vmatprep.subr.mxu0 0.0
          %741 = vmatpush1.msra.mxu0 0.0
          %742 = vmatprep.subr.mxu0 0.0
          %743 = vmatpush1.msra.mxu0 0.0
          %744 = vmatprep.subr.mxu0 0.0
          %745 = vmatpush1.msra.mxu0 0.0
          %746 = vmatprep.subr.mxu0 0.0
          %747 = vmatpush1.msra.mxu0 0.0
          %748 = vmatprep.subr.mxu0 0.0
          %749 = vmatpush1.msra.mxu0 0.0
          %750 = vmatprep.subr.mxu0 0.0
          %751 = vmatpush1.msra.mxu0 0.0
          %752 = vmatprep.subr.mxu0 0.0
          %753 = vmatpush1.msra.mxu0 0.0
          %754 = vmatprep.subr.mxu0 0.0
          %755 = vmatpush1.msra.mxu0 0.0
          %756 = vmatprep.subr.mxu0 0.0
          %757 = vmatpush1.msra.mxu0 0.0
          %758 = vmatprep.subr.mxu0 0.0
          %759 = vmatpush1.msra.mxu0 0.0
          %760 = vmatprep.subr.mxu0 0.0
          %761 = vmatpush1.msra.mxu0 0.0
          %762 = vmatprep.mubr.f32.mxu0 0.0
          %763 = vmatmul.mubr.f32.gmra.mrb[0].mxu0 %v693
          %v764 = vpop.f32.mrb[0].mxu0
          %v765 = vadd.f32 0.0, %v764
          %v766 = vpop.f32.mrb[0].mxu0
          %767 = vmatprep.mubr.f32.mxu0 0.0
          %768 = vmatmul.mubr.f32.gmra.mrb[0].mxu0 %v696
          %v769 = vpop.f32.mrb[0].mxu0
          %v770 = vadd.f32 0.0, %v769
          %v771 = vpop.f32.mrb[0].mxu0
          %772 = vdwg.mxu0
          %vm773 = vcmask 130048
          %774 = vst.msk [vmem:[#allocation3] sm:$0xff] %vm773, %v765
          %775 = vst.msk [vmem:[#allocation3 + $0x8] sm:$0xff] %vm773, %v770
        $region124: #{net_forward.1} parent=79 // pred_fallthru
          _
        %v776 = vld [vmem:[#allocation2] sm:$0xff]
        %v777 = vld [vmem:[#allocation2 + $0x8] sm:$0xff]
        %v778 = vld [vmem:[#allocation2 + $0x10] sm:$0xff]
        %v779 = vld [vmem:[#allocation2 + $0x18] sm:$0xff]
        %v780 = vpack.c.bf16 %v778, %v776
        %v781 = vpack.c.bf16 %v779, %v777
        %v782 = vld [vmem:[%s549] sm:$0xff]
        %v783 = vld [vmem:[%s549 + $0x8] sm:$0xff]
        %v784 = vld [vmem:[%s549 + $0x10] sm:$0xff]
        %v785 = vld [vmem:[%s549 + $0x18] sm:$0xff]
        %v786 = vld [vmem:[%s549 + $0x20] sm:$0xff]
        %v787 = vld [vmem:[%s549 + $0x28] sm:$0xff]
        %v788 = vld [vmem:[%s549 + $0x30] sm:$0xff]
        %v789 = vld [vmem:[%s549 + $0x38] sm:$0xff]
        %v790 = vld [vmem:[%s549 + $0x40] sm:$0xff]
        %v791 = vld [vmem:[%s549 + $0x48] sm:$0xff]
        %v792 = vld [vmem:[%s549 + $0x50] sm:$0xff]
        %v793 = vld [vmem:[%s549 + $0x58] sm:$0xff]
        %v794 = vld [vmem:[%s549 + $0x60] sm:$0xff]
        %v795 = vld [vmem:[%s549 + $0x68] sm:$0xff]
        %v796 = vld [vmem:[%s549 + $0x70] sm:$0xff]
        %v797 = vld [vmem:[%s549 + $0x78] sm:$0xff]
        %v798 = vld [vmem:[%s549 + $0x80] sm:$0xff]
        %v799 = vld [vmem:[%s549 + $0x88] sm:$0xff]
        %v800 = vld [vmem:[%s549 + $0x90] sm:$0xff]
        %v801 = vld [vmem:[%s549 + $0x98] sm:$0xff]
        %v802 = vld [vmem:[%s549 + $0xa0] sm:$0xff]
        %v803 = vld [vmem:[%s549 + $0xa8] sm:$0xff]
        %v804 = vld [vmem:[%s549 + $0xb0] sm:$0xff]
        %v805 = vld [vmem:[%s549 + $0xb8] sm:$0xff]
        %v806 = vld [vmem:[%s549 + $0xc0] sm:$0xff]
        %v807 = vld [vmem:[%s549 + $0xc8] sm:$0xff]
        %v808 = vld [vmem:[%s549 + $0xd0] sm:$0xff]
        %v809 = vld [vmem:[%s549 + $0xd8] sm:$0xff]
        %v810 = vld [vmem:[%s549 + $0xe0] sm:$0xff]
        %v811 = vld [vmem:[%s549 + $0xe8] sm:$0xff]
        %v812 = vld [vmem:[%s549 + $0xf0] sm:$0xff]
        %v813 = vld [vmem:[%s549 + $0xf8] sm:$0xff]
        %v814 = vld [vmem:[%s549 + $0x100] sm:$0xff]
        %v815 = vld [vmem:[%s549 + $0x108] sm:$0xff]
        %v816 = vld [vmem:[%s549 + $0x110] sm:$0xff]
        %v817 = vld [vmem:[%s549 + $0x118] sm:$0xff]
        %v818 = vld [vmem:[%s549 + $0x120] sm:$0xff]
        %v819 = vld [vmem:[%s549 + $0x128] sm:$0xff]
        %v820 = vld [vmem:[%s549 + $0x130] sm:$0xff]
        %v821 = vld [vmem:[%s549 + $0x138] sm:$0xff]
        %v822 = vld [vmem:[%s549 + $0x140] sm:$0xff]
        %v823 = vld [vmem:[%s549 + $0x148] sm:$0xff]
        %v824 = vld [vmem:[%s549 + $0x150] sm:$0xff]
        %v825 = vld [vmem:[%s549 + $0x158] sm:$0xff]
        %v826 = vld [vmem:[%s549 + $0x160] sm:$0xff]
        %v827 = vld [vmem:[%s549 + $0x168] sm:$0xff]
        %v828 = vld [vmem:[%s549 + $0x170] sm:$0xff]
        %v829 = vld [vmem:[%s549 + $0x178] sm:$0xff]
        %v830 = vld [vmem:[%s549 + $0x180] sm:$0xff]
        %v831 = vld [vmem:[%s549 + $0x188] sm:$0xff]
        %v832 = vld [vmem:[%s549 + $0x190] sm:$0xff]
        %v833 = vld [vmem:[%s549 + $0x198] sm:$0xff]
        %v834 = vld [vmem:[%s549 + $0x1a0] sm:$0xff]
        %v835 = vld [vmem:[%s549 + $0x1a8] sm:$0xff]
        %v836 = vld [vmem:[%s549 + $0x1b0] sm:$0xff]
        %v837 = vld [vmem:[%s549 + $0x1b8] sm:$0xff]
        %v838 = vld [vmem:[%s549 + $0x1c0] sm:$0xff]
        %v839 = vld [vmem:[%s549 + $0x1c8] sm:$0xff]
        %v840 = vld [vmem:[%s549 + $0x1d0] sm:$0xff]
        %v841 = vld [vmem:[%s549 + $0x1d8] sm:$0xff]
        %v842 = vld [vmem:[%s549 + $0x1e0] sm:$0xff]
        %v843 = vld [vmem:[%s549 + $0x1e8] sm:$0xff]
        %v844 = vld [vmem:[%s549 + $0x1f0] sm:$0xff]
        %v845 = vld [vmem:[%s549 + $0x1f8] sm:$0xff]
        %v846 = vld [vmem:[%s549 + $0x200] sm:$0xff]
        %v847 = vld [vmem:[%s549 + $0x208] sm:$0xff]
        %v848 = vld [vmem:[%s549 + $0x210] sm:$0xff]
        %v849 = vld [vmem:[%s549 + $0x218] sm:$0xff]
        %v850 = vld [vmem:[%s549 + $0x220] sm:$0xff]
        %v851 = vld [vmem:[%s549 + $0x228] sm:$0xff]
        %v852 = vld [vmem:[%s549 + $0x230] sm:$0xff]
        %v853 = vld [vmem:[%s549 + $0x238] sm:$0xff]
        %v854 = vld [vmem:[%s549 + $0x240] sm:$0xff]
        %v855 = vld [vmem:[%s549 + $0x248] sm:$0xff]
        %v856 = vld [vmem:[%s549 + $0x250] sm:$0xff]
        %v857 = vld [vmem:[%s549 + $0x258] sm:$0xff]
        %v858 = vld [vmem:[%s549 + $0x260] sm:$0xff]
        %v859 = vld [vmem:[%s549 + $0x268] sm:$0xff]
        %v860 = vld [vmem:[%s549 + $0x270] sm:$0xff]
        %v861 = vld [vmem:[%s549 + $0x278] sm:$0xff]
        %v862 = vld [vmem:[%s549 + $0x280] sm:$0xff]
        %v863 = vld [vmem:[%s549 + $0x288] sm:$0xff]
        %v864 = vld [vmem:[%s549 + $0x290] sm:$0xff]
        %v865 = vld [vmem:[%s549 + $0x298] sm:$0xff]
        %v866 = vld [vmem:[%s549 + $0x2a0] sm:$0xff]
        %v867 = vld [vmem:[%s549 + $0x2a8] sm:$0xff]
        %v868 = vld [vmem:[%s549 + $0x2b0] sm:$0xff]
        %v869 = vld [vmem:[%s549 + $0x2b8] sm:$0xff]
        %v870 = vld [vmem:[%s549 + $0x2c0] sm:$0xff]
        %v871 = vld [vmem:[%s549 + $0x2c8] sm:$0xff]
        %v872 = vld [vmem:[%s549 + $0x2d0] sm:$0xff]
        %v873 = vld [vmem:[%s549 + $0x2d8] sm:$0xff]
        %v874 = vld [vmem:[%s549 + $0x2e0] sm:$0xff]
        %v875 = vld [vmem:[%s549 + $0x2e8] sm:$0xff]
        %v876 = vld [vmem:[%s549 + $0x2f0] sm:$0xff]
        %v877 = vld [vmem:[%s549 + $0x2f8] sm:$0xff]
        %v878 = vld [vmem:[%s549 + $0x300] sm:$0xff]
        %v879 = vld [vmem:[%s549 + $0x308] sm:$0xff]
        %v880 = vld [vmem:[%s549 + $0x310] sm:$0xff]
        %v881 = vld [vmem:[%s549 + $0x318] sm:$0xff]
        %v882 = vld [vmem:[%s549 + $0x320] sm:$0xff]
        %v883 = vld [vmem:[%s549 + $0x328] sm:$0xff]
        %v884 = vld [vmem:[%s549 + $0x330] sm:$0xff]
        %v885 = vld [vmem:[%s549 + $0x338] sm:$0xff]
        %v886 = vld [vmem:[%s549 + $0x340] sm:$0xff]
        %v887 = vld [vmem:[%s549 + $0x348] sm:$0xff]
        %v888 = vld [vmem:[%s549 + $0x350] sm:$0xff]
        %v889 = vld [vmem:[%s549 + $0x358] sm:$0xff]
        %v890 = vld [vmem:[%s549 + $0x360] sm:$0xff]
        %v891 = vld [vmem:[%s549 + $0x368] sm:$0xff]
        %v892 = vld [vmem:[%s549 + $0x370] sm:$0xff]
        %v893 = vld [vmem:[%s549 + $0x378] sm:$0xff]
        %v894 = vld [vmem:[%s549 + $0x380] sm:$0xff]
        %v895 = vld [vmem:[%s549 + $0x388] sm:$0xff]
        %v896 = vld [vmem:[%s549 + $0x390] sm:$0xff]
        %v897 = vld [vmem:[%s549 + $0x398] sm:$0xff]
        %v898 = vld [vmem:[%s549 + $0x3a0] sm:$0xff]
        %v899 = vld [vmem:[%s549 + $0x3a8] sm:$0xff]
        %v900 = vld [vmem:[%s549 + $0x3b0] sm:$0xff]
        %v901 = vld [vmem:[%s549 + $0x3b8] sm:$0xff]
        %v902 = vld [vmem:[%s549 + $0x3c0] sm:$0xff]
        %v903 = vld [vmem:[%s549 + $0x3c8] sm:$0xff]
        %v904 = vld [vmem:[%s549 + $0x3d0] sm:$0xff]
        %v905 = vld [vmem:[%s549 + $0x3d8] sm:$0xff]
        %v906 = vld [vmem:[%s549 + $0x3e0] sm:$0xff]
        %v907 = vld [vmem:[%s549 + $0x3e8] sm:$0xff]
        %v908 = vld [vmem:[%s549 + $0x3f0] sm:$0xff]
        %v909 = vld [vmem:[%s549 + $0x3f8] sm:$0xff]
        %v1038 = vunpack.c.l.b16 %v782
        %v1039 = vunpack.c.h.b16 %v782
        %v1040 = vunpack.c.l.b16 %v783
        %v1041 = vunpack.c.h.b16 %v783
        %v1042 = vunpack.c.l.b16 %v784
        %v1043 = vunpack.c.h.b16 %v784
        %v1044 = vunpack.c.l.b16 %v785
        %v1045 = vunpack.c.h.b16 %v785
        %v1046 = vunpack.c.l.b16 %v786
        %v1047 = vunpack.c.h.b16 %v786
        %v1048 = vunpack.c.l.b16 %v787
        %v1049 = vunpack.c.h.b16 %v787
        %v1050 = vunpack.c.l.b16 %v788
        %v1051 = vunpack.c.h.b16 %v788
        %v1052 = vunpack.c.l.b16 %v789
        %v1053 = vunpack.c.h.b16 %v789
        %v1054 = vunpack.c.l.b16 %v790
        %v1055 = vunpack.c.h.b16 %v790
        %v1056 = vunpack.c.l.b16 %v791
        %v1057 = vunpack.c.h.b16 %v791
        %v1058 = vunpack.c.l.b16 %v792
        %v1059 = vunpack.c.h.b16 %v792
        %v1060 = vunpack.c.l.b16 %v793
        %v1061 = vunpack.c.h.b16 %v793
        %v1062 = vunpack.c.l.b16 %v794
        %v1063 = vunpack.c.h.b16 %v794
        %v1064 = vunpack.c.l.b16 %v795
        %v1065 = vunpack.c.h.b16 %v795
        %v1066 = vunpack.c.l.b16 %v796
        %v1067 = vunpack.c.h.b16 %v796
        %v1068 = vunpack.c.l.b16 %v797
        %v1069 = vunpack.c.h.b16 %v797
        %v1070 = vunpack.c.l.b16 %v798
        %v1071 = vunpack.c.h.b16 %v798
        %v1072 = vunpack.c.l.b16 %v799
        %v1073 = vunpack.c.h.b16 %v799
        %v1074 = vunpack.c.l.b16 %v800
        %v1075 = vunpack.c.h.b16 %v800
        %v1076 = vunpack.c.l.b16 %v801
        %v1077 = vunpack.c.h.b16 %v801
        %v1078 = vunpack.c.l.b16 %v802
        %v1079 = vunpack.c.h.b16 %v802
        %v1080 = vunpack.c.l.b16 %v803
        %v1081 = vunpack.c.h.b16 %v803
        %v1082 = vunpack.c.l.b16 %v804
        %v1083 = vunpack.c.h.b16 %v804
        %v1084 = vunpack.c.l.b16 %v805
        %v1085 = vunpack.c.h.b16 %v805
        %v1086 = vunpack.c.l.b16 %v806
        %v1087 = vunpack.c.h.b16 %v806
        %v1088 = vunpack.c.l.b16 %v807
        %v1089 = vunpack.c.h.b16 %v807
        %v1090 = vunpack.c.l.b16 %v808
        %v1091 = vunpack.c.h.b16 %v808
        %v1092 = vunpack.c.l.b16 %v809
        %v1093 = vunpack.c.h.b16 %v809
        %v1094 = vunpack.c.l.b16 %v810
        %v1095 = vunpack.c.h.b16 %v810
        %v1096 = vunpack.c.l.b16 %v811
        %v1097 = vunpack.c.h.b16 %v811
        %v1098 = vunpack.c.l.b16 %v812
        %v1099 = vunpack.c.h.b16 %v812
        %v1100 = vunpack.c.l.b16 %v813
        %v1101 = vunpack.c.h.b16 %v813
        %v1102 = vunpack.c.l.b16 %v814
        %v1103 = vunpack.c.h.b16 %v814
        %v1104 = vunpack.c.l.b16 %v815
        %v1105 = vunpack.c.h.b16 %v815
        %v1106 = vunpack.c.l.b16 %v816
        %v1107 = vunpack.c.h.b16 %v816
        %v1108 = vunpack.c.l.b16 %v817
        %v1109 = vunpack.c.h.b16 %v817
        %v1110 = vunpack.c.l.b16 %v818
        %v1111 = vunpack.c.h.b16 %v818
        %v1112 = vunpack.c.l.b16 %v819
        %v1113 = vunpack.c.h.b16 %v819
        %v1114 = vunpack.c.l.b16 %v820
        %v1115 = vunpack.c.h.b16 %v820
        %v1116 = vunpack.c.l.b16 %v821
        %v1117 = vunpack.c.h.b16 %v821
        %v1118 = vunpack.c.l.b16 %v822
        %v1119 = vunpack.c.h.b16 %v822
        %v1120 = vunpack.c.l.b16 %v823
        %v1121 = vunpack.c.h.b16 %v823
        %v1122 = vunpack.c.l.b16 %v824
        %v1123 = vunpack.c.h.b16 %v824
        %v1124 = vunpack.c.l.b16 %v825
        %v1125 = vunpack.c.h.b16 %v825
        %v1126 = vunpack.c.l.b16 %v826
        %v1127 = vunpack.c.h.b16 %v826
        %v1128 = vunpack.c.l.b16 %v827
        %v1129 = vunpack.c.h.b16 %v827
        %v1130 = vunpack.c.l.b16 %v828
        %v1131 = vunpack.c.h.b16 %v828
        %v1132 = vunpack.c.l.b16 %v829
        %v1133 = vunpack.c.h.b16 %v829
        %v1134 = vunpack.c.l.b16 %v830
        %v1135 = vunpack.c.h.b16 %v830
        %v1136 = vunpack.c.l.b16 %v831
        %v1137 = vunpack.c.h.b16 %v831
        %v1138 = vunpack.c.l.b16 %v832
        %v1139 = vunpack.c.h.b16 %v832
        %v1140 = vunpack.c.l.b16 %v833
        %v1141 = vunpack.c.h.b16 %v833
        %v1142 = vunpack.c.l.b16 %v834
        %v1143 = vunpack.c.h.b16 %v834
        %v1144 = vunpack.c.l.b16 %v835
        %v1145 = vunpack.c.h.b16 %v835
        %v1146 = vunpack.c.l.b16 %v836
        %v1147 = vunpack.c.h.b16 %v836
        %v1148 = vunpack.c.l.b16 %v837
        %v1149 = vunpack.c.h.b16 %v837
        %v1150 = vunpack.c.l.b16 %v838
        %v1151 = vunpack.c.h.b16 %v838
        %v1152 = vunpack.c.l.b16 %v839
        %v1153 = vunpack.c.h.b16 %v839
        %v1154 = vunpack.c.l.b16 %v840
        %v1155 = vunpack.c.h.b16 %v840
        %v1156 = vunpack.c.l.b16 %v841
        %v1157 = vunpack.c.h.b16 %v841
        %v1158 = vunpack.c.l.b16 %v842
        %v1159 = vunpack.c.h.b16 %v842
        %v1160 = vunpack.c.l.b16 %v843
        %v1161 = vunpack.c.h.b16 %v843
        %v1162 = vunpack.c.l.b16 %v844
        %v1163 = vunpack.c.h.b16 %v844
        %v1164 = vunpack.c.l.b16 %v845
        %v1165 = vunpack.c.h.b16 %v845
        %v1166 = vunpack.c.l.b16 %v846
        %v1167 = vunpack.c.h.b16 %v846
        %v1168 = vunpack.c.l.b16 %v847
        %v1169 = vunpack.c.h.b16 %v847
        %v1170 = vunpack.c.l.b16 %v848
        %v1171 = vunpack.c.h.b16 %v848
        %v1172 = vunpack.c.l.b16 %v849
        %v1173 = vunpack.c.h.b16 %v849
        %v1174 = vunpack.c.l.b16 %v850
        %v1175 = vunpack.c.h.b16 %v850
        %v1176 = vunpack.c.l.b16 %v851
        %v1177 = vunpack.c.h.b16 %v851
        %v1178 = vunpack.c.l.b16 %v852
        %v1179 = vunpack.c.h.b16 %v852
        %v1180 = vunpack.c.l.b16 %v853
        %v1181 = vunpack.c.h.b16 %v853
        %v1182 = vunpack.c.l.b16 %v854
        %v1183 = vunpack.c.h.b16 %v854
        %v1184 = vunpack.c.l.b16 %v855
        %v1185 = vunpack.c.h.b16 %v855
        %v1186 = vunpack.c.l.b16 %v856
        %v1187 = vunpack.c.h.b16 %v856
        %v1188 = vunpack.c.l.b16 %v857
        %v1189 = vunpack.c.h.b16 %v857
        %v1190 = vunpack.c.l.b16 %v858
        %v1191 = vunpack.c.h.b16 %v858
        %v1192 = vunpack.c.l.b16 %v859
        %v1193 = vunpack.c.h.b16 %v859
        %v1194 = vunpack.c.l.b16 %v860
        %v1195 = vunpack.c.h.b16 %v860
        %v1196 = vunpack.c.l.b16 %v861
        %v1197 = vunpack.c.h.b16 %v861
        %v1198 = vunpack.c.l.b16 %v862
        %v1199 = vunpack.c.h.b16 %v862
        %v1200 = vunpack.c.l.b16 %v863
        %v1201 = vunpack.c.h.b16 %v863
        %v1202 = vunpack.c.l.b16 %v864
        %v1203 = vunpack.c.h.b16 %v864
        %v1204 = vunpack.c.l.b16 %v865
        %v1205 = vunpack.c.h.b16 %v865
        %v1206 = vunpack.c.l.b16 %v866
        %v1207 = vunpack.c.h.b16 %v866
        %v1208 = vunpack.c.l.b16 %v867
        %v1209 = vunpack.c.h.b16 %v867
        %v1210 = vunpack.c.l.b16 %v868
        %v1211 = vunpack.c.h.b16 %v868
        %v1212 = vunpack.c.l.b16 %v869
        %v1213 = vunpack.c.h.b16 %v869
        %v1214 = vunpack.c.l.b16 %v870
        %v1215 = vunpack.c.h.b16 %v870
        %v1216 = vunpack.c.l.b16 %v871
        %v1217 = vunpack.c.h.b16 %v871
        %v1218 = vunpack.c.l.b16 %v872
        %v1219 = vunpack.c.h.b16 %v872
        %v1220 = vunpack.c.l.b16 %v873
        %v1221 = vunpack.c.h.b16 %v873
        %v1222 = vunpack.c.l.b16 %v874
        %v1223 = vunpack.c.h.b16 %v874
        %v1224 = vunpack.c.l.b16 %v875
        %v1225 = vunpack.c.h.b16 %v875
        %v1226 = vunpack.c.l.b16 %v876
        %v1227 = vunpack.c.h.b16 %v876
        %v1228 = vunpack.c.l.b16 %v877
        %v1229 = vunpack.c.h.b16 %v877
        %v1230 = vunpack.c.l.b16 %v878
        %v1231 = vunpack.c.h.b16 %v878
        %v1232 = vunpack.c.l.b16 %v879
        %v1233 = vunpack.c.h.b16 %v879
        %v1234 = vunpack.c.l.b16 %v880
        %v1235 = vunpack.c.h.b16 %v880
        %v1236 = vunpack.c.l.b16 %v881
        %v1237 = vunpack.c.h.b16 %v881
        %v1238 = vunpack.c.l.b16 %v882
        %v1239 = vunpack.c.h.b16 %v882
        %v1240 = vunpack.c.l.b16 %v883
        %v1241 = vunpack.c.h.b16 %v883
        %v1242 = vunpack.c.l.b16 %v884
        %v1243 = vunpack.c.h.b16 %v884
        %v1244 = vunpack.c.l.b16 %v885
        %v1245 = vunpack.c.h.b16 %v885
        %v1246 = vunpack.c.l.b16 %v886
        %v1247 = vunpack.c.h.b16 %v886
        %v1248 = vunpack.c.l.b16 %v887
        %v1249 = vunpack.c.h.b16 %v887
        %v1250 = vunpack.c.l.b16 %v888
        %v1251 = vunpack.c.h.b16 %v888
        %v1252 = vunpack.c.l.b16 %v889
        %v1253 = vunpack.c.h.b16 %v889
        %v1254 = vunpack.c.l.b16 %v890
        %v1255 = vunpack.c.h.b16 %v890
        %v1256 = vunpack.c.l.b16 %v891
        %v1257 = vunpack.c.h.b16 %v891
        %v1258 = vunpack.c.l.b16 %v892
        %v1259 = vunpack.c.h.b16 %v892
        %v1260 = vunpack.c.l.b16 %v893
        %v1261 = vunpack.c.h.b16 %v893
        %v1262 = vunpack.c.l.b16 %v894
        %v1263 = vunpack.c.h.b16 %v894
        %v1264 = vunpack.c.l.b16 %v895
        %v1265 = vunpack.c.h.b16 %v895
        %v1266 = vunpack.c.l.b16 %v896
        %v1267 = vunpack.c.h.b16 %v896
        %v1268 = vunpack.c.l.b16 %v897
        %v1269 = vunpack.c.h.b16 %v897
        %v1270 = vunpack.c.l.b16 %v898
        %v1271 = vunpack.c.h.b16 %v898
        %v1272 = vunpack.c.l.b16 %v899
        %v1273 = vunpack.c.h.b16 %v899
        %v1274 = vunpack.c.l.b16 %v900
        %v1275 = vunpack.c.h.b16 %v900
        %v1276 = vunpack.c.l.b16 %v901
        %v1277 = vunpack.c.h.b16 %v901
        %v1278 = vunpack.c.l.b16 %v902
        %v1279 = vunpack.c.h.b16 %v902
        %v1280 = vunpack.c.l.b16 %v903
        %v1281 = vunpack.c.h.b16 %v903
        %v1282 = vunpack.c.l.b16 %v904
        %v1283 = vunpack.c.h.b16 %v904
        %v1284 = vunpack.c.l.b16 %v905
        %v1285 = vunpack.c.h.b16 %v905
        %v1286 = vunpack.c.l.b16 %v906
        %v1287 = vunpack.c.h.b16 %v906
        %v1288 = vunpack.c.l.b16 %v907
        %v1289 = vunpack.c.h.b16 %v907
        %v1290 = vunpack.c.l.b16 %v908
        %v1291 = vunpack.c.h.b16 %v908
        %v1292 = vunpack.c.l.b16 %v909
        %v1293 = vunpack.c.h.b16 %v909
        %v1294 = vpack.c.b16 %v1046, %v1038
        %v1295 = vpack.c.b16 %v1047, %v1039
        %v1296 = vpack.c.b16 %v1048, %v1040
        %v1297 = vpack.c.b16 %v1049, %v1041
        %v1298 = vpack.c.b16 %v1050, %v1042
        %v1299 = vpack.c.b16 %v1051, %v1043
        %v1300 = vpack.c.b16 %v1052, %v1044
        %v1301 = vpack.c.b16 %v1053, %v1045
        %v1302 = vpack.c.b16 %v1062, %v1054
        %v1303 = vpack.c.b16 %v1063, %v1055
        %v1304 = vpack.c.b16 %v1064, %v1056
        %v1305 = vpack.c.b16 %v1065, %v1057
        %v1306 = vpack.c.b16 %v1066, %v1058
        %v1307 = vpack.c.b16 %v1067, %v1059
        %v1308 = vpack.c.b16 %v1068, %v1060
        %v1309 = vpack.c.b16 %v1069, %v1061
        %v1310 = vpack.c.b16 %v1078, %v1070
        %v1311 = vpack.c.b16 %v1079, %v1071
        %v1312 = vpack.c.b16 %v1080, %v1072
        %v1313 = vpack.c.b16 %v1081, %v1073
        %v1314 = vpack.c.b16 %v1082, %v1074
        %v1315 = vpack.c.b16 %v1083, %v1075
        %v1316 = vpack.c.b16 %v1084, %v1076
        %v1317 = vpack.c.b16 %v1085, %v1077
        %v1318 = vpack.c.b16 %v1094, %v1086
        %v1319 = vpack.c.b16 %v1095, %v1087
        %v1320 = vpack.c.b16 %v1096, %v1088
        %v1321 = vpack.c.b16 %v1097, %v1089
        %v1322 = vpack.c.b16 %v1098, %v1090
        %v1323 = vpack.c.b16 %v1099, %v1091
        %v1324 = vpack.c.b16 %v1100, %v1092
        %v1325 = vpack.c.b16 %v1101, %v1093
        %v1326 = vpack.c.b16 %v1110, %v1102
        %v1327 = vpack.c.b16 %v1111, %v1103
        %v1328 = vpack.c.b16 %v1112, %v1104
        %v1329 = vpack.c.b16 %v1113, %v1105
        %v1330 = vpack.c.b16 %v1114, %v1106
        %v1331 = vpack.c.b16 %v1115, %v1107
        %v1332 = vpack.c.b16 %v1116, %v1108
        %v1333 = vpack.c.b16 %v1117, %v1109
        %v1334 = vpack.c.b16 %v1126, %v1118
        %v1335 = vpack.c.b16 %v1127, %v1119
        %v1336 = vpack.c.b16 %v1128, %v1120
        %v1337 = vpack.c.b16 %v1129, %v1121
        %v1338 = vpack.c.b16 %v1130, %v1122
        %v1339 = vpack.c.b16 %v1131, %v1123
        %v1340 = vpack.c.b16 %v1132, %v1124
        %v1341 = vpack.c.b16 %v1133, %v1125
        %v1342 = vpack.c.b16 %v1142, %v1134
        %v1343 = vpack.c.b16 %v1143, %v1135
        %v1344 = vpack.c.b16 %v1144, %v1136
        %v1345 = vpack.c.b16 %v1145, %v1137
        %v1346 = vpack.c.b16 %v1146, %v1138
        %v1347 = vpack.c.b16 %v1147, %v1139
        %v1348 = vpack.c.b16 %v1148, %v1140
        %v1349 = vpack.c.b16 %v1149, %v1141
        %v1350 = vpack.c.b16 %v1158, %v1150
        %v1351 = vpack.c.b16 %v1159, %v1151
        %v1352 = vpack.c.b16 %v1160, %v1152
        %v1353 = vpack.c.b16 %v1161, %v1153
        %v1354 = vpack.c.b16 %v1162, %v1154
        %v1355 = vpack.c.b16 %v1163, %v1155
        %v1356 = vpack.c.b16 %v1164, %v1156
        %v1357 = vpack.c.b16 %v1165, %v1157
        %v1358 = vpack.c.b16 %v1174, %v1166
        %v1359 = vpack.c.b16 %v1175, %v1167
        %v1360 = vpack.c.b16 %v1176, %v1168
        %v1361 = vpack.c.b16 %v1177, %v1169
        %v1362 = vpack.c.b16 %v1178, %v1170
        %v1363 = vpack.c.b16 %v1179, %v1171
        %v1364 = vpack.c.b16 %v1180, %v1172
        %v1365 = vpack.c.b16 %v1181, %v1173
        %v1366 = vpack.c.b16 %v1190, %v1182
        %v1367 = vpack.c.b16 %v1191, %v1183
        %v1368 = vpack.c.b16 %v1192, %v1184
        %v1369 = vpack.c.b16 %v1193, %v1185
        %v1370 = vpack.c.b16 %v1194, %v1186
        %v1371 = vpack.c.b16 %v1195, %v1187
        %v1372 = vpack.c.b16 %v1196, %v1188
        %v1373 = vpack.c.b16 %v1197, %v1189
        %v1374 = vpack.c.b16 %v1206, %v1198
        %v1375 = vpack.c.b16 %v1207, %v1199
        %v1376 = vpack.c.b16 %v1208, %v1200
        %v1377 = vpack.c.b16 %v1209, %v1201
        %v1378 = vpack.c.b16 %v1210, %v1202
        %v1379 = vpack.c.b16 %v1211, %v1203
        %v1380 = vpack.c.b16 %v1212, %v1204
        %v1381 = vpack.c.b16 %v1213, %v1205
        %v1382 = vpack.c.b16 %v1222, %v1214
        %v1383 = vpack.c.b16 %v1223, %v1215
        %v1384 = vpack.c.b16 %v1224, %v1216
        %v1385 = vpack.c.b16 %v1225, %v1217
        %v1386 = vpack.c.b16 %v1226, %v1218
        %v1387 = vpack.c.b16 %v1227, %v1219
        %v1388 = vpack.c.b16 %v1228, %v1220
        %v1389 = vpack.c.b16 %v1229, %v1221
        %v1390 = vpack.c.b16 %v1238, %v1230
        %v1391 = vpack.c.b16 %v1239, %v1231
        %v1392 = vpack.c.b16 %v1240, %v1232
        %v1393 = vpack.c.b16 %v1241, %v1233
        %v1394 = vpack.c.b16 %v1242, %v1234
        %v1395 = vpack.c.b16 %v1243, %v1235
        %v1396 = vpack.c.b16 %v1244, %v1236
        %v1397 = vpack.c.b16 %v1245, %v1237
        %v1398 = vpack.c.b16 %v1254, %v1246
        %v1399 = vpack.c.b16 %v1255, %v1247
        %v1400 = vpack.c.b16 %v1256, %v1248
        %v1401 = vpack.c.b16 %v1257, %v1249
        %v1402 = vpack.c.b16 %v1258, %v1250
        %v1403 = vpack.c.b16 %v1259, %v1251
        %v1404 = vpack.c.b16 %v1260, %v1252
        %v1405 = vpack.c.b16 %v1261, %v1253
        %v1406 = vpack.c.b16 %v1270, %v1262
        %v1407 = vpack.c.b16 %v1271, %v1263
        %v1408 = vpack.c.b16 %v1272, %v1264
        %v1409 = vpack.c.b16 %v1273, %v1265
        %v1410 = vpack.c.b16 %v1274, %v1266
        %v1411 = vpack.c.b16 %v1275, %v1267
        %v1412 = vpack.c.b16 %v1276, %v1268
        %v1413 = vpack.c.b16 %v1277, %v1269
        %v1414 = vpack.c.b16 %v1286, %v1278
        %v1415 = vpack.c.b16 %v1287, %v1279
        %v1416 = vpack.c.b16 %v1288, %v1280
        %v1417 = vpack.c.b16 %v1289, %v1281
        %v1418 = vpack.c.b16 %v1290, %v1282
        %v1419 = vpack.c.b16 %v1291, %v1283
        %v1420 = vpack.c.b16 %v1292, %v1284
        %v1421 = vpack.c.b16 %v1293, %v1285
        %1550 = vmatprep.subr.bf16.mxu0 %v1295
        %1551 = vmatpush1.bf16.msra.mxu0 %v1294
        %1552 = vmatprep.subr.bf16.mxu0 %v1303
        %1553 = vmatpush1.bf16.msra.mxu0 %v1302
        %1554 = vmatprep.subr.bf16.mxu0 %v1311
        %1555 = vmatpush1.bf16.msra.mxu0 %v1310
        %1556 = vmatprep.subr.bf16.mxu0 %v1319
        %1557 = vmatpush1.bf16.msra.mxu0 %v1318
        %1558 = vmatprep.subr.bf16.mxu0 %v1327
        %1559 = vmatpush1.bf16.msra.mxu0 %v1326
        %1560 = vmatprep.subr.bf16.mxu0 %v1335
        %1561 = vmatpush1.bf16.msra.mxu0 %v1334
        %1562 = vmatprep.subr.bf16.mxu0 %v1343
        %1563 = vmatpush1.bf16.msra.mxu0 %v1342
        %1564 = vmatprep.subr.bf16.mxu0 %v1351
        %1565 = vmatpush1.bf16.msra.mxu0 %v1350
        %1566 = vmatprep.subr.bf16.mxu0 %v1359
        %1567 = vmatpush1.bf16.msra.mxu0 %v1358
        %1568 = vmatprep.subr.bf16.mxu0 %v1367
        %1569 = vmatpush1.bf16.msra.mxu0 %v1366
        %1570 = vmatprep.subr.bf16.mxu0 %v1375
        %1571 = vmatpush1.bf16.msra.mxu0 %v1374
        %1572 = vmatprep.subr.bf16.mxu0 %v1383
        %1573 = vmatpush1.bf16.msra.mxu0 %v1382
        %1574 = vmatprep.subr.bf16.mxu0 %v1391
        %1575 = vmatpush1.bf16.msra.mxu0 %v1390
        %1576 = vmatprep.subr.bf16.mxu0 %v1399
        %1577 = vmatpush1.bf16.msra.mxu0 %v1398
        %1578 = vmatprep.subr.bf16.mxu0 %v1407
        %1579 = vmatpush1.bf16.msra.mxu0 %v1406
        %1580 = vmatprep.subr.bf16.mxu0 %v1415
        %1581 = vmatpush1.bf16.msra.mxu0 %v1414
        %1582 = vmatprep.mubr.bf16.mxu0 %v781
        %1583 = vmatmul.mubr.bf16.gmra.mrb[0].mxu0 %v780
        %v1584 = vpop.f32.mrb[0].mxu0
        %v1585 = vadd.f32 0.0, %v1584
        %v1586 = vpop.f32.mrb[0].mxu0
        %v1587 = vadd.f32 0.0, %v1586
        %v1588 = vpop.f32.mrb[0].mxu0
        %v1589 = vadd.f32 0.0, %v1588
        %v1590 = vpop.f32.mrb[0].mxu0
        %v1591 = vadd.f32 0.0, %v1590
        %1592 = vdwg.mxu0
        %1593 = vmatprep.subr.bf16.mxu0 %v1297
        %1594 = vmatpush1.bf16.msra.mxu0 %v1296
        %1595 = vmatprep.subr.bf16.mxu0 %v1305
        %1596 = vmatpush1.bf16.msra.mxu0 %v1304
        %1597 = vmatprep.subr.bf16.mxu0 %v1313
        %1598 = vmatpush1.bf16.msra.mxu0 %v1312
        %1599 = vmatprep.subr.bf16.mxu0 %v1321
        %1600 = vmatpush1.bf16.msra.mxu0 %v1320
        %1601 = vmatprep.subr.bf16.mxu0 %v1329
        %1602 = vmatpush1.bf16.msra.mxu0 %v1328
        %1603 = vmatprep.subr.bf16.mxu0 %v1337
        %1604 = vmatpush1.bf16.msra.mxu0 %v1336
        %1605 = vmatprep.subr.bf16.mxu0 %v1345
        %1606 = vmatpush1.bf16.msra.mxu0 %v1344
        %1607 = vmatprep.subr.bf16.mxu0 %v1353
        %1608 = vmatpush1.bf16.msra.mxu0 %v1352
        %1609 = vmatprep.subr.bf16.mxu0 %v1361
        %1610 = vmatpush1.bf16.msra.mxu0 %v1360
        %1611 = vmatprep.subr.bf16.mxu0 %v1369
        %1612 = vmatpush1.bf16.msra.mxu0 %v1368
        %1613 = vmatprep.subr.bf16.mxu0 %v1377
        %1614 = vmatpush1.bf16.msra.mxu0 %v1376
        %1615 = vmatprep.subr.bf16.mxu0 %v1385
        %1616 = vmatpush1.bf16.msra.mxu0 %v1384
        %1617 = vmatprep.subr.bf16.mxu0 %v1393
        %1618 = vmatpush1.bf16.msra.mxu0 %v1392
        %1619 = vmatprep.subr.bf16.mxu0 %v1401
        %1620 = vmatpush1.bf16.msra.mxu0 %v1400
        %1621 = vmatprep.subr.bf16.mxu0 %v1409
        %1622 = vmatpush1.bf16.msra.mxu0 %v1408
        %1623 = vmatprep.subr.bf16.mxu0 %v1417
        %1624 = vmatpush1.bf16.msra.mxu0 %v1416
        %1625 = vmatprep.mubr.bf16.mxu0 %v781
        %1626 = vmatmul.mubr.bf16.gmra.mrb[0].mxu0 %v780
        %v1627 = vpop.f32.mrb[0].mxu0
        %v1628 = vadd.f32 0.0, %v1627
        %v1629 = vpop.f32.mrb[0].mxu0
        %v1630 = vadd.f32 0.0, %v1629
        %v1631 = vpop.f32.mrb[0].mxu0
        %v1632 = vadd.f32 0.0, %v1631
        %v1633 = vpop.f32.mrb[0].mxu0
        %v1634 = vadd.f32 0.0, %v1633
        %1635 = vdwg.mxu0
        %1636 = vmatprep.subr.bf16.mxu0 %v1299
        %1637 = vmatpush1.bf16.msra.mxu0 %v1298
        %1638 = vmatprep.subr.bf16.mxu0 %v1307
        %1639 = vmatpush1.bf16.msra.mxu0 %v1306
        %1640 = vmatprep.subr.bf16.mxu0 %v1315
        %1641 = vmatpush1.bf16.msra.mxu0 %v1314
        %1642 = vmatprep.subr.bf16.mxu0 %v1323
        %1643 = vmatpush1.bf16.msra.mxu0 %v1322
        %1644 = vmatprep.subr.bf16.mxu0 %v1331
        %1645 = vmatpush1.bf16.msra.mxu0 %v1330
        %1646 = vmatprep.subr.bf16.mxu0 %v1339
        %1647 = vmatpush1.bf16.msra.mxu0 %v1338
        %1648 = vmatprep.subr.bf16.mxu0 %v1347
        %1649 = vmatpush1.bf16.msra.mxu0 %v1346
        %1650 = vmatprep.subr.bf16.mxu0 %v1355
        %1651 = vmatpush1.bf16.msra.mxu0 %v1354
        %1652 = vmatprep.subr.bf16.mxu0 %v1363
        %1653 = vmatpush1.bf16.msra.mxu0 %v1362
        %1654 = vmatprep.subr.bf16.mxu0 %v1371
        %1655 = vmatpush1.bf16.msra.mxu0 %v1370
        %1656 = vmatprep.subr.bf16.mxu0 %v1379
        %1657 = vmatpush1.bf16.msra.mxu0 %v1378
        %1658 = vmatprep.subr.bf16.mxu0 %v1387
        %1659 = vmatpush1.bf16.msra.mxu0 %v1386
        %1660 = vmatprep.subr.bf16.mxu0 %v1395
        %1661 = vmatpush1.bf16.msra.mxu0 %v1394
        %1662 = vmatprep.subr.bf16.mxu0 %v1403
        %1663 = vmatpush1.bf16.msra.mxu0 %v1402
        %1664 = vmatprep.subr.bf16.mxu0 %v1411
        %1665 = vmatpush1.bf16.msra.mxu0 %v1410
        %1666 = vmatprep.subr.bf16.mxu0 %v1419
        %1667 = vmatpush1.bf16.msra.mxu0 %v1418
        %1668 = vmatprep.mubr.bf16.mxu0 %v781
        %1669 = vmatmul.mubr.bf16.gmra.mrb[0].mxu0 %v780
        %v1670 = vpop.f32.mrb[0].mxu0
        %v1671 = vadd.f32 0.0, %v1670
        %v1672 = vpop.f32.mrb[0].mxu0
        %v1673 = vadd.f32 0.0, %v1672
        %v1674 = vpop.f32.mrb[0].mxu0
        %v1675 = vadd.f32 0.0, %v1674
        %v1676 = vpop.f32.mrb[0].mxu0
        %v1677 = vadd.f32 0.0, %v1676
        %1678 = vdwg.mxu0
        %1679 = vmatprep.subr.bf16.mxu0 %v1301
        %1680 = vmatpush1.bf16.msra.mxu0 %v1300
        %1681 = vmatprep.subr.bf16.mxu0 %v1309
        %1682 = vmatpush1.bf16.msra.mxu0 %v1308
        %1683 = vmatprep.subr.bf16.mxu0 %v1317
        %1684 = vmatpush1.bf16.msra.mxu0 %v1316
        %1685 = vmatprep.subr.bf16.mxu0 %v1325
        %1686 = vmatpush1.bf16.msra.mxu0 %v1324
        %1687 = vmatprep.subr.bf16.mxu0 %v1333
        %1688 = vmatpush1.bf16.msra.mxu0 %v1332
        %1689 = vmatprep.subr.bf16.mxu0 %v1341
        %1690 = vmatpush1.bf16.msra.mxu0 %v1340
        %1691 = vmatprep.subr.bf16.mxu0 %v1349
        %1692 = vmatpush1.bf16.msra.mxu0 %v1348
        %1693 = vmatprep.subr.bf16.mxu0 %v1357
        %1694 = vmatpush1.bf16.msra.mxu0 %v1356
        %1695 = vmatprep.subr.bf16.mxu0 %v1365
        %1696 = vmatpush1.bf16.msra.mxu0 %v1364
        %1697 = vmatprep.subr.bf16.mxu0 %v1373
        %1698 = vmatpush1.bf16.msra.mxu0 %v1372
        %1699 = vmatprep.subr.bf16.mxu0 %v1381
        %1700 = vmatpush1.bf16.msra.mxu0 %v1380
        %1701 = vmatprep.subr.bf16.mxu0 %v1389
        %1702 = vmatpush1.bf16.msra.mxu0 %v1388
        %1703 = vmatprep.subr.bf16.mxu0 %v1397
        %1704 = vmatpush1.bf16.msra.mxu0 %v1396
        %1705 = vmatprep.subr.bf16.mxu0 %v1405
        %1706 = vmatpush1.bf16.msra.mxu0 %v1404
        %1707 = vmatprep.subr.bf16.mxu0 %v1413
        %1708 = vmatpush1.bf16.msra.mxu0 %v1412
        %1709 = vmatprep.subr.bf16.mxu0 %v1421
        %1710 = vmatpush1.bf16.msra.mxu0 %v1420
        %1711 = vmatprep.mubr.bf16.mxu0 %v781
        %1712 = vmatmul.mubr.bf16.gmra.mrb[0].mxu0 %v780
        %v1713 = vpop.f32.mrb[0].mxu0
        %v1714 = vadd.f32 0.0, %v1713
        %v1715 = vpop.f32.mrb[0].mxu0
        %v1716 = vadd.f32 0.0, %v1715
        %v1717 = vpop.f32.mrb[0].mxu0
        %v1718 = vadd.f32 0.0, %v1717
        %v1719 = vpop.f32.mrb[0].mxu0
        %v1720 = vadd.f32 0.0, %v1719
        %1721 = vdwg.mxu0
        %v1722 = vld [vmem:[#allocation15] sm:$0x3f]
        %v1724 = vlaneseq
        %v1725 = vshrl.u32 %v1724, 7
        %v1726 = vsub.s32 0, %v1725
        %v1727 = vrot.slane %v1722, %v1726
        %v1728 = vlaneseq
        %v1729 = vshrl.u32 %v1728, 7
        %v1730 = vsub.s32 1, %v1729
        %v1731 = vrot.slane %v1722, %v1730
        %v1732 = vlaneseq
        %v1733 = vshrl.u32 %v1732, 7
        %v1734 = vsub.s32 2, %v1733
        %v1735 = vrot.slane %v1722, %v1734
        %v1736 = vlaneseq
        %v1737 = vshrl.u32 %v1736, 7
        %v1738 = vsub.s32 3, %v1737
        %v1739 = vrot.slane %v1722, %v1738
        %v1740 = vlaneseq
        %v1741 = vshrl.u32 %v1740, 7
        %v1742 = vsub.s32 4, %v1741
        %v1743 = vrot.slane %v1722, %v1742
        %v1744 = vlaneseq
        %v1745 = vshrl.u32 %v1744, 7
        %v1746 = vsub.s32 5, %v1745
        %v1747 = vrot.slane %v1722, %v1746
        %v1754 = vadd.f32 %v1628, %v1727
        %v1755 = vadd.f32 %v1630, %v1731
        %v1756 = vadd.f32 %v1671, %v1735
        %v1757 = vadd.f32 %v1673, %v1739
        %v1758 = vadd.f32 %v1714, %v1743
        %v1759 = vadd.f32 %v1716, %v1747
        %v1760 = vadd.f32 %v1632, %v1727
        %v1761 = vadd.f32 %v1634, %v1731
        %v1762 = vadd.f32 %v1675, %v1735
        %v1763 = vadd.f32 %v1677, %v1739
        %v1764 = vadd.f32 %v1718, %v1743
        %v1765 = vadd.f32 %v1720, %v1747
        %v1766 = vld [vmem:[#allocation3] sm:$0xff]
        %v1767 = vld [vmem:[#allocation3 + $0x8] sm:$0xff]
        %vm1768 = vcmask 130048
        %v1770 = vsel %vm1768, %v1766, 0
        %v1773 = vsel %vm1768, %v1767, 0
        %1775 = vmatprep.subr.mxu0 %v1587
        %1776 = vmatpush1.msra.mxu0 %v1585
        %1777 = vmatprep.subr.mxu0 %v1591
        %1778 = vmatpush1.msra.mxu0 %v1589
        %1779 = vmatprep.subr.mxu0 0.0
        %1780 = vmatpush1.msra.mxu0 0.0
        %1781 = vmatprep.subr.mxu0 0.0
        %1782 = vmatpush1.msra.mxu0 0.0
        %1783 = vmatprep.subr.mxu0 0.0
        %1784 = vmatpush1.msra.mxu0 0.0
        %1785 = vmatprep.subr.mxu0 0.0
        %1786 = vmatpush1.msra.mxu0 0.0
        %1787 = vmatprep.subr.mxu0 0.0
        %1788 = vmatpush1.msra.mxu0 0.0
        %1789 = vmatprep.subr.mxu0 0.0
        %1790 = vmatpush1.msra.mxu0 0.0
        %1791 = vmatprep.subr.mxu0 0.0
        %1792 = vmatpush1.msra.mxu0 0.0
        %1793 = vmatprep.subr.mxu0 0.0
        %1794 = vmatpush1.msra.mxu0 0.0
        %1795 = vmatprep.subr.mxu0 0.0
        %1796 = vmatpush1.msra.mxu0 0.0
        %1797 = vmatprep.subr.mxu0 0.0
        %1798 = vmatpush1.msra.mxu0 0.0
        %1799 = vmatprep.subr.mxu0 0.0
        %1800 = vmatpush1.msra.mxu0 0.0
        %1801 = vmatprep.subr.mxu0 0.0
        %1802 = vmatpush1.msra.mxu0 0.0
        %1803 = vmatprep.subr.mxu0 0.0
        %1804 = vmatpush1.msra.mxu0 0.0
        %1805 = vmatprep.subr.mxu0 0.0
        %1806 = vmatpush1.msra.mxu0 0.0
        %1807 = vmatprep.subr.mxu0 0.0
        %1808 = vmatpush1.msra.mxu0 0.0
        %1809 = vmatprep.subr.mxu0 0.0
        %1810 = vmatpush1.msra.mxu0 0.0
        %1811 = vmatprep.subr.mxu0 0.0
        %1812 = vmatpush1.msra.mxu0 0.0
        %1813 = vmatprep.subr.mxu0 0.0
        %1814 = vmatpush1.msra.mxu0 0.0
        %1815 = vmatprep.subr.mxu0 0.0
        %1816 = vmatpush1.msra.mxu0 0.0
        %1817 = vmatprep.subr.mxu0 0.0
        %1818 = vmatpush1.msra.mxu0 0.0
        %1819 = vmatprep.subr.mxu0 0.0
        %1820 = vmatpush1.msra.mxu0 0.0
        %1821 = vmatprep.subr.mxu0 0.0
        %1822 = vmatpush1.msra.mxu0 0.0
        %1823 = vmatprep.subr.mxu0 0.0
        %1824 = vmatpush1.msra.mxu0 0.0
        %1825 = vmatprep.subr.mxu0 0.0
        %1826 = vmatpush1.msra.mxu0 0.0
        %1827 = vmatprep.subr.mxu0 0.0
        %1828 = vmatpush1.msra.mxu0 0.0
        %1829 = vmatprep.subr.mxu0 0.0
        %1830 = vmatpush1.msra.mxu0 0.0
        %1831 = vmatprep.subr.mxu0 0.0
        %1832 = vmatpush1.msra.mxu0 0.0
        %1833 = vmatprep.subr.mxu0 0.0
        %1834 = vmatpush1.msra.mxu0 0.0
        %1835 = vmatprep.subr.mxu0 0.0
        %1836 = vmatpush1.msra.mxu0 0.0
        %1837 = vmatprep.subr.mxu0 0.0
        %1838 = vmatpush1.msra.mxu0 0.0
        %1839 = vmatprep.mubr.f32.mxu0 0.0
        %1840 = vmatmul.mubr.f32.gmra.mrb[0].mxu0 %v1770
        %v1841 = vpop.f32.mrb[0].mxu0
        %v1842 = vadd.f32 0.0, %v1841
        %v1843 = vpop.f32.mrb[0].mxu0
        %v1844 = vadd.f32 0.0, %v1843
        %1845 = vmatprep.mubr.f32.mxu0 0.0
        %1846 = vmatmul.mubr.f32.gmra.mrb[0].mxu0 %v1773
        %v1847 = vpop.f32.mrb[0].mxu0
        %v1848 = vadd.f32 0.0, %v1847
        %v1849 = vpop.f32.mrb[0].mxu0
        %v1850 = vadd.f32 0.0, %v1849
        %1851 = vdwg.mxu0
        %v1852 = vpack.c.bf16 %v1848, %v1842
        %v1853 = vpack.c.bf16 %v1850, %v1844
        %v1854 = vld [vmem:[#allocation12] sm:$0xff]
        %v1855 = vld [vmem:[#allocation12 + $0x8] sm:$0xff]
        %v1856 = vld [vmem:[#allocation12 + $0x10] sm:$0xff]
        %v1857 = vld [vmem:[#allocation12 + $0x18] sm:$0xff]
        %v1858 = vld [vmem:[#allocation12 + $0x20] sm:$0xff]
        %v1859 = vld [vmem:[#allocation12 + $0x28] sm:$0xff]
        %v1860 = vld [vmem:[#allocation12 + $0x30] sm:$0xff]
        %v1861 = vld [vmem:[#allocation12 + $0x38] sm:$0xff]
        %v1862 = vld [vmem:[#allocation12 + $0x40] sm:$0xff]
        %v1863 = vld [vmem:[#allocation12 + $0x48] sm:$0xff]
        %v1864 = vld [vmem:[#allocation12 + $0x50] sm:$0xff]
        %v1865 = vld [vmem:[#allocation12 + $0x58] sm:$0xff]
        %v1866 = vld [vmem:[#allocation12 + $0x60] sm:$0xff]
        %v1867 = vld [vmem:[#allocation12 + $0x68] sm:$0xff]
        %v1868 = vld [vmem:[#allocation12 + $0x70] sm:$0xff]
        %v1869 = vld [vmem:[#allocation12 + $0x78] sm:$0xff]
        %v1870 = vld [vmem:[#allocation12 + $0x80] sm:$0xff]
        %v1871 = vld [vmem:[#allocation12 + $0x88] sm:$0xff]
        %v1872 = vld [vmem:[#allocation12 + $0x90] sm:$0xff]
        %v1873 = vld [vmem:[#allocation12 + $0x98] sm:$0xff]
        %v1874 = vld [vmem:[#allocation12 + $0xa0] sm:$0xff]
        %v1875 = vld [vmem:[#allocation12 + $0xa8] sm:$0xff]
        %v1876 = vld [vmem:[#allocation12 + $0xb0] sm:$0xff]
        %v1877 = vld [vmem:[#allocation12 + $0xb8] sm:$0xff]
        %v1878 = vld [vmem:[#allocation12 + $0xc0] sm:$0xff]
        %v1879 = vld [vmem:[#allocation12 + $0xc8] sm:$0xff]
        %v1880 = vld [vmem:[#allocation12 + $0xd0] sm:$0xff]
        %v1881 = vld [vmem:[#allocation12 + $0xd8] sm:$0xff]
        %v1882 = vld [vmem:[#allocation12 + $0xe0] sm:$0xff]
        %v1883 = vld [vmem:[#allocation12 + $0xe8] sm:$0xff]
        %v1884 = vld [vmem:[#allocation12 + $0xf0] sm:$0xff]
        %v1885 = vld [vmem:[#allocation12 + $0xf8] sm:$0xff]
        %v1886 = vld [vmem:[#allocation12 + $0x100] sm:$0xff]
        %v1887 = vld [vmem:[#allocation12 + $0x108] sm:$0xff]
        %v1888 = vld [vmem:[#allocation12 + $0x110] sm:$0xff]
        %v1889 = vld [vmem:[#allocation12 + $0x118] sm:$0xff]
        %v1890 = vld [vmem:[#allocation12 + $0x120] sm:$0xff]
        %v1891 = vld [vmem:[#allocation12 + $0x128] sm:$0xff]
        %v1892 = vld [vmem:[#allocation12 + $0x130] sm:$0xff]
        %v1893 = vld [vmem:[#allocation12 + $0x138] sm:$0xff]
        %v1894 = vld [vmem:[#allocation12 + $0x140] sm:$0xff]
        %v1895 = vld [vmem:[#allocation12 + $0x148] sm:$0xff]
        %v1896 = vld [vmem:[#allocation12 + $0x150] sm:$0xff]
        %v1897 = vld [vmem:[#allocation12 + $0x158] sm:$0xff]
        %v1898 = vld [vmem:[#allocation12 + $0x160] sm:$0xff]
        %v1899 = vld [vmem:[#allocation12 + $0x168] sm:$0xff]
        %v1900 = vld [vmem:[#allocation12 + $0x170] sm:$0xff]
        %v1901 = vld [vmem:[#allocation12 + $0x178] sm:$0xff]
        %v1902 = vld [vmem:[#allocation12 + $0x180] sm:$0xff]
        %v1903 = vld [vmem:[#allocation12 + $0x188] sm:$0xff]
        %v1904 = vld [vmem:[#allocation12 + $0x190] sm:$0xff]
        %v1905 = vld [vmem:[#allocation12 + $0x198] sm:$0xff]
        %v1906 = vld [vmem:[#allocation12 + $0x1a0] sm:$0xff]
        %v1907 = vld [vmem:[#allocation12 + $0x1a8] sm:$0xff]
        %v1908 = vld [vmem:[#allocation12 + $0x1b0] sm:$0xff]
        %v1909 = vld [vmem:[#allocation12 + $0x1b8] sm:$0xff]
        %v1910 = vld [vmem:[#allocation12 + $0x1c0] sm:$0xff]
        %v1911 = vld [vmem:[#allocation12 + $0x1c8] sm:$0xff]
        %v1912 = vld [vmem:[#allocation12 + $0x1d0] sm:$0xff]
        %v1913 = vld [vmem:[#allocation12 + $0x1d8] sm:$0xff]
        %v1914 = vld [vmem:[#allocation12 + $0x1e0] sm:$0xff]
        %v1915 = vld [vmem:[#allocation12 + $0x1e8] sm:$0xff]
        %v1916 = vld [vmem:[#allocation12 + $0x1f0] sm:$0xff]
        %v1917 = vld [vmem:[#allocation12 + $0x1f8] sm:$0xff]
        %v1918 = vld [vmem:[#allocation12 + $0x200] sm:$0xff]
        %v1919 = vld [vmem:[#allocation12 + $0x208] sm:$0xff]
        %v1920 = vld [vmem:[#allocation12 + $0x210] sm:$0xff]
        %v1921 = vld [vmem:[#allocation12 + $0x218] sm:$0xff]
        %v1922 = vld [vmem:[#allocation12 + $0x220] sm:$0xff]
        %v1923 = vld [vmem:[#allocation12 + $0x228] sm:$0xff]
        %v1924 = vld [vmem:[#allocation12 + $0x230] sm:$0xff]
        %v1925 = vld [vmem:[#allocation12 + $0x238] sm:$0xff]
        %v1926 = vld [vmem:[#allocation12 + $0x240] sm:$0xff]
        %v1927 = vld [vmem:[#allocation12 + $0x248] sm:$0xff]
        %v1928 = vld [vmem:[#allocation12 + $0x250] sm:$0xff]
        %v1929 = vld [vmem:[#allocation12 + $0x258] sm:$0xff]
        %v1930 = vld [vmem:[#allocation12 + $0x260] sm:$0xff]
        %v1931 = vld [vmem:[#allocation12 + $0x268] sm:$0xff]
        %v1932 = vld [vmem:[#allocation12 + $0x270] sm:$0xff]
        %v1933 = vld [vmem:[#allocation12 + $0x278] sm:$0xff]
        %v1934 = vld [vmem:[#allocation12 + $0x280] sm:$0xff]
        %v1935 = vld [vmem:[#allocation12 + $0x288] sm:$0xff]
        %v1936 = vld [vmem:[#allocation12 + $0x290] sm:$0xff]
        %v1937 = vld [vmem:[#allocation12 + $0x298] sm:$0xff]
        %v1938 = vld [vmem:[#allocation12 + $0x2a0] sm:$0xff]
        %v1939 = vld [vmem:[#allocation12 + $0x2a8] sm:$0xff]
        %v1940 = vld [vmem:[#allocation12 + $0x2b0] sm:$0xff]
        %v1941 = vld [vmem:[#allocation12 + $0x2b8] sm:$0xff]
        %v1942 = vld [vmem:[#allocation12 + $0x2c0] sm:$0xff]
        %v1943 = vld [vmem:[#allocation12 + $0x2c8] sm:$0xff]
        %v1944 = vld [vmem:[#allocation12 + $0x2d0] sm:$0xff]
        %v1945 = vld [vmem:[#allocation12 + $0x2d8] sm:$0xff]
        %v1946 = vld [vmem:[#allocation12 + $0x2e0] sm:$0xff]
        %v1947 = vld [vmem:[#allocation12 + $0x2e8] sm:$0xff]
        %v1948 = vld [vmem:[#allocation12 + $0x2f0] sm:$0xff]
        %v1949 = vld [vmem:[#allocation12 + $0x2f8] sm:$0xff]
        %v1950 = vld [vmem:[#allocation14] sm:$0x3f]
        %v1952 = vlaneseq
        %v1953 = vshrl.u32 %v1952, 7
        %v1954 = vsub.s32 0, %v1953
        %v1955 = vrot.slane %v1950, %v1954
        %v1956 = vlaneseq
        %v1957 = vshrl.u32 %v1956, 7
        %v1958 = vsub.s32 1, %v1957
        %v1959 = vrot.slane %v1950, %v1958
        %v1960 = vlaneseq
        %v1961 = vshrl.u32 %v1960, 7
        %v1962 = vsub.s32 2, %v1961
        %v1963 = vrot.slane %v1950, %v1962
        %v1964 = vlaneseq
        %v1965 = vshrl.u32 %v1964, 7
        %v1966 = vsub.s32 3, %v1965
        %v1967 = vrot.slane %v1950, %v1966
        %v1968 = vlaneseq
        %v1969 = vshrl.u32 %v1968, 7
        %v1970 = vsub.s32 4, %v1969
        %v1971 = vrot.slane %v1950, %v1970
        %v1972 = vlaneseq
        %v1973 = vshrl.u32 %v1972, 7
        %v1974 = vsub.s32 5, %v1973
        %v1975 = vrot.slane %v1950, %v1974
        %v2078 = vunpack.c.l.b16 %v1854
        %v2079 = vunpack.c.h.b16 %v1854
        %v2080 = vunpack.c.l.b16 %v1855
        %v2081 = vunpack.c.h.b16 %v1855
        %v2082 = vunpack.c.l.b16 %v1856
        %v2083 = vunpack.c.h.b16 %v1856
        %v2084 = vunpack.c.l.b16 %v1857
        %v2085 = vunpack.c.h.b16 %v1857
        %v2086 = vunpack.c.l.b16 %v1858
        %v2087 = vunpack.c.h.b16 %v1858
        %v2088 = vunpack.c.l.b16 %v1859
        %v2089 = vunpack.c.h.b16 %v1859
        %v2090 = vunpack.c.l.b16 %v1860
        %v2091 = vunpack.c.h.b16 %v1860
        %v2092 = vunpack.c.l.b16 %v1861
        %v2093 = vunpack.c.h.b16 %v1861
        %v2094 = vunpack.c.l.b16 %v1862
        %v2095 = vunpack.c.h.b16 %v1862
        %v2096 = vunpack.c.l.b16 %v1863
        %v2097 = vunpack.c.h.b16 %v1863
        %v2098 = vunpack.c.l.b16 %v1864
        %v2099 = vunpack.c.h.b16 %v1864
        %v2100 = vunpack.c.l.b16 %v1865
        %v2101 = vunpack.c.h.b16 %v1865
        %v2102 = vunpack.c.l.b16 %v1866
        %v2103 = vunpack.c.h.b16 %v1866
        %v2104 = vunpack.c.l.b16 %v1867
        %v2105 = vunpack.c.h.b16 %v1867
        %v2106 = vunpack.c.l.b16 %v1868
        %v2107 = vunpack.c.h.b16 %v1868
        %v2108 = vunpack.c.l.b16 %v1869
        %v2109 = vunpack.c.h.b16 %v1869
        %v2110 = vunpack.c.l.b16 %v1870
        %v2111 = vunpack.c.h.b16 %v1870
        %v2112 = vunpack.c.l.b16 %v1871
        %v2113 = vunpack.c.h.b16 %v1871
        %v2114 = vunpack.c.l.b16 %v1872
        %v2115 = vunpack.c.h.b16 %v1872
        %v2116 = vunpack.c.l.b16 %v1873
        %v2117 = vunpack.c.h.b16 %v1873
        %v2118 = vunpack.c.l.b16 %v1874
        %v2119 = vunpack.c.h.b16 %v1874
        %v2120 = vunpack.c.l.b16 %v1875
        %v2121 = vunpack.c.h.b16 %v1875
        %v2122 = vunpack.c.l.b16 %v1876
        %v2123 = vunpack.c.h.b16 %v1876
        %v2124 = vunpack.c.l.b16 %v1877
        %v2125 = vunpack.c.h.b16 %v1877
        %v2126 = vunpack.c.l.b16 %v1878
        %v2127 = vunpack.c.h.b16 %v1878
        %v2128 = vunpack.c.l.b16 %v1879
        %v2129 = vunpack.c.h.b16 %v1879
        %v2130 = vunpack.c.l.b16 %v1880
        %v2131 = vunpack.c.h.b16 %v1880
        %v2132 = vunpack.c.l.b16 %v1881
        %v2133 = vunpack.c.h.b16 %v1881
        %v2134 = vunpack.c.l.b16 %v1882
        %v2135 = vunpack.c.h.b16 %v1882
        %v2136 = vunpack.c.l.b16 %v1883
        %v2137 = vunpack.c.h.b16 %v1883
        %v2138 = vunpack.c.l.b16 %v1884
        %v2139 = vunpack.c.h.b16 %v1884
        %v2140 = vunpack.c.l.b16 %v1885
        %v2141 = vunpack.c.h.b16 %v1885
        %v2142 = vunpack.c.l.b16 %v1886
        %v2143 = vunpack.c.h.b16 %v1886
        %v2144 = vunpack.c.l.b16 %v1887
        %v2145 = vunpack.c.h.b16 %v1887
        %v2146 = vunpack.c.l.b16 %v1888
        %v2147 = vunpack.c.h.b16 %v1888
        %v2148 = vunpack.c.l.b16 %v1889
        %v2149 = vunpack.c.h.b16 %v1889
        %v2150 = vunpack.c.l.b16 %v1890
        %v2151 = vunpack.c.h.b16 %v1890
        %v2152 = vunpack.c.l.b16 %v1891
        %v2153 = vunpack.c.h.b16 %v1891
        %v2154 = vunpack.c.l.b16 %v1892
        %v2155 = vunpack.c.h.b16 %v1892
        %v2156 = vunpack.c.l.b16 %v1893
        %v2157 = vunpack.c.h.b16 %v1893
        %v2158 = vunpack.c.l.b16 %v1894
        %v2159 = vunpack.c.h.b16 %v1894
        %v2160 = vunpack.c.l.b16 %v1895
        %v2161 = vunpack.c.h.b16 %v1895
        %v2162 = vunpack.c.l.b16 %v1896
        %v2163 = vunpack.c.h.b16 %v1896
        %v2164 = vunpack.c.l.b16 %v1897
        %v2165 = vunpack.c.h.b16 %v1897
        %v2166 = vunpack.c.l.b16 %v1898
        %v2167 = vunpack.c.h.b16 %v1898
        %v2168 = vunpack.c.l.b16 %v1899
        %v2169 = vunpack.c.h.b16 %v1899
        %v2170 = vunpack.c.l.b16 %v1900
        %v2171 = vunpack.c.h.b16 %v1900
        %v2172 = vunpack.c.l.b16 %v1901
        %v2173 = vunpack.c.h.b16 %v1901
        %v2174 = vunpack.c.l.b16 %v1902
        %v2175 = vunpack.c.h.b16 %v1902
        %v2176 = vunpack.c.l.b16 %v1903
        %v2177 = vunpack.c.h.b16 %v1903
        %v2178 = vunpack.c.l.b16 %v1904
        %v2179 = vunpack.c.h.b16 %v1904
        %v2180 = vunpack.c.l.b16 %v1905
        %v2181 = vunpack.c.h.b16 %v1905
        %v2182 = vunpack.c.l.b16 %v1906
        %v2183 = vunpack.c.h.b16 %v1906
        %v2184 = vunpack.c.l.b16 %v1907
        %v2185 = vunpack.c.h.b16 %v1907
        %v2186 = vunpack.c.l.b16 %v1908
        %v2187 = vunpack.c.h.b16 %v1908
        %v2188 = vunpack.c.l.b16 %v1909
        %v2189 = vunpack.c.h.b16 %v1909
        %v2190 = vunpack.c.l.b16 %v1910
        %v2191 = vunpack.c.h.b16 %v1910
        %v2192 = vunpack.c.l.b16 %v1911
        %v2193 = vunpack.c.h.b16 %v1911
        %v2194 = vunpack.c.l.b16 %v1912
        %v2195 = vunpack.c.h.b16 %v1912
        %v2196 = vunpack.c.l.b16 %v1913
        %v2197 = vunpack.c.h.b16 %v1913
        %v2198 = vunpack.c.l.b16 %v1914
        %v2199 = vunpack.c.h.b16 %v1914
        %v2200 = vunpack.c.l.b16 %v1915
        %v2201 = vunpack.c.h.b16 %v1915
        %v2202 = vunpack.c.l.b16 %v1916
        %v2203 = vunpack.c.h.b16 %v1916
        %v2204 = vunpack.c.l.b16 %v1917
        %v2205 = vunpack.c.h.b16 %v1917
        %v2206 = vunpack.c.l.b16 %v1918
        %v2207 = vunpack.c.h.b16 %v1918
        %v2208 = vunpack.c.l.b16 %v1919
        %v2209 = vunpack.c.h.b16 %v1919
        %v2210 = vunpack.c.l.b16 %v1920
        %v2211 = vunpack.c.h.b16 %v1920
        %v2212 = vunpack.c.l.b16 %v1921
        %v2213 = vunpack.c.h.b16 %v1921
        %v2214 = vunpack.c.l.b16 %v1922
        %v2215 = vunpack.c.h.b16 %v1922
        %v2216 = vunpack.c.l.b16 %v1923
        %v2217 = vunpack.c.h.b16 %v1923
        %v2218 = vunpack.c.l.b16 %v1924
        %v2219 = vunpack.c.h.b16 %v1924
        %v2220 = vunpack.c.l.b16 %v1925
        %v2221 = vunpack.c.h.b16 %v1925
        %v2222 = vunpack.c.l.b16 %v1926
        %v2223 = vunpack.c.h.b16 %v1926
        %v2224 = vunpack.c.l.b16 %v1927
        %v2225 = vunpack.c.h.b16 %v1927
        %v2226 = vunpack.c.l.b16 %v1928
        %v2227 = vunpack.c.h.b16 %v1928
        %v2228 = vunpack.c.l.b16 %v1929
        %v2229 = vunpack.c.h.b16 %v1929
        %v2230 = vunpack.c.l.b16 %v1930
        %v2231 = vunpack.c.h.b16 %v1930
        %v2232 = vunpack.c.l.b16 %v1931
        %v2233 = vunpack.c.h.b16 %v1931
        %v2234 = vunpack.c.l.b16 %v1932
        %v2235 = vunpack.c.h.b16 %v1932
        %v2236 = vunpack.c.l.b16 %v1933
        %v2237 = vunpack.c.h.b16 %v1933
        %v2238 = vunpack.c.l.b16 %v1934
        %v2239 = vunpack.c.h.b16 %v1934
        %v2240 = vunpack.c.l.b16 %v1935
        %v2241 = vunpack.c.h.b16 %v1935
        %v2242 = vunpack.c.l.b16 %v1936
        %v2243 = vunpack.c.h.b16 %v1936
        %v2244 = vunpack.c.l.b16 %v1937
        %v2245 = vunpack.c.h.b16 %v1937
        %v2246 = vunpack.c.l.b16 %v1938
        %v2247 = vunpack.c.h.b16 %v1938
        %v2248 = vunpack.c.l.b16 %v1939
        %v2249 = vunpack.c.h.b16 %v1939
        %v2250 = vunpack.c.l.b16 %v1940
        %v2251 = vunpack.c.h.b16 %v1940
        %v2252 = vunpack.c.l.b16 %v1941
        %v2253 = vunpack.c.h.b16 %v1941
        %v2254 = vunpack.c.l.b16 %v1942
        %v2255 = vunpack.c.h.b16 %v1942
        %v2256 = vunpack.c.l.b16 %v1943
        %v2257 = vunpack.c.h.b16 %v1943
        %v2258 = vunpack.c.l.b16 %v1944
        %v2259 = vunpack.c.h.b16 %v1944
        %v2260 = vunpack.c.l.b16 %v1945
        %v2261 = vunpack.c.h.b16 %v1945
        %v2262 = vunpack.c.l.b16 %v1946
        %v2263 = vunpack.c.h.b16 %v1946
        %v2264 = vunpack.c.l.b16 %v1947
        %v2265 = vunpack.c.h.b16 %v1947
        %v2266 = vunpack.c.l.b16 %v1948
        %v2267 = vunpack.c.h.b16 %v1948
        %v2268 = vunpack.c.l.b16 %v1949
        %v2269 = vunpack.c.h.b16 %v1949
        %v2270 = vpack.c.b16 %v2084, %v2078
        %v2271 = vpack.c.b16 %v2085, %v2079
        %v2272 = vpack.c.b16 %v2086, %v2080
        %v2273 = vpack.c.b16 %v2087, %v2081
        %v2274 = vpack.c.b16 %v2088, %v2082
        %v2275 = vpack.c.b16 %v2089, %v2083
        %v2276 = vpack.c.b16 %v2096, %v2090
        %v2277 = vpack.c.b16 %v2097, %v2091
        %v2278 = vpack.c.b16 %v2098, %v2092
        %v2279 = vpack.c.b16 %v2099, %v2093
        %v2280 = vpack.c.b16 %v2100, %v2094
        %v2281 = vpack.c.b16 %v2101, %v2095
        %v2282 = vpack.c.b16 %v2108, %v2102
        %v2283 = vpack.c.b16 %v2109, %v2103
        %v2284 = vpack.c.b16 %v2110, %v2104
        %v2285 = vpack.c.b16 %v2111, %v2105
        %v2286 = vpack.c.b16 %v2112, %v2106
        %v2287 = vpack.c.b16 %v2113, %v2107
        %v2288 = vpack.c.b16 %v2120, %v2114
        %v2289 = vpack.c.b16 %v2121, %v2115
        %v2290 = vpack.c.b16 %v2122, %v2116
        %v2291 = vpack.c.b16 %v2123, %v2117
        %v2292 = vpack.c.b16 %v2124, %v2118
        %v2293 = vpack.c.b16 %v2125, %v2119
        %v2294 = vpack.c.b16 %v2132, %v2126
        %v2295 = vpack.c.b16 %v2133, %v2127
        %v2296 = vpack.c.b16 %v2134, %v2128
        %v2297 = vpack.c.b16 %v2135, %v2129
        %v2298 = vpack.c.b16 %v2136, %v2130
        %v2299 = vpack.c.b16 %v2137, %v2131
        %v2300 = vpack.c.b16 %v2144, %v2138
        %v2301 = vpack.c.b16 %v2145, %v2139
        %v2302 = vpack.c.b16 %v2146, %v2140
        %v2303 = vpack.c.b16 %v2147, %v2141
        %v2304 = vpack.c.b16 %v2148, %v2142
        %v2305 = vpack.c.b16 %v2149, %v2143
        %v2306 = vpack.c.b16 %v2156, %v2150
        %v2307 = vpack.c.b16 %v2157, %v2151
        %v2308 = vpack.c.b16 %v2158, %v2152
        %v2309 = vpack.c.b16 %v2159, %v2153
        %v2310 = vpack.c.b16 %v2160, %v2154
        %v2311 = vpack.c.b16 %v2161, %v2155
        %v2312 = vpack.c.b16 %v2168, %v2162
        %v2313 = vpack.c.b16 %v2169, %v2163
        %v2314 = vpack.c.b16 %v2170, %v2164
        %v2315 = vpack.c.b16 %v2171, %v2165
        %v2316 = vpack.c.b16 %v2172, %v2166
        %v2317 = vpack.c.b16 %v2173, %v2167
        %v2318 = vpack.c.b16 %v2180, %v2174
        %v2319 = vpack.c.b16 %v2181, %v2175
        %v2320 = vpack.c.b16 %v2182, %v2176
        %v2321 = vpack.c.b16 %v2183, %v2177
        %v2322 = vpack.c.b16 %v2184, %v2178
        %v2323 = vpack.c.b16 %v2185, %v2179
        %v2324 = vpack.c.b16 %v2192, %v2186
        %v2325 = vpack.c.b16 %v2193, %v2187
        %v2326 = vpack.c.b16 %v2194, %v2188
        %v2327 = vpack.c.b16 %v2195, %v2189
        %v2328 = vpack.c.b16 %v2196, %v2190
        %v2329 = vpack.c.b16 %v2197, %v2191
        %v2330 = vpack.c.b16 %v2204, %v2198
        %v2331 = vpack.c.b16 %v2205, %v2199
        %v2332 = vpack.c.b16 %v2206, %v2200
        %v2333 = vpack.c.b16 %v2207, %v2201
        %v2334 = vpack.c.b16 %v2208, %v2202
        %v2335 = vpack.c.b16 %v2209, %v2203
        %v2336 = vpack.c.b16 %v2216, %v2210
        %v2337 = vpack.c.b16 %v2217, %v2211
        %v2338 = vpack.c.b16 %v2218, %v2212
        %v2339 = vpack.c.b16 %v2219, %v2213
        %v2340 = vpack.c.b16 %v2220, %v2214
        %v2341 = vpack.c.b16 %v2221, %v2215
        %v2342 = vpack.c.b16 %v2228, %v2222
        %v2343 = vpack.c.b16 %v2229, %v2223
        %v2344 = vpack.c.b16 %v2230, %v2224
        %v2345 = vpack.c.b16 %v2231, %v2225
        %v2346 = vpack.c.b16 %v2232, %v2226
        %v2347 = vpack.c.b16 %v2233, %v2227
        %v2348 = vpack.c.b16 %v2240, %v2234
        %v2349 = vpack.c.b16 %v2241, %v2235
        %v2350 = vpack.c.b16 %v2242, %v2236
        %v2351 = vpack.c.b16 %v2243, %v2237
        %v2352 = vpack.c.b16 %v2244, %v2238
        %v2353 = vpack.c.b16 %v2245, %v2239
        %v2354 = vpack.c.b16 %v2252, %v2246
        %v2355 = vpack.c.b16 %v2253, %v2247
        %v2356 = vpack.c.b16 %v2254, %v2248
        %v2357 = vpack.c.b16 %v2255, %v2249
        %v2358 = vpack.c.b16 %v2256, %v2250
        %v2359 = vpack.c.b16 %v2257, %v2251
        %v2360 = vpack.c.b16 %v2264, %v2258
        %v2361 = vpack.c.b16 %v2265, %v2259
        %v2362 = vpack.c.b16 %v2266, %v2260
        %v2363 = vpack.c.b16 %v2267, %v2261
        %v2364 = vpack.c.b16 %v2268, %v2262
        %v2365 = vpack.c.b16 %v2269, %v2263
        %2462 = vmatprep.subr.bf16.mxu0 %v2271
        %2463 = vmatpush1.bf16.msra.mxu0 %v2270
        %2464 = vmatprep.subr.bf16.mxu0 %v2277
        %2465 = vmatpush1.bf16.msra.mxu0 %v2276
        %2466 = vmatprep.subr.bf16.mxu0 %v2283
        %2467 = vmatpush1.bf16.msra.mxu0 %v2282
        %2468 = vmatprep.subr.bf16.mxu0 %v2289
        %2469 = vmatpush1.bf16.msra.mxu0 %v2288
        %2470 = vmatprep.subr.bf16.mxu0 %v2295
        %2471 = vmatpush1.bf16.msra.mxu0 %v2294
        %2472 = vmatprep.subr.bf16.mxu0 %v2301
        %2473 = vmatpush1.bf16.msra.mxu0 %v2300
        %2474 = vmatprep.subr.bf16.mxu0 %v2307
        %2475 = vmatpush1.bf16.msra.mxu0 %v2306
        %2476 = vmatprep.subr.bf16.mxu0 %v2313
        %2477 = vmatpush1.bf16.msra.mxu0 %v2312
        %2478 = vmatprep.subr.bf16.mxu0 %v2319
        %2479 = vmatpush1.bf16.msra.mxu0 %v2318
        %2480 = vmatprep.subr.bf16.mxu0 %v2325
        %2481 = vmatpush1.bf16.msra.mxu0 %v2324
        %2482 = vmatprep.subr.bf16.mxu0 %v2331
        %2483 = vmatpush1.bf16.msra.mxu0 %v2330
        %2484 = vmatprep.subr.bf16.mxu0 %v2337
        %2485 = vmatpush1.bf16.msra.mxu0 %v2336
        %2486 = vmatprep.subr.bf16.mxu0 %v2343
        %2487 = vmatpush1.bf16.msra.mxu0 %v2342
        %2488 = vmatprep.subr.bf16.mxu0 %v2349
        %2489 = vmatpush1.bf16.msra.mxu0 %v2348
        %2490 = vmatprep.subr.bf16.mxu0 %v2355
        %2491 = vmatpush1.bf16.msra.mxu0 %v2354
        %2492 = vmatprep.subr.bf16.mxu0 %v2361
        %2493 = vmatpush1.bf16.msra.mxu0 %v2360
        %2494 = vmatprep.mubr.bf16.mxu0 %v1853
        %2495 = vmatmul.mubr.bf16.gmra.mrb[0].mxu0 %v1852
        %v2496 = vpop.f32.mrb[0].mxu0
        %v2497 = vadd.f32 %v1955, %v2496
        %v2498 = vpop.f32.mrb[0].mxu0
        %v2499 = vadd.f32 %v1959, %v2498
        %v2500 = vpop.f32.mrb[0].mxu0
        %v2501 = vadd.f32 %v1955, %v2500
        %v2502 = vpop.f32.mrb[0].mxu0
        %v2503 = vadd.f32 %v1959, %v2502
        %2504 = vdwg.mxu0
        %2505 = vmatprep.subr.bf16.mxu0 %v2273
        %2506 = vmatpush1.bf16.msra.mxu0 %v2272
        %2507 = vmatprep.subr.bf16.mxu0 %v2279
        %2508 = vmatpush1.bf16.msra.mxu0 %v2278
        %2509 = vmatprep.subr.bf16.mxu0 %v2285
        %2510 = vmatpush1.bf16.msra.mxu0 %v2284
        %2511 = vmatprep.subr.bf16.mxu0 %v2291
        %2512 = vmatpush1.bf16.msra.mxu0 %v2290
        %2513 = vmatprep.subr.bf16.mxu0 %v2297
        %2514 = vmatpush1.bf16.msra.mxu0 %v2296
        %2515 = vmatprep.subr.bf16.mxu0 %v2303
        %2516 = vmatpush1.bf16.msra.mxu0 %v2302
        %2517 = vmatprep.subr.bf16.mxu0 %v2309
        %2518 = vmatpush1.bf16.msra.mxu0 %v2308
        %2519 = vmatprep.subr.bf16.mxu0 %v2315
        %2520 = vmatpush1.bf16.msra.mxu0 %v2314
        %2521 = vmatprep.subr.bf16.mxu0 %v2321
        %2522 = vmatpush1.bf16.msra.mxu0 %v2320
        %2523 = vmatprep.subr.bf16.mxu0 %v2327
        %2524 = vmatpush1.bf16.msra.mxu0 %v2326
        %2525 = vmatprep.subr.bf16.mxu0 %v2333
        %2526 = vmatpush1.bf16.msra.mxu0 %v2332
        %2527 = vmatprep.subr.bf16.mxu0 %v2339
        %2528 = vmatpush1.bf16.msra.mxu0 %v2338
        %2529 = vmatprep.subr.bf16.mxu0 %v2345
        %2530 = vmatpush1.bf16.msra.mxu0 %v2344
        %2531 = vmatprep.subr.bf16.mxu0 %v2351
        %2532 = vmatpush1.bf16.msra.mxu0 %v2350
        %2533 = vmatprep.subr.bf16.mxu0 %v2357
        %2534 = vmatpush1.bf16.msra.mxu0 %v2356
        %2535 = vmatprep.subr.bf16.mxu0 %v2363
        %2536 = vmatpush1.bf16.msra.mxu0 %v2362
        %2537 = vmatprep.mubr.bf16.mxu0 %v1853
        %2538 = vmatmul.mubr.bf16.gmra.mrb[0].mxu0 %v1852
        %v2539 = vpop.f32.mrb[0].mxu0
        %v2540 = vadd.f32 %v1963, %v2539
        %v2541 = vpop.f32.mrb[0].mxu0
        %v2542 = vadd.f32 %v1967, %v2541
        %v2543 = vpop.f32.mrb[0].mxu0
        %v2544 = vadd.f32 %v1963, %v2543
        %v2545 = vpop.f32.mrb[0].mxu0
        %v2546 = vadd.f32 %v1967, %v2545
        %2547 = vdwg.mxu0
        %2548 = vmatprep.subr.bf16.mxu0 %v2275
        %2549 = vmatpush1.bf16.msra.mxu0 %v2274
        %2550 = vmatprep.subr.bf16.mxu0 %v2281
        %2551 = vmatpush1.bf16.msra.mxu0 %v2280
        %2552 = vmatprep.subr.bf16.mxu0 %v2287
        %2553 = vmatpush1.bf16.msra.mxu0 %v2286
        %2554 = vmatprep.subr.bf16.mxu0 %v2293
        %2555 = vmatpush1.bf16.msra.mxu0 %v2292
        %2556 = vmatprep.subr.bf16.mxu0 %v2299
        %2557 = vmatpush1.bf16.msra.mxu0 %v2298
        %2558 = vmatprep.subr.bf16.mxu0 %v2305
        %2559 = vmatpush1.bf16.msra.mxu0 %v2304
        %2560 = vmatprep.subr.bf16.mxu0 %v2311
        %2561 = vmatpush1.bf16.msra.mxu0 %v2310
        %2562 = vmatprep.subr.bf16.mxu0 %v2317
        %2563 = vmatpush1.bf16.msra.mxu0 %v2316
        %2564 = vmatprep.subr.bf16.mxu0 %v2323
        %2565 = vmatpush1.bf16.msra.mxu0 %v2322
        %2566 = vmatprep.subr.bf16.mxu0 %v2329
        %2567 = vmatpush1.bf16.msra.mxu0 %v2328
        %2568 = vmatprep.subr.bf16.mxu0 %v2335
        %2569 = vmatpush1.bf16.msra.mxu0 %v2334
        %2570 = vmatprep.subr.bf16.mxu0 %v2341
        %2571 = vmatpush1.bf16.msra.mxu0 %v2340
        %2572 = vmatprep.subr.bf16.mxu0 %v2347
        %2573 = vmatpush1.bf16.msra.mxu0 %v2346
        %2574 = vmatprep.subr.bf16.mxu0 %v2353
        %2575 = vmatpush1.bf16.msra.mxu0 %v2352
        %2576 = vmatprep.subr.bf16.mxu0 %v2359
        %2577 = vmatpush1.bf16.msra.mxu0 %v2358
        %2578 = vmatprep.subr.bf16.mxu0 %v2365
        %2579 = vmatpush1.bf16.msra.mxu0 %v2364
        %2580 = vmatprep.mubr.bf16.mxu0 %v1853
        %2581 = vmatmul.mubr.bf16.gmra.mrb[0].mxu0 %v1852
        %v2582 = vpop.f32.mrb[0].mxu0
        %v2583 = vadd.f32 %v1971, %v2582
        %v2584 = vpop.f32.mrb[0].mxu0
        %v2585 = vadd.f32 %v1975, %v2584
        %v2586 = vpop.f32.mrb[0].mxu0
        %v2587 = vadd.f32 %v1971, %v2586
        %v2588 = vpop.f32.mrb[0].mxu0
        %v2589 = vadd.f32 %v1975, %v2588
        %2590 = vdwg.mxu0
        %v2591 = vadd.f32 %v2497, %v1754
        %v2592 = vadd.f32 %v2499, %v1755
        %v2593 = vadd.f32 %v2501, %v1760
        %v2594 = vadd.f32 %v2503, %v1761
        %v2595 = vsub.f32 0.0, %v2591
        %v2596 = vsub.f32 0.0, %v2592
        %v2597 = vsub.f32 0.0, %v2593
        %v2598 = vsub.f32 0.0, %v2594
        %v2599 = vmul.f32 %v2595, 1.442695
        %v2600 = vpow.pop %v2599
        %v2601 = vmul.f32 %v2596, 1.442695
        %v2602 = vpow.pop %v2601
        %v2603 = vmul.f32 %v2597, 1.442695
        %v2604 = vpow.pop %v2603
        %v2605 = vmul.f32 %v2598, 1.442695
        %v2606 = vpow.pop %v2605
        %v2607 = vadd.f32 %v2600, 1.0
        %v2608 = vadd.f32 %v2602, 1.0
        %v2609 = vadd.f32 %v2604, 1.0
        %v2610 = vadd.f32 %v2606, 1.0
        %v2611 = vrcp.pop %v2607
        %v2612 = vmul.f32 1.0, %v2611
        %v2613 = vrcp.pop %v2608
        %v2614 = vmul.f32 1.0, %v2613
        %v2615 = vrcp.pop %v2609
        %v2616 = vmul.f32 1.0, %v2615
        %v2617 = vrcp.pop %v2610
        %v2618 = vmul.f32 1.0, %v2617
        %v2619 = vadd.f32 %v2540, %v1756
        %v2620 = vadd.f32 %v2542, %v1757
        %v2621 = vadd.f32 %v2544, %v1762
        %v2622 = vadd.f32 %v2546, %v1763
        %v2623 = vsub.f32 0.0, %v2619
        %v2624 = vsub.f32 0.0, %v2620
        %v2625 = vsub.f32 0.0, %v2621
        %v2626 = vsub.f32 0.0, %v2622
        %v2627 = vmul.f32 %v2623, 1.442695
        %v2628 = vpow.pop %v2627
        %v2629 = vmul.f32 %v2624, 1.442695
        %v2630 = vpow.pop %v2629
        %v2631 = vmul.f32 %v2625, 1.442695
        %v2632 = vpow.pop %v2631
        %v2633 = vmul.f32 %v2626, 1.442695
        %v2634 = vpow.pop %v2633
        %v2635 = vadd.f32 %v2628, 1.0
        %v2636 = vadd.f32 %v2630, 1.0
        %v2637 = vadd.f32 %v2632, 1.0
        %v2638 = vadd.f32 %v2634, 1.0
        %v2639 = vrcp.pop %v2635
        %v2640 = vmul.f32 1.0, %v2639
        %v2641 = vrcp.pop %v2636
        %v2642 = vmul.f32 1.0, %v2641
        %v2643 = vrcp.pop %v2637
        %v2644 = vmul.f32 1.0, %v2643
        %v2645 = vrcp.pop %v2638
        %v2646 = vmul.f32 1.0, %v2645
        %v2647 = vmul.f32 %v2612, %v1758
        %v2648 = vmul.f32 %v2614, %v1759
        %v2649 = vmul.f32 %v2616, %v1764
        %v2650 = vmul.f32 %v2618, %v1765
        %v2651 = vadd.f32 %v2583, %v2647
        %v2652 = vadd.f32 %v2585, %v2648
        %v2653 = vadd.f32 %v2587, %v2649
        %v2654 = vadd.f32 %v2589, %v2650
        %v2655 = vtanh.pop %v2651
        %v2656 = vtanh.pop %v2652
        %v2657 = vtanh.pop %v2653
        %v2658 = vtanh.pop %v2654
        %v2659 = vsub.f32 1.0, %v2640
        %v2660 = vsub.f32 1.0, %v2642
        %v2661 = vsub.f32 1.0, %v2644
        %v2662 = vsub.f32 1.0, %v2646
        %v2663 = vmul.f32 %v2659, %v2655
        %v2664 = vmul.f32 %v2660, %v2656
        %v2665 = vmul.f32 %v2661, %v2657
        %v2666 = vmul.f32 %v2662, %v2658
        %v2667 = vmul.f32 %v2640, %v776
        %v2668 = vmul.f32 %v2642, %v777
        %v2669 = vmul.f32 %v2644, %v778
        %v2670 = vmul.f32 %v2646, %v779
        %v2671 = vadd.f32 %v2663, %v2667
        %v2672 = vadd.f32 %v2664, %v2668
        %v2673 = vadd.f32 %v2665, %v2669
        %v2674 = vadd.f32 %v2666, %v2670
        %2675 = vst [vmem:[#allocation2] sm:$0xff] %v2671
        %2676 = vst [vmem:[#allocation2 + $0x8] sm:$0xff] %v2672
        %2677 = vst [vmem:[#allocation2 + $0x10] sm:$0xff] %v2673
        %2678 = vst [vmem:[#allocation2 + $0x18] sm:$0xff] %v2674
        %p2679 = scmp.eq.s32.totalorder %s38, 2
        // Predicated region
        $region125: #{net_forward.1} parent=79 // pred_check
          %p2680 = pneg %p2679
        $region126: #{net_forward.1} parent=79 // pred_check_branch
          %2682 = sbr.rel (%p2680) target = $region128
        $region127: #{net_forward.1} parent=79 // pred_region
          %v2683 = vld [vmem:[#allocation17] sm:$0xff]
          %v2684 = vld [vmem:[#allocation17 + $0x8] sm:$0xff]
          %v2685 = vld [vmem:[#allocation17 + $0x10] sm:$0xff]
          %v2686 = vld [vmem:[#allocation18] sm:$0x1]
          %v2687 = vld [vmem:[#allocation20] sm:$0xff]
          %v2688 = vld [vmem:[#allocation20 + $0x8] sm:$0xff]
          %v2689 = vld [vmem:[#allocation20 + $0x10] sm:$0xff]
          %v2690 = vld [vmem:[#allocation20 + $0x18] sm:$0xff]
          %v2691 = vld [vmem:[#allocation20 + $0x20] sm:$0xff]
          %v2692 = vld [vmem:[#allocation20 + $0x28] sm:$0xff]
          %v2693 = vld [vmem:[#allocation20 + $0x30] sm:$0xff]
          %v2694 = vld [vmem:[#allocation20 + $0x38] sm:$0xff]
          %v2695 = vld [vmem:[#allocation20 + $0x40] sm:$0xff]
          %v2696 = vld [vmem:[#allocation20 + $0x48] sm:$0xff]
          %v2697 = vld [vmem:[#allocation20 + $0x50] sm:$0xff]
          %v2698 = vld [vmem:[#allocation20 + $0x58] sm:$0xff]
          %v2699 = vld [vmem:[#allocation20 + $0x60] sm:$0xff]
          %v2700 = vld [vmem:[#allocation20 + $0x68] sm:$0xff]
          %v2701 = vld [vmem:[#allocation20 + $0x70] sm:$0xff]
          %v2702 = vld [vmem:[#allocation20 + $0x78] sm:$0xff]
          %v2703 = vld [vmem:[#allocation20 + $0x80] sm:$0xff]
          %v2704 = vld [vmem:[#allocation20 + $0x88] sm:$0xff]
          %v2705 = vld [vmem:[#allocation20 + $0x90] sm:$0xff]
          %v2706 = vld [vmem:[#allocation20 + $0x98] sm:$0xff]
          %v2707 = vld [vmem:[#allocation20 + $0xa0] sm:$0xff]
          %v2708 = vld [vmem:[#allocation20 + $0xa8] sm:$0xff]
          %v2709 = vld [vmem:[#allocation20 + $0xb0] sm:$0xff]
          %v2710 = vld [vmem:[#allocation20 + $0xb8] sm:$0xff]
          %v2711 = vld [vmem:[#allocation20 + $0xc0] sm:$0xff]
          %v2712 = vld [vmem:[#allocation20 + $0xc8] sm:$0xff]
          %v2713 = vld [vmem:[#allocation20 + $0xd0] sm:$0xff]
          %v2714 = vld [vmem:[#allocation20 + $0xd8] sm:$0xff]
          %v2715 = vld [vmem:[#allocation20 + $0xe0] sm:$0xff]
          %v2716 = vld [vmem:[#allocation20 + $0xe8] sm:$0xff]
          %v2717 = vld [vmem:[#allocation20 + $0xf0] sm:$0xff]
          %v2718 = vld [vmem:[#allocation20 + $0xf8] sm:$0xff]
          %v2719 = vld [vmem:[#allocation21] sm:$0x1]
          %v2720 = vld [vmem:[#allocation2] sm:$0xff]
          %v2721 = vld [vmem:[#allocation2 + $0x8] sm:$0xff]
          %v2722 = vld [vmem:[#allocation2 + $0x10] sm:$0xff]
          %v2723 = vld [vmem:[#allocation2 + $0x18] sm:$0xff]
          %2724 = vxpose.xlu0.b32.start [1/16] %v2720, 128
          %2725 = vxpose.xlu0.b32.cont [2/16] 0.0, 128
          %2726 = vxpose.xlu0.b32.cont [3/16] 0.0, 128
          %2727 = vxpose.xlu0.b32.cont [4/16] 0.0, 128
          %2728 = vxpose.xlu0.b32.cont [5/16] 0.0, 128
          %2729 = vxpose.xlu0.b32.cont [6/16] 0.0, 128
          %2730 = vxpose.xlu0.b32.cont [7/16] 0.0, 128
          %2731 = vxpose.xlu0.b32.cont [8/16] 0.0, 128
          %2732 = vxpose.xlu0.b32.cont [9/16] 0.0, 128
          %2733 = vxpose.xlu0.b32.cont [10/16] 0.0, 128
          %2734 = vxpose.xlu0.b32.cont [11/16] 0.0, 128
          %2735 = vxpose.xlu0.b32.cont [12/16] 0.0, 128
          %2736 = vxpose.xlu0.b32.cont [13/16] 0.0, 128
          %2737 = vxpose.xlu0.b32.cont [14/16] 0.0, 128
          %2738 = vxpose.xlu0.b32.cont [15/16] 0.0, 128
          %2739 = vxpose.xlu0.b32.end [16/16] 0.0, 128
          %v2740 = vpop.trf.xlu0
          %v2741 = vpop.trf.xlu0
          %v2742 = vpop.trf.xlu0
          %v2743 = vpop.trf.xlu0
          %v2744 = vpop.trf.xlu0
          %v2745 = vpop.trf.xlu0
          %v2746 = vpop.trf.xlu0
          %v2747 = vpop.trf.xlu0
          %v2748 = vpop.trf.xlu0
          %v2749 = vpop.trf.xlu0
          %v2750 = vpop.trf.xlu0
          %v2751 = vpop.trf.xlu0
          %v2752 = vpop.trf.xlu0
          %v2753 = vpop.trf.xlu0
          %v2754 = vpop.trf.xlu0
          %v2755 = vpop.trf.xlu0
          %2756 = vxpose.xlu0.b32.start [1/16] %v2721, 128
          %2757 = vxpose.xlu0.b32.cont [2/16] 0.0, 128
          %2758 = vxpose.xlu0.b32.cont [3/16] 0.0, 128
          %2759 = vxpose.xlu0.b32.cont [4/16] 0.0, 128
          %2760 = vxpose.xlu0.b32.cont [5/16] 0.0, 128
          %2761 = vxpose.xlu0.b32.cont [6/16] 0.0, 128
          %2762 = vxpose.xlu0.b32.cont [7/16] 0.0, 128
          %2763 = vxpose.xlu0.b32.cont [8/16] 0.0, 128
          %2764 = vxpose.xlu0.b32.cont [9/16] 0.0, 128
          %2765 = vxpose.xlu0.b32.cont [10/16] 0.0, 128
          %2766 = vxpose.xlu0.b32.cont [11/16] 0.0, 128
          %2767 = vxpose.xlu0.b32.cont [12/16] 0.0, 128
          %2768 = vxpose.xlu0.b32.cont [13/16] 0.0, 128
          %2769 = vxpose.xlu0.b32.cont [14/16] 0.0, 128
          %2770 = vxpose.xlu0.b32.cont [15/16] 0.0, 128
          %2771 = vxpose.xlu0.b32.end [16/16] 0.0, 128
          %v2772 = vpop.trf.xlu0
          %v2773 = vpop.trf.xlu0
          %v2774 = vpop.trf.xlu0
          %v2775 = vpop.trf.xlu0
          %v2776 = vpop.trf.xlu0
          %v2777 = vpop.trf.xlu0
          %v2778 = vpop.trf.xlu0
          %v2779 = vpop.trf.xlu0
          %v2780 = vpop.trf.xlu0
          %v2781 = vpop.trf.xlu0
          %v2782 = vpop.trf.xlu0
          %v2783 = vpop.trf.xlu0
          %v2784 = vpop.trf.xlu0
          %v2785 = vpop.trf.xlu0
          %v2786 = vpop.trf.xlu0
          %v2787 = vpop.trf.xlu0
          %v2788 = vld [vmem:[%s0] sm:$0xff]
          %2789 = vxpose.xlu0.b32.start [1/16] %v2788, 128
          %2790 = vxpose.xlu0.b32.cont [2/16] 0.0, 128
          %2791 = vxpose.xlu0.b32.cont [3/16] 0.0, 128
          %2792 = vxpose.xlu0.b32.cont [4/16] 0.0, 128
          %2793 = vxpose.xlu0.b32.cont [5/16] 0.0, 128
          %2794 = vxpose.xlu0.b32.cont [6/16] 0.0, 128
          %2795 = vxpose.xlu0.b32.cont [7/16] 0.0, 128
          %2796 = vxpose.xlu0.b32.cont [8/16] 0.0, 128
          %2797 = vxpose.xlu0.b32.cont [9/16] 0.0, 128
          %2798 = vxpose.xlu0.b32.cont [10/16] 0.0, 128
          %2799 = vxpose.xlu0.b32.cont [11/16] 0.0, 128
          %2800 = vxpose.xlu0.b32.cont [12/16] 0.0, 128
          %2801 = vxpose.xlu0.b32.cont [13/16] 0.0, 128
          %2802 = vxpose.xlu0.b32.cont [14/16] 0.0, 128
          %2803 = vxpose.xlu0.b32.cont [15/16] 0.0, 128
          %2804 = vxpose.xlu0.b32.end [16/16] 0.0, 128
          %v2805 = vpop.trf.xlu0
          %v2806 = vpop.trf.xlu0
          %v2807 = vpop.trf.xlu0
          %v2808 = vpop.trf.xlu0
          %v2809 = vpop.trf.xlu0
          %v2810 = vpop.trf.xlu0
          %v2811 = vpop.trf.xlu0
          %v2812 = vpop.trf.xlu0
          %v2813 = vpop.trf.xlu0
          %v2814 = vpop.trf.xlu0
          %v2815 = vpop.trf.xlu0
          %v2816 = vpop.trf.xlu0
          %v2817 = vpop.trf.xlu0
          %v2818 = vpop.trf.xlu0
          %v2819 = vpop.trf.xlu0
          %v2820 = vpop.trf.xlu0
          %vm2821 = vcmask 57344
          %2822 = vst.msk [vmem:[#allocation4] sm:$0x1] %vm2821, 0.0
          %vm2823 = vcmask 64512
          %2824 = vst.msk [vmem:[#allocation4 + $0x1] sm:$0xff] %vm2823, %v2740
          %2825 = vst.msk [vmem:[#allocation4 + $0x9] sm:$0xff] %vm2823, %v2741
          %2826 = vst.msk [vmem:[#allocation4 + $0x11] sm:$0xff] %vm2823, %v2742
          %2827 = vst.msk [vmem:[#allocation4 + $0x19] sm:$0xff] %vm2823, %v2743
          %2828 = vst.msk [vmem:[#allocation4 + $0x21] sm:$0xff] %vm2823, %v2744
          %2829 = vst.msk [vmem:[#allocation4 + $0x29] sm:$0xff] %vm2823, %v2745
          %2830 = vst.msk [vmem:[#allocation4 + $0x31] sm:$0xff] %vm2823, %v2746
          %2831 = vst.msk [vmem:[#allocation4 + $0x39] sm:$0xff] %vm2823, %v2747
          %2832 = vst.msk [vmem:[#allocation4 + $0x41] sm:$0xff] %vm2823, %v2748
          %2833 = vst.msk [vmem:[#allocation4 + $0x49] sm:$0xff] %vm2823, %v2749
          %2834 = vst.msk [vmem:[#allocation4 + $0x51] sm:$0xff] %vm2823, %v2750
          %2835 = vst.msk [vmem:[#allocation4 + $0x59] sm:$0xff] %vm2823, %v2751
          %2836 = vst.msk [vmem:[#allocation4 + $0x61] sm:$0xff] %vm2823, %v2752
          %2837 = vst.msk [vmem:[#allocation4 + $0x69] sm:$0xff] %vm2823, %v2753
          %2838 = vst.msk [vmem:[#allocation4 + $0x71] sm:$0xff] %vm2823, %v2754
          %2839 = vst.msk [vmem:[#allocation4 + $0x79] sm:$0xff] %vm2823, %v2755
          %2840 = vst.msk [vmem:[#allocation4 + $0x81] sm:$0xff] %vm2823, %v2772
          %2841 = vst.msk [vmem:[#allocation4 + $0x89] sm:$0xff] %vm2823, %v2773
          %2842 = vst.msk [vmem:[#allocation4 + $0x91] sm:$0xff] %vm2823, %v2774
          %2843 = vst.msk [vmem:[#allocation4 + $0x99] sm:$0xff] %vm2823, %v2775
          %2844 = vst.msk [vmem:[#allocation4 + $0xa1] sm:$0xff] %vm2823, %v2776
          %2845 = vst.msk [vmem:[#allocation4 + $0xa9] sm:$0xff] %vm2823, %v2777
          %2846 = vst.msk [vmem:[#allocation4 + $0xb1] sm:$0xff] %vm2823, %v2778
          %2847 = vst.msk [vmem:[#allocation4 + $0xb9] sm:$0xff] %vm2823, %v2779
          %2848 = vst.msk [vmem:[#allocation4 + $0xc1] sm:$0xff] %vm2823, %v2780
          %2849 = vst.msk [vmem:[#allocation4 + $0xc9] sm:$0xff] %vm2823, %v2805
          %2850 = vst.msk [vmem:[#allocation4 + $0xd1] sm:$0xff] %vm2823, %v2806
          %2851 = vst.msk [vmem:[#allocation4 + $0xd9] sm:$0xff] %vm2823, %v2807
          %2852 = vst.msk [vmem:[#allocation4 + $0xe1] sm:$0xff] %vm2823, %v2808
          %2853 = vst.msk [vmem:[#allocation4 + $0xe9] sm:$0xff] %vm2823, %v2809
          %2854 = vst.msk [vmem:[#allocation4 + $0xf1] sm:$0xff] %vm2823, %v2810
          %2855 = vst.msk [vmem:[#allocation4 + $0xf9] sm:$0xff] %vm2823, %v2811
          %2856 = vst.msk [vmem:[#allocation4 + $0x101] sm:$0xff] %vm2823, %v2812
          %2857 = vst.msk [vmem:[#allocation4 + $0x109] sm:$0xff] %vm2823, %v2813
          %2858 = vst.msk [vmem:[#allocation4 + $0x111] sm:$0xff] %vm2823, %v2814
          %2859 = vst.msk [vmem:[#allocation4 + $0x119] sm:$0xff] %vm2823, %v2815
          %2860 = vst.msk [vmem:[#allocation4 + $0x121] sm:$0xff] %vm2823, %v2816
          %vm2861 = vcmask 60416
          %2862 = vst.msk [vmem:[#allocation4 + $0x129] sm:$0xf] %vm2861, %v2817
          %2863 = vst.msk [vmem:[#allocation4 + $0x12d] sm:$0x1] %vm2821, 0.0
          %v2864 = vld [vmem:[#allocation23] sm:$0xff]
          %v2865 = vld [vmem:[#allocation23 + $0x8] sm:$0xff]
          %v2866 = vld [vmem:[#allocation23 + $0x10] sm:$0xff]
          %v2867 = vld [vmem:[#allocation23 + $0x18] sm:$0xff]
          %v2868 = vld [vmem:[#allocation23 + $0x20] sm:$0xff]
          %v2869 = vld [vmem:[#allocation23 + $0x28] sm:$0xff]
          %v2870 = vld [vmem:[#allocation23 + $0x30] sm:$0xff]
          %v2871 = vld [vmem:[#allocation23 + $0x38] sm:$0xff]
          %v2872 = vld [vmem:[#allocation23 + $0x40] sm:$0xff]
          %v2873 = vld [vmem:[#allocation23 + $0x48] sm:$0x7]
          %v2874 = vld [vmem:[#allocation8] sm:$0x1]
          %v2875 = vld [vmem:[#allocation4] sm:$0xff]
          %v2876 = vld [vmem:[#allocation4 + $0x8] sm:$0xff]
          %v2877 = vld [vmem:[#allocation4 + $0x10] sm:$0xff]
          %v2878 = vld [vmem:[#allocation4 + $0x18] sm:$0xff]
          %v2879 = vld [vmem:[#allocation4 + $0x20] sm:$0xff]
          %v2880 = vld [vmem:[#allocation4 + $0x28] sm:$0xff]
          %v2881 = vld [vmem:[#allocation4 + $0x30] sm:$0xff]
          %v2882 = vld [vmem:[#allocation4 + $0x38] sm:$0xff]
          %v2883 = vld [vmem:[#allocation4 + $0x40] sm:$0xff]
          %v2884 = vld [vmem:[#allocation4 + $0x48] sm:$0xff]
          %v2885 = vld [vmem:[#allocation4 + $0x50] sm:$0xff]
          %v2886 = vld [vmem:[#allocation4 + $0x58] sm:$0xff]
          %v2887 = vld [vmem:[#allocation4 + $0x60] sm:$0xff]
          %v2888 = vld [vmem:[#allocation4 + $0x68] sm:$0xff]
          %v2889 = vld [vmem:[#allocation4 + $0x70] sm:$0xff]
          %v2890 = vld [vmem:[#allocation4 + $0x78] sm:$0xff]
          %v2891 = vld [vmem:[#allocation4 + $0x80] sm:$0xff]
          %v2892 = vld [vmem:[#allocation4 + $0x88] sm:$0xff]
          %v2893 = vld [vmem:[#allocation4 + $0x90] sm:$0xff]
          %v2894 = vld [vmem:[#allocation4 + $0x98] sm:$0xff]
          %v2895 = vld [vmem:[#allocation4 + $0xa0] sm:$0xff]
          %v2896 = vld [vmem:[#allocation4 + $0xa8] sm:$0xff]
          %v2897 = vld [vmem:[#allocation4 + $0xb0] sm:$0xff]
          %v2898 = vld [vmem:[#allocation4 + $0xb8] sm:$0xff]
          %v2899 = vld [vmem:[#allocation4 + $0xc0] sm:$0xff]
          %v2900 = vld [vmem:[#allocation4 + $0xc8] sm:$0xff]
          %v2901 = vld [vmem:[#allocation4 + $0xd0] sm:$0xff]
          %v2902 = vld [vmem:[#allocation4 + $0xd8] sm:$0xff]
          %v2903 = vld [vmem:[#allocation4 + $0xe0] sm:$0xff]
          %v2904 = vld [vmem:[#allocation4 + $0xe8] sm:$0xff]
          %v2905 = vld [vmem:[#allocation4 + $0xf0] sm:$0xff]
          %v2906 = vld [vmem:[#allocation4 + $0xf8] sm:$0xff]
          %v2907 = vld [vmem:[#allocation4 + $0x100] sm:$0xff]
          %v2908 = vld [vmem:[#allocation4 + $0x108] sm:$0xff]
          %v2909 = vld [vmem:[#allocation4 + $0x110] sm:$0xff]
          %v2910 = vld [vmem:[#allocation4 + $0x118] sm:$0xff]
          %v2911 = vld [vmem:[#allocation4 + $0x120] sm:$0xff]
          %v2912 = vld [vmem:[#allocation4 + $0x128] sm:$0xf]
          %v2913 = vld [vmem:[#allocation4 + $0x1] sm:$0xff]
          %v2914 = vld [vmem:[#allocation4 + $0x9] sm:$0xff]
          %v2915 = vld [vmem:[#allocation4 + $0x11] sm:$0xff]
          %v2916 = vld [vmem:[#allocation4 + $0x19] sm:$0xff]
          %v2917 = vld [vmem:[#allocation4 + $0x21] sm:$0xff]
          %v2918 = vld [vmem:[#allocation4 + $0x29] sm:$0xff]
          %v2919 = vld [vmem:[#allocation4 + $0x31] sm:$0xff]
          %v2920 = vld [vmem:[#allocation4 + $0x39] sm:$0xff]
          %v2921 = vld [vmem:[#allocation4 + $0x41] sm:$0xff]
          %v2922 = vld [vmem:[#allocation4 + $0x49] sm:$0xff]
          %v2923 = vld [vmem:[#allocation4 + $0x51] sm:$0xff]
          %v2924 = vld [vmem:[#allocation4 + $0x59] sm:$0xff]
          %v2925 = vld [vmem:[#allocation4 + $0x61] sm:$0xff]
          %v2926 = vld [vmem:[#allocation4 + $0x69] sm:$0xff]
          %v2927 = vld [vmem:[#allocation4 + $0x71] sm:$0xff]
          %v2928 = vld [vmem:[#allocation4 + $0x79] sm:$0xff]
          %v2929 = vld [vmem:[#allocation4 + $0x81] sm:$0xff]
          %v2930 = vld [vmem:[#allocation4 + $0x89] sm:$0xff]
          %v2931 = vld [vmem:[#allocation4 + $0x91] sm:$0xff]
          %v2932 = vld [vmem:[#allocation4 + $0x99] sm:$0xff]
          %v2933 = vld [vmem:[#allocation4 + $0xa1] sm:$0xff]
          %v2934 = vld [vmem:[#allocation4 + $0xa9] sm:$0xff]
          %v2935 = vld [vmem:[#allocation4 + $0xb1] sm:$0xff]
          %v2936 = vld [vmem:[#allocation4 + $0xb9] sm:$0xff]
          %v2937 = vld [vmem:[#allocation4 + $0xc1] sm:$0xff]
          %v2938 = vld [vmem:[#allocation4 + $0xc9] sm:$0xff]
          %v2939 = vld [vmem:[#allocation4 + $0xd1] sm:$0xff]
          %v2940 = vld [vmem:[#allocation4 + $0xd9] sm:$0xff]
          %v2941 = vld [vmem:[#allocation4 + $0xe1] sm:$0xff]
          %v2942 = vld [vmem:[#allocation4 + $0xe9] sm:$0xff]
          %v2943 = vld [vmem:[#allocation4 + $0xf1] sm:$0xff]
          %v2944 = vld [vmem:[#allocation4 + $0xf9] sm:$0xff]
          %v2945 = vld [vmem:[#allocation4 + $0x101] sm:$0xff]
          %v2946 = vld [vmem:[#allocation4 + $0x109] sm:$0xff]
          %v2947 = vld [vmem:[#allocation4 + $0x111] sm:$0xff]
          %v2948 = vld [vmem:[#allocation4 + $0x119] sm:$0xff]
          %v2949 = vld [vmem:[#allocation4 + $0x121] sm:$0xff]
          %v2950 = vld [vmem:[#allocation4 + $0x129] sm:$0xf]
          %v2952 = vsel %vm2823, %v2913, 0
          %v2955 = vsel %vm2823, %v2914, 0
          %v2958 = vsel %vm2823, %v2915, 0
          %v2961 = vsel %vm2823, %v2916, 0
          %v2964 = vsel %vm2823, %v2917, 0
          %v2967 = vsel %vm2823, %v2918, 0
          %v2970 = vsel %vm2823, %v2919, 0
          %v2973 = vsel %vm2823, %v2920, 0
          %v2976 = vsel %vm2823, %v2921, 0
          %v2979 = vsel %vm2823, %v2922, 0
          %v2982 = vsel %vm2823, %v2923, 0
          %v2985 = vsel %vm2823, %v2924, 0
          %v2988 = vsel %vm2823, %v2925, 0
          %v2991 = vsel %vm2823, %v2926, 0
          %v2994 = vsel %vm2823, %v2927, 0
          %v2997 = vsel %vm2823, %v2928, 0
          %v3000 = vsel %vm2823, %v2929, 0
          %v3003 = vsel %vm2823, %v2930, 0
          %v3006 = vsel %vm2823, %v2931, 0
          %v3009 = vsel %vm2823, %v2932, 0
          %v3012 = vsel %vm2823, %v2933, 0
          %v3015 = vsel %vm2823, %v2934, 0
          %v3018 = vsel %vm2823, %v2935, 0
          %v3021 = vsel %vm2823, %v2936, 0
          %v3024 = vsel %vm2823, %v2937, 0
          %v3027 = vsel %vm2823, %v2938, 0
          %v3030 = vsel %vm2823, %v2939, 0
          %v3033 = vsel %vm2823, %v2940, 0
          %v3036 = vsel %vm2823, %v2941, 0
          %v3039 = vsel %vm2823, %v2942, 0
          %v3042 = vsel %vm2823, %v2943, 0
          %v3045 = vsel %vm2823, %v2944, 0
          %v3048 = vsel %vm2823, %v2945, 0
          %v3051 = vsel %vm2823, %v2946, 0
          %v3054 = vsel %vm2823, %v2947, 0
          %v3057 = vsel %vm2823, %v2948, 0
          %v3060 = vsel %vm2823, %v2949, 0
          %v3063 = vsel %vm2823, %v2950, 0
          %3065 = vmatprep.subr.mxu0 0.0
          %3066 = vmatpush1.msra.mxu0 %v2684
          %3067 = vmatprep.subr.mxu0 0.0
          %3068 = vmatpush1.msra.mxu0 0.0
          %3069 = vmatprep.subr.mxu0 0.0
          %3070 = vmatpush1.msra.mxu0 0.0
          %3071 = vmatprep.subr.mxu0 0.0
          %3072 = vmatpush1.msra.mxu0 0.0
          %3073 = vmatprep.subr.mxu0 0.0
          %3074 = vmatpush1.msra.mxu0 0.0
          %3075 = vmatprep.subr.mxu0 0.0
          %3076 = vmatpush1.msra.mxu0 0.0
          %3077 = vmatprep.subr.mxu0 0.0
          %3078 = vmatpush1.msra.mxu0 0.0
          %3079 = vmatprep.subr.mxu0 0.0
          %3080 = vmatpush1.msra.mxu0 0.0
          %3081 = vmatprep.subr.mxu0 0.0
          %3082 = vmatpush1.msra.mxu0 0.0
          %3083 = vmatprep.subr.mxu0 0.0
          %3084 = vmatpush1.msra.mxu0 0.0
          %3085 = vmatprep.subr.mxu0 0.0
          %3086 = vmatpush1.msra.mxu0 0.0
          %3087 = vmatprep.subr.mxu0 0.0
          %3088 = vmatpush1.msra.mxu0 0.0
          %3089 = vmatprep.subr.mxu0 0.0
          %3090 = vmatpush1.msra.mxu0 0.0
          %3091 = vmatprep.subr.mxu0 0.0
          %3092 = vmatpush1.msra.mxu0 0.0
          %3093 = vmatprep.subr.mxu0 0.0
          %3094 = vmatpush1.msra.mxu0 0.0
          %3095 = vmatprep.subr.mxu0 0.0
          %3096 = vmatpush1.msra.mxu0 0.0
          %3097 = vmatprep.subr.mxu0 0.0
          %3098 = vmatpush1.msra.mxu0 0.0
          %3099 = vmatprep.subr.mxu0 0.0
          %3100 = vmatpush1.msra.mxu0 0.0
          %3101 = vmatprep.subr.mxu0 0.0
          %3102 = vmatpush1.msra.mxu0 0.0
          %3103 = vmatprep.subr.mxu0 0.0
          %3104 = vmatpush1.msra.mxu0 0.0
          %3105 = vmatprep.subr.mxu0 0.0
          %3106 = vmatpush1.msra.mxu0 0.0
          %3107 = vmatprep.subr.mxu0 0.0
          %3108 = vmatpush1.msra.mxu0 0.0
          %3109 = vmatprep.subr.mxu0 0.0
          %3110 = vmatpush1.msra.mxu0 0.0
          %3111 = vmatprep.subr.mxu0 0.0
          %3112 = vmatpush1.msra.mxu0 0.0
          %3113 = vmatprep.subr.mxu0 0.0
          %3114 = vmatpush1.msra.mxu0 0.0
          %3115 = vmatprep.subr.mxu0 0.0
          %3116 = vmatpush1.msra.mxu0 0.0
          %3117 = vmatprep.subr.mxu0 0.0
          %3118 = vmatpush1.msra.mxu0 0.0
          %3119 = vmatprep.subr.mxu0 0.0
          %3120 = vmatpush1.msra.mxu0 0.0
          %3121 = vmatprep.subr.mxu0 0.0
          %3122 = vmatpush1.msra.mxu0 0.0
          %3123 = vmatprep.subr.mxu0 0.0
          %3124 = vmatpush1.msra.mxu0 0.0
          %3125 = vmatprep.subr.mxu0 0.0
          %3126 = vmatpush1.msra.mxu0 0.0
          %3127 = vmatprep.subr.mxu0 0.0
          %3128 = vmatpush1.msra.mxu0 0.0
          %3129 = vmatprep.mubr.f32.mxu0 0.0
          %3130 = vmatmul.mubr.f32.gmra.mrb[0].mxu0 %v2952
          %v3131 = vpop.f32.mrb[0].mxu0
          %v3132 = vadd.f32 0.0, %v3131
          %v3133 = vpop.f32.mrb[0].mxu0
          %3134 = vmatprep.mubr.f32.mxu0 0.0
          %3135 = vmatmul.mubr.f32.gmra.mrb[0].mxu0 %v2955
          %v3136 = vpop.f32.mrb[0].mxu0
          %v3137 = vadd.f32 0.0, %v3136
          %v3138 = vpop.f32.mrb[0].mxu0
          %3139 = vmatprep.mubr.f32.mxu0 0.0
          %3140 = vmatmul.mubr.f32.gmra.mrb[0].mxu0 %v2958
          %v3141 = vpop.f32.mrb[0].mxu0
          %v3142 = vadd.f32 0.0, %v3141
          %v3143 = vpop.f32.mrb[0].mxu0
          %3144 = vmatprep.mubr.f32.mxu0 0.0
          %3145 = vmatmul.mubr.f32.gmra.mrb[0].mxu0 %v2961
          %v3146 = vpop.f32.mrb[0].mxu0
          %v3147 = vadd.f32 0.0, %v3146
          %v3148 = vpop.f32.mrb[0].mxu0
          %3149 = vmatprep.mubr.f32.mxu0 0.0
          %3150 = vmatmul.mubr.f32.gmra.mrb[0].mxu0 %v2964
          %v3151 = vpop.f32.mrb[0].mxu0
          %v3152 = vadd.f32 0.0, %v3151
          %v3153 = vpop.f32.mrb[0].mxu0
          %3154 = vmatprep.mubr.f32.mxu0 0.0
          %3155 = vmatmul.mubr.f32.gmra.mrb[0].mxu0 %v2967
          %v3156 = vpop.f32.mrb[0].mxu0
          %v3157 = vadd.f32 0.0, %v3156
          %v3158 = vpop.f32.mrb[0].mxu0
          %3159 = vmatprep.mubr.f32.mxu0 0.0
          %3160 = vmatmul.mubr.f32.gmra.mrb[0].mxu0 %v2970
          %v3161 = vpop.f32.mrb[0].mxu0
          %v3162 = vadd.f32 0.0, %v3161
          %v3163 = vpop.f32.mrb[0].mxu0
          %3164 = vmatprep.mubr.f32.mxu0 0.0
          %3165 = vmatmul.mubr.f32.gmra.mrb[0].mxu0 %v2973
          %v3166 = vpop.f32.mrb[0].mxu0
          %v3167 = vadd.f32 0.0, %v3166
          %v3168 = vpop.f32.mrb[0].mxu0
          %3169 = vmatprep.mubr.f32.mxu0 0.0
          %3170 = vmatmul.mubr.f32.gmra.mrb[0].mxu0 %v2976
          %v3171 = vpop.f32.mrb[0].mxu0
          %v3172 = vadd.f32 0.0, %v3171
          %v3173 = vpop.f32.mrb[0].mxu0
          %3174 = vmatprep.mubr.f32.mxu0 0.0
          %3175 = vmatmul.mubr.f32.gmra.mrb[0].mxu0 %v2979
          %v3176 = vpop.f32.mrb[0].mxu0
          %v3177 = vadd.f32 0.0, %v3176
          %v3178 = vpop.f32.mrb[0].mxu0
          %3179 = vmatprep.mubr.f32.mxu0 0.0
          %3180 = vmatmul.mubr.f32.gmra.mrb[0].mxu0 %v2982
          %v3181 = vpop.f32.mrb[0].mxu0
          %v3182 = vadd.f32 0.0, %v3181
          %v3183 = vpop.f32.mrb[0].mxu0
          %3184 = vmatprep.mubr.f32.mxu0 0.0
          %3185 = vmatmul.mubr.f32.gmra.mrb[0].mxu0 %v2985
          %v3186 = vpop.f32.mrb[0].mxu0
          %v3187 = vadd.f32 0.0, %v3186
          %v3188 = vpop.f32.mrb[0].mxu0
          %3189 = vmatprep.mubr.f32.mxu0 0.0
          %3190 = vmatmul.mubr.f32.gmra.mrb[0].mxu0 %v2988
          %v3191 = vpop.f32.mrb[0].mxu0
          %v3192 = vadd.f32 0.0, %v3191
          %v3193 = vpop.f32.mrb[0].mxu0
          %3194 = vmatprep.mubr.f32.mxu0 0.0
          %3195 = vmatmul.mubr.f32.gmra.mrb[0].mxu0 %v2991
          %v3196 = vpop.f32.mrb[0].mxu0
          %v3197 = vadd.f32 0.0, %v3196
          %v3198 = vpop.f32.mrb[0].mxu0
          %3199 = vmatprep.mubr.f32.mxu0 0.0
          %3200 = vmatmul.mubr.f32.gmra.mrb[0].mxu0 %v2994
          %v3201 = vpop.f32.mrb[0].mxu0
          %v3202 = vadd.f32 0.0, %v3201
          %v3203 = vpop.f32.mrb[0].mxu0
          %3204 = vmatprep.mubr.f32.mxu0 0.0
          %3205 = vmatmul.mubr.f32.gmra.mrb[0].mxu0 %v2997
          %v3206 = vpop.f32.mrb[0].mxu0
          %v3207 = vadd.f32 0.0, %v3206
          %v3208 = vpop.f32.mrb[0].mxu0
          %3209 = vmatprep.mubr.f32.mxu0 0.0
          %3210 = vmatmul.mubr.f32.gmra.mrb[0].mxu0 %v3000
          %v3211 = vpop.f32.mrb[0].mxu0
          %v3212 = vadd.f32 0.0, %v3211
          %v3213 = vpop.f32.mrb[0].mxu0
          %3214 = vmatprep.mubr.f32.mxu0 0.0
          %3215 = vmatmul.mubr.f32.gmra.mrb[0].mxu0 %v3003
          %v3216 = vpop.f32.mrb[0].mxu0
          %v3217 = vadd.f32 0.0, %v3216
          %v3218 = vpop.f32.mrb[0].mxu0
          %3219 = vmatprep.mubr.f32.mxu0 0.0
          %3220 = vmatmul.mubr.f32.gmra.mrb[0].mxu0 %v3006
          %v3221 = vpop.f32.mrb[0].mxu0
          %v3222 = vadd.f32 0.0, %v3221
          %v3223 = vpop.f32.mrb[0].mxu0
          %3224 = vmatprep.mubr.f32.mxu0 0.0
          %3225 = vmatmul.mubr.f32.gmra.mrb[0].mxu0 %v3009
          %v3226 = vpop.f32.mrb[0].mxu0
          %v3227 = vadd.f32 0.0, %v3226
          %v3228 = vpop.f32.mrb[0].mxu0
          %3229 = vmatprep.mubr.f32.mxu0 0.0
          %3230 = vmatmul.mubr.f32.gmra.mrb[0].mxu0 %v3012
          %v3231 = vpop.f32.mrb[0].mxu0
          %v3232 = vadd.f32 0.0, %v3231
          %v3233 = vpop.f32.mrb[0].mxu0
          %3234 = vmatprep.mubr.f32.mxu0 0.0
          %3235 = vmatmul.mubr.f32.gmra.mrb[0].mxu0 %v3015
          %v3236 = vpop.f32.mrb[0].mxu0
          %v3237 = vadd.f32 0.0, %v3236
          %v3238 = vpop.f32.mrb[0].mxu0
          %3239 = vmatprep.mubr.f32.mxu0 0.0
          %3240 = vmatmul.mubr.f32.gmra.mrb[0].mxu0 %v3018
          %v3241 = vpop.f32.mrb[0].mxu0
          %v3242 = vadd.f32 0.0, %v3241
          %v3243 = vpop.f32.mrb[0].mxu0
          %3244 = vmatprep.mubr.f32.mxu0 0.0
          %3245 = vmatmul.mubr.f32.gmra.mrb[0].mxu0 %v3021
          %v3246 = vpop.f32.mrb[0].mxu0
          %v3247 = vadd.f32 0.0, %v3246
          %v3248 = vpop.f32.mrb[0].mxu0
          %3249 = vmatprep.mubr.f32.mxu0 0.0
          %3250 = vmatmul.mubr.f32.gmra.mrb[0].mxu0 %v3024
          %v3251 = vpop.f32.mrb[0].mxu0
          %v3252 = vadd.f32 0.0, %v3251
          %v3253 = vpop.f32.mrb[0].mxu0
          %3254 = vmatprep.mubr.f32.mxu0 0.0
          %3255 = vmatmul.mubr.f32.gmra.mrb[0].mxu0 %v3027
          %v3256 = vpop.f32.mrb[0].mxu0
          %v3257 = vadd.f32 0.0, %v3256
          %v3258 = vpop.f32.mrb[0].mxu0
          %3259 = vmatprep.mubr.f32.mxu0 0.0
          %3260 = vmatmul.mubr.f32.gmra.mrb[0].mxu0 %v3030
          %v3261 = vpop.f32.mrb[0].mxu0
          %v3262 = vadd.f32 0.0, %v3261
          %v3263 = vpop.f32.mrb[0].mxu0
          %3264 = vmatprep.mubr.f32.mxu0 0.0
          %3265 = vmatmul.mubr.f32.gmra.mrb[0].mxu0 %v3033
          %v3266 = vpop.f32.mrb[0].mxu0
          %v3267 = vadd.f32 0.0, %v3266
          %v3268 = vpop.f32.mrb[0].mxu0
          %3269 = vmatprep.mubr.f32.mxu0 0.0
          %3270 = vmatmul.mubr.f32.gmra.mrb[0].mxu0 %v3036
          %v3271 = vpop.f32.mrb[0].mxu0
          %v3272 = vadd.f32 0.0, %v3271
          %v3273 = vpop.f32.mrb[0].mxu0
          %3274 = vmatprep.mubr.f32.mxu0 0.0
          %3275 = vmatmul.mubr.f32.gmra.mrb[0].mxu0 %v3039
          %v3276 = vpop.f32.mrb[0].mxu0
          %v3277 = vadd.f32 0.0, %v3276
          %v3278 = vpop.f32.mrb[0].mxu0
          %3279 = vmatprep.mubr.f32.mxu0 0.0
          %3280 = vmatmul.mubr.f32.gmra.mrb[0].mxu0 %v3042
          %v3281 = vpop.f32.mrb[0].mxu0
          %v3282 = vadd.f32 0.0, %v3281
          %v3283 = vpop.f32.mrb[0].mxu0
          %3284 = vmatprep.mubr.f32.mxu0 0.0
          %3285 = vmatmul.mubr.f32.gmra.mrb[0].mxu0 %v3045
          %v3286 = vpop.f32.mrb[0].mxu0
          %v3287 = vadd.f32 0.0, %v3286
          %v3288 = vpop.f32.mrb[0].mxu0
          %3289 = vmatprep.mubr.f32.mxu0 0.0
          %3290 = vmatmul.mubr.f32.gmra.mrb[0].mxu0 %v3048
          %v3291 = vpop.f32.mrb[0].mxu0
          %v3292 = vadd.f32 0.0, %v3291
          %v3293 = vpop.f32.mrb[0].mxu0
          %3294 = vmatprep.mubr.f32.mxu0 0.0
          %3295 = vmatmul.mubr.f32.gmra.mrb[0].mxu0 %v3051
          %v3296 = vpop.f32.mrb[0].mxu0
          %v3297 = vadd.f32 0.0, %v3296
          %v3298 = vpop.f32.mrb[0].mxu0
          %3299 = vmatprep.mubr.f32.mxu0 0.0
          %3300 = vmatmul.mubr.f32.gmra.mrb[0].mxu0 %v3054
          %v3301 = vpop.f32.mrb[0].mxu0
          %v3302 = vadd.f32 0.0, %v3301
          %v3303 = vpop.f32.mrb[0].mxu0
          %3304 = vmatprep.mubr.f32.mxu0 0.0
          %3305 = vmatmul.mubr.f32.gmra.mrb[0].mxu0 %v3057
          %v3306 = vpop.f32.mrb[0].mxu0
          %v3307 = vadd.f32 0.0, %v3306
          %v3308 = vpop.f32.mrb[0].mxu0
          %3309 = vmatprep.mubr.f32.mxu0 0.0
          %3310 = vmatmul.mubr.f32.gmra.mrb[0].mxu0 %v3060
          %v3311 = vpop.f32.mrb[0].mxu0
          %v3312 = vadd.f32 0.0, %v3311
          %v3313 = vpop.f32.mrb[0].mxu0
          %3314 = vmatprep.mubr.f32.mxu0 0.0
          %3315 = vmatmul.mubr.f32.gmra.mrb[0].mxu0 %v3063
          %v3316 = vpop.f32.mrb[0].mxu0
          %v3317 = vadd.f32 0.0, %v3316
          %v3318 = vpop.f32.mrb[0].mxu0
          %3319 = vdwg.mxu0
          %v3321 = vsel %vm2823, %v2875, 0
          %v3324 = vsel %vm2823, %v2876, 0
          %v3327 = vsel %vm2823, %v2877, 0
          %v3330 = vsel %vm2823, %v2878, 0
          %v3333 = vsel %vm2823, %v2879, 0
          %v3336 = vsel %vm2823, %v2880, 0
          %v3339 = vsel %vm2823, %v2881, 0
          %v3342 = vsel %vm2823, %v2882, 0
          %v3345 = vsel %vm2823, %v2883, 0
          %v3348 = vsel %vm2823, %v2884, 0
          %v3351 = vsel %vm2823, %v2885, 0
          %v3354 = vsel %vm2823, %v2886, 0
          %v3357 = vsel %vm2823, %v2887, 0
          %v3360 = vsel %vm2823, %v2888, 0
          %v3363 = vsel %vm2823, %v2889, 0
          %v3366 = vsel %vm2823, %v2890, 0
          %v3369 = vsel %vm2823, %v2891, 0
          %v3372 = vsel %vm2823, %v2892, 0
          %v3375 = vsel %vm2823, %v2893, 0
          %v3378 = vsel %vm2823, %v2894, 0
          %v3381 = vsel %vm2823, %v2895, 0
          %v3384 = vsel %vm2823, %v2896, 0
          %v3387 = vsel %vm2823, %v2897, 0
          %v3390 = vsel %vm2823, %v2898, 0
          %v3393 = vsel %vm2823, %v2899, 0
          %v3396 = vsel %vm2823, %v2900, 0
          %v3399 = vsel %vm2823, %v2901, 0
          %v3402 = vsel %vm2823, %v2902, 0
          %v3405 = vsel %vm2823, %v2903, 0
          %v3408 = vsel %vm2823, %v2904, 0
          %v3411 = vsel %vm2823, %v2905, 0
          %v3414 = vsel %vm2823, %v2906, 0
          %v3417 = vsel %vm2823, %v2907, 0
          %v3420 = vsel %vm2823, %v2908, 0
          %v3423 = vsel %vm2823, %v2909, 0
          %v3426 = vsel %vm2823, %v2910, 0
          %v3429 = vsel %vm2823, %v2911, 0
          %v3432 = vsel %vm2823, %v2912, 0
          %3434 = vmatprep.subr.mxu0 0.0
          %3435 = vmatpush1.msra.mxu0 %v2683
          %3436 = vmatprep.subr.mxu0 0.0
          %3437 = vmatpush1.msra.mxu0 0.0
          %3438 = vmatprep.subr.mxu0 0.0
          %3439 = vmatpush1.msra.mxu0 0.0
          %3440 = vmatprep.subr.mxu0 0.0
          %3441 = vmatpush1.msra.mxu0 0.0
          %3442 = vmatprep.subr.mxu0 0.0
          %3443 = vmatpush1.msra.mxu0 0.0
          %3444 = vmatprep.subr.mxu0 0.0
          %3445 = vmatpush1.msra.mxu0 0.0
          %3446 = vmatprep.subr.mxu0 0.0
          %3447 = vmatpush1.msra.mxu0 0.0
          %3448 = vmatprep.subr.mxu0 0.0
          %3449 = vmatpush1.msra.mxu0 0.0
          %3450 = vmatprep.subr.mxu0 0.0
          %3451 = vmatpush1.msra.mxu0 0.0
          %3452 = vmatprep.subr.mxu0 0.0
          %3453 = vmatpush1.msra.mxu0 0.0
          %3454 = vmatprep.subr.mxu0 0.0
          %3455 = vmatpush1.msra.mxu0 0.0
          %3456 = vmatprep.subr.mxu0 0.0
          %3457 = vmatpush1.msra.mxu0 0.0
          %3458 = vmatprep.subr.mxu0 0.0
          %3459 = vmatpush1.msra.mxu0 0.0
          %3460 = vmatprep.subr.mxu0 0.0
          %3461 = vmatpush1.msra.mxu0 0.0
          %3462 = vmatprep.subr.mxu0 0.0
          %3463 = vmatpush1.msra.mxu0 0.0
          %3464 = vmatprep.subr.mxu0 0.0
          %3465 = vmatpush1.msra.mxu0 0.0
          %3466 = vmatprep.subr.mxu0 0.0
          %3467 = vmatpush1.msra.mxu0 0.0
          %3468 = vmatprep.subr.mxu0 0.0
          %3469 = vmatpush1.msra.mxu0 0.0
          %3470 = vmatprep.subr.mxu0 0.0
          %3471 = vmatpush1.msra.mxu0 0.0
          %3472 = vmatprep.subr.mxu0 0.0
          %3473 = vmatpush1.msra.mxu0 0.0
          %3474 = vmatprep.subr.mxu0 0.0
          %3475 = vmatpush1.msra.mxu0 0.0
          %3476 = vmatprep.subr.mxu0 0.0
          %3477 = vmatpush1.msra.mxu0 0.0
          %3478 = vmatprep.subr.mxu0 0.0
          %3479 = vmatpush1.msra.mxu0 0.0
          %3480 = vmatprep.subr.mxu0 0.0
          %3481 = vmatpush1.msra.mxu0 0.0
          %3482 = vmatprep.subr.mxu0 0.0
          %3483 = vmatpush1.msra.mxu0 0.0
          %3484 = vmatprep.subr.mxu0 0.0
          %3485 = vmatpush1.msra.mxu0 0.0
          %3486 = vmatprep.subr.mxu0 0.0
          %3487 = vmatpush1.msra.mxu0 0.0
          %3488 = vmatprep.subr.mxu0 0.0
          %3489 = vmatpush1.msra.mxu0 0.0
          %3490 = vmatprep.subr.mxu0 0.0
          %3491 = vmatpush1.msra.mxu0 0.0
          %3492 = vmatprep.subr.mxu0 0.0
          %3493 = vmatpush1.msra.mxu0 0.0
          %3494 = vmatprep.subr.mxu0 0.0
          %3495 = vmatpush1.msra.mxu0 0.0
          %3496 = vmatprep.subr.mxu0 0.0
          %3497 = vmatpush1.msra.mxu0 0.0
          %3498 = vmatprep.mubr.f32.mxu0 0.0
          %3499 = vmatmul.mubr.f32.gmra.mrb[0].mxu0 %v3321
          %v3500 = vpop.f32.mrb[0].mxu0
          %v3501 = vadd.f32 %v3132, %v3500
          %v3502 = vpop.f32.mrb[0].mxu0
          %3503 = vmatprep.mubr.f32.mxu0 0.0
          %3504 = vmatmul.mubr.f32.gmra.mrb[0].mxu0 %v3324
          %v3505 = vpop.f32.mrb[0].mxu0
          %v3506 = vadd.f32 %v3137, %v3505
          %v3507 = vpop.f32.mrb[0].mxu0
          %3508 = vmatprep.mubr.f32.mxu0 0.0
          %3509 = vmatmul.mubr.f32.gmra.mrb[0].mxu0 %v3327
          %v3510 = vpop.f32.mrb[0].mxu0
          %v3511 = vadd.f32 %v3142, %v3510
          %v3512 = vpop.f32.mrb[0].mxu0
          %3513 = vmatprep.mubr.f32.mxu0 0.0
          %3514 = vmatmul.mubr.f32.gmra.mrb[0].mxu0 %v3330
          %v3515 = vpop.f32.mrb[0].mxu0
          %v3516 = vadd.f32 %v3147, %v3515
          %v3517 = vpop.f32.mrb[0].mxu0
          %3518 = vmatprep.mubr.f32.mxu0 0.0
          %3519 = vmatmul.mubr.f32.gmra.mrb[0].mxu0 %v3333
          %v3520 = vpop.f32.mrb[0].mxu0
          %v3521 = vadd.f32 %v3152, %v3520
          %v3522 = vpop.f32.mrb[0].mxu0
          %3523 = vmatprep.mubr.f32.mxu0 0.0
          %3524 = vmatmul.mubr.f32.gmra.mrb[0].mxu0 %v3336
          %v3525 = vpop.f32.mrb[0].mxu0
          %v3526 = vadd.f32 %v3157, %v3525
          %v3527 = vpop.f32.mrb[0].mxu0
          %3528 = vmatprep.mubr.f32.mxu0 0.0
          %3529 = vmatmul.mubr.f32.gmra.mrb[0].mxu0 %v3339
          %v3530 = vpop.f32.mrb[0].mxu0
          %v3531 = vadd.f32 %v3162, %v3530
          %v3532 = vpop.f32.mrb[0].mxu0
          %3533 = vmatprep.mubr.f32.mxu0 0.0
          %3534 = vmatmul.mubr.f32.gmra.mrb[0].mxu0 %v3342
          %v3535 = vpop.f32.mrb[0].mxu0
          %v3536 = vadd.f32 %v3167, %v3535
          %v3537 = vpop.f32.mrb[0].mxu0
          %3538 = vmatprep.mubr.f32.mxu0 0.0
          %3539 = vmatmul.mubr.f32.gmra.mrb[0].mxu0 %v3345
          %v3540 = vpop.f32.mrb[0].mxu0
          %v3541 = vadd.f32 %v3172, %v3540
          %v3542 = vpop.f32.mrb[0].mxu0
          %3543 = vmatprep.mubr.f32.mxu0 0.0
          %3544 = vmatmul.mubr.f32.gmra.mrb[0].mxu0 %v3348
          %v3545 = vpop.f32.mrb[0].mxu0
          %v3546 = vadd.f32 %v3177, %v3545
          %v3547 = vpop.f32.mrb[0].mxu0
          %3548 = vmatprep.mubr.f32.mxu0 0.0
          %3549 = vmatmul.mubr.f32.gmra.mrb[0].mxu0 %v3351
          %v3550 = vpop.f32.mrb[0].mxu0
          %v3551 = vadd.f32 %v3182, %v3550
          %v3552 = vpop.f32.mrb[0].mxu0
          %3553 = vmatprep.mubr.f32.mxu0 0.0
          %3554 = vmatmul.mubr.f32.gmra.mrb[0].mxu0 %v3354
          %v3555 = vpop.f32.mrb[0].mxu0
          %v3556 = vadd.f32 %v3187, %v3555
          %v3557 = vpop.f32.mrb[0].mxu0
          %3558 = vmatprep.mubr.f32.mxu0 0.0
          %3559 = vmatmul.mubr.f32.gmra.mrb[0].mxu0 %v3357
          %v3560 = vpop.f32.mrb[0].mxu0
          %v3561 = vadd.f32 %v3192, %v3560
          %v3562 = vpop.f32.mrb[0].mxu0
          %3563 = vmatprep.mubr.f32.mxu0 0.0
          %3564 = vmatmul.mubr.f32.gmra.mrb[0].mxu0 %v3360
          %v3565 = vpop.f32.mrb[0].mxu0
          %v3566 = vadd.f32 %v3197, %v3565
          %v3567 = vpop.f32.mrb[0].mxu0
          %3568 = vmatprep.mubr.f32.mxu0 0.0
          %3569 = vmatmul.mubr.f32.gmra.mrb[0].mxu0 %v3363
          %v3570 = vpop.f32.mrb[0].mxu0
          %v3571 = vadd.f32 %v3202, %v3570
          %v3572 = vpop.f32.mrb[0].mxu0
          %3573 = vmatprep.mubr.f32.mxu0 0.0
          %3574 = vmatmul.mubr.f32.gmra.mrb[0].mxu0 %v3366
          %v3575 = vpop.f32.mrb[0].mxu0
          %v3576 = vadd.f32 %v3207, %v3575
          %v3577 = vpop.f32.mrb[0].mxu0
          %3578 = vmatprep.mubr.f32.mxu0 0.0
          %3579 = vmatmul.mubr.f32.gmra.mrb[0].mxu0 %v3369
          %v3580 = vpop.f32.mrb[0].mxu0
          %v3581 = vadd.f32 %v3212, %v3580
          %v3582 = vpop.f32.mrb[0].mxu0
          %3583 = vmatprep.mubr.f32.mxu0 0.0
          %3584 = vmatmul.mubr.f32.gmra.mrb[0].mxu0 %v3372
          %v3585 = vpop.f32.mrb[0].mxu0
          %v3586 = vadd.f32 %v3217, %v3585
          %v3587 = vpop.f32.mrb[0].mxu0
          %3588 = vmatprep.mubr.f32.mxu0 0.0
          %3589 = vmatmul.mubr.f32.gmra.mrb[0].mxu0 %v3375
          %v3590 = vpop.f32.mrb[0].mxu0
          %v3591 = vadd.f32 %v3222, %v3590
          %v3592 = vpop.f32.mrb[0].mxu0
          %3593 = vmatprep.mubr.f32.mxu0 0.0
          %3594 = vmatmul.mubr.f32.gmra.mrb[0].mxu0 %v3378
          %v3595 = vpop.f32.mrb[0].mxu0
          %v3596 = vadd.f32 %v3227, %v3595
          %v3597 = vpop.f32.mrb[0].mxu0
          %3598 = vmatprep.mubr.f32.mxu0 0.0
          %3599 = vmatmul.mubr.f32.gmra.mrb[0].mxu0 %v3381
          %v3600 = vpop.f32.mrb[0].mxu0
          %v3601 = vadd.f32 %v3232, %v3600
          %v3602 = vpop.f32.mrb[0].mxu0
          %3603 = vmatprep.mubr.f32.mxu0 0.0
          %3604 = vmatmul.mubr.f32.gmra.mrb[0].mxu0 %v3384
          %v3605 = vpop.f32.mrb[0].mxu0
          %v3606 = vadd.f32 %v3237, %v3605
          %v3607 = vpop.f32.mrb[0].mxu0
          %3608 = vmatprep.mubr.f32.mxu0 0.0
          %3609 = vmatmul.mubr.f32.gmra.mrb[0].mxu0 %v3387
          %v3610 = vpop.f32.mrb[0].mxu0
          %v3611 = vadd.f32 %v3242, %v3610
          %v3612 = vpop.f32.mrb[0].mxu0
          %3613 = vmatprep.mubr.f32.mxu0 0.0
          %3614 = vmatmul.mubr.f32.gmra.mrb[0].mxu0 %v3390
          %v3615 = vpop.f32.mrb[0].mxu0
          %v3616 = vadd.f32 %v3247, %v3615
          %v3617 = vpop.f32.mrb[0].mxu0
          %3618 = vmatprep.mubr.f32.mxu0 0.0
          %3619 = vmatmul.mubr.f32.gmra.mrb[0].mxu0 %v3393
          %v3620 = vpop.f32.mrb[0].mxu0
          %v3621 = vadd.f32 %v3252, %v3620
          %v3622 = vpop.f32.mrb[0].mxu0
          %3623 = vmatprep.mubr.f32.mxu0 0.0
          %3624 = vmatmul.mubr.f32.gmra.mrb[0].mxu0 %v3396
          %v3625 = vpop.f32.mrb[0].mxu0
          %v3626 = vadd.f32 %v3257, %v3625
          %v3627 = vpop.f32.mrb[0].mxu0
          %3628 = vmatprep.mubr.f32.mxu0 0.0
          %3629 = vmatmul.mubr.f32.gmra.mrb[0].mxu0 %v3399
          %v3630 = vpop.f32.mrb[0].mxu0
          %v3631 = vadd.f32 %v3262, %v3630
          %v3632 = vpop.f32.mrb[0].mxu0
          %3633 = vmatprep.mubr.f32.mxu0 0.0
          %3634 = vmatmul.mubr.f32.gmra.mrb[0].mxu0 %v3402
          %v3635 = vpop.f32.mrb[0].mxu0
          %v3636 = vadd.f32 %v3267, %v3635
          %v3637 = vpop.f32.mrb[0].mxu0
          %3638 = vmatprep.mubr.f32.mxu0 0.0
          %3639 = vmatmul.mubr.f32.gmra.mrb[0].mxu0 %v3405
          %v3640 = vpop.f32.mrb[0].mxu0
          %v3641 = vadd.f32 %v3272, %v3640
          %v3642 = vpop.f32.mrb[0].mxu0
          %3643 = vmatprep.mubr.f32.mxu0 0.0
          %3644 = vmatmul.mubr.f32.gmra.mrb[0].mxu0 %v3408
          %v3645 = vpop.f32.mrb[0].mxu0
          %v3646 = vadd.f32 %v3277, %v3645
          %v3647 = vpop.f32.mrb[0].mxu0
          %3648 = vmatprep.mubr.f32.mxu0 0.0
          %3649 = vmatmul.mubr.f32.gmra.mrb[0].mxu0 %v3411
          %v3650 = vpop.f32.mrb[0].mxu0
          %v3651 = vadd.f32 %v3282, %v3650
          %v3652 = vpop.f32.mrb[0].mxu0
          %3653 = vmatprep.mubr.f32.mxu0 0.0
          %3654 = vmatmul.mubr.f32.gmra.mrb[0].mxu0 %v3414
          %v3655 = vpop.f32.mrb[0].mxu0
          %v3656 = vadd.f32 %v3287, %v3655
          %v3657 = vpop.f32.mrb[0].mxu0
          %3658 = vmatprep.mubr.f32.mxu0 0.0
          %3659 = vmatmul.mubr.f32.gmra.mrb[0].mxu0 %v3417
          %v3660 = vpop.f32.mrb[0].mxu0
          %v3661 = vadd.f32 %v3292, %v3660
          %v3662 = vpop.f32.mrb[0].mxu0
          %3663 = vmatprep.mubr.f32.mxu0 0.0
          %3664 = vmatmul.mubr.f32.gmra.mrb[0].mxu0 %v3420
          %v3665 = vpop.f32.mrb[0].mxu0
          %v3666 = vadd.f32 %v3297, %v3665
          %v3667 = vpop.f32.mrb[0].mxu0
          %3668 = vmatprep.mubr.f32.mxu0 0.0
          %3669 = vmatmul.mubr.f32.gmra.mrb[0].mxu0 %v3423
          %v3670 = vpop.f32.mrb[0].mxu0
          %v3671 = vadd.f32 %v3302, %v3670
          %v3672 = vpop.f32.mrb[0].mxu0
          %3673 = vmatprep.mubr.f32.mxu0 0.0
          %3674 = vmatmul.mubr.f32.gmra.mrb[0].mxu0 %v3426
          %v3675 = vpop.f32.mrb[0].mxu0
          %v3676 = vadd.f32 %v3307, %v3675
          %v3677 = vpop.f32.mrb[0].mxu0
          %3678 = vmatprep.mubr.f32.mxu0 0.0
          %3679 = vmatmul.mubr.f32.gmra.mrb[0].mxu0 %v3429
          %v3680 = vpop.f32.mrb[0].mxu0
          %v3681 = vadd.f32 %v3312, %v3680
          %v3682 = vpop.f32.mrb[0].mxu0
          %3683 = vmatprep.mubr.f32.mxu0 0.0
          %3684 = vmatmul.mubr.f32.gmra.mrb[0].mxu0 %v3432
          %v3685 = vpop.f32.mrb[0].mxu0
          %v3686 = vadd.f32 %v3317, %v3685
          %v3687 = vpop.f32.mrb[0].mxu0
          %3688 = vdwg.mxu0
          %v3689 = vld [vmem:[#allocation4 + $0x2] sm:$0xff]
          %v3690 = vld [vmem:[#allocation4 + $0xa] sm:$0xff]
          %v3691 = vld [vmem:[#allocation4 + $0x12] sm:$0xff]
          %v3692 = vld [vmem:[#allocation4 + $0x1a] sm:$0xff]
          %v3693 = vld [vmem:[#allocation4 + $0x22] sm:$0xff]
          %v3694 = vld [vmem:[#allocation4 + $0x2a] sm:$0xff]
          %v3695 = vld [vmem:[#allocation4 + $0x32] sm:$0xff]
          %v3696 = vld [vmem:[#allocation4 + $0x3a] sm:$0xff]
          %v3697 = vld [vmem:[#allocation4 + $0x42] sm:$0xff]
          %v3698 = vld [vmem:[#allocation4 + $0x4a] sm:$0xff]
          %v3699 = vld [vmem:[#allocation4 + $0x52] sm:$0xff]
          %v3700 = vld [vmem:[#allocation4 + $0x5a] sm:$0xff]
          %v3701 = vld [vmem:[#allocation4 + $0x62] sm:$0xff]
          %v3702 = vld [vmem:[#allocation4 + $0x6a] sm:$0xff]
          %v3703 = vld [vmem:[#allocation4 + $0x72] sm:$0xff]
          %v3704 = vld [vmem:[#allocation4 + $0x7a] sm:$0xff]
          %v3705 = vld [vmem:[#allocation4 + $0x82] sm:$0xff]
          %v3706 = vld [vmem:[#allocation4 + $0x8a] sm:$0xff]
          %v3707 = vld [vmem:[#allocation4 + $0x92] sm:$0xff]
          %v3708 = vld [vmem:[#allocation4 + $0x9a] sm:$0xff]
          %v3709 = vld [vmem:[#allocation4 + $0xa2] sm:$0xff]
          %v3710 = vld [vmem:[#allocation4 + $0xaa] sm:$0xff]
          %v3711 = vld [vmem:[#allocation4 + $0xb2] sm:$0xff]
          %v3712 = vld [vmem:[#allocation4 + $0xba] sm:$0xff]
          %v3713 = vld [vmem:[#allocation4 + $0xc2] sm:$0xff]
          %v3714 = vld [vmem:[#allocation4 + $0xca] sm:$0xff]
          %v3715 = vld [vmem:[#allocation4 + $0xd2] sm:$0xff]
          %v3716 = vld [vmem:[#allocation4 + $0xda] sm:$0xff]
          %v3717 = vld [vmem:[#allocation4 + $0xe2] sm:$0xff]
          %v3718 = vld [vmem:[#allocation4 + $0xea] sm:$0xff]
          %v3719 = vld [vmem:[#allocation4 + $0xf2] sm:$0xff]
          %v3720 = vld [vmem:[#allocation4 + $0xfa] sm:$0xff]
          %v3721 = vld [vmem:[#allocation4 + $0x102] sm:$0xff]
          %v3722 = vld [vmem:[#allocation4 + $0x10a] sm:$0xff]
          %v3723 = vld [vmem:[#allocation4 + $0x112] sm:$0xff]
          %v3724 = vld [vmem:[#allocation4 + $0x11a] sm:$0xff]
          %v3725 = vld [vmem:[#allocation4 + $0x122] sm:$0xff]
          %v3726 = vld [vmem:[#allocation4 + $0x12a] sm:$0xf]
          %v3728 = vsel %vm2823, %v3689, 0
          %v3731 = vsel %vm2823, %v3690, 0
          %v3734 = vsel %vm2823, %v3691, 0
          %v3737 = vsel %vm2823, %v3692, 0
          %v3740 = vsel %vm2823, %v3693, 0
          %v3743 = vsel %vm2823, %v3694, 0
          %v3746 = vsel %vm2823, %v3695, 0
          %v3749 = vsel %vm2823, %v3696, 0
          %v3752 = vsel %vm2823, %v3697, 0
          %v3755 = vsel %vm2823, %v3698, 0
          %v3758 = vsel %vm2823, %v3699, 0
          %v3761 = vsel %vm2823, %v3700, 0
          %v3764 = vsel %vm2823, %v3701, 0
          %v3767 = vsel %vm2823, %v3702, 0
          %v3770 = vsel %vm2823, %v3703, 0
          %v3773 = vsel %vm2823, %v3704, 0
          %v3776 = vsel %vm2823, %v3705, 0
          %v3779 = vsel %vm2823, %v3706, 0
          %v3782 = vsel %vm2823, %v3707, 0
          %v3785 = vsel %vm2823, %v3708, 0
          %v3788 = vsel %vm2823, %v3709, 0
          %v3791 = vsel %vm2823, %v3710, 0
          %v3794 = vsel %vm2823, %v3711, 0
          %v3797 = vsel %vm2823, %v3712, 0
          %v3800 = vsel %vm2823, %v3713, 0
          %v3803 = vsel %vm2823, %v3714, 0
          %v3806 = vsel %vm2823, %v3715, 0
          %v3809 = vsel %vm2823, %v3716, 0
          %v3812 = vsel %vm2823, %v3717, 0
          %v3815 = vsel %vm2823, %v3718, 0
          %v3818 = vsel %vm2823, %v3719, 0
          %v3821 = vsel %vm2823, %v3720, 0
          %v3824 = vsel %vm2823, %v3721, 0
          %v3827 = vsel %vm2823, %v3722, 0
          %v3830 = vsel %vm2823, %v3723, 0
          %v3833 = vsel %vm2823, %v3724, 0
          %v3836 = vsel %vm2823, %v3725, 0
          %v3839 = vsel %vm2823, %v3726, 0
          %3841 = vmatprep.subr.mxu0 0.0
          %3842 = vmatpush1.msra.mxu0 %v2685
          %3843 = vmatprep.subr.mxu0 0.0
          %3844 = vmatpush1.msra.mxu0 0.0
          %3845 = vmatprep.subr.mxu0 0.0
          %3846 = vmatpush1.msra.mxu0 0.0
          %3847 = vmatprep.subr.mxu0 0.0
          %3848 = vmatpush1.msra.mxu0 0.0
          %3849 = vmatprep.subr.mxu0 0.0
          %3850 = vmatpush1.msra.mxu0 0.0
          %3851 = vmatprep.subr.mxu0 0.0
          %3852 = vmatpush1.msra.mxu0 0.0
          %3853 = vmatprep.subr.mxu0 0.0
          %3854 = vmatpush1.msra.mxu0 0.0
          %3855 = vmatprep.subr.mxu0 0.0
          %3856 = vmatpush1.msra.mxu0 0.0
          %3857 = vmatprep.subr.mxu0 0.0
          %3858 = vmatpush1.msra.mxu0 0.0
          %3859 = vmatprep.subr.mxu0 0.0
          %3860 = vmatpush1.msra.mxu0 0.0
          %3861 = vmatprep.subr.mxu0 0.0
          %3862 = vmatpush1.msra.mxu0 0.0
          %3863 = vmatprep.subr.mxu0 0.0
          %3864 = vmatpush1.msra.mxu0 0.0
          %3865 = vmatprep.subr.mxu0 0.0
          %3866 = vmatpush1.msra.mxu0 0.0
          %3867 = vmatprep.subr.mxu0 0.0
          %3868 = vmatpush1.msra.mxu0 0.0
          %3869 = vmatprep.subr.mxu0 0.0
          %3870 = vmatpush1.msra.mxu0 0.0
          %3871 = vmatprep.subr.mxu0 0.0
          %3872 = vmatpush1.msra.mxu0 0.0
          %3873 = vmatprep.subr.mxu0 0.0
          %3874 = vmatpush1.msra.mxu0 0.0
          %3875 = vmatprep.subr.mxu0 0.0
          %3876 = vmatpush1.msra.mxu0 0.0
          %3877 = vmatprep.subr.mxu0 0.0
          %3878 = vmatpush1.msra.mxu0 0.0
          %3879 = vmatprep.subr.mxu0 0.0
          %3880 = vmatpush1.msra.mxu0 0.0
          %3881 = vmatprep.subr.mxu0 0.0
          %3882 = vmatpush1.msra.mxu0 0.0
          %3883 = vmatprep.subr.mxu0 0.0
          %3884 = vmatpush1.msra.mxu0 0.0
          %3885 = vmatprep.subr.mxu0 0.0
          %3886 = vmatpush1.msra.mxu0 0.0
          %3887 = vmatprep.subr.mxu0 0.0
          %3888 = vmatpush1.msra.mxu0 0.0
          %3889 = vmatprep.subr.mxu0 0.0
          %3890 = vmatpush1.msra.mxu0 0.0
          %3891 = vmatprep.subr.mxu0 0.0
          %3892 = vmatpush1.msra.mxu0 0.0
          %3893 = vmatprep.subr.mxu0 0.0
          %3894 = vmatpush1.msra.mxu0 0.0
          %3895 = vmatprep.subr.mxu0 0.0
          %3896 = vmatpush1.msra.mxu0 0.0
          %3897 = vmatprep.subr.mxu0 0.0
          %3898 = vmatpush1.msra.mxu0 0.0
          %3899 = vmatprep.subr.mxu0 0.0
          %3900 = vmatpush1.msra.mxu0 0.0
          %3901 = vmatprep.subr.mxu0 0.0
          %3902 = vmatpush1.msra.mxu0 0.0
          %3903 = vmatprep.subr.mxu0 0.0
          %3904 = vmatpush1.msra.mxu0 0.0
          %3905 = vmatprep.mubr.f32.mxu0 0.0
          %3906 = vmatmul.mubr.f32.gmra.mrb[0].mxu0 %v3728
          %v3907 = vpop.f32.mrb[0].mxu0
          %v3908 = vadd.f32 0.0, %v3907
          %v3909 = vpop.f32.mrb[0].mxu0
          %3910 = vmatprep.mubr.f32.mxu0 0.0
          %3911 = vmatmul.mubr.f32.gmra.mrb[0].mxu0 %v3731
          %v3912 = vpop.f32.mrb[0].mxu0
          %v3913 = vadd.f32 0.0, %v3912
          %v3914 = vpop.f32.mrb[0].mxu0
          %3915 = vmatprep.mubr.f32.mxu0 0.0
          %3916 = vmatmul.mubr.f32.gmra.mrb[0].mxu0 %v3734
          %v3917 = vpop.f32.mrb[0].mxu0
          %v3918 = vadd.f32 0.0, %v3917
          %v3919 = vpop.f32.mrb[0].mxu0
          %3920 = vmatprep.mubr.f32.mxu0 0.0
          %3921 = vmatmul.mubr.f32.gmra.mrb[0].mxu0 %v3737
          %v3922 = vpop.f32.mrb[0].mxu0
          %v3923 = vadd.f32 0.0, %v3922
          %v3924 = vpop.f32.mrb[0].mxu0
          %3925 = vmatprep.mubr.f32.mxu0 0.0
          %3926 = vmatmul.mubr.f32.gmra.mrb[0].mxu0 %v3740
          %v3927 = vpop.f32.mrb[0].mxu0
          %v3928 = vadd.f32 0.0, %v3927
          %v3929 = vpop.f32.mrb[0].mxu0
          %3930 = vmatprep.mubr.f32.mxu0 0.0
          %3931 = vmatmul.mubr.f32.gmra.mrb[0].mxu0 %v3743
          %v3932 = vpop.f32.mrb[0].mxu0
          %v3933 = vadd.f32 0.0, %v3932
          %v3934 = vpop.f32.mrb[0].mxu0
          %3935 = vmatprep.mubr.f32.mxu0 0.0
          %3936 = vmatmul.mubr.f32.gmra.mrb[0].mxu0 %v3746
          %v3937 = vpop.f32.mrb[0].mxu0
          %v3938 = vadd.f32 0.0, %v3937
          %v3939 = vpop.f32.mrb[0].mxu0
          %3940 = vmatprep.mubr.f32.mxu0 0.0
          %3941 = vmatmul.mubr.f32.gmra.mrb[0].mxu0 %v3749
          %v3942 = vpop.f32.mrb[0].mxu0
          %v3943 = vadd.f32 0.0, %v3942
          %v3944 = vpop.f32.mrb[0].mxu0
          %3945 = vmatprep.mubr.f32.mxu0 0.0
          %3946 = vmatmul.mubr.f32.gmra.mrb[0].mxu0 %v3752
          %v3947 = vpop.f32.mrb[0].mxu0
          %v3948 = vadd.f32 0.0, %v3947
          %v3949 = vpop.f32.mrb[0].mxu0
          %3950 = vmatprep.mubr.f32.mxu0 0.0
          %3951 = vmatmul.mubr.f32.gmra.mrb[0].mxu0 %v3755
          %v3952 = vpop.f32.mrb[0].mxu0
          %v3953 = vadd.f32 0.0, %v3952
          %v3954 = vpop.f32.mrb[0].mxu0
          %3955 = vmatprep.mubr.f32.mxu0 0.0
          %3956 = vmatmul.mubr.f32.gmra.mrb[0].mxu0 %v3758
          %v3957 = vpop.f32.mrb[0].mxu0
          %v3958 = vadd.f32 0.0, %v3957
          %v3959 = vpop.f32.mrb[0].mxu0
          %3960 = vmatprep.mubr.f32.mxu0 0.0
          %3961 = vmatmul.mubr.f32.gmra.mrb[0].mxu0 %v3761
          %v3962 = vpop.f32.mrb[0].mxu0
          %v3963 = vadd.f32 0.0, %v3962
          %v3964 = vpop.f32.mrb[0].mxu0
          %3965 = vmatprep.mubr.f32.mxu0 0.0
          %3966 = vmatmul.mubr.f32.gmra.mrb[0].mxu0 %v3764
          %v3967 = vpop.f32.mrb[0].mxu0
          %v3968 = vadd.f32 0.0, %v3967
          %v3969 = vpop.f32.mrb[0].mxu0
          %3970 = vmatprep.mubr.f32.mxu0 0.0
          %3971 = vmatmul.mubr.f32.gmra.mrb[0].mxu0 %v3767
          %v3972 = vpop.f32.mrb[0].mxu0
          %v3973 = vadd.f32 0.0, %v3972
          %v3974 = vpop.f32.mrb[0].mxu0
          %3975 = vmatprep.mubr.f32.mxu0 0.0
          %3976 = vmatmul.mubr.f32.gmra.mrb[0].mxu0 %v3770
          %v3977 = vpop.f32.mrb[0].mxu0
          %v3978 = vadd.f32 0.0, %v3977
          %v3979 = vpop.f32.mrb[0].mxu0
          %3980 = vmatprep.mubr.f32.mxu0 0.0
          %3981 = vmatmul.mubr.f32.gmra.mrb[0].mxu0 %v3773
          %v3982 = vpop.f32.mrb[0].mxu0
          %v3983 = vadd.f32 0.0, %v3982
          %v3984 = vpop.f32.mrb[0].mxu0
          %3985 = vmatprep.mubr.f32.mxu0 0.0
          %3986 = vmatmul.mubr.f32.gmra.mrb[0].mxu0 %v3776
          %v3987 = vpop.f32.mrb[0].mxu0
          %v3988 = vadd.f32 0.0, %v3987
          %v3989 = vpop.f32.mrb[0].mxu0
          %3990 = vmatprep.mubr.f32.mxu0 0.0
          %3991 = vmatmul.mubr.f32.gmra.mrb[0].mxu0 %v3779
          %v3992 = vpop.f32.mrb[0].mxu0
          %v3993 = vadd.f32 0.0, %v3992
          %v3994 = vpop.f32.mrb[0].mxu0
          %3995 = vmatprep.mubr.f32.mxu0 0.0
          %3996 = vmatmul.mubr.f32.gmra.mrb[0].mxu0 %v3782
          %v3997 = vpop.f32.mrb[0].mxu0
          %v3998 = vadd.f32 0.0, %v3997
          %v3999 = vpop.f32.mrb[0].mxu0
          %4000 = vmatprep.mubr.f32.mxu0 0.0
          %4001 = vmatmul.mubr.f32.gmra.mrb[0].mxu0 %v3785
          %v4002 = vpop.f32.mrb[0].mxu0
          %v4003 = vadd.f32 0.0, %v4002
          %v4004 = vpop.f32.mrb[0].mxu0
          %4005 = vmatprep.mubr.f32.mxu0 0.0
          %4006 = vmatmul.mubr.f32.gmra.mrb[0].mxu0 %v3788
          %v4007 = vpop.f32.mrb[0].mxu0
          %v4008 = vadd.f32 0.0, %v4007
          %v4009 = vpop.f32.mrb[0].mxu0
          %4010 = vmatprep.mubr.f32.mxu0 0.0
          %4011 = vmatmul.mubr.f32.gmra.mrb[0].mxu0 %v3791
          %v4012 = vpop.f32.mrb[0].mxu0
          %v4013 = vadd.f32 0.0, %v4012
          %v4014 = vpop.f32.mrb[0].mxu0
          %4015 = vmatprep.mubr.f32.mxu0 0.0
          %4016 = vmatmul.mubr.f32.gmra.mrb[0].mxu0 %v3794
          %v4017 = vpop.f32.mrb[0].mxu0
          %v4018 = vadd.f32 0.0, %v4017
          %v4019 = vpop.f32.mrb[0].mxu0
          %4020 = vmatprep.mubr.f32.mxu0 0.0
          %4021 = vmatmul.mubr.f32.gmra.mrb[0].mxu0 %v3797
          %v4022 = vpop.f32.mrb[0].mxu0
          %v4023 = vadd.f32 0.0, %v4022
          %v4024 = vpop.f32.mrb[0].mxu0
          %4025 = vmatprep.mubr.f32.mxu0 0.0
          %4026 = vmatmul.mubr.f32.gmra.mrb[0].mxu0 %v3800
          %v4027 = vpop.f32.mrb[0].mxu0
          %v4028 = vadd.f32 0.0, %v4027
          %v4029 = vpop.f32.mrb[0].mxu0
          %4030 = vmatprep.mubr.f32.mxu0 0.0
          %4031 = vmatmul.mubr.f32.gmra.mrb[0].mxu0 %v3803
          %v4032 = vpop.f32.mrb[0].mxu0
          %v4033 = vadd.f32 0.0, %v4032
          %v4034 = vpop.f32.mrb[0].mxu0
          %4035 = vmatprep.mubr.f32.mxu0 0.0
          %4036 = vmatmul.mubr.f32.gmra.mrb[0].mxu0 %v3806
          %v4037 = vpop.f32.mrb[0].mxu0
          %v4038 = vadd.f32 0.0, %v4037
          %v4039 = vpop.f32.mrb[0].mxu0
          %4040 = vmatprep.mubr.f32.mxu0 0.0
          %4041 = vmatmul.mubr.f32.gmra.mrb[0].mxu0 %v3809
          %v4042 = vpop.f32.mrb[0].mxu0
          %v4043 = vadd.f32 0.0, %v4042
          %v4044 = vpop.f32.mrb[0].mxu0
          %4045 = vmatprep.mubr.f32.mxu0 0.0
          %4046 = vmatmul.mubr.f32.gmra.mrb[0].mxu0 %v3812
          %v4047 = vpop.f32.mrb[0].mxu0
          %v4048 = vadd.f32 0.0, %v4047
          %v4049 = vpop.f32.mrb[0].mxu0
          %4050 = vmatprep.mubr.f32.mxu0 0.0
          %4051 = vmatmul.mubr.f32.gmra.mrb[0].mxu0 %v3815
          %v4052 = vpop.f32.mrb[0].mxu0
          %v4053 = vadd.f32 0.0, %v4052
          %v4054 = vpop.f32.mrb[0].mxu0
          %4055 = vmatprep.mubr.f32.mxu0 0.0
          %4056 = vmatmul.mubr.f32.gmra.mrb[0].mxu0 %v3818
          %v4057 = vpop.f32.mrb[0].mxu0
          %v4058 = vadd.f32 0.0, %v4057
          %v4059 = vpop.f32.mrb[0].mxu0
          %4060 = vmatprep.mubr.f32.mxu0 0.0
          %4061 = vmatmul.mubr.f32.gmra.mrb[0].mxu0 %v3821
          %v4062 = vpop.f32.mrb[0].mxu0
          %v4063 = vadd.f32 0.0, %v4062
          %v4064 = vpop.f32.mrb[0].mxu0
          %4065 = vmatprep.mubr.f32.mxu0 0.0
          %4066 = vmatmul.mubr.f32.gmra.mrb[0].mxu0 %v3824
          %v4067 = vpop.f32.mrb[0].mxu0
          %v4068 = vadd.f32 0.0, %v4067
          %v4069 = vpop.f32.mrb[0].mxu0
          %4070 = vmatprep.mubr.f32.mxu0 0.0
          %4071 = vmatmul.mubr.f32.gmra.mrb[0].mxu0 %v3827
          %v4072 = vpop.f32.mrb[0].mxu0
          %v4073 = vadd.f32 0.0, %v4072
          %v4074 = vpop.f32.mrb[0].mxu0
          %4075 = vmatprep.mubr.f32.mxu0 0.0
          %4076 = vmatmul.mubr.f32.gmra.mrb[0].mxu0 %v3830
          %v4077 = vpop.f32.mrb[0].mxu0
          %v4078 = vadd.f32 0.0, %v4077
          %v4079 = vpop.f32.mrb[0].mxu0
          %4080 = vmatprep.mubr.f32.mxu0 0.0
          %4081 = vmatmul.mubr.f32.gmra.mrb[0].mxu0 %v3833
          %v4082 = vpop.f32.mrb[0].mxu0
          %v4083 = vadd.f32 0.0, %v4082
          %v4084 = vpop.f32.mrb[0].mxu0
          %4085 = vmatprep.mubr.f32.mxu0 0.0
          %4086 = vmatmul.mubr.f32.gmra.mrb[0].mxu0 %v3836
          %v4087 = vpop.f32.mrb[0].mxu0
          %v4088 = vadd.f32 0.0, %v4087
          %v4089 = vpop.f32.mrb[0].mxu0
          %4090 = vmatprep.mubr.f32.mxu0 0.0
          %4091 = vmatmul.mubr.f32.gmra.mrb[0].mxu0 %v3839
          %v4092 = vpop.f32.mrb[0].mxu0
          %v4093 = vadd.f32 0.0, %v4092
          %v4094 = vpop.f32.mrb[0].mxu0
          %4095 = vdwg.mxu0
          %v4096 = vadd.f32 %v3501, %v3908
          %v4097 = vadd.f32 %v3506, %v3913
          %v4098 = vadd.f32 %v3511, %v3918
          %v4099 = vadd.f32 %v3516, %v3923
          %v4100 = vadd.f32 %v3521, %v3928
          %v4101 = vadd.f32 %v3526, %v3933
          %v4102 = vadd.f32 %v3531, %v3938
          %v4103 = vadd.f32 %v3536, %v3943
          %v4104 = vadd.f32 %v3541, %v3948
          %v4105 = vadd.f32 %v3546, %v3953
          %v4106 = vadd.f32 %v3551, %v3958
          %v4107 = vadd.f32 %v3556, %v3963
          %v4108 = vadd.f32 %v3561, %v3968
          %v4109 = vadd.f32 %v3566, %v3973
          %v4110 = vadd.f32 %v3571, %v3978
          %v4111 = vadd.f32 %v3576, %v3983
          %v4112 = vadd.f32 %v3581, %v3988
          %v4113 = vadd.f32 %v3586, %v3993
          %v4114 = vadd.f32 %v3591, %v3998
          %v4115 = vadd.f32 %v3596, %v4003
          %v4116 = vadd.f32 %v3601, %v4008
          %v4117 = vadd.f32 %v3606, %v4013
          %v4118 = vadd.f32 %v3611, %v4018
          %v4119 = vadd.f32 %v3616, %v4023
          %v4120 = vadd.f32 %v3621, %v4028
          %v4121 = vadd.f32 %v3626, %v4033
          %v4122 = vadd.f32 %v3631, %v4038
          %v4123 = vadd.f32 %v3636, %v4043
          %v4124 = vadd.f32 %v3641, %v4048
          %v4125 = vadd.f32 %v3646, %v4053
          %v4126 = vadd.f32 %v3651, %v4058
          %v4127 = vadd.f32 %v3656, %v4063
          %v4128 = vadd.f32 %v3661, %v4068
          %v4129 = vadd.f32 %v3666, %v4073
          %v4130 = vadd.f32 %v3671, %v4078
          %v4131 = vadd.f32 %v3676, %v4083
          %v4132 = vadd.f32 %v3681, %v4088
          %v4133 = vadd.f32 %v3686, %v4093
          %v4135 = vlaneseq
          %v4136 = vshrl.u32 %v4135, 7
          %v4137 = vsub.s32 0, %v4136
          %v4138 = vrot.slane %v2686, %v4137
          %v4140 = vadd.f32 %v4096, %v4138
          %v4141 = vadd.f32 %v4097, %v4138
          %v4142 = vadd.f32 %v4098, %v4138
          %v4143 = vadd.f32 %v4099, %v4138
          %v4144 = vadd.f32 %v4100, %v4138
          %v4145 = vadd.f32 %v4101, %v4138
          %v4146 = vadd.f32 %v4102, %v4138
          %v4147 = vadd.f32 %v4103, %v4138
          %v4148 = vadd.f32 %v4104, %v4138
          %v4149 = vadd.f32 %v4105, %v4138
          %v4150 = vadd.f32 %v4106, %v4138
          %v4151 = vadd.f32 %v4107, %v4138
          %v4152 = vadd.f32 %v4108, %v4138
          %v4153 = vadd.f32 %v4109, %v4138
          %v4154 = vadd.f32 %v4110, %v4138
          %v4155 = vadd.f32 %v4111, %v4138
          %v4156 = vadd.f32 %v4112, %v4138
          %v4157 = vadd.f32 %v4113, %v4138
          %v4158 = vadd.f32 %v4114, %v4138
          %v4159 = vadd.f32 %v4115, %v4138
          %v4160 = vadd.f32 %v4116, %v4138
          %v4161 = vadd.f32 %v4117, %v4138
          %v4162 = vadd.f32 %v4118, %v4138
          %v4163 = vadd.f32 %v4119, %v4138
          %v4164 = vadd.f32 %v4120, %v4138
          %v4165 = vadd.f32 %v4121, %v4138
          %v4166 = vadd.f32 %v4122, %v4138
          %v4167 = vadd.f32 %v4123, %v4138
          %v4168 = vadd.f32 %v4124, %v4138
          %v4169 = vadd.f32 %v4125, %v4138
          %v4170 = vadd.f32 %v4126, %v4138
          %v4171 = vadd.f32 %v4127, %v4138
          %v4172 = vadd.f32 %v4128, %v4138
          %v4173 = vadd.f32 %v4129, %v4138
          %v4174 = vadd.f32 %v4130, %v4138
          %v4175 = vadd.f32 %v4131, %v4138
          %v4176 = vadd.f32 %v4132, %v4138
          %v4177 = vadd.f32 %v4133, %v4138
          %v4178 = vmax.f32 %v4140, 0.0
          %v4179 = vmax.f32 %v4141, 0.0
          %v4180 = vmax.f32 %v4142, 0.0
          %v4181 = vmax.f32 %v4143, 0.0
          %v4182 = vmax.f32 %v4144, 0.0
          %v4183 = vmax.f32 %v4145, 0.0
          %v4184 = vmax.f32 %v4146, 0.0
          %v4185 = vmax.f32 %v4147, 0.0
          %v4186 = vmax.f32 %v4148, 0.0
          %v4187 = vmax.f32 %v4149, 0.0
          %v4188 = vmax.f32 %v4150, 0.0
          %v4189 = vmax.f32 %v4151, 0.0
          %v4190 = vmax.f32 %v4152, 0.0
          %v4191 = vmax.f32 %v4153, 0.0
          %v4192 = vmax.f32 %v4154, 0.0
          %v4193 = vmax.f32 %v4155, 0.0
          %v4194 = vmax.f32 %v4156, 0.0
          %v4195 = vmax.f32 %v4157, 0.0
          %v4196 = vmax.f32 %v4158, 0.0
          %v4197 = vmax.f32 %v4159, 0.0
          %v4198 = vmax.f32 %v4160, 0.0
          %v4199 = vmax.f32 %v4161, 0.0
          %v4200 = vmax.f32 %v4162, 0.0
          %v4201 = vmax.f32 %v4163, 0.0
          %v4202 = vmax.f32 %v4164, 0.0
          %v4203 = vmax.f32 %v4165, 0.0
          %v4204 = vmax.f32 %v4166, 0.0
          %v4205 = vmax.f32 %v4167, 0.0
          %v4206 = vmax.f32 %v4168, 0.0
          %v4207 = vmax.f32 %v4169, 0.0
          %v4208 = vmax.f32 %v4170, 0.0
          %v4209 = vmax.f32 %v4171, 0.0
          %v4210 = vmax.f32 %v4172, 0.0
          %v4211 = vmax.f32 %v4173, 0.0
          %v4212 = vmax.f32 %v4174, 0.0
          %v4213 = vmax.f32 %v4175, 0.0
          %v4214 = vmax.f32 %v4176, 0.0
          %v4215 = vmax.f32 %v4177, 0.0
          %4216 = vst [vmem:[#allocation5] sm:$0xff] %v4178
          %4217 = vst [vmem:[#allocation5 + $0x8] sm:$0xff] %v4179
          %4218 = vst [vmem:[#allocation5 + $0x10] sm:$0xff] %v4180
          %4219 = vst [vmem:[#allocation5 + $0x18] sm:$0xff] %v4181
          %4220 = vst [vmem:[#allocation5 + $0x20] sm:$0xff] %v4182
          %4221 = vst [vmem:[#allocation5 + $0x28] sm:$0xff] %v4183
          %4222 = vst [vmem:[#allocation5 + $0x30] sm:$0xff] %v4184
          %4223 = vst [vmem:[#allocation5 + $0x38] sm:$0xff] %v4185
          %4224 = vst [vmem:[#allocation5 + $0x40] sm:$0xff] %v4186
          %4225 = vst [vmem:[#allocation5 + $0x48] sm:$0xff] %v4187
          %4226 = vst [vmem:[#allocation5 + $0x50] sm:$0xff] %v4188
          %4227 = vst [vmem:[#allocation5 + $0x58] sm:$0xff] %v4189
          %4228 = vst [vmem:[#allocation5 + $0x60] sm:$0xff] %v4190
          %4229 = vst [vmem:[#allocation5 + $0x68] sm:$0xff] %v4191
          %4230 = vst [vmem:[#allocation5 + $0x70] sm:$0xff] %v4192
          %4231 = vst [vmem:[#allocation5 + $0x78] sm:$0xff] %v4193
          %4232 = vst [vmem:[#allocation5 + $0x80] sm:$0xff] %v4194
          %4233 = vst [vmem:[#allocation5 + $0x88] sm:$0xff] %v4195
          %4234 = vst [vmem:[#allocation5 + $0x90] sm:$0xff] %v4196
          %4235 = vst [vmem:[#allocation5 + $0x98] sm:$0xff] %v4197
          %4236 = vst [vmem:[#allocation5 + $0xa0] sm:$0xff] %v4198
          %4237 = vst [vmem:[#allocation5 + $0xa8] sm:$0xff] %v4199
          %4238 = vst [vmem:[#allocation5 + $0xb0] sm:$0xff] %v4200
          %4239 = vst [vmem:[#allocation5 + $0xb8] sm:$0xff] %v4201
          %4240 = vst [vmem:[#allocation5 + $0xc0] sm:$0xff] %v4202
          %4241 = vst [vmem:[#allocation5 + $0xc8] sm:$0xff] %v4203
          %4242 = vst [vmem:[#allocation5 + $0xd0] sm:$0xff] %v4204
          %4243 = vst [vmem:[#allocation5 + $0xd8] sm:$0xff] %v4205
          %4244 = vst [vmem:[#allocation5 + $0xe0] sm:$0xff] %v4206
          %4245 = vst [vmem:[#allocation5 + $0xe8] sm:$0xff] %v4207
          %4246 = vst [vmem:[#allocation5 + $0xf0] sm:$0xff] %v4208
          %4247 = vst [vmem:[#allocation5 + $0xf8] sm:$0xff] %v4209
          %4248 = vst [vmem:[#allocation5 + $0x100] sm:$0xff] %v4210
          %4249 = vst [vmem:[#allocation5 + $0x108] sm:$0xff] %v4211
          %4250 = vst [vmem:[#allocation5 + $0x110] sm:$0xff] %v4212
          %4251 = vst [vmem:[#allocation5 + $0x118] sm:$0xff] %v4213
          %4252 = vst [vmem:[#allocation5 + $0x120] sm:$0xff] %v4214
          %4253 = vst [vmem:[#allocation5 + $0x128] sm:$0xf] %v4215
          %v4254 = vld [vmem:[#allocation5] ss:$2 sm:$0xff]
          %s4255 = scalar_lea.vmem [#allocation5], 16
          %v4256 = vld [vmem:[%s4255] ss:$2 sm:$0xff]
          %s4257 = scalar_lea.vmem [#allocation5], 32
          %v4258 = vld [vmem:[%s4257] ss:$2 sm:$0xff]
          %s4259 = scalar_lea.vmem [#allocation5], 48
          %v4260 = vld [vmem:[%s4259] ss:$2 sm:$0xff]
          %s4261 = scalar_lea.vmem [#allocation5], 64
          %v4262 = vld [vmem:[%s4261] ss:$2 sm:$0xff]
          %s4263 = scalar_lea.vmem [#allocation5], 80
          %v4264 = vld [vmem:[%s4263] ss:$2 sm:$0xff]
          %s4265 = scalar_lea.vmem [#allocation5], 96
          %v4266 = vld [vmem:[%s4265] ss:$2 sm:$0xff]
          %s4267 = scalar_lea.vmem [#allocation5], 112
          %v4268 = vld [vmem:[%s4267] ss:$2 sm:$0xff]
          %s4269 = scalar_lea.vmem [#allocation5], 128
          %v4270 = vld [vmem:[%s4269] ss:$2 sm:$0xff]
          %s4271 = scalar_lea.vmem [#allocation5], 144
          %v4272 = vld [vmem:[%s4271] ss:$2 sm:$0xff]
          %s4273 = scalar_lea.vmem [#allocation5], 160
          %v4274 = vld [vmem:[%s4273] ss:$2 sm:$0xff]
          %s4275 = scalar_lea.vmem [#allocation5], 176
          %v4276 = vld [vmem:[%s4275] ss:$2 sm:$0xff]
          %s4277 = scalar_lea.vmem [#allocation5], 192
          %v4278 = vld [vmem:[%s4277] ss:$2 sm:$0xff]
          %s4279 = scalar_lea.vmem [#allocation5], 208
          %v4280 = vld [vmem:[%s4279] ss:$2 sm:$0xff]
          %s4281 = scalar_lea.vmem [#allocation5], 224
          %v4282 = vld [vmem:[%s4281] ss:$2 sm:$0xff]
          %s4283 = scalar_lea.vmem [#allocation5], 240
          %v4284 = vld [vmem:[%s4283] ss:$2 sm:$0xff]
          %s4285 = scalar_lea.vmem [#allocation5], 256
          %v4286 = vld [vmem:[%s4285] ss:$2 sm:$0xff]
          %s4287 = scalar_lea.vmem [#allocation5], 272
          %v4288 = vld [vmem:[%s4287] ss:$2 sm:$0xff]
          %s4289 = scalar_lea.vmem [#allocation5], 288
          %v4290 = vld [vmem:[%s4289] ss:$2 sm:$0x1f]
          %s4291 = scalar_lea.vmem [#allocation5], 1
          %v4292 = vld [vmem:[%s4291] ss:$2 sm:$0xff]
          %s4293 = scalar_lea.vmem [#allocation5], 17
          %v4294 = vld [vmem:[%s4293] ss:$2 sm:$0xff]
          %s4295 = scalar_lea.vmem [#allocation5], 33
          %v4296 = vld [vmem:[%s4295] ss:$2 sm:$0xff]
          %s4297 = scalar_lea.vmem [#allocation5], 49
          %v4298 = vld [vmem:[%s4297] ss:$2 sm:$0xff]
          %s4299 = scalar_lea.vmem [#allocation5], 65
          %v4300 = vld [vmem:[%s4299] ss:$2 sm:$0xff]
          %s4301 = scalar_lea.vmem [#allocation5], 81
          %v4302 = vld [vmem:[%s4301] ss:$2 sm:$0xff]
          %s4303 = scalar_lea.vmem [#allocation5], 97
          %v4304 = vld [vmem:[%s4303] ss:$2 sm:$0xff]
          %s4305 = scalar_lea.vmem [#allocation5], 113
          %v4306 = vld [vmem:[%s4305] ss:$2 sm:$0xff]
          %s4307 = scalar_lea.vmem [#allocation5], 129
          %v4308 = vld [vmem:[%s4307] ss:$2 sm:$0xff]
          %s4309 = scalar_lea.vmem [#allocation5], 145
          %v4310 = vld [vmem:[%s4309] ss:$2 sm:$0xff]
          %s4311 = scalar_lea.vmem [#allocation5], 161
          %v4312 = vld [vmem:[%s4311] ss:$2 sm:$0xff]
          %s4313 = scalar_lea.vmem [#allocation5], 177
          %v4314 = vld [vmem:[%s4313] ss:$2 sm:$0xff]
          %s4315 = scalar_lea.vmem [#allocation5], 193
          %v4316 = vld [vmem:[%s4315] ss:$2 sm:$0xff]
          %s4317 = scalar_lea.vmem [#allocation5], 209
          %v4318 = vld [vmem:[%s4317] ss:$2 sm:$0xff]
          %s4319 = scalar_lea.vmem [#allocation5], 225
          %v4320 = vld [vmem:[%s4319] ss:$2 sm:$0xff]
          %s4321 = scalar_lea.vmem [#allocation5], 241
          %v4322 = vld [vmem:[%s4321] ss:$2 sm:$0xff]
          %s4323 = scalar_lea.vmem [#allocation5], 257
          %v4324 = vld [vmem:[%s4323] ss:$2 sm:$0xff]
          %s4325 = scalar_lea.vmem [#allocation5], 273
          %v4326 = vld [vmem:[%s4325] ss:$2 sm:$0xff]
          %s4327 = scalar_lea.vmem [#allocation5], 289
          %v4328 = vld [vmem:[%s4327] ss:$2 sm:$0x1f]
          %v4329 = vmax.f32 %v4254, %v4292
          %v4330 = vmax.f32 %v4256, %v4294
          %v4331 = vmax.f32 %v4258, %v4296
          %v4332 = vmax.f32 %v4260, %v4298
          %v4333 = vmax.f32 %v4262, %v4300
          %v4334 = vmax.f32 %v4264, %v4302
          %v4335 = vmax.f32 %v4266, %v4304
          %v4336 = vmax.f32 %v4268, %v4306
          %v4337 = vmax.f32 %v4270, %v4308
          %v4338 = vmax.f32 %v4272, %v4310
          %v4339 = vmax.f32 %v4274, %v4312
          %v4340 = vmax.f32 %v4276, %v4314
          %v4341 = vmax.f32 %v4278, %v4316
          %v4342 = vmax.f32 %v4280, %v4318
          %v4343 = vmax.f32 %v4282, %v4320
          %v4344 = vmax.f32 %v4284, %v4322
          %v4345 = vmax.f32 %v4286, %v4324
          %v4346 = vmax.f32 %v4288, %v4326
          %v4347 = vmax.f32 %v4290, %v4328
          %s4348 = scalar_lea.vmem [#allocation5], 2
          %v4349 = vld [vmem:[%s4348] ss:$2 sm:$0xff]
          %s4350 = scalar_lea.vmem [#allocation5], 18
          %v4351 = vld [vmem:[%s4350] ss:$2 sm:$0xff]
          %s4352 = scalar_lea.vmem [#allocation5], 34
          %v4353 = vld [vmem:[%s4352] ss:$2 sm:$0xff]
          %s4354 = scalar_lea.vmem [#allocation5], 50
          %v4355 = vld [vmem:[%s4354] ss:$2 sm:$0xff]
          %s4356 = scalar_lea.vmem [#allocation5], 66
          %v4357 = vld [vmem:[%s4356] ss:$2 sm:$0xff]
          %s4358 = scalar_lea.vmem [#allocation5], 82
          %v4359 = vld [vmem:[%s4358] ss:$2 sm:$0xff]
          %s4360 = scalar_lea.vmem [#allocation5], 98
          %v4361 = vld [vmem:[%s4360] ss:$2 sm:$0xff]
          %s4362 = scalar_lea.vmem [#allocation5], 114
          %v4363 = vld [vmem:[%s4362] ss:$2 sm:$0xff]
          %s4364 = scalar_lea.vmem [#allocation5], 130
          %v4365 = vld [vmem:[%s4364] ss:$2 sm:$0xff]
          %s4366 = scalar_lea.vmem [#allocation5], 146
          %v4367 = vld [vmem:[%s4366] ss:$2 sm:$0xff]
          %s4368 = scalar_lea.vmem [#allocation5], 162
          %v4369 = vld [vmem:[%s4368] ss:$2 sm:$0xff]
          %s4370 = scalar_lea.vmem [#allocation5], 178
          %v4371 = vld [vmem:[%s4370] ss:$2 sm:$0xff]
          %s4372 = scalar_lea.vmem [#allocation5], 194
          %v4373 = vld [vmem:[%s4372] ss:$2 sm:$0xff]
          %s4374 = scalar_lea.vmem [#allocation5], 210
          %v4375 = vld [vmem:[%s4374] ss:$2 sm:$0xff]
          %s4376 = scalar_lea.vmem [#allocation5], 226
          %v4377 = vld [vmem:[%s4376] ss:$2 sm:$0xff]
          %s4378 = scalar_lea.vmem [#allocation5], 242
          %v4379 = vld [vmem:[%s4378] ss:$2 sm:$0xff]
          %s4380 = scalar_lea.vmem [#allocation5], 258
          %v4381 = vld [vmem:[%s4380] ss:$2 sm:$0xff]
          %s4382 = scalar_lea.vmem [#allocation5], 274
          %v4383 = vld [vmem:[%s4382] ss:$2 sm:$0xff]
          %s4384 = scalar_lea.vmem [#allocation5], 290
          %v4385 = vld [vmem:[%s4384] ss:$2 sm:$0x1f]
          %v4386 = vmax.f32 %v4329, %v4349
          %v4387 = vmax.f32 %v4330, %v4351
          %v4388 = vmax.f32 %v4331, %v4353
          %v4389 = vmax.f32 %v4332, %v4355
          %v4390 = vmax.f32 %v4333, %v4357
          %v4391 = vmax.f32 %v4334, %v4359
          %v4392 = vmax.f32 %v4335, %v4361
          %v4393 = vmax.f32 %v4336, %v4363
          %v4394 = vmax.f32 %v4337, %v4365
          %v4395 = vmax.f32 %v4338, %v4367
          %v4396 = vmax.f32 %v4339, %v4369
          %v4397 = vmax.f32 %v4340, %v4371
          %v4398 = vmax.f32 %v4341, %v4373
          %v4399 = vmax.f32 %v4342, %v4375
          %v4400 = vmax.f32 %v4343, %v4377
          %v4401 = vmax.f32 %v4344, %v4379
          %v4402 = vmax.f32 %v4345, %v4381
          %v4403 = vmax.f32 %v4346, %v4383
          %v4404 = vmax.f32 %v4347, %v4385
          %4405 = vst [vmem:[#allocation6] sm:$0x1] 0.0
          %4406 = vst [vmem:[#allocation6 + $0x96] sm:$0x1] 0.0
          %4407 = vst [vmem:[#allocation6 + $0x1] sm:$0xff] %v4386
          %4408 = vst [vmem:[#allocation6 + $0x9] sm:$0xff] %v4387
          %4409 = vst [vmem:[#allocation6 + $0x11] sm:$0xff] %v4388
          %4410 = vst [vmem:[#allocation6 + $0x19] sm:$0xff] %v4389
          %4411 = vst [vmem:[#allocation6 + $0x21] sm:$0xff] %v4390
          %4412 = vst [vmem:[#allocation6 + $0x29] sm:$0xff] %v4391
          %4413 = vst [vmem:[#allocation6 + $0x31] sm:$0xff] %v4392
          %4414 = vst [vmem:[#allocation6 + $0x39] sm:$0xff] %v4393
          %4415 = vst [vmem:[#allocation6 + $0x41] sm:$0xff] %v4394
          %4416 = vst [vmem:[#allocation6 + $0x49] sm:$0xff] %v4395
          %4417 = vst [vmem:[#allocation6 + $0x51] sm:$0xff] %v4396
          %4418 = vst [vmem:[#allocation6 + $0x59] sm:$0xff] %v4397
          %4419 = vst [vmem:[#allocation6 + $0x61] sm:$0xff] %v4398
          %4420 = vst [vmem:[#allocation6 + $0x69] sm:$0xff] %v4399
          %4421 = vst [vmem:[#allocation6 + $0x71] sm:$0xff] %v4400
          %4422 = vst [vmem:[#allocation6 + $0x79] sm:$0xff] %v4401
          %4423 = vst [vmem:[#allocation6 + $0x81] sm:$0xff] %v4402
          %4424 = vst [vmem:[#allocation6 + $0x89] sm:$0xff] %v4403
          %4425 = vst [vmem:[#allocation6 + $0x91] sm:$0x1f] %v4404
          %v4426 = vld [vmem:[#allocation6] sm:$0xff]
          %v4427 = vld [vmem:[#allocation6 + $0x8] sm:$0xff]
          %v4428 = vld [vmem:[#allocation6 + $0x10] sm:$0xff]
          %v4429 = vld [vmem:[#allocation6 + $0x18] sm:$0xff]
          %v4430 = vld [vmem:[#allocation6 + $0x20] sm:$0xff]
          %v4431 = vld [vmem:[#allocation6 + $0x28] sm:$0xff]
          %v4432 = vld [vmem:[#allocation6 + $0x30] sm:$0xff]
          %v4433 = vld [vmem:[#allocation6 + $0x38] sm:$0xff]
          %v4434 = vld [vmem:[#allocation6 + $0x40] sm:$0xff]
          %v4435 = vld [vmem:[#allocation6 + $0x48] sm:$0xff]
          %v4436 = vld [vmem:[#allocation6 + $0x50] sm:$0xff]
          %v4437 = vld [vmem:[#allocation6 + $0x58] sm:$0xff]
          %v4438 = vld [vmem:[#allocation6 + $0x60] sm:$0xff]
          %v4439 = vld [vmem:[#allocation6 + $0x68] sm:$0xff]
          %v4440 = vld [vmem:[#allocation6 + $0x70] sm:$0xff]
          %v4441 = vld [vmem:[#allocation6 + $0x78] sm:$0xff]
          %v4442 = vld [vmem:[#allocation6 + $0x80] sm:$0xff]
          %v4443 = vld [vmem:[#allocation6 + $0x88] sm:$0xff]
          %v4444 = vld [vmem:[#allocation6 + $0x90] sm:$0x3f]
          %v4445 = vld [vmem:[#allocation6 + $0x1] sm:$0xff]
          %v4446 = vld [vmem:[#allocation6 + $0x9] sm:$0xff]
          %v4447 = vld [vmem:[#allocation6 + $0x11] sm:$0xff]
          %v4448 = vld [vmem:[#allocation6 + $0x19] sm:$0xff]
          %v4449 = vld [vmem:[#allocation6 + $0x21] sm:$0xff]
          %v4450 = vld [vmem:[#allocation6 + $0x29] sm:$0xff]
          %v4451 = vld [vmem:[#allocation6 + $0x31] sm:$0xff]
          %v4452 = vld [vmem:[#allocation6 + $0x39] sm:$0xff]
          %v4453 = vld [vmem:[#allocation6 + $0x41] sm:$0xff]
          %v4454 = vld [vmem:[#allocation6 + $0x49] sm:$0xff]
          %v4455 = vld [vmem:[#allocation6 + $0x51] sm:$0xff]
          %v4456 = vld [vmem:[#allocation6 + $0x59] sm:$0xff]
          %v4457 = vld [vmem:[#allocation6 + $0x61] sm:$0xff]
          %v4458 = vld [vmem:[#allocation6 + $0x69] sm:$0xff]
          %v4459 = vld [vmem:[#allocation6 + $0x71] sm:$0xff]
          %v4460 = vld [vmem:[#allocation6 + $0x79] sm:$0xff]
          %v4461 = vld [vmem:[#allocation6 + $0x81] sm:$0xff]
          %v4462 = vld [vmem:[#allocation6 + $0x89] sm:$0xff]
          %v4463 = vld [vmem:[#allocation6 + $0x91] sm:$0x3f]
          %4464 = vmatprep.subr.mxu0 0.0
          %4465 = vmatpush1.msra.mxu0 %v2703
          %4466 = vmatprep.subr.mxu0 0.0
          %4467 = vmatpush1.msra.mxu0 %v2704
          %4468 = vmatprep.subr.mxu0 0.0
          %4469 = vmatpush1.msra.mxu0 %v2705
          %4470 = vmatprep.subr.mxu0 0.0
          %4471 = vmatpush1.msra.mxu0 %v2706
          %4472 = vmatprep.subr.mxu0 0.0
          %4473 = vmatpush1.msra.mxu0 %v2707
          %4474 = vmatprep.subr.mxu0 0.0
          %4475 = vmatpush1.msra.mxu0 %v2708
          %4476 = vmatprep.subr.mxu0 0.0
          %4477 = vmatpush1.msra.mxu0 %v2709
          %4478 = vmatprep.subr.mxu0 0.0
          %4479 = vmatpush1.msra.mxu0 %v2710
          %4480 = vmatprep.subr.mxu0 0.0
          %4481 = vmatpush1.msra.mxu0 %v2711
          %4482 = vmatprep.subr.mxu0 0.0
          %4483 = vmatpush1.msra.mxu0 %v2712
          %4484 = vmatprep.subr.mxu0 0.0
          %4485 = vmatpush1.msra.mxu0 %v2713
          %4486 = vmatprep.subr.mxu0 0.0
          %4487 = vmatpush1.msra.mxu0 %v2714
          %4488 = vmatprep.subr.mxu0 0.0
          %4489 = vmatpush1.msra.mxu0 %v2715
          %4490 = vmatprep.subr.mxu0 0.0
          %4491 = vmatpush1.msra.mxu0 %v2716
          %4492 = vmatprep.subr.mxu0 0.0
          %4493 = vmatpush1.msra.mxu0 %v2717
          %4494 = vmatprep.subr.mxu0 0.0
          %4495 = vmatpush1.msra.mxu0 %v2718
          %4496 = vmatprep.subr.mxu0 0.0
          %4497 = vmatpush1.msra.mxu0 0.0
          %4498 = vmatprep.subr.mxu0 0.0
          %4499 = vmatpush1.msra.mxu0 0.0
          %4500 = vmatprep.subr.mxu0 0.0
          %4501 = vmatpush1.msra.mxu0 0.0
          %4502 = vmatprep.subr.mxu0 0.0
          %4503 = vmatpush1.msra.mxu0 0.0
          %4504 = vmatprep.subr.mxu0 0.0
          %4505 = vmatpush1.msra.mxu0 0.0
          %4506 = vmatprep.subr.mxu0 0.0
          %4507 = vmatpush1.msra.mxu0 0.0
          %4508 = vmatprep.subr.mxu0 0.0
          %4509 = vmatpush1.msra.mxu0 0.0
          %4510 = vmatprep.subr.mxu0 0.0
          %4511 = vmatpush1.msra.mxu0 0.0
          %4512 = vmatprep.subr.mxu0 0.0
          %4513 = vmatpush1.msra.mxu0 0.0
          %4514 = vmatprep.subr.mxu0 0.0
          %4515 = vmatpush1.msra.mxu0 0.0
          %4516 = vmatprep.subr.mxu0 0.0
          %4517 = vmatpush1.msra.mxu0 0.0
          %4518 = vmatprep.subr.mxu0 0.0
          %4519 = vmatpush1.msra.mxu0 0.0
          %4520 = vmatprep.subr.mxu0 0.0
          %4521 = vmatpush1.msra.mxu0 0.0
          %4522 = vmatprep.subr.mxu0 0.0
          %4523 = vmatpush1.msra.mxu0 0.0
          %4524 = vmatprep.subr.mxu0 0.0
          %4525 = vmatpush1.msra.mxu0 0.0
          %4526 = vmatprep.subr.mxu0 0.0
          %4527 = vmatpush1.msra.mxu0 0.0
          %4528 = vmatprep.mubr.f32.mxu0 0.0
          %4529 = vmatmul.mubr.f32.gmra.mrb[0].mxu0 %v4445
          %v4530 = vpop.f32.mrb[0].mxu0
          %v4531 = vadd.f32 0.0, %v4530
          %v4532 = vpop.f32.mrb[0].mxu0
          %4533 = vmatprep.mubr.f32.mxu0 0.0
          %4534 = vmatmul.mubr.f32.gmra.mrb[0].mxu0 %v4446
          %v4535 = vpop.f32.mrb[0].mxu0
          %v4536 = vadd.f32 0.0, %v4535
          %v4537 = vpop.f32.mrb[0].mxu0
          %4538 = vmatprep.mubr.f32.mxu0 0.0
          %4539 = vmatmul.mubr.f32.gmra.mrb[0].mxu0 %v4447
          %v4540 = vpop.f32.mrb[0].mxu0
          %v4541 = vadd.f32 0.0, %v4540
          %v4542 = vpop.f32.mrb[0].mxu0
          %4543 = vmatprep.mubr.f32.mxu0 0.0
          %4544 = vmatmul.mubr.f32.gmra.mrb[0].mxu0 %v4448
          %v4545 = vpop.f32.mrb[0].mxu0
          %v4546 = vadd.f32 0.0, %v4545
          %v4547 = vpop.f32.mrb[0].mxu0
          %4548 = vmatprep.mubr.f32.mxu0 0.0
          %4549 = vmatmul.mubr.f32.gmra.mrb[0].mxu0 %v4449
          %v4550 = vpop.f32.mrb[0].mxu0
          %v4551 = vadd.f32 0.0, %v4550
          %v4552 = vpop.f32.mrb[0].mxu0
          %4553 = vmatprep.mubr.f32.mxu0 0.0
          %4554 = vmatmul.mubr.f32.gmra.mrb[0].mxu0 %v4450
          %v4555 = vpop.f32.mrb[0].mxu0
          %v4556 = vadd.f32 0.0, %v4555
          %v4557 = vpop.f32.mrb[0].mxu0
          %4558 = vmatprep.mubr.f32.mxu0 0.0
          %4559 = vmatmul.mubr.f32.gmra.mrb[0].mxu0 %v4451
          %v4560 = vpop.f32.mrb[0].mxu0
          %v4561 = vadd.f32 0.0, %v4560
          %v4562 = vpop.f32.mrb[0].mxu0
          %4563 = vmatprep.mubr.f32.mxu0 0.0
          %4564 = vmatmul.mubr.f32.gmra.mrb[0].mxu0 %v4452
          %v4565 = vpop.f32.mrb[0].mxu0
          %v4566 = vadd.f32 0.0, %v4565
          %v4567 = vpop.f32.mrb[0].mxu0
          %4568 = vmatprep.mubr.f32.mxu0 0.0
          %4569 = vmatmul.mubr.f32.gmra.mrb[0].mxu0 %v4453
          %v4570 = vpop.f32.mrb[0].mxu0
          %v4571 = vadd.f32 0.0, %v4570
          %v4572 = vpop.f32.mrb[0].mxu0
          %4573 = vmatprep.mubr.f32.mxu0 0.0
          %4574 = vmatmul.mubr.f32.gmra.mrb[0].mxu0 %v4454
          %v4575 = vpop.f32.mrb[0].mxu0
          %v4576 = vadd.f32 0.0, %v4575
          %v4577 = vpop.f32.mrb[0].mxu0
          %4578 = vmatprep.mubr.f32.mxu0 0.0
          %4579 = vmatmul.mubr.f32.gmra.mrb[0].mxu0 %v4455
          %v4580 = vpop.f32.mrb[0].mxu0
          %v4581 = vadd.f32 0.0, %v4580
          %v4582 = vpop.f32.mrb[0].mxu0
          %4583 = vmatprep.mubr.f32.mxu0 0.0
          %4584 = vmatmul.mubr.f32.gmra.mrb[0].mxu0 %v4456
          %v4585 = vpop.f32.mrb[0].mxu0
          %v4586 = vadd.f32 0.0, %v4585
          %v4587 = vpop.f32.mrb[0].mxu0
          %4588 = vmatprep.mubr.f32.mxu0 0.0
          %4589 = vmatmul.mubr.f32.gmra.mrb[0].mxu0 %v4457
          %v4590 = vpop.f32.mrb[0].mxu0
          %v4591 = vadd.f32 0.0, %v4590
          %v4592 = vpop.f32.mrb[0].mxu0
          %4593 = vmatprep.mubr.f32.mxu0 0.0
          %4594 = vmatmul.mubr.f32.gmra.mrb[0].mxu0 %v4458
          %v4595 = vpop.f32.mrb[0].mxu0
          %v4596 = vadd.f32 0.0, %v4595
          %v4597 = vpop.f32.mrb[0].mxu0
          %4598 = vmatprep.mubr.f32.mxu0 0.0
          %4599 = vmatmul.mubr.f32.gmra.mrb[0].mxu0 %v4459
          %v4600 = vpop.f32.mrb[0].mxu0
          %v4601 = vadd.f32 0.0, %v4600
          %v4602 = vpop.f32.mrb[0].mxu0
          %4603 = vmatprep.mubr.f32.mxu0 0.0
          %4604 = vmatmul.mubr.f32.gmra.mrb[0].mxu0 %v4460
          %v4605 = vpop.f32.mrb[0].mxu0
          %v4606 = vadd.f32 0.0, %v4605
          %v4607 = vpop.f32.mrb[0].mxu0
          %4608 = vmatprep.mubr.f32.mxu0 0.0
          %4609 = vmatmul.mubr.f32.gmra.mrb[0].mxu0 %v4461
          %v4610 = vpop.f32.mrb[0].mxu0
          %v4611 = vadd.f32 0.0, %v4610
          %v4612 = vpop.f32.mrb[0].mxu0
          %4613 = vmatprep.mubr.f32.mxu0 0.0
          %4614 = vmatmul.mubr.f32.gmra.mrb[0].mxu0 %v4462
          %v4615 = vpop.f32.mrb[0].mxu0
          %v4616 = vadd.f32 0.0, %v4615
          %v4617 = vpop.f32.mrb[0].mxu0
          %4618 = vmatprep.mubr.f32.mxu0 0.0
          %4619 = vmatmul.mubr.f32.gmra.mrb[0].mxu0 %v4463
          %v4620 = vpop.f32.mrb[0].mxu0
          %v4621 = vadd.f32 0.0, %v4620
          %v4622 = vpop.f32.mrb[0].mxu0
          %4623 = vdwg.mxu0
          %4624 = vmatprep.subr.mxu0 0.0
          %4625 = vmatpush1.msra.mxu0 %v2687
          %4626 = vmatprep.subr.mxu0 0.0
          %4627 = vmatpush1.msra.mxu0 %v2688
          %4628 = vmatprep.subr.mxu0 0.0
          %4629 = vmatpush1.msra.mxu0 %v2689
          %4630 = vmatprep.subr.mxu0 0.0
          %4631 = vmatpush1.msra.mxu0 %v2690
          %4632 = vmatprep.subr.mxu0 0.0
          %4633 = vmatpush1.msra.mxu0 %v2691
          %4634 = vmatprep.subr.mxu0 0.0
          %4635 = vmatpush1.msra.mxu0 %v2692
          %4636 = vmatprep.subr.mxu0 0.0
          %4637 = vmatpush1.msra.mxu0 %v2693
          %4638 = vmatprep.subr.mxu0 0.0
          %4639 = vmatpush1.msra.mxu0 %v2694
          %4640 = vmatprep.subr.mxu0 0.0
          %4641 = vmatpush1.msra.mxu0 %v2695
          %4642 = vmatprep.subr.mxu0 0.0
          %4643 = vmatpush1.msra.mxu0 %v2696
          %4644 = vmatprep.subr.mxu0 0.0
          %4645 = vmatpush1.msra.mxu0 %v2697
          %4646 = vmatprep.subr.mxu0 0.0
          %4647 = vmatpush1.msra.mxu0 %v2698
          %4648 = vmatprep.subr.mxu0 0.0
          %4649 = vmatpush1.msra.mxu0 %v2699
          %4650 = vmatprep.subr.mxu0 0.0
          %4651 = vmatpush1.msra.mxu0 %v2700
          %4652 = vmatprep.subr.mxu0 0.0
          %4653 = vmatpush1.msra.mxu0 %v2701
          %4654 = vmatprep.subr.mxu0 0.0
          %4655 = vmatpush1.msra.mxu0 %v2702
          %4656 = vmatprep.subr.mxu0 0.0
          %4657 = vmatpush1.msra.mxu0 0.0
          %4658 = vmatprep.subr.mxu0 0.0
          %4659 = vmatpush1.msra.mxu0 0.0
          %4660 = vmatprep.subr.mxu0 0.0
          %4661 = vmatpush1.msra.mxu0 0.0
          %4662 = vmatprep.subr.mxu0 0.0
          %4663 = vmatpush1.msra.mxu0 0.0
          %4664 = vmatprep.subr.mxu0 0.0
          %4665 = vmatpush1.msra.mxu0 0.0
          %4666 = vmatprep.subr.mxu0 0.0
          %4667 = vmatpush1.msra.mxu0 0.0
          %4668 = vmatprep.subr.mxu0 0.0
          %4669 = vmatpush1.msra.mxu0 0.0
          %4670 = vmatprep.subr.mxu0 0.0
          %4671 = vmatpush1.msra.mxu0 0.0
          %4672 = vmatprep.subr.mxu0 0.0
          %4673 = vmatpush1.msra.mxu0 0.0
          %4674 = vmatprep.subr.mxu0 0.0
          %4675 = vmatpush1.msra.mxu0 0.0
          %4676 = vmatprep.subr.mxu0 0.0
          %4677 = vmatpush1.msra.mxu0 0.0
          %4678 = vmatprep.subr.mxu0 0.0
          %4679 = vmatpush1.msra.mxu0 0.0
          %4680 = vmatprep.subr.mxu0 0.0
          %4681 = vmatpush1.msra.mxu0 0.0
          %4682 = vmatprep.subr.mxu0 0.0
          %4683 = vmatpush1.msra.mxu0 0.0
          %4684 = vmatprep.subr.mxu0 0.0
          %4685 = vmatpush1.msra.mxu0 0.0
          %4686 = vmatprep.subr.mxu0 0.0
          %4687 = vmatpush1.msra.mxu0 0.0
          %4688 = vmatprep.mubr.f32.mxu0 0.0
          %4689 = vmatmul.mubr.f32.gmra.mrb[0].mxu0 %v4426
          %v4690 = vpop.f32.mrb[0].mxu0
          %v4691 = vadd.f32 %v4531, %v4690
          %v4692 = vpop.f32.mrb[0].mxu0
          %4693 = vmatprep.mubr.f32.mxu0 0.0
          %4694 = vmatmul.mubr.f32.gmra.mrb[0].mxu0 %v4427
          %v4695 = vpop.f32.mrb[0].mxu0
          %v4696 = vadd.f32 %v4536, %v4695
          %v4697 = vpop.f32.mrb[0].mxu0
          %4698 = vmatprep.mubr.f32.mxu0 0.0
          %4699 = vmatmul.mubr.f32.gmra.mrb[0].mxu0 %v4428
          %v4700 = vpop.f32.mrb[0].mxu0
          %v4701 = vadd.f32 %v4541, %v4700
          %v4702 = vpop.f32.mrb[0].mxu0
          %4703 = vmatprep.mubr.f32.mxu0 0.0
          %4704 = vmatmul.mubr.f32.gmra.mrb[0].mxu0 %v4429
          %v4705 = vpop.f32.mrb[0].mxu0
          %v4706 = vadd.f32 %v4546, %v4705
          %v4707 = vpop.f32.mrb[0].mxu0
          %4708 = vmatprep.mubr.f32.mxu0 0.0
          %4709 = vmatmul.mubr.f32.gmra.mrb[0].mxu0 %v4430
          %v4710 = vpop.f32.mrb[0].mxu0
          %v4711 = vadd.f32 %v4551, %v4710
          %v4712 = vpop.f32.mrb[0].mxu0
          %4713 = vmatprep.mubr.f32.mxu0 0.0
          %4714 = vmatmul.mubr.f32.gmra.mrb[0].mxu0 %v4431
          %v4715 = vpop.f32.mrb[0].mxu0
          %v4716 = vadd.f32 %v4556, %v4715
          %v4717 = vpop.f32.mrb[0].mxu0
          %4718 = vmatprep.mubr.f32.mxu0 0.0
          %4719 = vmatmul.mubr.f32.gmra.mrb[0].mxu0 %v4432
          %v4720 = vpop.f32.mrb[0].mxu0
          %v4721 = vadd.f32 %v4561, %v4720
          %v4722 = vpop.f32.mrb[0].mxu0
          %4723 = vmatprep.mubr.f32.mxu0 0.0
          %4724 = vmatmul.mubr.f32.gmra.mrb[0].mxu0 %v4433
          %v4725 = vpop.f32.mrb[0].mxu0
          %v4726 = vadd.f32 %v4566, %v4725
          %v4727 = vpop.f32.mrb[0].mxu0
          %4728 = vmatprep.mubr.f32.mxu0 0.0
          %4729 = vmatmul.mubr.f32.gmra.mrb[0].mxu0 %v4434
          %v4730 = vpop.f32.mrb[0].mxu0
          %v4731 = vadd.f32 %v4571, %v4730
          %v4732 = vpop.f32.mrb[0].mxu0
          %4733 = vmatprep.mubr.f32.mxu0 0.0
          %4734 = vmatmul.mubr.f32.gmra.mrb[0].mxu0 %v4435
          %v4735 = vpop.f32.mrb[0].mxu0
          %v4736 = vadd.f32 %v4576, %v4735
          %v4737 = vpop.f32.mrb[0].mxu0
          %4738 = vmatprep.mubr.f32.mxu0 0.0
          %4739 = vmatmul.mubr.f32.gmra.mrb[0].mxu0 %v4436
          %v4740 = vpop.f32.mrb[0].mxu0
          %v4741 = vadd.f32 %v4581, %v4740
          %v4742 = vpop.f32.mrb[0].mxu0
          %4743 = vmatprep.mubr.f32.mxu0 0.0
          %4744 = vmatmul.mubr.f32.gmra.mrb[0].mxu0 %v4437
          %v4745 = vpop.f32.mrb[0].mxu0
          %v4746 = vadd.f32 %v4586, %v4745
          %v4747 = vpop.f32.mrb[0].mxu0
          %4748 = vmatprep.mubr.f32.mxu0 0.0
          %4749 = vmatmul.mubr.f32.gmra.mrb[0].mxu0 %v4438
          %v4750 = vpop.f32.mrb[0].mxu0
          %v4751 = vadd.f32 %v4591, %v4750
          %v4752 = vpop.f32.mrb[0].mxu0
          %4753 = vmatprep.mubr.f32.mxu0 0.0
          %4754 = vmatmul.mubr.f32.gmra.mrb[0].mxu0 %v4439
          %v4755 = vpop.f32.mrb[0].mxu0
          %v4756 = vadd.f32 %v4596, %v4755
          %v4757 = vpop.f32.mrb[0].mxu0
          %4758 = vmatprep.mubr.f32.mxu0 0.0
          %4759 = vmatmul.mubr.f32.gmra.mrb[0].mxu0 %v4440
          %v4760 = vpop.f32.mrb[0].mxu0
          %v4761 = vadd.f32 %v4601, %v4760
          %v4762 = vpop.f32.mrb[0].mxu0
          %4763 = vmatprep.mubr.f32.mxu0 0.0
          %4764 = vmatmul.mubr.f32.gmra.mrb[0].mxu0 %v4441
          %v4765 = vpop.f32.mrb[0].mxu0
          %v4766 = vadd.f32 %v4606, %v4765
          %v4767 = vpop.f32.mrb[0].mxu0
          %4768 = vmatprep.mubr.f32.mxu0 0.0
          %4769 = vmatmul.mubr.f32.gmra.mrb[0].mxu0 %v4442
          %v4770 = vpop.f32.mrb[0].mxu0
          %v4771 = vadd.f32 %v4611, %v4770
          %v4772 = vpop.f32.mrb[0].mxu0
          %4773 = vmatprep.mubr.f32.mxu0 0.0
          %4774 = vmatmul.mubr.f32.gmra.mrb[0].mxu0 %v4443
          %v4775 = vpop.f32.mrb[0].mxu0
          %v4776 = vadd.f32 %v4616, %v4775
          %v4777 = vpop.f32.mrb[0].mxu0
          %4778 = vmatprep.mubr.f32.mxu0 0.0
          %4779 = vmatmul.mubr.f32.gmra.mrb[0].mxu0 %v4444
          %v4780 = vpop.f32.mrb[0].mxu0
          %v4781 = vadd.f32 %v4621, %v4780
          %v4782 = vpop.f32.mrb[0].mxu0
          %4783 = vdwg.mxu0
          %v4785 = vlaneseq
          %v4786 = vshrl.u32 %v4785, 7
          %v4787 = vsub.s32 0, %v4786
          %v4788 = vrot.slane %v2719, %v4787
          %v4790 = vadd.f32 %v4691, %v4788
          %v4791 = vadd.f32 %v4696, %v4788
          %v4792 = vadd.f32 %v4701, %v4788
          %v4793 = vadd.f32 %v4706, %v4788
          %v4794 = vadd.f32 %v4711, %v4788
          %v4795 = vadd.f32 %v4716, %v4788
          %v4796 = vadd.f32 %v4721, %v4788
          %v4797 = vadd.f32 %v4726, %v4788
          %v4798 = vadd.f32 %v4731, %v4788
          %v4799 = vadd.f32 %v4736, %v4788
          %v4800 = vadd.f32 %v4741, %v4788
          %v4801 = vadd.f32 %v4746, %v4788
          %v4802 = vadd.f32 %v4751, %v4788
          %v4803 = vadd.f32 %v4756, %v4788
          %v4804 = vadd.f32 %v4761, %v4788
          %v4805 = vadd.f32 %v4766, %v4788
          %v4806 = vadd.f32 %v4771, %v4788
          %v4807 = vadd.f32 %v4776, %v4788
          %v4808 = vadd.f32 %v4781, %v4788
          %v4809 = vmax.f32 %v4790, 0.0
          %v4810 = vmax.f32 %v4791, 0.0
          %v4811 = vmax.f32 %v4792, 0.0
          %v4812 = vmax.f32 %v4793, 0.0
          %v4813 = vmax.f32 %v4794, 0.0
          %v4814 = vmax.f32 %v4795, 0.0
          %v4815 = vmax.f32 %v4796, 0.0
          %v4816 = vmax.f32 %v4797, 0.0
          %v4817 = vmax.f32 %v4798, 0.0
          %v4818 = vmax.f32 %v4799, 0.0
          %v4819 = vmax.f32 %v4800, 0.0
          %v4820 = vmax.f32 %v4801, 0.0
          %v4821 = vmax.f32 %v4802, 0.0
          %v4822 = vmax.f32 %v4803, 0.0
          %v4823 = vmax.f32 %v4804, 0.0
          %v4824 = vmax.f32 %v4805, 0.0
          %v4825 = vmax.f32 %v4806, 0.0
          %v4826 = vmax.f32 %v4807, 0.0
          %v4827 = vmax.f32 %v4808, 0.0
          %4828 = vst [vmem:[#allocation5] sm:$0xff] %v4809
          %4829 = vst [vmem:[#allocation5 + $0x8] sm:$0xff] %v4810
          %4830 = vst [vmem:[#allocation5 + $0x10] sm:$0xff] %v4811
          %4831 = vst [vmem:[#allocation5 + $0x18] sm:$0xff] %v4812
          %4832 = vst [vmem:[#allocation5 + $0x20] sm:$0xff] %v4813
          %4833 = vst [vmem:[#allocation5 + $0x28] sm:$0xff] %v4814
          %4834 = vst [vmem:[#allocation5 + $0x30] sm:$0xff] %v4815
          %4835 = vst [vmem:[#allocation5 + $0x38] sm:$0xff] %v4816
          %4836 = vst [vmem:[#allocation5 + $0x40] sm:$0xff] %v4817
          %4837 = vst [vmem:[#allocation5 + $0x48] sm:$0xff] %v4818
          %4838 = vst [vmem:[#allocation5 + $0x50] sm:$0xff] %v4819
          %4839 = vst [vmem:[#allocation5 + $0x58] sm:$0xff] %v4820
          %4840 = vst [vmem:[#allocation5 + $0x60] sm:$0xff] %v4821
          %4841 = vst [vmem:[#allocation5 + $0x68] sm:$0xff] %v4822
          %4842 = vst [vmem:[#allocation5 + $0x70] sm:$0xff] %v4823
          %4843 = vst [vmem:[#allocation5 + $0x78] sm:$0xff] %v4824
          %4844 = vst [vmem:[#allocation5 + $0x80] sm:$0xff] %v4825
          %4845 = vst [vmem:[#allocation5 + $0x88] sm:$0xff] %v4826
          %4846 = vst [vmem:[#allocation5 + $0x90] sm:$0x3f] %v4827
          %v4847 = vld [vmem:[#allocation5] ss:$2 sm:$0xff]
          %v4848 = vld [vmem:[%s4255] ss:$2 sm:$0xff]
          %v4849 = vld [vmem:[%s4257] ss:$2 sm:$0xff]
          %v4850 = vld [vmem:[%s4259] ss:$2 sm:$0xff]
          %v4851 = vld [vmem:[%s4261] ss:$2 sm:$0xff]
          %v4852 = vld [vmem:[%s4263] ss:$2 sm:$0xff]
          %v4853 = vld [vmem:[%s4265] ss:$2 sm:$0xff]
          %v4854 = vld [vmem:[%s4267] ss:$2 sm:$0xff]
          %v4855 = vld [vmem:[%s4269] ss:$2 sm:$0xff]
          %v4856 = vld [vmem:[%s4271] ss:$2 sm:$0x7]
          %v4857 = vld [vmem:[%s4291] ss:$2 sm:$0xff]
          %v4858 = vld [vmem:[%s4293] ss:$2 sm:$0xff]
          %v4859 = vld [vmem:[%s4295] ss:$2 sm:$0xff]
          %v4860 = vld [vmem:[%s4297] ss:$2 sm:$0xff]
          %v4861 = vld [vmem:[%s4299] ss:$2 sm:$0xff]
          %v4862 = vld [vmem:[%s4301] ss:$2 sm:$0xff]
          %v4863 = vld [vmem:[%s4303] ss:$2 sm:$0xff]
          %v4864 = vld [vmem:[%s4305] ss:$2 sm:$0xff]
          %v4865 = vld [vmem:[%s4307] ss:$2 sm:$0xff]
          %v4866 = vld [vmem:[%s4309] ss:$2 sm:$0x7]
          %v4867 = vmax.f32 %v4847, %v4857
          %v4868 = vmax.f32 %v4848, %v4858
          %v4869 = vmax.f32 %v4849, %v4859
          %v4870 = vmax.f32 %v4850, %v4860
          %v4871 = vmax.f32 %v4851, %v4861
          %v4872 = vmax.f32 %v4852, %v4862
          %v4873 = vmax.f32 %v4853, %v4863
          %v4874 = vmax.f32 %v4854, %v4864
          %v4875 = vmax.f32 %v4855, %v4865
          %v4876 = vmax.f32 %v4856, %v4866
          %v4877 = vmul.f32 %v4867, %v2864
          %v4878 = vmul.f32 %v4868, %v2865
          %v4879 = vmul.f32 %v4869, %v2866
          %v4880 = vmul.f32 %v4870, %v2867
          %v4881 = vmul.f32 %v4871, %v2868
          %v4882 = vmul.f32 %v4872, %v2869
          %v4883 = vmul.f32 %v4873, %v2870
          %v4884 = vmul.f32 %v4874, %v2871
          %v4885 = vmul.f32 %v4875, %v2872
          %v4886 = vmul.f32 %v4876, %v2873
          %v4887 = vadd.f32 %v4877, %v4878
          %v4888 = vadd.f32 %v4887, %v4879
          %v4889 = vadd.f32 %v4888, %v4880
          %v4890 = vadd.f32 %v4889, %v4881
          %v4891 = vadd.f32 %v4890, %v4882
          %v4892 = vadd.f32 %v4891, %v4883
          %v4893 = vadd.f32 %v4892, %v4884
          %v4894 = vadd.f32 %v4893, %v4885
          %vm4895 = vcmask 1042432
          %v4896 = vsel %vm4895, %v4886, 0.0
          %v4897 = vadd.f32 %v4894, %v4896
          %v4898 = vrot.slane %v4897, 4
          %v4899 = vadd.f32 %v4897, %v4898
          %v4900 = vrot.slane %v4899, 2
          %v4901 = vadd.f32 %v4899, %v4900
          %v4902 = vrot.slane %v4901, 1
          %v4903 = vadd.f32 %v4901, %v4902
          %4904 = vadd.xlane.f32.xlu0 %v4903
          %v4905 = vpop.xlane.xlu0 %4904
          %v4906 = vadd.f32 %v4905, %v2874
          %4907 = vst.msk [vmem:[#allocation4 + $0xc9] sm:$0x1] %vm2821, 0.0
          %v4908 = vld [vmem:[#allocation24] sm:$0xff]
          %v4909 = vld [vmem:[#allocation24 + $0x8] sm:$0xff]
          %v4910 = vld [vmem:[#allocation24 + $0x10] sm:$0xff]
          %v4911 = vld [vmem:[#allocation24 + $0x18] sm:$0xff]
          %v4912 = vld [vmem:[#allocation24 + $0x20] sm:$0xff]
          %v4913 = vld [vmem:[#allocation24 + $0x28] sm:$0xff]
          %v4914 = vld [vmem:[#allocation24 + $0x30] sm:$0x3]
          %v4915 = vld [vmem:[#allocation9] sm:$0x1]
          %v4916 = vld [vmem:[#allocation4] sm:$0xff]
          %v4917 = vld [vmem:[#allocation4 + $0x8] sm:$0xff]
          %v4918 = vld [vmem:[#allocation4 + $0x10] sm:$0xff]
          %v4919 = vld [vmem:[#allocation4 + $0x18] sm:$0xff]
          %v4920 = vld [vmem:[#allocation4 + $0x20] sm:$0xff]
          %v4921 = vld [vmem:[#allocation4 + $0x28] sm:$0xff]
          %v4922 = vld [vmem:[#allocation4 + $0x30] sm:$0xff]
          %v4923 = vld [vmem:[#allocation4 + $0x38] sm:$0xff]
          %v4924 = vld [vmem:[#allocation4 + $0x40] sm:$0xff]
          %v4925 = vld [vmem:[#allocation4 + $0x48] sm:$0xff]
          %v4926 = vld [vmem:[#allocation4 + $0x50] sm:$0xff]
          %v4927 = vld [vmem:[#allocation4 + $0x58] sm:$0xff]
          %v4928 = vld [vmem:[#allocation4 + $0x60] sm:$0xff]
          %v4929 = vld [vmem:[#allocation4 + $0x68] sm:$0xff]
          %v4930 = vld [vmem:[#allocation4 + $0x70] sm:$0xff]
          %v4931 = vld [vmem:[#allocation4 + $0x78] sm:$0xff]
          %v4932 = vld [vmem:[#allocation4 + $0x80] sm:$0xff]
          %v4933 = vld [vmem:[#allocation4 + $0x88] sm:$0xff]
          %v4934 = vld [vmem:[#allocation4 + $0x90] sm:$0xff]
          %v4935 = vld [vmem:[#allocation4 + $0x98] sm:$0xff]
          %v4936 = vld [vmem:[#allocation4 + $0xa0] sm:$0xff]
          %v4937 = vld [vmem:[#allocation4 + $0xa8] sm:$0xff]
          %v4938 = vld [vmem:[#allocation4 + $0xb0] sm:$0xff]
          %v4939 = vld [vmem:[#allocation4 + $0xb8] sm:$0xff]
          %v4940 = vld [vmem:[#allocation4 + $0xc0] sm:$0xff]
          %v4941 = vld [vmem:[#allocation4 + $0x1] sm:$0xff]
          %v4942 = vld [vmem:[#allocation4 + $0x9] sm:$0xff]
          %v4943 = vld [vmem:[#allocation4 + $0x11] sm:$0xff]
          %v4944 = vld [vmem:[#allocation4 + $0x19] sm:$0xff]
          %v4945 = vld [vmem:[#allocation4 + $0x21] sm:$0xff]
          %v4946 = vld [vmem:[#allocation4 + $0x29] sm:$0xff]
          %v4947 = vld [vmem:[#allocation4 + $0x31] sm:$0xff]
          %v4948 = vld [vmem:[#allocation4 + $0x39] sm:$0xff]
          %v4949 = vld [vmem:[#allocation4 + $0x41] sm:$0xff]
          %v4950 = vld [vmem:[#allocation4 + $0x49] sm:$0xff]
          %v4951 = vld [vmem:[#allocation4 + $0x51] sm:$0xff]
          %v4952 = vld [vmem:[#allocation4 + $0x59] sm:$0xff]
          %v4953 = vld [vmem:[#allocation4 + $0x61] sm:$0xff]
          %v4954 = vld [vmem:[#allocation4 + $0x69] sm:$0xff]
          %v4955 = vld [vmem:[#allocation4 + $0x71] sm:$0xff]
          %v4956 = vld [vmem:[#allocation4 + $0x79] sm:$0xff]
          %v4957 = vld [vmem:[#allocation4 + $0x81] sm:$0xff]
          %v4958 = vld [vmem:[#allocation4 + $0x89] sm:$0xff]
          %v4959 = vld [vmem:[#allocation4 + $0x91] sm:$0xff]
          %v4960 = vld [vmem:[#allocation4 + $0x99] sm:$0xff]
          %v4961 = vld [vmem:[#allocation4 + $0xa1] sm:$0xff]
          %v4962 = vld [vmem:[#allocation4 + $0xa9] sm:$0xff]
          %v4963 = vld [vmem:[#allocation4 + $0xb1] sm:$0xff]
          %v4964 = vld [vmem:[#allocation4 + $0xb9] sm:$0xff]
          %v4965 = vld [vmem:[#allocation4 + $0xc1] sm:$0xff]
          %v4967 = vsel %vm2823, %v4941, 0
          %v4970 = vsel %vm2823, %v4942, 0
          %v4973 = vsel %vm2823, %v4943, 0
          %v4976 = vsel %vm2823, %v4944, 0
          %v4979 = vsel %vm2823, %v4945, 0
          %v4982 = vsel %vm2823, %v4946, 0
          %v4985 = vsel %vm2823, %v4947, 0
          %v4988 = vsel %vm2823, %v4948, 0
          %v4991 = vsel %vm2823, %v4949, 0
          %v4994 = vsel %vm2823, %v4950, 0
          %v4997 = vsel %vm2823, %v4951, 0
          %v5000 = vsel %vm2823, %v4952, 0
          %v5003 = vsel %vm2823, %v4953, 0
          %v5006 = vsel %vm2823, %v4954, 0
          %v5009 = vsel %vm2823, %v4955, 0
          %v5012 = vsel %vm2823, %v4956, 0
          %v5015 = vsel %vm2823, %v4957, 0
          %v5018 = vsel %vm2823, %v4958, 0
          %v5021 = vsel %vm2823, %v4959, 0
          %v5024 = vsel %vm2823, %v4960, 0
          %v5027 = vsel %vm2823, %v4961, 0
          %v5030 = vsel %vm2823, %v4962, 0
          %v5033 = vsel %vm2823, %v4963, 0
          %v5036 = vsel %vm2823, %v4964, 0
          %v5039 = vsel %vm2823, %v4965, 0
          %5041 = vmatprep.subr.mxu0 0.0
          %5042 = vmatpush1.msra.mxu0 %v2684
          %5043 = vmatprep.subr.mxu0 0.0
          %5044 = vmatpush1.msra.mxu0 0.0
          %5045 = vmatprep.subr.mxu0 0.0
          %5046 = vmatpush1.msra.mxu0 0.0
          %5047 = vmatprep.subr.mxu0 0.0
          %5048 = vmatpush1.msra.mxu0 0.0
          %5049 = vmatprep.subr.mxu0 0.0
          %5050 = vmatpush1.msra.mxu0 0.0
          %5051 = vmatprep.subr.mxu0 0.0
          %5052 = vmatpush1.msra.mxu0 0.0
          %5053 = vmatprep.subr.mxu0 0.0
          %5054 = vmatpush1.msra.mxu0 0.0
          %5055 = vmatprep.subr.mxu0 0.0
          %5056 = vmatpush1.msra.mxu0 0.0
          %5057 = vmatprep.subr.mxu0 0.0
          %5058 = vmatpush1.msra.mxu0 0.0
          %5059 = vmatprep.subr.mxu0 0.0
          %5060 = vmatpush1.msra.mxu0 0.0
          %5061 = vmatprep.subr.mxu0 0.0
          %5062 = vmatpush1.msra.mxu0 0.0
          %5063 = vmatprep.subr.mxu0 0.0
          %5064 = vmatpush1.msra.mxu0 0.0
          %5065 = vmatprep.subr.mxu0 0.0
          %5066 = vmatpush1.msra.mxu0 0.0
          %5067 = vmatprep.subr.mxu0 0.0
          %5068 = vmatpush1.msra.mxu0 0.0
          %5069 = vmatprep.subr.mxu0 0.0
          %5070 = vmatpush1.msra.mxu0 0.0
          %5071 = vmatprep.subr.mxu0 0.0
          %5072 = vmatpush1.msra.mxu0 0.0
          %5073 = vmatprep.subr.mxu0 0.0
          %5074 = vmatpush1.msra.mxu0 0.0
          %5075 = vmatprep.subr.mxu0 0.0
          %5076 = vmatpush1.msra.mxu0 0.0
          %5077 = vmatprep.subr.mxu0 0.0
          %5078 = vmatpush1.msra.mxu0 0.0
          %5079 = vmatprep.subr.mxu0 0.0
          %5080 = vmatpush1.msra.mxu0 0.0
          %5081 = vmatprep.subr.mxu0 0.0
          %5082 = vmatpush1.msra.mxu0 0.0
          %5083 = vmatprep.subr.mxu0 0.0
          %5084 = vmatpush1.msra.mxu0 0.0
          %5085 = vmatprep.subr.mxu0 0.0
          %5086 = vmatpush1.msra.mxu0 0.0
          %5087 = vmatprep.subr.mxu0 0.0
          %5088 = vmatpush1.msra.mxu0 0.0
          %5089 = vmatprep.subr.mxu0 0.0
          %5090 = vmatpush1.msra.mxu0 0.0
          %5091 = vmatprep.subr.mxu0 0.0
          %5092 = vmatpush1.msra.mxu0 0.0
          %5093 = vmatprep.subr.mxu0 0.0
          %5094 = vmatpush1.msra.mxu0 0.0
          %5095 = vmatprep.subr.mxu0 0.0
          %5096 = vmatpush1.msra.mxu0 0.0
          %5097 = vmatprep.subr.mxu0 0.0
          %5098 = vmatpush1.msra.mxu0 0.0
          %5099 = vmatprep.subr.mxu0 0.0
          %5100 = vmatpush1.msra.mxu0 0.0
          %5101 = vmatprep.subr.mxu0 0.0
          %5102 = vmatpush1.msra.mxu0 0.0
          %5103 = vmatprep.subr.mxu0 0.0
          %5104 = vmatpush1.msra.mxu0 0.0
          %5105 = vmatprep.mubr.f32.mxu0 0.0
          %5106 = vmatmul.mubr.f32.gmra.mrb[0].mxu0 %v4967
          %v5107 = vpop.f32.mrb[0].mxu0
          %v5108 = vadd.f32 0.0, %v5107
          %v5109 = vpop.f32.mrb[0].mxu0
          %5110 = vmatprep.mubr.f32.mxu0 0.0
          %5111 = vmatmul.mubr.f32.gmra.mrb[0].mxu0 %v4970
          %v5112 = vpop.f32.mrb[0].mxu0
          %v5113 = vadd.f32 0.0, %v5112
          %v5114 = vpop.f32.mrb[0].mxu0
          %5115 = vmatprep.mubr.f32.mxu0 0.0
          %5116 = vmatmul.mubr.f32.gmra.mrb[0].mxu0 %v4973
          %v5117 = vpop.f32.mrb[0].mxu0
          %v5118 = vadd.f32 0.0, %v5117
          %v5119 = vpop.f32.mrb[0].mxu0
          %5120 = vmatprep.mubr.f32.mxu0 0.0
          %5121 = vmatmul.mubr.f32.gmra.mrb[0].mxu0 %v4976
          %v5122 = vpop.f32.mrb[0].mxu0
          %v5123 = vadd.f32 0.0, %v5122
          %v5124 = vpop.f32.mrb[0].mxu0
          %5125 = vmatprep.mubr.f32.mxu0 0.0
          %5126 = vmatmul.mubr.f32.gmra.mrb[0].mxu0 %v4979
          %v5127 = vpop.f32.mrb[0].mxu0
          %v5128 = vadd.f32 0.0, %v5127
          %v5129 = vpop.f32.mrb[0].mxu0
          %5130 = vmatprep.mubr.f32.mxu0 0.0
          %5131 = vmatmul.mubr.f32.gmra.mrb[0].mxu0 %v4982
          %v5132 = vpop.f32.mrb[0].mxu0
          %v5133 = vadd.f32 0.0, %v5132
          %v5134 = vpop.f32.mrb[0].mxu0
          %5135 = vmatprep.mubr.f32.mxu0 0.0
          %5136 = vmatmul.mubr.f32.gmra.mrb[0].mxu0 %v4985
          %v5137 = vpop.f32.mrb[0].mxu0
          %v5138 = vadd.f32 0.0, %v5137
          %v5139 = vpop.f32.mrb[0].mxu0
          %5140 = vmatprep.mubr.f32.mxu0 0.0
          %5141 = vmatmul.mubr.f32.gmra.mrb[0].mxu0 %v4988
          %v5142 = vpop.f32.mrb[0].mxu0
          %v5143 = vadd.f32 0.0, %v5142
          %v5144 = vpop.f32.mrb[0].mxu0
          %5145 = vmatprep.mubr.f32.mxu0 0.0
          %5146 = vmatmul.mubr.f32.gmra.mrb[0].mxu0 %v4991
          %v5147 = vpop.f32.mrb[0].mxu0
          %v5148 = vadd.f32 0.0, %v5147
          %v5149 = vpop.f32.mrb[0].mxu0
          %5150 = vmatprep.mubr.f32.mxu0 0.0
          %5151 = vmatmul.mubr.f32.gmra.mrb[0].mxu0 %v4994
          %v5152 = vpop.f32.mrb[0].mxu0
          %v5153 = vadd.f32 0.0, %v5152
          %v5154 = vpop.f32.mrb[0].mxu0
          %5155 = vmatprep.mubr.f32.mxu0 0.0
          %5156 = vmatmul.mubr.f32.gmra.mrb[0].mxu0 %v4997
          %v5157 = vpop.f32.mrb[0].mxu0
          %v5158 = vadd.f32 0.0, %v5157
          %v5159 = vpop.f32.mrb[0].mxu0
          %5160 = vmatprep.mubr.f32.mxu0 0.0
          %5161 = vmatmul.mubr.f32.gmra.mrb[0].mxu0 %v5000
          %v5162 = vpop.f32.mrb[0].mxu0
          %v5163 = vadd.f32 0.0, %v5162
          %v5164 = vpop.f32.mrb[0].mxu0
          %5165 = vmatprep.mubr.f32.mxu0 0.0
          %5166 = vmatmul.mubr.f32.gmra.mrb[0].mxu0 %v5003
          %v5167 = vpop.f32.mrb[0].mxu0
          %v5168 = vadd.f32 0.0, %v5167
          %v5169 = vpop.f32.mrb[0].mxu0
          %5170 = vmatprep.mubr.f32.mxu0 0.0
          %5171 = vmatmul.mubr.f32.gmra.mrb[0].mxu0 %v5006
          %v5172 = vpop.f32.mrb[0].mxu0
          %v5173 = vadd.f32 0.0, %v5172
          %v5174 = vpop.f32.mrb[0].mxu0
          %5175 = vmatprep.mubr.f32.mxu0 0.0
          %5176 = vmatmul.mubr.f32.gmra.mrb[0].mxu0 %v5009
          %v5177 = vpop.f32.mrb[0].mxu0
          %v5178 = vadd.f32 0.0, %v5177
          %v5179 = vpop.f32.mrb[0].mxu0
          %5180 = vmatprep.mubr.f32.mxu0 0.0
          %5181 = vmatmul.mubr.f32.gmra.mrb[0].mxu0 %v5012
          %v5182 = vpop.f32.mrb[0].mxu0
          %v5183 = vadd.f32 0.0, %v5182
          %v5184 = vpop.f32.mrb[0].mxu0
          %5185 = vmatprep.mubr.f32.mxu0 0.0
          %5186 = vmatmul.mubr.f32.gmra.mrb[0].mxu0 %v5015
          %v5187 = vpop.f32.mrb[0].mxu0
          %v5188 = vadd.f32 0.0, %v5187
          %v5189 = vpop.f32.mrb[0].mxu0
          %5190 = vmatprep.mubr.f32.mxu0 0.0
          %5191 = vmatmul.mubr.f32.gmra.mrb[0].mxu0 %v5018
          %v5192 = vpop.f32.mrb[0].mxu0
          %v5193 = vadd.f32 0.0, %v5192
          %v5194 = vpop.f32.mrb[0].mxu0
          %5195 = vmatprep.mubr.f32.mxu0 0.0
          %5196 = vmatmul.mubr.f32.gmra.mrb[0].mxu0 %v5021
          %v5197 = vpop.f32.mrb[0].mxu0
          %v5198 = vadd.f32 0.0, %v5197
          %v5199 = vpop.f32.mrb[0].mxu0
          %5200 = vmatprep.mubr.f32.mxu0 0.0
          %5201 = vmatmul.mubr.f32.gmra.mrb[0].mxu0 %v5024
          %v5202 = vpop.f32.mrb[0].mxu0
          %v5203 = vadd.f32 0.0, %v5202
          %v5204 = vpop.f32.mrb[0].mxu0
          %5205 = vmatprep.mubr.f32.mxu0 0.0
          %5206 = vmatmul.mubr.f32.gmra.mrb[0].mxu0 %v5027
          %v5207 = vpop.f32.mrb[0].mxu0
          %v5208 = vadd.f32 0.0, %v5207
          %v5209 = vpop.f32.mrb[0].mxu0
          %5210 = vmatprep.mubr.f32.mxu0 0.0
          %5211 = vmatmul.mubr.f32.gmra.mrb[0].mxu0 %v5030
          %v5212 = vpop.f32.mrb[0].mxu0
          %v5213 = vadd.f32 0.0, %v5212
          %v5214 = vpop.f32.mrb[0].mxu0
          %5215 = vmatprep.mubr.f32.mxu0 0.0
          %5216 = vmatmul.mubr.f32.gmra.mrb[0].mxu0 %v5033
          %v5217 = vpop.f32.mrb[0].mxu0
          %v5218 = vadd.f32 0.0, %v5217
          %v5219 = vpop.f32.mrb[0].mxu0
          %5220 = vmatprep.mubr.f32.mxu0 0.0
          %5221 = vmatmul.mubr.f32.gmra.mrb[0].mxu0 %v5036
          %v5222 = vpop.f32.mrb[0].mxu0
          %v5223 = vadd.f32 0.0, %v5222
          %v5224 = vpop.f32.mrb[0].mxu0
          %5225 = vmatprep.mubr.f32.mxu0 0.0
          %5226 = vmatmul.mubr.f32.gmra.mrb[0].mxu0 %v5039
          %v5227 = vpop.f32.mrb[0].mxu0
          %v5228 = vadd.f32 0.0, %v5227
          %v5229 = vpop.f32.mrb[0].mxu0
          %5230 = vdwg.mxu0
          %v5232 = vsel %vm2823, %v4916, 0
          %v5235 = vsel %vm2823, %v4917, 0
          %v5238 = vsel %vm2823, %v4918, 0
          %v5241 = vsel %vm2823, %v4919, 0
          %v5244 = vsel %vm2823, %v4920, 0
          %v5247 = vsel %vm2823, %v4921, 0
          %v5250 = vsel %vm2823, %v4922, 0
          %v5253 = vsel %vm2823, %v4923, 0
          %v5256 = vsel %vm2823, %v4924, 0
          %v5259 = vsel %vm2823, %v4925, 0
          %v5262 = vsel %vm2823, %v4926, 0
          %v5265 = vsel %vm2823, %v4927, 0
          %v5268 = vsel %vm2823, %v4928, 0
          %v5271 = vsel %vm2823, %v4929, 0
          %v5274 = vsel %vm2823, %v4930, 0
          %v5277 = vsel %vm2823, %v4931, 0
          %v5280 = vsel %vm2823, %v4932, 0
          %v5283 = vsel %vm2823, %v4933, 0
          %v5286 = vsel %vm2823, %v4934, 0
          %v5289 = vsel %vm2823, %v4935, 0
          %v5292 = vsel %vm2823, %v4936, 0
          %v5295 = vsel %vm2823, %v4937, 0
          %v5298 = vsel %vm2823, %v4938, 0
          %v5301 = vsel %vm2823, %v4939, 0
          %v5304 = vsel %vm2823, %v4940, 0
          %5306 = vmatprep.subr.mxu0 0.0
          %5307 = vmatpush1.msra.mxu0 %v2683
          %5308 = vmatprep.subr.mxu0 0.0
          %5309 = vmatpush1.msra.mxu0 0.0
          %5310 = vmatprep.subr.mxu0 0.0
          %5311 = vmatpush1.msra.mxu0 0.0
          %5312 = vmatprep.subr.mxu0 0.0
          %5313 = vmatpush1.msra.mxu0 0.0
          %5314 = vmatprep.subr.mxu0 0.0
          %5315 = vmatpush1.msra.mxu0 0.0
          %5316 = vmatprep.subr.mxu0 0.0
          %5317 = vmatpush1.msra.mxu0 0.0
          %5318 = vmatprep.subr.mxu0 0.0
          %5319 = vmatpush1.msra.mxu0 0.0
          %5320 = vmatprep.subr.mxu0 0.0
          %5321 = vmatpush1.msra.mxu0 0.0
          %5322 = vmatprep.subr.mxu0 0.0
          %5323 = vmatpush1.msra.mxu0 0.0
          %5324 = vmatprep.subr.mxu0 0.0
          %5325 = vmatpush1.msra.mxu0 0.0
          %5326 = vmatprep.subr.mxu0 0.0
          %5327 = vmatpush1.msra.mxu0 0.0
          %5328 = vmatprep.subr.mxu0 0.0
          %5329 = vmatpush1.msra.mxu0 0.0
          %5330 = vmatprep.subr.mxu0 0.0
          %5331 = vmatpush1.msra.mxu0 0.0
          %5332 = vmatprep.subr.mxu0 0.0
          %5333 = vmatpush1.msra.mxu0 0.0
          %5334 = vmatprep.subr.mxu0 0.0
          %5335 = vmatpush1.msra.mxu0 0.0
          %5336 = vmatprep.subr.mxu0 0.0
          %5337 = vmatpush1.msra.mxu0 0.0
          %5338 = vmatprep.subr.mxu0 0.0
          %5339 = vmatpush1.msra.mxu0 0.0
          %5340 = vmatprep.subr.mxu0 0.0
          %5341 = vmatpush1.msra.mxu0 0.0
          %5342 = vmatprep.subr.mxu0 0.0
          %5343 = vmatpush1.msra.mxu0 0.0
          %5344 = vmatprep.subr.mxu0 0.0
          %5345 = vmatpush1.msra.mxu0 0.0
          %5346 = vmatprep.subr.mxu0 0.0
          %5347 = vmatpush1.msra.mxu0 0.0
          %5348 = vmatprep.subr.mxu0 0.0
          %5349 = vmatpush1.msra.mxu0 0.0
          %5350 = vmatprep.subr.mxu0 0.0
          %5351 = vmatpush1.msra.mxu0 0.0
          %5352 = vmatprep.subr.mxu0 0.0
          %5353 = vmatpush1.msra.mxu0 0.0
          %5354 = vmatprep.subr.mxu0 0.0
          %5355 = vmatpush1.msra.mxu0 0.0
          %5356 = vmatprep.subr.mxu0 0.0
          %5357 = vmatpush1.msra.mxu0 0.0
          %5358 = vmatprep.subr.mxu0 0.0
          %5359 = vmatpush1.msra.mxu0 0.0
          %5360 = vmatprep.subr.mxu0 0.0
          %5361 = vmatpush1.msra.mxu0 0.0
          %5362 = vmatprep.subr.mxu0 0.0
          %5363 = vmatpush1.msra.mxu0 0.0
          %5364 = vmatprep.subr.mxu0 0.0
          %5365 = vmatpush1.msra.mxu0 0.0
          %5366 = vmatprep.subr.mxu0 0.0
          %5367 = vmatpush1.msra.mxu0 0.0
          %5368 = vmatprep.subr.mxu0 0.0
          %5369 = vmatpush1.msra.mxu0 0.0
          %5370 = vmatprep.mubr.f32.mxu0 0.0
          %5371 = vmatmul.mubr.f32.gmra.mrb[0].mxu0 %v5232
          %v5372 = vpop.f32.mrb[0].mxu0
          %v5373 = vadd.f32 %v5108, %v5372
          %v5374 = vpop.f32.mrb[0].mxu0
          %5375 = vmatprep.mubr.f32.mxu0 0.0
          %5376 = vmatmul.mubr.f32.gmra.mrb[0].mxu0 %v5235
          %v5377 = vpop.f32.mrb[0].mxu0
          %v5378 = vadd.f32 %v5113, %v5377
          %v5379 = vpop.f32.mrb[0].mxu0
          %5380 = vmatprep.mubr.f32.mxu0 0.0
          %5381 = vmatmul.mubr.f32.gmra.mrb[0].mxu0 %v5238
          %v5382 = vpop.f32.mrb[0].mxu0
          %v5383 = vadd.f32 %v5118, %v5382
          %v5384 = vpop.f32.mrb[0].mxu0
          %5385 = vmatprep.mubr.f32.mxu0 0.0
          %5386 = vmatmul.mubr.f32.gmra.mrb[0].mxu0 %v5241
          %v5387 = vpop.f32.mrb[0].mxu0
          %v5388 = vadd.f32 %v5123, %v5387
          %v5389 = vpop.f32.mrb[0].mxu0
          %5390 = vmatprep.mubr.f32.mxu0 0.0
          %5391 = vmatmul.mubr.f32.gmra.mrb[0].mxu0 %v5244
          %v5392 = vpop.f32.mrb[0].mxu0
          %v5393 = vadd.f32 %v5128, %v5392
          %v5394 = vpop.f32.mrb[0].mxu0
          %5395 = vmatprep.mubr.f32.mxu0 0.0
          %5396 = vmatmul.mubr.f32.gmra.mrb[0].mxu0 %v5247
          %v5397 = vpop.f32.mrb[0].mxu0
          %v5398 = vadd.f32 %v5133, %v5397
          %v5399 = vpop.f32.mrb[0].mxu0
          %5400 = vmatprep.mubr.f32.mxu0 0.0
          %5401 = vmatmul.mubr.f32.gmra.mrb[0].mxu0 %v5250
          %v5402 = vpop.f32.mrb[0].mxu0
          %v5403 = vadd.f32 %v5138, %v5402
          %v5404 = vpop.f32.mrb[0].mxu0
          %5405 = vmatprep.mubr.f32.mxu0 0.0
          %5406 = vmatmul.mubr.f32.gmra.mrb[0].mxu0 %v5253
          %v5407 = vpop.f32.mrb[0].mxu0
          %v5408 = vadd.f32 %v5143, %v5407
          %v5409 = vpop.f32.mrb[0].mxu0
          %5410 = vmatprep.mubr.f32.mxu0 0.0
          %5411 = vmatmul.mubr.f32.gmra.mrb[0].mxu0 %v5256
          %v5412 = vpop.f32.mrb[0].mxu0
          %v5413 = vadd.f32 %v5148, %v5412
          %v5414 = vpop.f32.mrb[0].mxu0
          %5415 = vmatprep.mubr.f32.mxu0 0.0
          %5416 = vmatmul.mubr.f32.gmra.mrb[0].mxu0 %v5259
          %v5417 = vpop.f32.mrb[0].mxu0
          %v5418 = vadd.f32 %v5153, %v5417
          %v5419 = vpop.f32.mrb[0].mxu0
          %5420 = vmatprep.mubr.f32.mxu0 0.0
          %5421 = vmatmul.mubr.f32.gmra.mrb[0].mxu0 %v5262
          %v5422 = vpop.f32.mrb[0].mxu0
          %v5423 = vadd.f32 %v5158, %v5422
          %v5424 = vpop.f32.mrb[0].mxu0
          %5425 = vmatprep.mubr.f32.mxu0 0.0
          %5426 = vmatmul.mubr.f32.gmra.mrb[0].mxu0 %v5265
          %v5427 = vpop.f32.mrb[0].mxu0
          %v5428 = vadd.f32 %v5163, %v5427
          %v5429 = vpop.f32.mrb[0].mxu0
          %5430 = vmatprep.mubr.f32.mxu0 0.0
          %5431 = vmatmul.mubr.f32.gmra.mrb[0].mxu0 %v5268
          %v5432 = vpop.f32.mrb[0].mxu0
          %v5433 = vadd.f32 %v5168, %v5432
          %v5434 = vpop.f32.mrb[0].mxu0
          %5435 = vmatprep.mubr.f32.mxu0 0.0
          %5436 = vmatmul.mubr.f32.gmra.mrb[0].mxu0 %v5271
          %v5437 = vpop.f32.mrb[0].mxu0
          %v5438 = vadd.f32 %v5173, %v5437
          %v5439 = vpop.f32.mrb[0].mxu0
          %5440 = vmatprep.mubr.f32.mxu0 0.0
          %5441 = vmatmul.mubr.f32.gmra.mrb[0].mxu0 %v5274
          %v5442 = vpop.f32.mrb[0].mxu0
          %v5443 = vadd.f32 %v5178, %v5442
          %v5444 = vpop.f32.mrb[0].mxu0
          %5445 = vmatprep.mubr.f32.mxu0 0.0
          %5446 = vmatmul.mubr.f32.gmra.mrb[0].mxu0 %v5277
          %v5447 = vpop.f32.mrb[0].mxu0
          %v5448 = vadd.f32 %v5183, %v5447
          %v5449 = vpop.f32.mrb[0].mxu0
          %5450 = vmatprep.mubr.f32.mxu0 0.0
          %5451 = vmatmul.mubr.f32.gmra.mrb[0].mxu0 %v5280
          %v5452 = vpop.f32.mrb[0].mxu0
          %v5453 = vadd.f32 %v5188, %v5452
          %v5454 = vpop.f32.mrb[0].mxu0
          %5455 = vmatprep.mubr.f32.mxu0 0.0
          %5456 = vmatmul.mubr.f32.gmra.mrb[0].mxu0 %v5283
          %v5457 = vpop.f32.mrb[0].mxu0
          %v5458 = vadd.f32 %v5193, %v5457
          %v5459 = vpop.f32.mrb[0].mxu0
          %5460 = vmatprep.mubr.f32.mxu0 0.0
          %5461 = vmatmul.mubr.f32.gmra.mrb[0].mxu0 %v5286
          %v5462 = vpop.f32.mrb[0].mxu0
          %v5463 = vadd.f32 %v5198, %v5462
          %v5464 = vpop.f32.mrb[0].mxu0
          %5465 = vmatprep.mubr.f32.mxu0 0.0
          %5466 = vmatmul.mubr.f32.gmra.mrb[0].mxu0 %v5289
          %v5467 = vpop.f32.mrb[0].mxu0
          %v5468 = vadd.f32 %v5203, %v5467
          %v5469 = vpop.f32.mrb[0].mxu0
          %5470 = vmatprep.mubr.f32.mxu0 0.0
          %5471 = vmatmul.mubr.f32.gmra.mrb[0].mxu0 %v5292
          %v5472 = vpop.f32.mrb[0].mxu0
          %v5473 = vadd.f32 %v5208, %v5472
          %v5474 = vpop.f32.mrb[0].mxu0
          %5475 = vmatprep.mubr.f32.mxu0 0.0
          %5476 = vmatmul.mubr.f32.gmra.mrb[0].mxu0 %v5295
          %v5477 = vpop.f32.mrb[0].mxu0
          %v5478 = vadd.f32 %v5213, %v5477
          %v5479 = vpop.f32.mrb[0].mxu0
          %5480 = vmatprep.mubr.f32.mxu0 0.0
          %5481 = vmatmul.mubr.f32.gmra.mrb[0].mxu0 %v5298
          %v5482 = vpop.f32.mrb[0].mxu0
          %v5483 = vadd.f32 %v5218, %v5482
          %v5484 = vpop.f32.mrb[0].mxu0
          %5485 = vmatprep.mubr.f32.mxu0 0.0
          %5486 = vmatmul.mubr.f32.gmra.mrb[0].mxu0 %v5301
          %v5487 = vpop.f32.mrb[0].mxu0
          %v5488 = vadd.f32 %v5223, %v5487
          %v5489 = vpop.f32.mrb[0].mxu0
          %5490 = vmatprep.mubr.f32.mxu0 0.0
          %5491 = vmatmul.mubr.f32.gmra.mrb[0].mxu0 %v5304
          %v5492 = vpop.f32.mrb[0].mxu0
          %v5493 = vadd.f32 %v5228, %v5492
          %v5494 = vpop.f32.mrb[0].mxu0
          %5495 = vdwg.mxu0
          %v5496 = vld [vmem:[#allocation4 + $0x2] sm:$0xff]
          %v5497 = vld [vmem:[#allocation4 + $0xa] sm:$0xff]
          %v5498 = vld [vmem:[#allocation4 + $0x12] sm:$0xff]
          %v5499 = vld [vmem:[#allocation4 + $0x1a] sm:$0xff]
          %v5500 = vld [vmem:[#allocation4 + $0x22] sm:$0xff]
          %v5501 = vld [vmem:[#allocation4 + $0x2a] sm:$0xff]
          %v5502 = vld [vmem:[#allocation4 + $0x32] sm:$0xff]
          %v5503 = vld [vmem:[#allocation4 + $0x3a] sm:$0xff]
          %v5504 = vld [vmem:[#allocation4 + $0x42] sm:$0xff]
          %v5505 = vld [vmem:[#allocation4 + $0x4a] sm:$0xff]
          %v5506 = vld [vmem:[#allocation4 + $0x52] sm:$0xff]
          %v5507 = vld [vmem:[#allocation4 + $0x5a] sm:$0xff]
          %v5508 = vld [vmem:[#allocation4 + $0x62] sm:$0xff]
          %v5509 = vld [vmem:[#allocation4 + $0x6a] sm:$0xff]
          %v5510 = vld [vmem:[#allocation4 + $0x72] sm:$0xff]
          %v5511 = vld [vmem:[#allocation4 + $0x7a] sm:$0xff]
          %v5512 = vld [vmem:[#allocation4 + $0x82] sm:$0xff]
          %v5513 = vld [vmem:[#allocation4 + $0x8a] sm:$0xff]
          %v5514 = vld [vmem:[#allocation4 + $0x92] sm:$0xff]
          %v5515 = vld [vmem:[#allocation4 + $0x9a] sm:$0xff]
          %v5516 = vld [vmem:[#allocation4 + $0xa2] sm:$0xff]
          %v5517 = vld [vmem:[#allocation4 + $0xaa] sm:$0xff]
          %v5518 = vld [vmem:[#allocation4 + $0xb2] sm:$0xff]
          %v5519 = vld [vmem:[#allocation4 + $0xba] sm:$0xff]
          %v5520 = vld [vmem:[#allocation4 + $0xc2] sm:$0xff]
          %v5522 = vsel %vm2823, %v5496, 0
          %v5525 = vsel %vm2823, %v5497, 0
          %v5528 = vsel %vm2823, %v5498, 0
          %v5531 = vsel %vm2823, %v5499, 0
          %v5534 = vsel %vm2823, %v5500, 0
          %v5537 = vsel %vm2823, %v5501, 0
          %v5540 = vsel %vm2823, %v5502, 0
          %v5543 = vsel %vm2823, %v5503, 0
          %v5546 = vsel %vm2823, %v5504, 0
          %v5549 = vsel %vm2823, %v5505, 0
          %v5552 = vsel %vm2823, %v5506, 0
          %v5555 = vsel %vm2823, %v5507, 0
          %v5558 = vsel %vm2823, %v5508, 0
          %v5561 = vsel %vm2823, %v5509, 0
          %v5564 = vsel %vm2823, %v5510, 0
          %v5567 = vsel %vm2823, %v5511, 0
          %v5570 = vsel %vm2823, %v5512, 0
          %v5573 = vsel %vm2823, %v5513, 0
          %v5576 = vsel %vm2823, %v5514, 0
          %v5579 = vsel %vm2823, %v5515, 0
          %v5582 = vsel %vm2823, %v5516, 0
          %v5585 = vsel %vm2823, %v5517, 0
          %v5588 = vsel %vm2823, %v5518, 0
          %v5591 = vsel %vm2823, %v5519, 0
          %v5594 = vsel %vm2823, %v5520, 0
          %5596 = vmatprep.subr.mxu0 0.0
          %5597 = vmatpush1.msra.mxu0 %v2685
          %5598 = vmatprep.subr.mxu0 0.0
          %5599 = vmatpush1.msra.mxu0 0.0
          %5600 = vmatprep.subr.mxu0 0.0
          %5601 = vmatpush1.msra.mxu0 0.0
          %5602 = vmatprep.subr.mxu0 0.0
          %5603 = vmatpush1.msra.mxu0 0.0
          %5604 = vmatprep.subr.mxu0 0.0
          %5605 = vmatpush1.msra.mxu0 0.0
          %5606 = vmatprep.subr.mxu0 0.0
          %5607 = vmatpush1.msra.mxu0 0.0
          %5608 = vmatprep.subr.mxu0 0.0
          %5609 = vmatpush1.msra.mxu0 0.0
          %5610 = vmatprep.subr.mxu0 0.0
          %5611 = vmatpush1.msra.mxu0 0.0
          %5612 = vmatprep.subr.mxu0 0.0
          %5613 = vmatpush1.msra.mxu0 0.0
          %5614 = vmatprep.subr.mxu0 0.0
          %5615 = vmatpush1.msra.mxu0 0.0
          %5616 = vmatprep.subr.mxu0 0.0
          %5617 = vmatpush1.msra.mxu0 0.0
          %5618 = vmatprep.subr.mxu0 0.0
          %5619 = vmatpush1.msra.mxu0 0.0
          %5620 = vmatprep.subr.mxu0 0.0
          %5621 = vmatpush1.msra.mxu0 0.0
          %5622 = vmatprep.subr.mxu0 0.0
          %5623 = vmatpush1.msra.mxu0 0.0
          %5624 = vmatprep.subr.mxu0 0.0
          %5625 = vmatpush1.msra.mxu0 0.0
          %5626 = vmatprep.subr.mxu0 0.0
          %5627 = vmatpush1.msra.mxu0 0.0
          %5628 = vmatprep.subr.mxu0 0.0
          %5629 = vmatpush1.msra.mxu0 0.0
          %5630 = vmatprep.subr.mxu0 0.0
          %5631 = vmatpush1.msra.mxu0 0.0
          %5632 = vmatprep.subr.mxu0 0.0
          %5633 = vmatpush1.msra.mxu0 0.0
          %5634 = vmatprep.subr.mxu0 0.0
          %5635 = vmatpush1.msra.mxu0 0.0
          %5636 = vmatprep.subr.mxu0 0.0
          %5637 = vmatpush1.msra.mxu0 0.0
          %5638 = vmatprep.subr.mxu0 0.0
          %5639 = vmatpush1.msra.mxu0 0.0
          %5640 = vmatprep.subr.mxu0 0.0
          %5641 = vmatpush1.msra.mxu0 0.0
          %5642 = vmatprep.subr.mxu0 0.0
          %5643 = vmatpush1.msra.mxu0 0.0
          %5644 = vmatprep.subr.mxu0 0.0
          %5645 = vmatpush1.msra.mxu0 0.0
          %5646 = vmatprep.subr.mxu0 0.0
          %5647 = vmatpush1.msra.mxu0 0.0
          %5648 = vmatprep.subr.mxu0 0.0
          %5649 = vmatpush1.msra.mxu0 0.0
          %5650 = vmatprep.subr.mxu0 0.0
          %5651 = vmatpush1.msra.mxu0 0.0
          %5652 = vmatprep.subr.mxu0 0.0
          %5653 = vmatpush1.msra.mxu0 0.0
          %5654 = vmatprep.subr.mxu0 0.0
          %5655 = vmatpush1.msra.mxu0 0.0
          %5656 = vmatprep.subr.mxu0 0.0
          %5657 = vmatpush1.msra.mxu0 0.0
          %5658 = vmatprep.subr.mxu0 0.0
          %5659 = vmatpush1.msra.mxu0 0.0
          %5660 = vmatprep.mubr.f32.mxu0 0.0
          %5661 = vmatmul.mubr.f32.gmra.mrb[0].mxu0 %v5522
          %v5662 = vpop.f32.mrb[0].mxu0
          %v5663 = vadd.f32 0.0, %v5662
          %v5664 = vpop.f32.mrb[0].mxu0
          %5665 = vmatprep.mubr.f32.mxu0 0.0
          %5666 = vmatmul.mubr.f32.gmra.mrb[0].mxu0 %v5525
          %v5667 = vpop.f32.mrb[0].mxu0
          %v5668 = vadd.f32 0.0, %v5667
          %v5669 = vpop.f32.mrb[0].mxu0
          %5670 = vmatprep.mubr.f32.mxu0 0.0
          %5671 = vmatmul.mubr.f32.gmra.mrb[0].mxu0 %v5528
          %v5672 = vpop.f32.mrb[0].mxu0
          %v5673 = vadd.f32 0.0, %v5672
          %v5674 = vpop.f32.mrb[0].mxu0
          %5675 = vmatprep.mubr.f32.mxu0 0.0
          %5676 = vmatmul.mubr.f32.gmra.mrb[0].mxu0 %v5531
          %v5677 = vpop.f32.mrb[0].mxu0
          %v5678 = vadd.f32 0.0, %v5677
          %v5679 = vpop.f32.mrb[0].mxu0
          %5680 = vmatprep.mubr.f32.mxu0 0.0
          %5681 = vmatmul.mubr.f32.gmra.mrb[0].mxu0 %v5534
          %v5682 = vpop.f32.mrb[0].mxu0
          %v5683 = vadd.f32 0.0, %v5682
          %v5684 = vpop.f32.mrb[0].mxu0
          %5685 = vmatprep.mubr.f32.mxu0 0.0
          %5686 = vmatmul.mubr.f32.gmra.mrb[0].mxu0 %v5537
          %v5687 = vpop.f32.mrb[0].mxu0
          %v5688 = vadd.f32 0.0, %v5687
          %v5689 = vpop.f32.mrb[0].mxu0
          %5690 = vmatprep.mubr.f32.mxu0 0.0
          %5691 = vmatmul.mubr.f32.gmra.mrb[0].mxu0 %v5540
          %v5692 = vpop.f32.mrb[0].mxu0
          %v5693 = vadd.f32 0.0, %v5692
          %v5694 = vpop.f32.mrb[0].mxu0
          %5695 = vmatprep.mubr.f32.mxu0 0.0
          %5696 = vmatmul.mubr.f32.gmra.mrb[0].mxu0 %v5543
          %v5697 = vpop.f32.mrb[0].mxu0
          %v5698 = vadd.f32 0.0, %v5697
          %v5699 = vpop.f32.mrb[0].mxu0
          %5700 = vmatprep.mubr.f32.mxu0 0.0
          %5701 = vmatmul.mubr.f32.gmra.mrb[0].mxu0 %v5546
          %v5702 = vpop.f32.mrb[0].mxu0
          %v5703 = vadd.f32 0.0, %v5702
          %v5704 = vpop.f32.mrb[0].mxu0
          %5705 = vmatprep.mubr.f32.mxu0 0.0
          %5706 = vmatmul.mubr.f32.gmra.mrb[0].mxu0 %v5549
          %v5707 = vpop.f32.mrb[0].mxu0
          %v5708 = vadd.f32 0.0, %v5707
          %v5709 = vpop.f32.mrb[0].mxu0
          %5710 = vmatprep.mubr.f32.mxu0 0.0
          %5711 = vmatmul.mubr.f32.gmra.mrb[0].mxu0 %v5552
          %v5712 = vpop.f32.mrb[0].mxu0
          %v5713 = vadd.f32 0.0, %v5712
          %v5714 = vpop.f32.mrb[0].mxu0
          %5715 = vmatprep.mubr.f32.mxu0 0.0
          %5716 = vmatmul.mubr.f32.gmra.mrb[0].mxu0 %v5555
          %v5717 = vpop.f32.mrb[0].mxu0
          %v5718 = vadd.f32 0.0, %v5717
          %v5719 = vpop.f32.mrb[0].mxu0
          %5720 = vmatprep.mubr.f32.mxu0 0.0
          %5721 = vmatmul.mubr.f32.gmra.mrb[0].mxu0 %v5558
          %v5722 = vpop.f32.mrb[0].mxu0
          %v5723 = vadd.f32 0.0, %v5722
          %v5724 = vpop.f32.mrb[0].mxu0
          %5725 = vmatprep.mubr.f32.mxu0 0.0
          %5726 = vmatmul.mubr.f32.gmra.mrb[0].mxu0 %v5561
          %v5727 = vpop.f32.mrb[0].mxu0
          %v5728 = vadd.f32 0.0, %v5727
          %v5729 = vpop.f32.mrb[0].mxu0
          %5730 = vmatprep.mubr.f32.mxu0 0.0
          %5731 = vmatmul.mubr.f32.gmra.mrb[0].mxu0 %v5564
          %v5732 = vpop.f32.mrb[0].mxu0
          %v5733 = vadd.f32 0.0, %v5732
          %v5734 = vpop.f32.mrb[0].mxu0
          %5735 = vmatprep.mubr.f32.mxu0 0.0
          %5736 = vmatmul.mubr.f32.gmra.mrb[0].mxu0 %v5567
          %v5737 = vpop.f32.mrb[0].mxu0
          %v5738 = vadd.f32 0.0, %v5737
          %v5739 = vpop.f32.mrb[0].mxu0
          %5740 = vmatprep.mubr.f32.mxu0 0.0
          %5741 = vmatmul.mubr.f32.gmra.mrb[0].mxu0 %v5570
          %v5742 = vpop.f32.mrb[0].mxu0
          %v5743 = vadd.f32 0.0, %v5742
          %v5744 = vpop.f32.mrb[0].mxu0
          %5745 = vmatprep.mubr.f32.mxu0 0.0
          %5746 = vmatmul.mubr.f32.gmra.mrb[0].mxu0 %v5573
          %v5747 = vpop.f32.mrb[0].mxu0
          %v5748 = vadd.f32 0.0, %v5747
          %v5749 = vpop.f32.mrb[0].mxu0
          %5750 = vmatprep.mubr.f32.mxu0 0.0
          %5751 = vmatmul.mubr.f32.gmra.mrb[0].mxu0 %v5576
          %v5752 = vpop.f32.mrb[0].mxu0
          %v5753 = vadd.f32 0.0, %v5752
          %v5754 = vpop.f32.mrb[0].mxu0
          %5755 = vmatprep.mubr.f32.mxu0 0.0
          %5756 = vmatmul.mubr.f32.gmra.mrb[0].mxu0 %v5579
          %v5757 = vpop.f32.mrb[0].mxu0
          %v5758 = vadd.f32 0.0, %v5757
          %v5759 = vpop.f32.mrb[0].mxu0
          %5760 = vmatprep.mubr.f32.mxu0 0.0
          %5761 = vmatmul.mubr.f32.gmra.mrb[0].mxu0 %v5582
          %v5762 = vpop.f32.mrb[0].mxu0
          %v5763 = vadd.f32 0.0, %v5762
          %v5764 = vpop.f32.mrb[0].mxu0
          %5765 = vmatprep.mubr.f32.mxu0 0.0
          %5766 = vmatmul.mubr.f32.gmra.mrb[0].mxu0 %v5585
          %v5767 = vpop.f32.mrb[0].mxu0
          %v5768 = vadd.f32 0.0, %v5767
          %v5769 = vpop.f32.mrb[0].mxu0
          %5770 = vmatprep.mubr.f32.mxu0 0.0
          %5771 = vmatmul.mubr.f32.gmra.mrb[0].mxu0 %v5588
          %v5772 = vpop.f32.mrb[0].mxu0
          %v5773 = vadd.f32 0.0, %v5772
          %v5774 = vpop.f32.mrb[0].mxu0
          %5775 = vmatprep.mubr.f32.mxu0 0.0
          %5776 = vmatmul.mubr.f32.gmra.mrb[0].mxu0 %v5591
          %v5777 = vpop.f32.mrb[0].mxu0
          %v5778 = vadd.f32 0.0, %v5777
          %v5779 = vpop.f32.mrb[0].mxu0
          %5780 = vmatprep.mubr.f32.mxu0 0.0
          %5781 = vmatmul.mubr.f32.gmra.mrb[0].mxu0 %v5594
          %v5782 = vpop.f32.mrb[0].mxu0
          %v5783 = vadd.f32 0.0, %v5782
          %v5784 = vpop.f32.mrb[0].mxu0
          %5785 = vdwg.mxu0
          %v5786 = vadd.f32 %v5373, %v5663
          %v5787 = vadd.f32 %v5378, %v5668
          %v5788 = vadd.f32 %v5383, %v5673
          %v5789 = vadd.f32 %v5388, %v5678
          %v5790 = vadd.f32 %v5393, %v5683
          %v5791 = vadd.f32 %v5398, %v5688
          %v5792 = vadd.f32 %v5403, %v5693
          %v5793 = vadd.f32 %v5408, %v5698
          %v5794 = vadd.f32 %v5413, %v5703
          %v5795 = vadd.f32 %v5418, %v5708
          %v5796 = vadd.f32 %v5423, %v5713
          %v5797 = vadd.f32 %v5428, %v5718
          %v5798 = vadd.f32 %v5433, %v5723
          %v5799 = vadd.f32 %v5438, %v5728
          %v5800 = vadd.f32 %v5443, %v5733
          %v5801 = vadd.f32 %v5448, %v5738
          %v5802 = vadd.f32 %v5453, %v5743
          %v5803 = vadd.f32 %v5458, %v5748
          %v5804 = vadd.f32 %v5463, %v5753
          %v5805 = vadd.f32 %v5468, %v5758
          %v5806 = vadd.f32 %v5473, %v5763
          %v5807 = vadd.f32 %v5478, %v5768
          %v5808 = vadd.f32 %v5483, %v5773
          %v5809 = vadd.f32 %v5488, %v5778
          %v5810 = vadd.f32 %v5493, %v5783
          %v5811 = vadd.f32 %v5786, %v4138
          %v5812 = vadd.f32 %v5787, %v4138
          %v5813 = vadd.f32 %v5788, %v4138
          %v5814 = vadd.f32 %v5789, %v4138
          %v5815 = vadd.f32 %v5790, %v4138
          %v5816 = vadd.f32 %v5791, %v4138
          %v5817 = vadd.f32 %v5792, %v4138
          %v5818 = vadd.f32 %v5793, %v4138
          %v5819 = vadd.f32 %v5794, %v4138
          %v5820 = vadd.f32 %v5795, %v4138
          %v5821 = vadd.f32 %v5796, %v4138
          %v5822 = vadd.f32 %v5797, %v4138
          %v5823 = vadd.f32 %v5798, %v4138
          %v5824 = vadd.f32 %v5799, %v4138
          %v5825 = vadd.f32 %v5800, %v4138
          %v5826 = vadd.f32 %v5801, %v4138
          %v5827 = vadd.f32 %v5802, %v4138
          %v5828 = vadd.f32 %v5803, %v4138
          %v5829 = vadd.f32 %v5804, %v4138
          %v5830 = vadd.f32 %v5805, %v4138
          %v5831 = vadd.f32 %v5806, %v4138
          %v5832 = vadd.f32 %v5807, %v4138
          %v5833 = vadd.f32 %v5808, %v4138
          %v5834 = vadd.f32 %v5809, %v4138
          %v5835 = vadd.f32 %v5810, %v4138
          %v5836 = vmax.f32 %v5811, 0.0
          %v5837 = vmax.f32 %v5812, 0.0
          %v5838 = vmax.f32 %v5813, 0.0
          %v5839 = vmax.f32 %v5814, 0.0
          %v5840 = vmax.f32 %v5815, 0.0
          %v5841 = vmax.f32 %v5816, 0.0
          %v5842 = vmax.f32 %v5817, 0.0
          %v5843 = vmax.f32 %v5818, 0.0
          %v5844 = vmax.f32 %v5819, 0.0
          %v5845 = vmax.f32 %v5820, 0.0
          %v5846 = vmax.f32 %v5821, 0.0
          %v5847 = vmax.f32 %v5822, 0.0
          %v5848 = vmax.f32 %v5823, 0.0
          %v5849 = vmax.f32 %v5824, 0.0
          %v5850 = vmax.f32 %v5825, 0.0
          %v5851 = vmax.f32 %v5826, 0.0
          %v5852 = vmax.f32 %v5827, 0.0
          %v5853 = vmax.f32 %v5828, 0.0
          %v5854 = vmax.f32 %v5829, 0.0
          %v5855 = vmax.f32 %v5830, 0.0
          %v5856 = vmax.f32 %v5831, 0.0
          %v5857 = vmax.f32 %v5832, 0.0
          %v5858 = vmax.f32 %v5833, 0.0
          %v5859 = vmax.f32 %v5834, 0.0
          %v5860 = vmax.f32 %v5835, 0.0
          %5861 = vst [vmem:[#allocation5] sm:$0xff] %v5836
          %5862 = vst [vmem:[#allocation5 + $0x8] sm:$0xff] %v5837
          %5863 = vst [vmem:[#allocation5 + $0x10] sm:$0xff] %v5838
          %5864 = vst [vmem:[#allocation5 + $0x18] sm:$0xff] %v5839
          %5865 = vst [vmem:[#allocation5 + $0x20] sm:$0xff] %v5840
          %5866 = vst [vmem:[#allocation5 + $0x28] sm:$0xff] %v5841
          %5867 = vst [vmem:[#allocation5 + $0x30] sm:$0xff] %v5842
          %5868 = vst [vmem:[#allocation5 + $0x38] sm:$0xff] %v5843
          %5869 = vst [vmem:[#allocation5 + $0x40] sm:$0xff] %v5844
          %5870 = vst [vmem:[#allocation5 + $0x48] sm:$0xff] %v5845
          %5871 = vst [vmem:[#allocation5 + $0x50] sm:$0xff] %v5846
          %5872 = vst [vmem:[#allocation5 + $0x58] sm:$0xff] %v5847
          %5873 = vst [vmem:[#allocation5 + $0x60] sm:$0xff] %v5848
          %5874 = vst [vmem:[#allocation5 + $0x68] sm:$0xff] %v5849
          %5875 = vst [vmem:[#allocation5 + $0x70] sm:$0xff] %v5850
          %5876 = vst [vmem:[#allocation5 + $0x78] sm:$0xff] %v5851
          %5877 = vst [vmem:[#allocation5 + $0x80] sm:$0xff] %v5852
          %5878 = vst [vmem:[#allocation5 + $0x88] sm:$0xff] %v5853
          %5879 = vst [vmem:[#allocation5 + $0x90] sm:$0xff] %v5854
          %5880 = vst [vmem:[#allocation5 + $0x98] sm:$0xff] %v5855
          %5881 = vst [vmem:[#allocation5 + $0xa0] sm:$0xff] %v5856
          %5882 = vst [vmem:[#allocation5 + $0xa8] sm:$0xff] %v5857
          %5883 = vst [vmem:[#allocation5 + $0xb0] sm:$0xff] %v5858
          %5884 = vst [vmem:[#allocation5 + $0xb8] sm:$0xff] %v5859
          %5885 = vst [vmem:[#allocation5 + $0xc0] sm:$0xff] %v5860
          %v5886 = vld [vmem:[#allocation5] ss:$2 sm:$0xff]
          %v5887 = vld [vmem:[%s4255] ss:$2 sm:$0xff]
          %v5888 = vld [vmem:[%s4257] ss:$2 sm:$0xff]
          %v5889 = vld [vmem:[%s4259] ss:$2 sm:$0xff]
          %v5890 = vld [vmem:[%s4261] ss:$2 sm:$0xff]
          %v5891 = vld [vmem:[%s4263] ss:$2 sm:$0xff]
          %v5892 = vld [vmem:[%s4265] ss:$2 sm:$0xff]
          %v5893 = vld [vmem:[%s4267] ss:$2 sm:$0xff]
          %v5894 = vld [vmem:[%s4269] ss:$2 sm:$0xff]
          %v5895 = vld [vmem:[%s4271] ss:$2 sm:$0xff]
          %v5896 = vld [vmem:[%s4273] ss:$2 sm:$0xff]
          %v5897 = vld [vmem:[%s4275] ss:$2 sm:$0xff]
          %v5898 = vld [vmem:[%s4277] ss:$2 sm:$0x7]
          %v5899 = vld [vmem:[%s4291] ss:$2 sm:$0xff]
          %v5900 = vld [vmem:[%s4293] ss:$2 sm:$0xff]
          %v5901 = vld [vmem:[%s4295] ss:$2 sm:$0xff]
          %v5902 = vld [vmem:[%s4297] ss:$2 sm:$0xff]
          %v5903 = vld [vmem:[%s4299] ss:$2 sm:$0xff]
          %v5904 = vld [vmem:[%s4301] ss:$2 sm:$0xff]
          %v5905 = vld [vmem:[%s4303] ss:$2 sm:$0xff]
          %v5906 = vld [vmem:[%s4305] ss:$2 sm:$0xff]
          %v5907 = vld [vmem:[%s4307] ss:$2 sm:$0xff]
          %v5908 = vld [vmem:[%s4309] ss:$2 sm:$0xff]
          %v5909 = vld [vmem:[%s4311] ss:$2 sm:$0xff]
          %v5910 = vld [vmem:[%s4313] ss:$2 sm:$0xff]
          %v5911 = vld [vmem:[%s4315] ss:$2 sm:$0x7]
          %v5912 = vmax.f32 %v5886, %v5899
          %v5913 = vmax.f32 %v5887, %v5900
          %v5914 = vmax.f32 %v5888, %v5901
          %v5915 = vmax.f32 %v5889, %v5902
          %v5916 = vmax.f32 %v5890, %v5903
          %v5917 = vmax.f32 %v5891, %v5904
          %v5918 = vmax.f32 %v5892, %v5905
          %v5919 = vmax.f32 %v5893, %v5906
          %v5920 = vmax.f32 %v5894, %v5907
          %v5921 = vmax.f32 %v5895, %v5908
          %v5922 = vmax.f32 %v5896, %v5909
          %v5923 = vmax.f32 %v5897, %v5910
          %v5924 = vmax.f32 %v5898, %v5911
          %s5925 = scalar_lea.vmem [#allocation5], 2
          %v5926 = vld [vmem:[%s5925] ss:$2 sm:$0xff]
          %s5927 = scalar_lea.vmem [#allocation5], 18
          %v5928 = vld [vmem:[%s5927] ss:$2 sm:$0xff]
          %s5929 = scalar_lea.vmem [#allocation5], 34
          %v5930 = vld [vmem:[%s5929] ss:$2 sm:$0xff]
          %s5931 = scalar_lea.vmem [#allocation5], 50
          %v5932 = vld [vmem:[%s5931] ss:$2 sm:$0xff]
          %s5933 = scalar_lea.vmem [#allocation5], 66
          %v5934 = vld [vmem:[%s5933] ss:$2 sm:$0xff]
          %s5935 = scalar_lea.vmem [#allocation5], 82
          %v5936 = vld [vmem:[%s5935] ss:$2 sm:$0xff]
          %s5937 = scalar_lea.vmem [#allocation5], 98
          %v5938 = vld [vmem:[%s5937] ss:$2 sm:$0xff]
          %s5939 = scalar_lea.vmem [#allocation5], 114
          %v5940 = vld [vmem:[%s5939] ss:$2 sm:$0xff]
          %s5941 = scalar_lea.vmem [#allocation5], 130
          %v5942 = vld [vmem:[%s5941] ss:$2 sm:$0xff]
          %s5943 = scalar_lea.vmem [#allocation5], 146
          %v5944 = vld [vmem:[%s5943] ss:$2 sm:$0xff]
          %s5945 = scalar_lea.vmem [#allocation5], 162
          %v5946 = vld [vmem:[%s5945] ss:$2 sm:$0xff]
          %s5947 = scalar_lea.vmem [#allocation5], 178
          %v5948 = vld [vmem:[%s5947] ss:$2 sm:$0xff]
          %s5949 = scalar_lea.vmem [#allocation5], 194
          %v5950 = vld [vmem:[%s5949] ss:$2 sm:$0x7]
          %v5951 = vmax.f32 %v5912, %v5926
          %v5952 = vmax.f32 %v5913, %v5928
          %v5953 = vmax.f32 %v5914, %v5930
          %v5954 = vmax.f32 %v5915, %v5932
          %v5955 = vmax.f32 %v5916, %v5934
          %v5956 = vmax.f32 %v5917, %v5936
          %v5957 = vmax.f32 %v5918, %v5938
          %v5958 = vmax.f32 %v5919, %v5940
          %v5959 = vmax.f32 %v5920, %v5942
          %v5960 = vmax.f32 %v5921, %v5944
          %v5961 = vmax.f32 %v5922, %v5946
          %v5962 = vmax.f32 %v5923, %v5948
          %v5963 = vmax.f32 %v5924, %v5950
          %5964 = vst [vmem:[#allocation7] sm:$0x1] 0.0
          %5965 = vst [vmem:[#allocation7 + $0x64] sm:$0x1] 0.0
          %5966 = vst [vmem:[#allocation7 + $0x1] sm:$0xff] %v5951
          %5967 = vst [vmem:[#allocation7 + $0x9] sm:$0xff] %v5952
          %5968 = vst [vmem:[#allocation7 + $0x11] sm:$0xff] %v5953
          %5969 = vst [vmem:[#allocation7 + $0x19] sm:$0xff] %v5954
          %5970 = vst [vmem:[#allocation7 + $0x21] sm:$0xff] %v5955
          %5971 = vst [vmem:[#allocation7 + $0x29] sm:$0xff] %v5956
          %5972 = vst [vmem:[#allocation7 + $0x31] sm:$0xff] %v5957
          %5973 = vst [vmem:[#allocation7 + $0x39] sm:$0xff] %v5958
          %5974 = vst [vmem:[#allocation7 + $0x41] sm:$0xff] %v5959
          %5975 = vst [vmem:[#allocation7 + $0x49] sm:$0xff] %v5960
          %5976 = vst [vmem:[#allocation7 + $0x51] sm:$0xff] %v5961
          %5977 = vst [vmem:[#allocation7 + $0x59] sm:$0xff] %v5962
          %5978 = vst [vmem:[#allocation7 + $0x61] sm:$0x7] %v5963
          %v5979 = vld [vmem:[#allocation7] sm:$0xff]
          %v5980 = vld [vmem:[#allocation7 + $0x8] sm:$0xff]
          %v5981 = vld [vmem:[#allocation7 + $0x10] sm:$0xff]
          %v5982 = vld [vmem:[#allocation7 + $0x18] sm:$0xff]
          %v5983 = vld [vmem:[#allocation7 + $0x20] sm:$0xff]
          %v5984 = vld [vmem:[#allocation7 + $0x28] sm:$0xff]
          %v5985 = vld [vmem:[#allocation7 + $0x30] sm:$0xff]
          %v5986 = vld [vmem:[#allocation7 + $0x38] sm:$0xff]
          %v5987 = vld [vmem:[#allocation7 + $0x40] sm:$0xff]
          %v5988 = vld [vmem:[#allocation7 + $0x48] sm:$0xff]
          %v5989 = vld [vmem:[#allocation7 + $0x50] sm:$0xff]
          %v5990 = vld [vmem:[#allocation7 + $0x58] sm:$0xff]
          %v5991 = vld [vmem:[#allocation7 + $0x60] sm:$0xf]
          %v5992 = vld [vmem:[#allocation7 + $0x1] sm:$0xff]
          %v5993 = vld [vmem:[#allocation7 + $0x9] sm:$0xff]
          %v5994 = vld [vmem:[#allocation7 + $0x11] sm:$0xff]
          %v5995 = vld [vmem:[#allocation7 + $0x19] sm:$0xff]
          %v5996 = vld [vmem:[#allocation7 + $0x21] sm:$0xff]
          %v5997 = vld [vmem:[#allocation7 + $0x29] sm:$0xff]
          %v5998 = vld [vmem:[#allocation7 + $0x31] sm:$0xff]
          %v5999 = vld [vmem:[#allocation7 + $0x39] sm:$0xff]
          %v6000 = vld [vmem:[#allocation7 + $0x41] sm:$0xff]
          %v6001 = vld [vmem:[#allocation7 + $0x49] sm:$0xff]
          %v6002 = vld [vmem:[#allocation7 + $0x51] sm:$0xff]
          %v6003 = vld [vmem:[#allocation7 + $0x59] sm:$0xff]
          %v6004 = vld [vmem:[#allocation7 + $0x61] sm:$0xf]
          %6005 = vmatprep.subr.mxu0 0.0
          %6006 = vmatpush1.msra.mxu0 %v2703
          %6007 = vmatprep.subr.mxu0 0.0
          %6008 = vmatpush1.msra.mxu0 %v2704
          %6009 = vmatprep.subr.mxu0 0.0
          %6010 = vmatpush1.msra.mxu0 %v2705
          %6011 = vmatprep.subr.mxu0 0.0
          %6012 = vmatpush1.msra.mxu0 %v2706
          %6013 = vmatprep.subr.mxu0 0.0
          %6014 = vmatpush1.msra.mxu0 %v2707
          %6015 = vmatprep.subr.mxu0 0.0
          %6016 = vmatpush1.msra.mxu0 %v2708
          %6017 = vmatprep.subr.mxu0 0.0
          %6018 = vmatpush1.msra.mxu0 %v2709
          %6019 = vmatprep.subr.mxu0 0.0
          %6020 = vmatpush1.msra.mxu0 %v2710
          %6021 = vmatprep.subr.mxu0 0.0
          %6022 = vmatpush1.msra.mxu0 %v2711
          %6023 = vmatprep.subr.mxu0 0.0
          %6024 = vmatpush1.msra.mxu0 %v2712
          %6025 = vmatprep.subr.mxu0 0.0
          %6026 = vmatpush1.msra.mxu0 %v2713
          %6027 = vmatprep.subr.mxu0 0.0
          %6028 = vmatpush1.msra.mxu0 %v2714
          %6029 = vmatprep.subr.mxu0 0.0
          %6030 = vmatpush1.msra.mxu0 %v2715
          %6031 = vmatprep.subr.mxu0 0.0
          %6032 = vmatpush1.msra.mxu0 %v2716
          %6033 = vmatprep.subr.mxu0 0.0
          %6034 = vmatpush1.msra.mxu0 %v2717
          %6035 = vmatprep.subr.mxu0 0.0
          %6036 = vmatpush1.msra.mxu0 %v2718
          %6037 = vmatprep.subr.mxu0 0.0
          %6038 = vmatpush1.msra.mxu0 0.0
          %6039 = vmatprep.subr.mxu0 0.0
          %6040 = vmatpush1.msra.mxu0 0.0
          %6041 = vmatprep.subr.mxu0 0.0
          %6042 = vmatpush1.msra.mxu0 0.0
          %6043 = vmatprep.subr.mxu0 0.0
          %6044 = vmatpush1.msra.mxu0 0.0
          %6045 = vmatprep.subr.mxu0 0.0
          %6046 = vmatpush1.msra.mxu0 0.0
          %6047 = vmatprep.subr.mxu0 0.0
          %6048 = vmatpush1.msra.mxu0 0.0
          %6049 = vmatprep.subr.mxu0 0.0
          %6050 = vmatpush1.msra.mxu0 0.0
          %6051 = vmatprep.subr.mxu0 0.0
          %6052 = vmatpush1.msra.mxu0 0.0
          %6053 = vmatprep.subr.mxu0 0.0
          %6054 = vmatpush1.msra.mxu0 0.0
          %6055 = vmatprep.subr.mxu0 0.0
          %6056 = vmatpush1.msra.mxu0 0.0
          %6057 = vmatprep.subr.mxu0 0.0
          %6058 = vmatpush1.msra.mxu0 0.0
          %6059 = vmatprep.subr.mxu0 0.0
          %6060 = vmatpush1.msra.mxu0 0.0
          %6061 = vmatprep.subr.mxu0 0.0
          %6062 = vmatpush1.msra.mxu0 0.0
          %6063 = vmatprep.subr.mxu0 0.0
          %6064 = vmatpush1.msra.mxu0 0.0
          %6065 = vmatprep.subr.mxu0 0.0
          %6066 = vmatpush1.msra.mxu0 0.0
          %6067 = vmatprep.subr.mxu0 0.0
          %6068 = vmatpush1.msra.mxu0 0.0
          %6069 = vmatprep.mubr.f32.mxu0 0.0
          %6070 = vmatmul.mubr.f32.gmra.mrb[0].mxu0 %v5992
          %v6071 = vpop.f32.mrb[0].mxu0
          %v6072 = vadd.f32 0.0, %v6071
          %v6073 = vpop.f32.mrb[0].mxu0
          %6074 = vmatprep.mubr.f32.mxu0 0.0
          %6075 = vmatmul.mubr.f32.gmra.mrb[0].mxu0 %v5993
          %v6076 = vpop.f32.mrb[0].mxu0
          %v6077 = vadd.f32 0.0, %v6076
          %v6078 = vpop.f32.mrb[0].mxu0
          %6079 = vmatprep.mubr.f32.mxu0 0.0
          %6080 = vmatmul.mubr.f32.gmra.mrb[0].mxu0 %v5994
          %v6081 = vpop.f32.mrb[0].mxu0
          %v6082 = vadd.f32 0.0, %v6081
          %v6083 = vpop.f32.mrb[0].mxu0
          %6084 = vmatprep.mubr.f32.mxu0 0.0
          %6085 = vmatmul.mubr.f32.gmra.mrb[0].mxu0 %v5995
          %v6086 = vpop.f32.mrb[0].mxu0
          %v6087 = vadd.f32 0.0, %v6086
          %v6088 = vpop.f32.mrb[0].mxu0
          %6089 = vmatprep.mubr.f32.mxu0 0.0
          %6090 = vmatmul.mubr.f32.gmra.mrb[0].mxu0 %v5996
          %v6091 = vpop.f32.mrb[0].mxu0
          %v6092 = vadd.f32 0.0, %v6091
          %v6093 = vpop.f32.mrb[0].mxu0
          %6094 = vmatprep.mubr.f32.mxu0 0.0
          %6095 = vmatmul.mubr.f32.gmra.mrb[0].mxu0 %v5997
          %v6096 = vpop.f32.mrb[0].mxu0
          %v6097 = vadd.f32 0.0, %v6096
          %v6098 = vpop.f32.mrb[0].mxu0
          %6099 = vmatprep.mubr.f32.mxu0 0.0
          %6100 = vmatmul.mubr.f32.gmra.mrb[0].mxu0 %v5998
          %v6101 = vpop.f32.mrb[0].mxu0
          %v6102 = vadd.f32 0.0, %v6101
          %v6103 = vpop.f32.mrb[0].mxu0
          %6104 = vmatprep.mubr.f32.mxu0 0.0
          %6105 = vmatmul.mubr.f32.gmra.mrb[0].mxu0 %v5999
          %v6106 = vpop.f32.mrb[0].mxu0
          %v6107 = vadd.f32 0.0, %v6106
          %v6108 = vpop.f32.mrb[0].mxu0
          %6109 = vmatprep.mubr.f32.mxu0 0.0
          %6110 = vmatmul.mubr.f32.gmra.mrb[0].mxu0 %v6000
          %v6111 = vpop.f32.mrb[0].mxu0
          %v6112 = vadd.f32 0.0, %v6111
          %v6113 = vpop.f32.mrb[0].mxu0
          %6114 = vmatprep.mubr.f32.mxu0 0.0
          %6115 = vmatmul.mubr.f32.gmra.mrb[0].mxu0 %v6001
          %v6116 = vpop.f32.mrb[0].mxu0
          %v6117 = vadd.f32 0.0, %v6116
          %v6118 = vpop.f32.mrb[0].mxu0
          %6119 = vmatprep.mubr.f32.mxu0 0.0
          %6120 = vmatmul.mubr.f32.gmra.mrb[0].mxu0 %v6002
          %v6121 = vpop.f32.mrb[0].mxu0
          %v6122 = vadd.f32 0.0, %v6121
          %v6123 = vpop.f32.mrb[0].mxu0
          %6124 = vmatprep.mubr.f32.mxu0 0.0
          %6125 = vmatmul.mubr.f32.gmra.mrb[0].mxu0 %v6003
          %v6126 = vpop.f32.mrb[0].mxu0
          %v6127 = vadd.f32 0.0, %v6126
          %v6128 = vpop.f32.mrb[0].mxu0
          %6129 = vmatprep.mubr.f32.mxu0 0.0
          %6130 = vmatmul.mubr.f32.gmra.mrb[0].mxu0 %v6004
          %v6131 = vpop.f32.mrb[0].mxu0
          %v6132 = vadd.f32 0.0, %v6131
          %v6133 = vpop.f32.mrb[0].mxu0
          %6134 = vdwg.mxu0
          %6135 = vmatprep.subr.mxu0 0.0
          %6136 = vmatpush1.msra.mxu0 %v2687
          %6137 = vmatprep.subr.mxu0 0.0
          %6138 = vmatpush1.msra.mxu0 %v2688
          %6139 = vmatprep.subr.mxu0 0.0
          %6140 = vmatpush1.msra.mxu0 %v2689
          %6141 = vmatprep.subr.mxu0 0.0
          %6142 = vmatpush1.msra.mxu0 %v2690
          %6143 = vmatprep.subr.mxu0 0.0
          %6144 = vmatpush1.msra.mxu0 %v2691
          %6145 = vmatprep.subr.mxu0 0.0
          %6146 = vmatpush1.msra.mxu0 %v2692
          %6147 = vmatprep.subr.mxu0 0.0
          %6148 = vmatpush1.msra.mxu0 %v2693
          %6149 = vmatprep.subr.mxu0 0.0
          %6150 = vmatpush1.msra.mxu0 %v2694
          %6151 = vmatprep.subr.mxu0 0.0
          %6152 = vmatpush1.msra.mxu0 %v2695
          %6153 = vmatprep.subr.mxu0 0.0
          %6154 = vmatpush1.msra.mxu0 %v2696
          %6155 = vmatprep.subr.mxu0 0.0
          %6156 = vmatpush1.msra.mxu0 %v2697
          %6157 = vmatprep.subr.mxu0 0.0
          %6158 = vmatpush1.msra.mxu0 %v2698
          %6159 = vmatprep.subr.mxu0 0.0
          %6160 = vmatpush1.msra.mxu0 %v2699
          %6161 = vmatprep.subr.mxu0 0.0
          %6162 = vmatpush1.msra.mxu0 %v2700
          %6163 = vmatprep.subr.mxu0 0.0
          %6164 = vmatpush1.msra.mxu0 %v2701
          %6165 = vmatprep.subr.mxu0 0.0
          %6166 = vmatpush1.msra.mxu0 %v2702
          %6167 = vmatprep.subr.mxu0 0.0
          %6168 = vmatpush1.msra.mxu0 0.0
          %6169 = vmatprep.subr.mxu0 0.0
          %6170 = vmatpush1.msra.mxu0 0.0
          %6171 = vmatprep.subr.mxu0 0.0
          %6172 = vmatpush1.msra.mxu0 0.0
          %6173 = vmatprep.subr.mxu0 0.0
          %6174 = vmatpush1.msra.mxu0 0.0
          %6175 = vmatprep.subr.mxu0 0.0
          %6176 = vmatpush1.msra.mxu0 0.0
          %6177 = vmatprep.subr.mxu0 0.0
          %6178 = vmatpush1.msra.mxu0 0.0
          %6179 = vmatprep.subr.mxu0 0.0
          %6180 = vmatpush1.msra.mxu0 0.0
          %6181 = vmatprep.subr.mxu0 0.0
          %6182 = vmatpush1.msra.mxu0 0.0
          %6183 = vmatprep.subr.mxu0 0.0
          %6184 = vmatpush1.msra.mxu0 0.0
          %6185 = vmatprep.subr.mxu0 0.0
          %6186 = vmatpush1.msra.mxu0 0.0
          %6187 = vmatprep.subr.mxu0 0.0
          %6188 = vmatpush1.msra.mxu0 0.0
          %6189 = vmatprep.subr.mxu0 0.0
          %6190 = vmatpush1.msra.mxu0 0.0
          %6191 = vmatprep.subr.mxu0 0.0
          %6192 = vmatpush1.msra.mxu0 0.0
          %6193 = vmatprep.subr.mxu0 0.0
          %6194 = vmatpush1.msra.mxu0 0.0
          %6195 = vmatprep.subr.mxu0 0.0
          %6196 = vmatpush1.msra.mxu0 0.0
          %6197 = vmatprep.subr.mxu0 0.0
          %6198 = vmatpush1.msra.mxu0 0.0
          %6199 = vmatprep.mubr.f32.mxu0 0.0
          %6200 = vmatmul.mubr.f32.gmra.mrb[0].mxu0 %v5979
          %v6201 = vpop.f32.mrb[0].mxu0
          %v6202 = vadd.f32 %v6072, %v6201
          %v6203 = vpop.f32.mrb[0].mxu0
          %6204 = vmatprep.mubr.f32.mxu0 0.0
          %6205 = vmatmul.mubr.f32.gmra.mrb[0].mxu0 %v5980
          %v6206 = vpop.f32.mrb[0].mxu0
          %v6207 = vadd.f32 %v6077, %v6206
          %v6208 = vpop.f32.mrb[0].mxu0
          %6209 = vmatprep.mubr.f32.mxu0 0.0
          %6210 = vmatmul.mubr.f32.gmra.mrb[0].mxu0 %v5981
          %v6211 = vpop.f32.mrb[0].mxu0
          %v6212 = vadd.f32 %v6082, %v6211
          %v6213 = vpop.f32.mrb[0].mxu0
          %6214 = vmatprep.mubr.f32.mxu0 0.0
          %6215 = vmatmul.mubr.f32.gmra.mrb[0].mxu0 %v5982
          %v6216 = vpop.f32.mrb[0].mxu0
          %v6217 = vadd.f32 %v6087, %v6216
          %v6218 = vpop.f32.mrb[0].mxu0
          %6219 = vmatprep.mubr.f32.mxu0 0.0
          %6220 = vmatmul.mubr.f32.gmra.mrb[0].mxu0 %v5983
          %v6221 = vpop.f32.mrb[0].mxu0
          %v6222 = vadd.f32 %v6092, %v6221
          %v6223 = vpop.f32.mrb[0].mxu0
          %6224 = vmatprep.mubr.f32.mxu0 0.0
          %6225 = vmatmul.mubr.f32.gmra.mrb[0].mxu0 %v5984
          %v6226 = vpop.f32.mrb[0].mxu0
          %v6227 = vadd.f32 %v6097, %v6226
          %v6228 = vpop.f32.mrb[0].mxu0
          %6229 = vmatprep.mubr.f32.mxu0 0.0
          %6230 = vmatmul.mubr.f32.gmra.mrb[0].mxu0 %v5985
          %v6231 = vpop.f32.mrb[0].mxu0
          %v6232 = vadd.f32 %v6102, %v6231
          %v6233 = vpop.f32.mrb[0].mxu0
          %6234 = vmatprep.mubr.f32.mxu0 0.0
          %6235 = vmatmul.mubr.f32.gmra.mrb[0].mxu0 %v5986
          %v6236 = vpop.f32.mrb[0].mxu0
          %v6237 = vadd.f32 %v6107, %v6236
          %v6238 = vpop.f32.mrb[0].mxu0
          %6239 = vmatprep.mubr.f32.mxu0 0.0
          %6240 = vmatmul.mubr.f32.gmra.mrb[0].mxu0 %v5987
          %v6241 = vpop.f32.mrb[0].mxu0
          %v6242 = vadd.f32 %v6112, %v6241
          %v6243 = vpop.f32.mrb[0].mxu0
          %6244 = vmatprep.mubr.f32.mxu0 0.0
          %6245 = vmatmul.mubr.f32.gmra.mrb[0].mxu0 %v5988
          %v6246 = vpop.f32.mrb[0].mxu0
          %v6247 = vadd.f32 %v6117, %v6246
          %v6248 = vpop.f32.mrb[0].mxu0
          %6249 = vmatprep.mubr.f32.mxu0 0.0
          %6250 = vmatmul.mubr.f32.gmra.mrb[0].mxu0 %v5989
          %v6251 = vpop.f32.mrb[0].mxu0
          %v6252 = vadd.f32 %v6122, %v6251
          %v6253 = vpop.f32.mrb[0].mxu0
          %6254 = vmatprep.mubr.f32.mxu0 0.0
          %6255 = vmatmul.mubr.f32.gmra.mrb[0].mxu0 %v5990
          %v6256 = vpop.f32.mrb[0].mxu0
          %v6257 = vadd.f32 %v6127, %v6256
          %v6258 = vpop.f32.mrb[0].mxu0
          %6259 = vmatprep.mubr.f32.mxu0 0.0
          %6260 = vmatmul.mubr.f32.gmra.mrb[0].mxu0 %v5991
          %v6261 = vpop.f32.mrb[0].mxu0
          %v6262 = vadd.f32 %v6132, %v6261
          %v6263 = vpop.f32.mrb[0].mxu0
          %6264 = vdwg.mxu0
          %v6265 = vadd.f32 %v6202, %v4788
          %v6266 = vadd.f32 %v6207, %v4788
          %v6267 = vadd.f32 %v6212, %v4788
          %v6268 = vadd.f32 %v6217, %v4788
          %v6269 = vadd.f32 %v6222, %v4788
          %v6270 = vadd.f32 %v6227, %v4788
          %v6271 = vadd.f32 %v6232, %v4788
          %v6272 = vadd.f32 %v6237, %v4788
          %v6273 = vadd.f32 %v6242, %v4788
          %v6274 = vadd.f32 %v6247, %v4788
          %v6275 = vadd.f32 %v6252, %v4788
          %v6276 = vadd.f32 %v6257, %v4788
          %v6277 = vadd.f32 %v6262, %v4788
          %v6278 = vmax.f32 %v6265, 0.0
          %v6279 = vmax.f32 %v6266, 0.0
          %v6280 = vmax.f32 %v6267, 0.0
          %v6281 = vmax.f32 %v6268, 0.0
          %v6282 = vmax.f32 %v6269, 0.0
          %v6283 = vmax.f32 %v6270, 0.0
          %v6284 = vmax.f32 %v6271, 0.0
          %v6285 = vmax.f32 %v6272, 0.0
          %v6286 = vmax.f32 %v6273, 0.0
          %v6287 = vmax.f32 %v6274, 0.0
          %v6288 = vmax.f32 %v6275, 0.0
          %v6289 = vmax.f32 %v6276, 0.0
          %v6290 = vmax.f32 %v6277, 0.0
          %6291 = vst [vmem:[#allocation5] sm:$0xff] %v6278
          %6292 = vst [vmem:[#allocation5 + $0x8] sm:$0xff] %v6279
          %6293 = vst [vmem:[#allocation5 + $0x10] sm:$0xff] %v6280
          %6294 = vst [vmem:[#allocation5 + $0x18] sm:$0xff] %v6281
          %6295 = vst [vmem:[#allocation5 + $0x20] sm:$0xff] %v6282
          %6296 = vst [vmem:[#allocation5 + $0x28] sm:$0xff] %v6283
          %6297 = vst [vmem:[#allocation5 + $0x30] sm:$0xff] %v6284
          %6298 = vst [vmem:[#allocation5 + $0x38] sm:$0xff] %v6285
          %6299 = vst [vmem:[#allocation5 + $0x40] sm:$0xff] %v6286
          %6300 = vst [vmem:[#allocation5 + $0x48] sm:$0xff] %v6287
          %6301 = vst [vmem:[#allocation5 + $0x50] sm:$0xff] %v6288
          %6302 = vst [vmem:[#allocation5 + $0x58] sm:$0xff] %v6289
          %6303 = vst [vmem:[#allocation5 + $0x60] sm:$0xf] %v6290
          %v6304 = vld [vmem:[#allocation5] ss:$2 sm:$0xff]
          %v6305 = vld [vmem:[%s4255] ss:$2 sm:$0xff]
          %v6306 = vld [vmem:[%s4257] ss:$2 sm:$0xff]
          %v6307 = vld [vmem:[%s4259] ss:$2 sm:$0xff]
          %v6308 = vld [vmem:[%s4261] ss:$2 sm:$0xff]
          %v6309 = vld [vmem:[%s4263] ss:$2 sm:$0xff]
          %v6310 = vld [vmem:[%s4265] ss:$2 sm:$0x3]
          %v6311 = vld [vmem:[%s4291] ss:$2 sm:$0xff]
          %v6312 = vld [vmem:[%s4293] ss:$2 sm:$0xff]
          %v6313 = vld [vmem:[%s4295] ss:$2 sm:$0xff]
          %v6314 = vld [vmem:[%s4297] ss:$2 sm:$0xff]
          %v6315 = vld [vmem:[%s4299] ss:$2 sm:$0xff]
          %v6316 = vld [vmem:[%s4301] ss:$2 sm:$0xff]
          %v6317 = vld [vmem:[%s4303] ss:$2 sm:$0x3]
          %v6318 = vmax.f32 %v6304, %v6311
          %v6319 = vmax.f32 %v6305, %v6312
          %v6320 = vmax.f32 %v6306, %v6313
          %v6321 = vmax.f32 %v6307, %v6314
          %v6322 = vmax.f32 %v6308, %v6315
          %v6323 = vmax.f32 %v6309, %v6316
          %v6324 = vmax.f32 %v6310, %v6317
          %v6325 = vmul.f32 %v6318, %v4908
          %v6326 = vmul.f32 %v6319, %v4909
          %v6327 = vmul.f32 %v6320, %v4910
          %v6328 = vmul.f32 %v6321, %v4911
          %v6329 = vmul.f32 %v6322, %v4912
          %v6330 = vmul.f32 %v6323, %v4913
          %v6331 = vmul.f32 %v6324, %v4914
          %v6332 = vadd.f32 %v6325, %v6326
          %v6333 = vadd.f32 %v6332, %v6327
          %v6334 = vadd.f32 %v6333, %v6328
          %v6335 = vadd.f32 %v6334, %v6329
          %v6336 = vadd.f32 %v6335, %v6330
          %vm6337 = vcmask 1041408
          %v6338 = vsel %vm6337, %v6331, 0.0
          %v6339 = vadd.f32 %v6336, %v6338
          %v6340 = vrot.slane %v6339, 4
          %v6341 = vadd.f32 %v6339, %v6340
          %v6342 = vrot.slane %v6341, 2
          %v6343 = vadd.f32 %v6341, %v6342
          %v6344 = vrot.slane %v6343, 1
          %v6345 = vadd.f32 %v6343, %v6344
          %6346 = vadd.xlane.f32.xlu0 %v6345
          %v6347 = vpop.xlane.xlu0 %6346
          %v6348 = vadd.f32 %v6347, %v4915
          %v6349 = vmul.f32 %v4906, %v6348
          %v6350 = vsub.f32 0.0, %v6349
          %v6351 = vmul.f32 %v6350, 1.442695
          %v6352 = vpow.pop %v6351
          %v6353 = vadd.f32 %v6352, 1.0
          %v6354 = vrcp.pop %v6353
          %v6355 = vmul.f32 1.0, %v6354
          %6357 = vset.pattern.permute.xlu0 0
          %6358 = vperm.xlu0 %6357, %v6355
          %v6359 = vpop.permute.xlu0 %6358
          %v6361 = vlaneseq
          %v6362 = vshrl.u32 %v6361, 7
          %v6363 = vsub.s32 0, %v6362
          %v6364 = vrot.slane %v6359, %v6363
          %6365 = vst [vmem:[%s15] sm:$0x1] %v6364
          %6366 = vxpose.xlu0.b32.start [1/16] %v2722, 128
          %6367 = vxpose.xlu0.b32.cont [2/16] 0.0, 128
          %6368 = vxpose.xlu0.b32.cont [3/16] 0.0, 128
          %6369 = vxpose.xlu0.b32.cont [4/16] 0.0, 128
          %6370 = vxpose.xlu0.b32.cont [5/16] 0.0, 128
          %6371 = vxpose.xlu0.b32.cont [6/16] 0.0, 128
          %6372 = vxpose.xlu0.b32.cont [7/16] 0.0, 128
          %6373 = vxpose.xlu0.b32.cont [8/16] 0.0, 128
          %6374 = vxpose.xlu0.b32.cont [9/16] 0.0, 128
          %6375 = vxpose.xlu0.b32.cont [10/16] 0.0, 128
          %6376 = vxpose.xlu0.b32.cont [11/16] 0.0, 128
          %6377 = vxpose.xlu0.b32.cont [12/16] 0.0, 128
          %6378 = vxpose.xlu0.b32.cont [13/16] 0.0, 128
          %6379 = vxpose.xlu0.b32.cont [14/16] 0.0, 128
          %6380 = vxpose.xlu0.b32.cont [15/16] 0.0, 128
          %6381 = vxpose.xlu0.b32.end [16/16] 0.0, 128
          %v6382 = vpop.trf.xlu0
          %v6383 = vpop.trf.xlu0
          %v6384 = vpop.trf.xlu0
          %v6385 = vpop.trf.xlu0
          %v6386 = vpop.trf.xlu0
          %v6387 = vpop.trf.xlu0
          %v6388 = vpop.trf.xlu0
          %v6389 = vpop.trf.xlu0
          %v6390 = vpop.trf.xlu0
          %v6391 = vpop.trf.xlu0
          %v6392 = vpop.trf.xlu0
          %v6393 = vpop.trf.xlu0
          %v6394 = vpop.trf.xlu0
          %v6395 = vpop.trf.xlu0
          %v6396 = vpop.trf.xlu0
          %v6397 = vpop.trf.xlu0
          %6398 = vxpose.xlu0.b32.start [1/16] %v2723, 128
          %6399 = vxpose.xlu0.b32.cont [2/16] 0.0, 128
          %6400 = vxpose.xlu0.b32.cont [3/16] 0.0, 128
          %6401 = vxpose.xlu0.b32.cont [4/16] 0.0, 128
          %6402 = vxpose.xlu0.b32.cont [5/16] 0.0, 128
          %6403 = vxpose.xlu0.b32.cont [6/16] 0.0, 128
          %6404 = vxpose.xlu0.b32.cont [7/16] 0.0, 128
          %6405 = vxpose.xlu0.b32.cont [8/16] 0.0, 128
          %6406 = vxpose.xlu0.b32.cont [9/16] 0.0, 128
          %6407 = vxpose.xlu0.b32.cont [10/16] 0.0, 128
          %6408 = vxpose.xlu0.b32.cont [11/16] 0.0, 128
          %6409 = vxpose.xlu0.b32.cont [12/16] 0.0, 128
          %6410 = vxpose.xlu0.b32.cont [13/16] 0.0, 128
          %6411 = vxpose.xlu0.b32.cont [14/16] 0.0, 128
          %6412 = vxpose.xlu0.b32.cont [15/16] 0.0, 128
          %6413 = vxpose.xlu0.b32.end [16/16] 0.0, 128
          %v6414 = vpop.trf.xlu0
          %v6415 = vpop.trf.xlu0
          %v6416 = vpop.trf.xlu0
          %v6417 = vpop.trf.xlu0
          %v6418 = vpop.trf.xlu0
          %v6419 = vpop.trf.xlu0
          %v6420 = vpop.trf.xlu0
          %v6421 = vpop.trf.xlu0
          %v6422 = vpop.trf.xlu0
          %v6423 = vpop.trf.xlu0
          %v6424 = vpop.trf.xlu0
          %v6425 = vpop.trf.xlu0
          %v6426 = vpop.trf.xlu0
          %v6427 = vpop.trf.xlu0
          %v6428 = vpop.trf.xlu0
          %v6429 = vpop.trf.xlu0
          %v6430 = vld [vmem:[%s0 + $0x8] sm:$0xff]
          %6431 = vxpose.xlu0.b32.start [1/16] %v6430, 128
          %6432 = vxpose.xlu0.b32.cont [2/16] 0.0, 128
          %6433 = vxpose.xlu0.b32.cont [3/16] 0.0, 128
          %6434 = vxpose.xlu0.b32.cont [4/16] 0.0, 128
          %6435 = vxpose.xlu0.b32.cont [5/16] 0.0, 128
          %6436 = vxpose.xlu0.b32.cont [6/16] 0.0, 128
          %6437 = vxpose.xlu0.b32.cont [7/16] 0.0, 128
          %6438 = vxpose.xlu0.b32.cont [8/16] 0.0, 128
          %6439 = vxpose.xlu0.b32.cont [9/16] 0.0, 128
          %6440 = vxpose.xlu0.b32.cont [10/16] 0.0, 128
          %6441 = vxpose.xlu0.b32.cont [11/16] 0.0, 128
          %6442 = vxpose.xlu0.b32.cont [12/16] 0.0, 128
          %6443 = vxpose.xlu0.b32.cont [13/16] 0.0, 128
          %6444 = vxpose.xlu0.b32.cont [14/16] 0.0, 128
          %6445 = vxpose.xlu0.b32.cont [15/16] 0.0, 128
          %6446 = vxpose.xlu0.b32.end [16/16] 0.0, 128
          %v6447 = vpop.trf.xlu0
          %v6448 = vpop.trf.xlu0
          %v6449 = vpop.trf.xlu0
          %v6450 = vpop.trf.xlu0
          %v6451 = vpop.trf.xlu0
          %v6452 = vpop.trf.xlu0
          %v6453 = vpop.trf.xlu0
          %v6454 = vpop.trf.xlu0
          %v6455 = vpop.trf.xlu0
          %v6456 = vpop.trf.xlu0
          %v6457 = vpop.trf.xlu0
          %v6458 = vpop.trf.xlu0
          %v6459 = vpop.trf.xlu0
          %v6460 = vpop.trf.xlu0
          %v6461 = vpop.trf.xlu0
          %v6462 = vpop.trf.xlu0
          %6463 = vst.msk [vmem:[#allocation4] sm:$0x1] %vm2821, 0.0
          %6464 = vst.msk [vmem:[#allocation4 + $0x1] sm:$0xff] %vm2823, %v6382
          %6465 = vst.msk [vmem:[#allocation4 + $0x9] sm:$0xff] %vm2823, %v6383
          %6466 = vst.msk [vmem:[#allocation4 + $0x11] sm:$0xff] %vm2823, %v6384
          %6467 = vst.msk [vmem:[#allocation4 + $0x19] sm:$0xff] %vm2823, %v6385
          %6468 = vst.msk [vmem:[#allocation4 + $0x21] sm:$0xff] %vm2823, %v6386
          %6469 = vst.msk [vmem:[#allocation4 + $0x29] sm:$0xff] %vm2823, %v6387
          %6470 = vst.msk [vmem:[#allocation4 + $0x31] sm:$0xff] %vm2823, %v6388
          %6471 = vst.msk [vmem:[#allocation4 + $0x39] sm:$0xff] %vm2823, %v6389
          %6472 = vst.msk [vmem:[#allocation4 + $0x41] sm:$0xff] %vm2823, %v6390
          %6473 = vst.msk [vmem:[#allocation4 + $0x49] sm:$0xff] %vm2823, %v6391
          %6474 = vst.msk [vmem:[#allocation4 + $0x51] sm:$0xff] %vm2823, %v6392
          %6475 = vst.msk [vmem:[#allocation4 + $0x59] sm:$0xff] %vm2823, %v6393
          %6476 = vst.msk [vmem:[#allocation4 + $0x61] sm:$0xff] %vm2823, %v6394
          %6477 = vst.msk [vmem:[#allocation4 + $0x69] sm:$0xff] %vm2823, %v6395
          %6478 = vst.msk [vmem:[#allocation4 + $0x71] sm:$0xff] %vm2823, %v6396
          %6479 = vst.msk [vmem:[#allocation4 + $0x79] sm:$0xff] %vm2823, %v6397
          %6480 = vst.msk [vmem:[#allocation4 + $0x81] sm:$0xff] %vm2823, %v6414
          %6481 = vst.msk [vmem:[#allocation4 + $0x89] sm:$0xff] %vm2823, %v6415
          %6482 = vst.msk [vmem:[#allocation4 + $0x91] sm:$0xff] %vm2823, %v6416
          %6483 = vst.msk [vmem:[#allocation4 + $0x99] sm:$0xff] %vm2823, %v6417
          %6484 = vst.msk [vmem:[#allocation4 + $0xa1] sm:$0xff] %vm2823, %v6418
          %6485 = vst.msk [vmem:[#allocation4 + $0xa9] sm:$0xff] %vm2823, %v6419
          %6486 = vst.msk [vmem:[#allocation4 + $0xb1] sm:$0xff] %vm2823, %v6420
          %6487 = vst.msk [vmem:[#allocation4 + $0xb9] sm:$0xff] %vm2823, %v6421
          %6488 = vst.msk [vmem:[#allocation4 + $0xc1] sm:$0xff] %vm2823, %v6422
          %6489 = vst.msk [vmem:[#allocation4 + $0xc9] sm:$0xff] %vm2823, %v6447
          %6490 = vst.msk [vmem:[#allocation4 + $0xd1] sm:$0xff] %vm2823, %v6448
          %6491 = vst.msk [vmem:[#allocation4 + $0xd9] sm:$0xff] %vm2823, %v6449
          %6492 = vst.msk [vmem:[#allocation4 + $0xe1] sm:$0xff] %vm2823, %v6450
          %6493 = vst.msk [vmem:[#allocation4 + $0xe9] sm:$0xff] %vm2823, %v6451
          %6494 = vst.msk [vmem:[#allocation4 + $0xf1] sm:$0xff] %vm2823, %v6452
          %6495 = vst.msk [vmem:[#allocation4 + $0xf9] sm:$0xff] %vm2823, %v6453
          %6496 = vst.msk [vmem:[#allocation4 + $0x101] sm:$0xff] %vm2823, %v6454
          %6497 = vst.msk [vmem:[#allocation4 + $0x109] sm:$0xff] %vm2823, %v6455
          %6498 = vst.msk [vmem:[#allocation4 + $0x111] sm:$0xff] %vm2823, %v6456
          %6499 = vst.msk [vmem:[#allocation4 + $0x119] sm:$0xff] %vm2823, %v6457
          %6500 = vst.msk [vmem:[#allocation4 + $0x121] sm:$0xff] %vm2823, %v6458
          %6501 = vst.msk [vmem:[#allocation4 + $0x129] sm:$0xf] %vm2861, %v6459
          %6502 = vst.msk [vmem:[#allocation4 + $0x12d] sm:$0x1] %vm2821, 0.0
          %v6503 = vld [vmem:[#allocation23] sm:$0xff]
          %v6504 = vld [vmem:[#allocation23 + $0x8] sm:$0xff]
          %v6505 = vld [vmem:[#allocation23 + $0x10] sm:$0xff]
          %v6506 = vld [vmem:[#allocation23 + $0x18] sm:$0xff]
          %v6507 = vld [vmem:[#allocation23 + $0x20] sm:$0xff]
          %v6508 = vld [vmem:[#allocation23 + $0x28] sm:$0xff]
          %v6509 = vld [vmem:[#allocation23 + $0x30] sm:$0xff]
          %v6510 = vld [vmem:[#allocation23 + $0x38] sm:$0xff]
          %v6511 = vld [vmem:[#allocation23 + $0x40] sm:$0xff]
          %v6512 = vld [vmem:[#allocation23 + $0x48] sm:$0x7]
          %v6513 = vld [vmem:[#allocation8] sm:$0x1]
          %v6514 = vld [vmem:[#allocation4] sm:$0xff]
          %v6515 = vld [vmem:[#allocation4 + $0x8] sm:$0xff]
          %v6516 = vld [vmem:[#allocation4 + $0x10] sm:$0xff]
          %v6517 = vld [vmem:[#allocation4 + $0x18] sm:$0xff]
          %v6518 = vld [vmem:[#allocation4 + $0x20] sm:$0xff]
          %v6519 = vld [vmem:[#allocation4 + $0x28] sm:$0xff]
          %v6520 = vld [vmem:[#allocation4 + $0x30] sm:$0xff]
          %v6521 = vld [vmem:[#allocation4 + $0x38] sm:$0xff]
          %v6522 = vld [vmem:[#allocation4 + $0x40] sm:$0xff]
          %v6523 = vld [vmem:[#allocation4 + $0x48] sm:$0xff]
          %v6524 = vld [vmem:[#allocation4 + $0x50] sm:$0xff]
          %v6525 = vld [vmem:[#allocation4 + $0x58] sm:$0xff]
          %v6526 = vld [vmem:[#allocation4 + $0x60] sm:$0xff]
          %v6527 = vld [vmem:[#allocation4 + $0x68] sm:$0xff]
          %v6528 = vld [vmem:[#allocation4 + $0x70] sm:$0xff]
          %v6529 = vld [vmem:[#allocation4 + $0x78] sm:$0xff]
          %v6530 = vld [vmem:[#allocation4 + $0x80] sm:$0xff]
          %v6531 = vld [vmem:[#allocation4 + $0x88] sm:$0xff]
          %v6532 = vld [vmem:[#allocation4 + $0x90] sm:$0xff]
          %v6533 = vld [vmem:[#allocation4 + $0x98] sm:$0xff]
          %v6534 = vld [vmem:[#allocation4 + $0xa0] sm:$0xff]
          %v6535 = vld [vmem:[#allocation4 + $0xa8] sm:$0xff]
          %v6536 = vld [vmem:[#allocation4 + $0xb0] sm:$0xff]
          %v6537 = vld [vmem:[#allocation4 + $0xb8] sm:$0xff]
          %v6538 = vld [vmem:[#allocation4 + $0xc0] sm:$0xff]
          %v6539 = vld [vmem:[#allocation4 + $0xc8] sm:$0xff]
          %v6540 = vld [vmem:[#allocation4 + $0xd0] sm:$0xff]
          %v6541 = vld [vmem:[#allocation4 + $0xd8] sm:$0xff]
          %v6542 = vld [vmem:[#allocation4 + $0xe0] sm:$0xff]
          %v6543 = vld [vmem:[#allocation4 + $0xe8] sm:$0xff]
          %v6544 = vld [vmem:[#allocation4 + $0xf0] sm:$0xff]
          %v6545 = vld [vmem:[#allocation4 + $0xf8] sm:$0xff]
          %v6546 = vld [vmem:[#allocation4 + $0x100] sm:$0xff]
          %v6547 = vld [vmem:[#allocation4 + $0x108] sm:$0xff]
          %v6548 = vld [vmem:[#allocation4 + $0x110] sm:$0xff]
          %v6549 = vld [vmem:[#allocation4 + $0x118] sm:$0xff]
          %v6550 = vld [vmem:[#allocation4 + $0x120] sm:$0xff]
          %v6551 = vld [vmem:[#allocation4 + $0x128] sm:$0xf]
          %v6552 = vld [vmem:[#allocation4 + $0x1] sm:$0xff]
          %v6553 = vld [vmem:[#allocation4 + $0x9] sm:$0xff]
          %v6554 = vld [vmem:[#allocation4 + $0x11] sm:$0xff]
          %v6555 = vld [vmem:[#allocation4 + $0x19] sm:$0xff]
          %v6556 = vld [vmem:[#allocation4 + $0x21] sm:$0xff]
          %v6557 = vld [vmem:[#allocation4 + $0x29] sm:$0xff]
          %v6558 = vld [vmem:[#allocation4 + $0x31] sm:$0xff]
          %v6559 = vld [vmem:[#allocation4 + $0x39] sm:$0xff]
          %v6560 = vld [vmem:[#allocation4 + $0x41] sm:$0xff]
          %v6561 = vld [vmem:[#allocation4 + $0x49] sm:$0xff]
          %v6562 = vld [vmem:[#allocation4 + $0x51] sm:$0xff]
          %v6563 = vld [vmem:[#allocation4 + $0x59] sm:$0xff]
          %v6564 = vld [vmem:[#allocation4 + $0x61] sm:$0xff]
          %v6565 = vld [vmem:[#allocation4 + $0x69] sm:$0xff]
          %v6566 = vld [vmem:[#allocation4 + $0x71] sm:$0xff]
          %v6567 = vld [vmem:[#allocation4 + $0x79] sm:$0xff]
          %v6568 = vld [vmem:[#allocation4 + $0x81] sm:$0xff]
          %v6569 = vld [vmem:[#allocation4 + $0x89] sm:$0xff]
          %v6570 = vld [vmem:[#allocation4 + $0x91] sm:$0xff]
          %v6571 = vld [vmem:[#allocation4 + $0x99] sm:$0xff]
          %v6572 = vld [vmem:[#allocation4 + $0xa1] sm:$0xff]
          %v6573 = vld [vmem:[#allocation4 + $0xa9] sm:$0xff]
          %v6574 = vld [vmem:[#allocation4 + $0xb1] sm:$0xff]
          %v6575 = vld [vmem:[#allocation4 + $0xb9] sm:$0xff]
          %v6576 = vld [vmem:[#allocation4 + $0xc1] sm:$0xff]
          %v6577 = vld [vmem:[#allocation4 + $0xc9] sm:$0xff]
          %v6578 = vld [vmem:[#allocation4 + $0xd1] sm:$0xff]
          %v6579 = vld [vmem:[#allocation4 + $0xd9] sm:$0xff]
          %v6580 = vld [vmem:[#allocation4 + $0xe1] sm:$0xff]
          %v6581 = vld [vmem:[#allocation4 + $0xe9] sm:$0xff]
          %v6582 = vld [vmem:[#allocation4 + $0xf1] sm:$0xff]
          %v6583 = vld [vmem:[#allocation4 + $0xf9] sm:$0xff]
          %v6584 = vld [vmem:[#allocation4 + $0x101] sm:$0xff]
          %v6585 = vld [vmem:[#allocation4 + $0x109] sm:$0xff]
          %v6586 = vld [vmem:[#allocation4 + $0x111] sm:$0xff]
          %v6587 = vld [vmem:[#allocation4 + $0x119] sm:$0xff]
          %v6588 = vld [vmem:[#allocation4 + $0x121] sm:$0xff]
          %v6589 = vld [vmem:[#allocation4 + $0x129] sm:$0xf]
          %v6591 = vsel %vm2823, %v6552, 0
          %v6594 = vsel %vm2823, %v6553, 0
          %v6597 = vsel %vm2823, %v6554, 0
          %v6600 = vsel %vm2823, %v6555, 0
          %v6603 = vsel %vm2823, %v6556, 0
          %v6606 = vsel %vm2823, %v6557, 0
          %v6609 = vsel %vm2823, %v6558, 0
          %v6612 = vsel %vm2823, %v6559, 0
          %v6615 = vsel %vm2823, %v6560, 0
          %v6618 = vsel %vm2823, %v6561, 0
          %v6621 = vsel %vm2823, %v6562, 0
          %v6624 = vsel %vm2823, %v6563, 0
          %v6627 = vsel %vm2823, %v6564, 0
          %v6630 = vsel %vm2823, %v6565, 0
          %v6633 = vsel %vm2823, %v6566, 0
          %v6636 = vsel %vm2823, %v6567, 0
          %v6639 = vsel %vm2823, %v6568, 0
          %v6642 = vsel %vm2823, %v6569, 0
          %v6645 = vsel %vm2823, %v6570, 0
          %v6648 = vsel %vm2823, %v6571, 0
          %v6651 = vsel %vm2823, %v6572, 0
          %v6654 = vsel %vm2823, %v6573, 0
          %v6657 = vsel %vm2823, %v6574, 0
          %v6660 = vsel %vm2823, %v6575, 0
          %v6663 = vsel %vm2823, %v6576, 0
          %v6666 = vsel %vm2823, %v6577, 0
          %v6669 = vsel %vm2823, %v6578, 0
          %v6672 = vsel %vm2823, %v6579, 0
          %v6675 = vsel %vm2823, %v6580, 0
          %v6678 = vsel %vm2823, %v6581, 0
          %v6681 = vsel %vm2823, %v6582, 0
          %v6684 = vsel %vm2823, %v6583, 0
          %v6687 = vsel %vm2823, %v6584, 0
          %v6690 = vsel %vm2823, %v6585, 0
          %v6693 = vsel %vm2823, %v6586, 0
          %v6696 = vsel %vm2823, %v6587, 0
          %v6699 = vsel %vm2823, %v6588, 0
          %v6702 = vsel %vm2823, %v6589, 0
          %6704 = vmatprep.subr.mxu0 0.0
          %6705 = vmatpush1.msra.mxu0 %v2684
          %6706 = vmatprep.subr.mxu0 0.0
          %6707 = vmatpush1.msra.mxu0 0.0
          %6708 = vmatprep.subr.mxu0 0.0
          %6709 = vmatpush1.msra.mxu0 0.0
          %6710 = vmatprep.subr.mxu0 0.0
          %6711 = vmatpush1.msra.mxu0 0.0
          %6712 = vmatprep.subr.mxu0 0.0
          %6713 = vmatpush1.msra.mxu0 0.0
          %6714 = vmatprep.subr.mxu0 0.0
          %6715 = vmatpush1.msra.mxu0 0.0
          %6716 = vmatprep.subr.mxu0 0.0
          %6717 = vmatpush1.msra.mxu0 0.0
          %6718 = vmatprep.subr.mxu0 0.0
          %6719 = vmatpush1.msra.mxu0 0.0
          %6720 = vmatprep.subr.mxu0 0.0
          %6721 = vmatpush1.msra.mxu0 0.0
          %6722 = vmatprep.subr.mxu0 0.0
          %6723 = vmatpush1.msra.mxu0 0.0
          %6724 = vmatprep.subr.mxu0 0.0
          %6725 = vmatpush1.msra.mxu0 0.0
          %6726 = vmatprep.subr.mxu0 0.0
          %6727 = vmatpush1.msra.mxu0 0.0
          %6728 = vmatprep.subr.mxu0 0.0
          %6729 = vmatpush1.msra.mxu0 0.0
          %6730 = vmatprep.subr.mxu0 0.0
          %6731 = vmatpush1.msra.mxu0 0.0
          %6732 = vmatprep.subr.mxu0 0.0
          %6733 = vmatpush1.msra.mxu0 0.0
          %6734 = vmatprep.subr.mxu0 0.0
          %6735 = vmatpush1.msra.mxu0 0.0
          %6736 = vmatprep.subr.mxu0 0.0
          %6737 = vmatpush1.msra.mxu0 0.0
          %6738 = vmatprep.subr.mxu0 0.0
          %6739 = vmatpush1.msra.mxu0 0.0
          %6740 = vmatprep.subr.mxu0 0.0
          %6741 = vmatpush1.msra.mxu0 0.0
          %6742 = vmatprep.subr.mxu0 0.0
          %6743 = vmatpush1.msra.mxu0 0.0
          %6744 = vmatprep.subr.mxu0 0.0
          %6745 = vmatpush1.msra.mxu0 0.0
          %6746 = vmatprep.subr.mxu0 0.0
          %6747 = vmatpush1.msra.mxu0 0.0
          %6748 = vmatprep.subr.mxu0 0.0
          %6749 = vmatpush1.msra.mxu0 0.0
          %6750 = vmatprep.subr.mxu0 0.0
          %6751 = vmatpush1.msra.mxu0 0.0
          %6752 = vmatprep.subr.mxu0 0.0
          %6753 = vmatpush1.msra.mxu0 0.0
          %6754 = vmatprep.subr.mxu0 0.0
          %6755 = vmatpush1.msra.mxu0 0.0
          %6756 = vmatprep.subr.mxu0 0.0
          %6757 = vmatpush1.msra.mxu0 0.0
          %6758 = vmatprep.subr.mxu0 0.0
          %6759 = vmatpush1.msra.mxu0 0.0
          %6760 = vmatprep.subr.mxu0 0.0
          %6761 = vmatpush1.msra.mxu0 0.0
          %6762 = vmatprep.subr.mxu0 0.0
          %6763 = vmatpush1.msra.mxu0 0.0
          %6764 = vmatprep.subr.mxu0 0.0
          %6765 = vmatpush1.msra.mxu0 0.0
          %6766 = vmatprep.subr.mxu0 0.0
          %6767 = vmatpush1.msra.mxu0 0.0
          %6768 = vmatprep.mubr.f32.mxu0 0.0
          %6769 = vmatmul.mubr.f32.gmra.mrb[0].mxu0 %v6591
          %v6770 = vpop.f32.mrb[0].mxu0
          %v6771 = vadd.f32 0.0, %v6770
          %v6772 = vpop.f32.mrb[0].mxu0
          %6773 = vmatprep.mubr.f32.mxu0 0.0
          %6774 = vmatmul.mubr.f32.gmra.mrb[0].mxu0 %v6594
          %v6775 = vpop.f32.mrb[0].mxu0
          %v6776 = vadd.f32 0.0, %v6775
          %v6777 = vpop.f32.mrb[0].mxu0
          %6778 = vmatprep.mubr.f32.mxu0 0.0
          %6779 = vmatmul.mubr.f32.gmra.mrb[0].mxu0 %v6597
          %v6780 = vpop.f32.mrb[0].mxu0
          %v6781 = vadd.f32 0.0, %v6780
          %v6782 = vpop.f32.mrb[0].mxu0
          %6783 = vmatprep.mubr.f32.mxu0 0.0
          %6784 = vmatmul.mubr.f32.gmra.mrb[0].mxu0 %v6600
          %v6785 = vpop.f32.mrb[0].mxu0
          %v6786 = vadd.f32 0.0, %v6785
          %v6787 = vpop.f32.mrb[0].mxu0
          %6788 = vmatprep.mubr.f32.mxu0 0.0
          %6789 = vmatmul.mubr.f32.gmra.mrb[0].mxu0 %v6603
          %v6790 = vpop.f32.mrb[0].mxu0
          %v6791 = vadd.f32 0.0, %v6790
          %v6792 = vpop.f32.mrb[0].mxu0
          %6793 = vmatprep.mubr.f32.mxu0 0.0
          %6794 = vmatmul.mubr.f32.gmra.mrb[0].mxu0 %v6606
          %v6795 = vpop.f32.mrb[0].mxu0
          %v6796 = vadd.f32 0.0, %v6795
          %v6797 = vpop.f32.mrb[0].mxu0
          %6798 = vmatprep.mubr.f32.mxu0 0.0
          %6799 = vmatmul.mubr.f32.gmra.mrb[0].mxu0 %v6609
          %v6800 = vpop.f32.mrb[0].mxu0
          %v6801 = vadd.f32 0.0, %v6800
          %v6802 = vpop.f32.mrb[0].mxu0
          %6803 = vmatprep.mubr.f32.mxu0 0.0
          %6804 = vmatmul.mubr.f32.gmra.mrb[0].mxu0 %v6612
          %v6805 = vpop.f32.mrb[0].mxu0
          %v6806 = vadd.f32 0.0, %v6805
          %v6807 = vpop.f32.mrb[0].mxu0
          %6808 = vmatprep.mubr.f32.mxu0 0.0
          %6809 = vmatmul.mubr.f32.gmra.mrb[0].mxu0 %v6615
          %v6810 = vpop.f32.mrb[0].mxu0
          %v6811 = vadd.f32 0.0, %v6810
          %v6812 = vpop.f32.mrb[0].mxu0
          %6813 = vmatprep.mubr.f32.mxu0 0.0
          %6814 = vmatmul.mubr.f32.gmra.mrb[0].mxu0 %v6618
          %v6815 = vpop.f32.mrb[0].mxu0
          %v6816 = vadd.f32 0.0, %v6815
          %v6817 = vpop.f32.mrb[0].mxu0
          %6818 = vmatprep.mubr.f32.mxu0 0.0
          %6819 = vmatmul.mubr.f32.gmra.mrb[0].mxu0 %v6621
          %v6820 = vpop.f32.mrb[0].mxu0
          %v6821 = vadd.f32 0.0, %v6820
          %v6822 = vpop.f32.mrb[0].mxu0
          %6823 = vmatprep.mubr.f32.mxu0 0.0
          %6824 = vmatmul.mubr.f32.gmra.mrb[0].mxu0 %v6624
          %v6825 = vpop.f32.mrb[0].mxu0
          %v6826 = vadd.f32 0.0, %v6825
          %v6827 = vpop.f32.mrb[0].mxu0
          %6828 = vmatprep.mubr.f32.mxu0 0.0
          %6829 = vmatmul.mubr.f32.gmra.mrb[0].mxu0 %v6627
          %v6830 = vpop.f32.mrb[0].mxu0
          %v6831 = vadd.f32 0.0, %v6830
          %v6832 = vpop.f32.mrb[0].mxu0
          %6833 = vmatprep.mubr.f32.mxu0 0.0
          %6834 = vmatmul.mubr.f32.gmra.mrb[0].mxu0 %v6630
          %v6835 = vpop.f32.mrb[0].mxu0
          %v6836 = vadd.f32 0.0, %v6835
          %v6837 = vpop.f32.mrb[0].mxu0
          %6838 = vmatprep.mubr.f32.mxu0 0.0
          %6839 = vmatmul.mubr.f32.gmra.mrb[0].mxu0 %v6633
          %v6840 = vpop.f32.mrb[0].mxu0
          %v6841 = vadd.f32 0.0, %v6840
          %v6842 = vpop.f32.mrb[0].mxu0
          %6843 = vmatprep.mubr.f32.mxu0 0.0
          %6844 = vmatmul.mubr.f32.gmra.mrb[0].mxu0 %v6636
          %v6845 = vpop.f32.mrb[0].mxu0
          %v6846 = vadd.f32 0.0, %v6845
          %v6847 = vpop.f32.mrb[0].mxu0
          %6848 = vmatprep.mubr.f32.mxu0 0.0
          %6849 = vmatmul.mubr.f32.gmra.mrb[0].mxu0 %v6639
          %v6850 = vpop.f32.mrb[0].mxu0
          %v6851 = vadd.f32 0.0, %v6850
          %v6852 = vpop.f32.mrb[0].mxu0
          %6853 = vmatprep.mubr.f32.mxu0 0.0
          %6854 = vmatmul.mubr.f32.gmra.mrb[0].mxu0 %v6642
          %v6855 = vpop.f32.mrb[0].mxu0
          %v6856 = vadd.f32 0.0, %v6855
          %v6857 = vpop.f32.mrb[0].mxu0
          %6858 = vmatprep.mubr.f32.mxu0 0.0
          %6859 = vmatmul.mubr.f32.gmra.mrb[0].mxu0 %v6645
          %v6860 = vpop.f32.mrb[0].mxu0
          %v6861 = vadd.f32 0.0, %v6860
          %v6862 = vpop.f32.mrb[0].mxu0
          %6863 = vmatprep.mubr.f32.mxu0 0.0
          %6864 = vmatmul.mubr.f32.gmra.mrb[0].mxu0 %v6648
          %v6865 = vpop.f32.mrb[0].mxu0
          %v6866 = vadd.f32 0.0, %v6865
          %v6867 = vpop.f32.mrb[0].mxu0
          %6868 = vmatprep.mubr.f32.mxu0 0.0
          %6869 = vmatmul.mubr.f32.gmra.mrb[0].mxu0 %v6651
          %v6870 = vpop.f32.mrb[0].mxu0
          %v6871 = vadd.f32 0.0, %v6870
          %v6872 = vpop.f32.mrb[0].mxu0
          %6873 = vmatprep.mubr.f32.mxu0 0.0
          %6874 = vmatmul.mubr.f32.gmra.mrb[0].mxu0 %v6654
          %v6875 = vpop.f32.mrb[0].mxu0
          %v6876 = vadd.f32 0.0, %v6875
          %v6877 = vpop.f32.mrb[0].mxu0
          %6878 = vmatprep.mubr.f32.mxu0 0.0
          %6879 = vmatmul.mubr.f32.gmra.mrb[0].mxu0 %v6657
          %v6880 = vpop.f32.mrb[0].mxu0
          %v6881 = vadd.f32 0.0, %v6880
          %v6882 = vpop.f32.mrb[0].mxu0
          %6883 = vmatprep.mubr.f32.mxu0 0.0
          %6884 = vmatmul.mubr.f32.gmra.mrb[0].mxu0 %v6660
          %v6885 = vpop.f32.mrb[0].mxu0
          %v6886 = vadd.f32 0.0, %v6885
          %v6887 = vpop.f32.mrb[0].mxu0
          %6888 = vmatprep.mubr.f32.mxu0 0.0
          %6889 = vmatmul.mubr.f32.gmra.mrb[0].mxu0 %v6663
          %v6890 = vpop.f32.mrb[0].mxu0
          %v6891 = vadd.f32 0.0, %v6890
          %v6892 = vpop.f32.mrb[0].mxu0
          %6893 = vmatprep.mubr.f32.mxu0 0.0
          %6894 = vmatmul.mubr.f32.gmra.mrb[0].mxu0 %v6666
          %v6895 = vpop.f32.mrb[0].mxu0
          %v6896 = vadd.f32 0.0, %v6895
          %v6897 = vpop.f32.mrb[0].mxu0
          %6898 = vmatprep.mubr.f32.mxu0 0.0
          %6899 = vmatmul.mubr.f32.gmra.mrb[0].mxu0 %v6669
          %v6900 = vpop.f32.mrb[0].mxu0
          %v6901 = vadd.f32 0.0, %v6900
          %v6902 = vpop.f32.mrb[0].mxu0
          %6903 = vmatprep.mubr.f32.mxu0 0.0
          %6904 = vmatmul.mubr.f32.gmra.mrb[0].mxu0 %v6672
          %v6905 = vpop.f32.mrb[0].mxu0
          %v6906 = vadd.f32 0.0, %v6905
          %v6907 = vpop.f32.mrb[0].mxu0
          %6908 = vmatprep.mubr.f32.mxu0 0.0
          %6909 = vmatmul.mubr.f32.gmra.mrb[0].mxu0 %v6675
          %v6910 = vpop.f32.mrb[0].mxu0
          %v6911 = vadd.f32 0.0, %v6910
          %v6912 = vpop.f32.mrb[0].mxu0
          %6913 = vmatprep.mubr.f32.mxu0 0.0
          %6914 = vmatmul.mubr.f32.gmra.mrb[0].mxu0 %v6678
          %v6915 = vpop.f32.mrb[0].mxu0
          %v6916 = vadd.f32 0.0, %v6915
          %v6917 = vpop.f32.mrb[0].mxu0
          %6918 = vmatprep.mubr.f32.mxu0 0.0
          %6919 = vmatmul.mubr.f32.gmra.mrb[0].mxu0 %v6681
          %v6920 = vpop.f32.mrb[0].mxu0
          %v6921 = vadd.f32 0.0, %v6920
          %v6922 = vpop.f32.mrb[0].mxu0
          %6923 = vmatprep.mubr.f32.mxu0 0.0
          %6924 = vmatmul.mubr.f32.gmra.mrb[0].mxu0 %v6684
          %v6925 = vpop.f32.mrb[0].mxu0
          %v6926 = vadd.f32 0.0, %v6925
          %v6927 = vpop.f32.mrb[0].mxu0
          %6928 = vmatprep.mubr.f32.mxu0 0.0
          %6929 = vmatmul.mubr.f32.gmra.mrb[0].mxu0 %v6687
          %v6930 = vpop.f32.mrb[0].mxu0
          %v6931 = vadd.f32 0.0, %v6930
          %v6932 = vpop.f32.mrb[0].mxu0
          %6933 = vmatprep.mubr.f32.mxu0 0.0
          %6934 = vmatmul.mubr.f32.gmra.mrb[0].mxu0 %v6690
          %v6935 = vpop.f32.mrb[0].mxu0
          %v6936 = vadd.f32 0.0, %v6935
          %v6937 = vpop.f32.mrb[0].mxu0
          %6938 = vmatprep.mubr.f32.mxu0 0.0
          %6939 = vmatmul.mubr.f32.gmra.mrb[0].mxu0 %v6693
          %v6940 = vpop.f32.mrb[0].mxu0
          %v6941 = vadd.f32 0.0, %v6940
          %v6942 = vpop.f32.mrb[0].mxu0
          %6943 = vmatprep.mubr.f32.mxu0 0.0
          %6944 = vmatmul.mubr.f32.gmra.mrb[0].mxu0 %v6696
          %v6945 = vpop.f32.mrb[0].mxu0
          %v6946 = vadd.f32 0.0, %v6945
          %v6947 = vpop.f32.mrb[0].mxu0
          %6948 = vmatprep.mubr.f32.mxu0 0.0
          %6949 = vmatmul.mubr.f32.gmra.mrb[0].mxu0 %v6699
          %v6950 = vpop.f32.mrb[0].mxu0
          %v6951 = vadd.f32 0.0, %v6950
          %v6952 = vpop.f32.mrb[0].mxu0
          %6953 = vmatprep.mubr.f32.mxu0 0.0
          %6954 = vmatmul.mubr.f32.gmra.mrb[0].mxu0 %v6702
          %v6955 = vpop.f32.mrb[0].mxu0
          %v6956 = vadd.f32 0.0, %v6955
          %v6957 = vpop.f32.mrb[0].mxu0
          %6958 = vdwg.mxu0
          %v6960 = vsel %vm2823, %v6514, 0
          %v6963 = vsel %vm2823, %v6515, 0
          %v6966 = vsel %vm2823, %v6516, 0
          %v6969 = vsel %vm2823, %v6517, 0
          %v6972 = vsel %vm2823, %v6518, 0
          %v6975 = vsel %vm2823, %v6519, 0
          %v6978 = vsel %vm2823, %v6520, 0
          %v6981 = vsel %vm2823, %v6521, 0
          %v6984 = vsel %vm2823, %v6522, 0
          %v6987 = vsel %vm2823, %v6523, 0
          %v6990 = vsel %vm2823, %v6524, 0
          %v6993 = vsel %vm2823, %v6525, 0
          %v6996 = vsel %vm2823, %v6526, 0
          %v6999 = vsel %vm2823, %v6527, 0
          %v7002 = vsel %vm2823, %v6528, 0
          %v7005 = vsel %vm2823, %v6529, 0
          %v7008 = vsel %vm2823, %v6530, 0
          %v7011 = vsel %vm2823, %v6531, 0
          %v7014 = vsel %vm2823, %v6532, 0
          %v7017 = vsel %vm2823, %v6533, 0
          %v7020 = vsel %vm2823, %v6534, 0
          %v7023 = vsel %vm2823, %v6535, 0
          %v7026 = vsel %vm2823, %v6536, 0
          %v7029 = vsel %vm2823, %v6537, 0
          %v7032 = vsel %vm2823, %v6538, 0
          %v7035 = vsel %vm2823, %v6539, 0
          %v7038 = vsel %vm2823, %v6540, 0
          %v7041 = vsel %vm2823, %v6541, 0
          %v7044 = vsel %vm2823, %v6542, 0
          %v7047 = vsel %vm2823, %v6543, 0
          %v7050 = vsel %vm2823, %v6544, 0
          %v7053 = vsel %vm2823, %v6545, 0
          %v7056 = vsel %vm2823, %v6546, 0
          %v7059 = vsel %vm2823, %v6547, 0
          %v7062 = vsel %vm2823, %v6548, 0
          %v7065 = vsel %vm2823, %v6549, 0
          %v7068 = vsel %vm2823, %v6550, 0
          %v7071 = vsel %vm2823, %v6551, 0
          %7073 = vmatprep.subr.mxu0 0.0
          %7074 = vmatpush1.msra.mxu0 %v2683
          %7075 = vmatprep.subr.mxu0 0.0
          %7076 = vmatpush1.msra.mxu0 0.0
          %7077 = vmatprep.subr.mxu0 0.0
          %7078 = vmatpush1.msra.mxu0 0.0
          %7079 = vmatprep.subr.mxu0 0.0
          %7080 = vmatpush1.msra.mxu0 0.0
          %7081 = vmatprep.subr.mxu0 0.0
          %7082 = vmatpush1.msra.mxu0 0.0
          %7083 = vmatprep.subr.mxu0 0.0
          %7084 = vmatpush1.msra.mxu0 0.0
          %7085 = vmatprep.subr.mxu0 0.0
          %7086 = vmatpush1.msra.mxu0 0.0
          %7087 = vmatprep.subr.mxu0 0.0
          %7088 = vmatpush1.msra.mxu0 0.0
          %7089 = vmatprep.subr.mxu0 0.0
          %7090 = vmatpush1.msra.mxu0 0.0
          %7091 = vmatprep.subr.mxu0 0.0
          %7092 = vmatpush1.msra.mxu0 0.0
          %7093 = vmatprep.subr.mxu0 0.0
          %7094 = vmatpush1.msra.mxu0 0.0
          %7095 = vmatprep.subr.mxu0 0.0
          %7096 = vmatpush1.msra.mxu0 0.0
          %7097 = vmatprep.subr.mxu0 0.0
          %7098 = vmatpush1.msra.mxu0 0.0
          %7099 = vmatprep.subr.mxu0 0.0
          %7100 = vmatpush1.msra.mxu0 0.0
          %7101 = vmatprep.subr.mxu0 0.0
          %7102 = vmatpush1.msra.mxu0 0.0
          %7103 = vmatprep.subr.mxu0 0.0
          %7104 = vmatpush1.msra.mxu0 0.0
          %7105 = vmatprep.subr.mxu0 0.0
          %7106 = vmatpush1.msra.mxu0 0.0
          %7107 = vmatprep.subr.mxu0 0.0
          %7108 = vmatpush1.msra.mxu0 0.0
          %7109 = vmatprep.subr.mxu0 0.0
          %7110 = vmatpush1.msra.mxu0 0.0
          %7111 = vmatprep.subr.mxu0 0.0
          %7112 = vmatpush1.msra.mxu0 0.0
          %7113 = vmatprep.subr.mxu0 0.0
          %7114 = vmatpush1.msra.mxu0 0.0
          %7115 = vmatprep.subr.mxu0 0.0
          %7116 = vmatpush1.msra.mxu0 0.0
          %7117 = vmatprep.subr.mxu0 0.0
          %7118 = vmatpush1.msra.mxu0 0.0
          %7119 = vmatprep.subr.mxu0 0.0
          %7120 = vmatpush1.msra.mxu0 0.0
          %7121 = vmatprep.subr.mxu0 0.0
          %7122 = vmatpush1.msra.mxu0 0.0
          %7123 = vmatprep.subr.mxu0 0.0
          %7124 = vmatpush1.msra.mxu0 0.0
          %7125 = vmatprep.subr.mxu0 0.0
          %7126 = vmatpush1.msra.mxu0 0.0
          %7127 = vmatprep.subr.mxu0 0.0
          %7128 = vmatpush1.msra.mxu0 0.0
          %7129 = vmatprep.subr.mxu0 0.0
          %7130 = vmatpush1.msra.mxu0 0.0
          %7131 = vmatprep.subr.mxu0 0.0
          %7132 = vmatpush1.msra.mxu0 0.0
          %7133 = vmatprep.subr.mxu0 0.0
          %7134 = vmatpush1.msra.mxu0 0.0
          %7135 = vmatprep.subr.mxu0 0.0
          %7136 = vmatpush1.msra.mxu0 0.0
          %7137 = vmatprep.mubr.f32.mxu0 0.0
          %7138 = vmatmul.mubr.f32.gmra.mrb[0].mxu0 %v6960
          %v7139 = vpop.f32.mrb[0].mxu0
          %v7140 = vadd.f32 %v6771, %v7139
          %v7141 = vpop.f32.mrb[0].mxu0
          %7142 = vmatprep.mubr.f32.mxu0 0.0
          %7143 = vmatmul.mubr.f32.gmra.mrb[0].mxu0 %v6963
          %v7144 = vpop.f32.mrb[0].mxu0
          %v7145 = vadd.f32 %v6776, %v7144
          %v7146 = vpop.f32.mrb[0].mxu0
          %7147 = vmatprep.mubr.f32.mxu0 0.0
          %7148 = vmatmul.mubr.f32.gmra.mrb[0].mxu0 %v6966
          %v7149 = vpop.f32.mrb[0].mxu0
          %v7150 = vadd.f32 %v6781, %v7149
          %v7151 = vpop.f32.mrb[0].mxu0
          %7152 = vmatprep.mubr.f32.mxu0 0.0
          %7153 = vmatmul.mubr.f32.gmra.mrb[0].mxu0 %v6969
          %v7154 = vpop.f32.mrb[0].mxu0
          %v7155 = vadd.f32 %v6786, %v7154
          %v7156 = vpop.f32.mrb[0].mxu0
          %7157 = vmatprep.mubr.f32.mxu0 0.0
          %7158 = vmatmul.mubr.f32.gmra.mrb[0].mxu0 %v6972
          %v7159 = vpop.f32.mrb[0].mxu0
          %v7160 = vadd.f32 %v6791, %v7159
          %v7161 = vpop.f32.mrb[0].mxu0
          %7162 = vmatprep.mubr.f32.mxu0 0.0
          %7163 = vmatmul.mubr.f32.gmra.mrb[0].mxu0 %v6975
          %v7164 = vpop.f32.mrb[0].mxu0
          %v7165 = vadd.f32 %v6796, %v7164
          %v7166 = vpop.f32.mrb[0].mxu0
          %7167 = vmatprep.mubr.f32.mxu0 0.0
          %7168 = vmatmul.mubr.f32.gmra.mrb[0].mxu0 %v6978
          %v7169 = vpop.f32.mrb[0].mxu0
          %v7170 = vadd.f32 %v6801, %v7169
          %v7171 = vpop.f32.mrb[0].mxu0
          %7172 = vmatprep.mubr.f32.mxu0 0.0
          %7173 = vmatmul.mubr.f32.gmra.mrb[0].mxu0 %v6981
          %v7174 = vpop.f32.mrb[0].mxu0
          %v7175 = vadd.f32 %v6806, %v7174
          %v7176 = vpop.f32.mrb[0].mxu0
          %7177 = vmatprep.mubr.f32.mxu0 0.0
          %7178 = vmatmul.mubr.f32.gmra.mrb[0].mxu0 %v6984
          %v7179 = vpop.f32.mrb[0].mxu0
          %v7180 = vadd.f32 %v6811, %v7179
          %v7181 = vpop.f32.mrb[0].mxu0
          %7182 = vmatprep.mubr.f32.mxu0 0.0
          %7183 = vmatmul.mubr.f32.gmra.mrb[0].mxu0 %v6987
          %v7184 = vpop.f32.mrb[0].mxu0
          %v7185 = vadd.f32 %v6816, %v7184
          %v7186 = vpop.f32.mrb[0].mxu0
          %7187 = vmatprep.mubr.f32.mxu0 0.0
          %7188 = vmatmul.mubr.f32.gmra.mrb[0].mxu0 %v6990
          %v7189 = vpop.f32.mrb[0].mxu0
          %v7190 = vadd.f32 %v6821, %v7189
          %v7191 = vpop.f32.mrb[0].mxu0
          %7192 = vmatprep.mubr.f32.mxu0 0.0
          %7193 = vmatmul.mubr.f32.gmra.mrb[0].mxu0 %v6993
          %v7194 = vpop.f32.mrb[0].mxu0
          %v7195 = vadd.f32 %v6826, %v7194
          %v7196 = vpop.f32.mrb[0].mxu0
          %7197 = vmatprep.mubr.f32.mxu0 0.0
          %7198 = vmatmul.mubr.f32.gmra.mrb[0].mxu0 %v6996
          %v7199 = vpop.f32.mrb[0].mxu0
          %v7200 = vadd.f32 %v6831, %v7199
          %v7201 = vpop.f32.mrb[0].mxu0
          %7202 = vmatprep.mubr.f32.mxu0 0.0
          %7203 = vmatmul.mubr.f32.gmra.mrb[0].mxu0 %v6999
          %v7204 = vpop.f32.mrb[0].mxu0
          %v7205 = vadd.f32 %v6836, %v7204
          %v7206 = vpop.f32.mrb[0].mxu0
          %7207 = vmatprep.mubr.f32.mxu0 0.0
          %7208 = vmatmul.mubr.f32.gmra.mrb[0].mxu0 %v7002
          %v7209 = vpop.f32.mrb[0].mxu0
          %v7210 = vadd.f32 %v6841, %v7209
          %v7211 = vpop.f32.mrb[0].mxu0
          %7212 = vmatprep.mubr.f32.mxu0 0.0
          %7213 = vmatmul.mubr.f32.gmra.mrb[0].mxu0 %v7005
          %v7214 = vpop.f32.mrb[0].mxu0
          %v7215 = vadd.f32 %v6846, %v7214
          %v7216 = vpop.f32.mrb[0].mxu0
          %7217 = vmatprep.mubr.f32.mxu0 0.0
          %7218 = vmatmul.mubr.f32.gmra.mrb[0].mxu0 %v7008
          %v7219 = vpop.f32.mrb[0].mxu0
          %v7220 = vadd.f32 %v6851, %v7219
          %v7221 = vpop.f32.mrb[0].mxu0
          %7222 = vmatprep.mubr.f32.mxu0 0.0
          %7223 = vmatmul.mubr.f32.gmra.mrb[0].mxu0 %v7011
          %v7224 = vpop.f32.mrb[0].mxu0
          %v7225 = vadd.f32 %v6856, %v7224
          %v7226 = vpop.f32.mrb[0].mxu0
          %7227 = vmatprep.mubr.f32.mxu0 0.0
          %7228 = vmatmul.mubr.f32.gmra.mrb[0].mxu0 %v7014
          %v7229 = vpop.f32.mrb[0].mxu0
          %v7230 = vadd.f32 %v6861, %v7229
          %v7231 = vpop.f32.mrb[0].mxu0
          %7232 = vmatprep.mubr.f32.mxu0 0.0
          %7233 = vmatmul.mubr.f32.gmra.mrb[0].mxu0 %v7017
          %v7234 = vpop.f32.mrb[0].mxu0
          %v7235 = vadd.f32 %v6866, %v7234
          %v7236 = vpop.f32.mrb[0].mxu0
          %7237 = vmatprep.mubr.f32.mxu0 0.0
          %7238 = vmatmul.mubr.f32.gmra.mrb[0].mxu0 %v7020
          %v7239 = vpop.f32.mrb[0].mxu0
          %v7240 = vadd.f32 %v6871, %v7239
          %v7241 = vpop.f32.mrb[0].mxu0
          %7242 = vmatprep.mubr.f32.mxu0 0.0
          %7243 = vmatmul.mubr.f32.gmra.mrb[0].mxu0 %v7023
          %v7244 = vpop.f32.mrb[0].mxu0
          %v7245 = vadd.f32 %v6876, %v7244
          %v7246 = vpop.f32.mrb[0].mxu0
          %7247 = vmatprep.mubr.f32.mxu0 0.0
          %7248 = vmatmul.mubr.f32.gmra.mrb[0].mxu0 %v7026
          %v7249 = vpop.f32.mrb[0].mxu0
          %v7250 = vadd.f32 %v6881, %v7249
          %v7251 = vpop.f32.mrb[0].mxu0
          %7252 = vmatprep.mubr.f32.mxu0 0.0
          %7253 = vmatmul.mubr.f32.gmra.mrb[0].mxu0 %v7029
          %v7254 = vpop.f32.mrb[0].mxu0
          %v7255 = vadd.f32 %v6886, %v7254
          %v7256 = vpop.f32.mrb[0].mxu0
          %7257 = vmatprep.mubr.f32.mxu0 0.0
          %7258 = vmatmul.mubr.f32.gmra.mrb[0].mxu0 %v7032
          %v7259 = vpop.f32.mrb[0].mxu0
          %v7260 = vadd.f32 %v6891, %v7259
          %v7261 = vpop.f32.mrb[0].mxu0
          %7262 = vmatprep.mubr.f32.mxu0 0.0
          %7263 = vmatmul.mubr.f32.gmra.mrb[0].mxu0 %v7035
          %v7264 = vpop.f32.mrb[0].mxu0
          %v7265 = vadd.f32 %v6896, %v7264
          %v7266 = vpop.f32.mrb[0].mxu0
          %7267 = vmatprep.mubr.f32.mxu0 0.0
          %7268 = vmatmul.mubr.f32.gmra.mrb[0].mxu0 %v7038
          %v7269 = vpop.f32.mrb[0].mxu0
          %v7270 = vadd.f32 %v6901, %v7269
          %v7271 = vpop.f32.mrb[0].mxu0
          %7272 = vmatprep.mubr.f32.mxu0 0.0
          %7273 = vmatmul.mubr.f32.gmra.mrb[0].mxu0 %v7041
          %v7274 = vpop.f32.mrb[0].mxu0
          %v7275 = vadd.f32 %v6906, %v7274
          %v7276 = vpop.f32.mrb[0].mxu0
          %7277 = vmatprep.mubr.f32.mxu0 0.0
          %7278 = vmatmul.mubr.f32.gmra.mrb[0].mxu0 %v7044
          %v7279 = vpop.f32.mrb[0].mxu0
          %v7280 = vadd.f32 %v6911, %v7279
          %v7281 = vpop.f32.mrb[0].mxu0
          %7282 = vmatprep.mubr.f32.mxu0 0.0
          %7283 = vmatmul.mubr.f32.gmra.mrb[0].mxu0 %v7047
          %v7284 = vpop.f32.mrb[0].mxu0
          %v7285 = vadd.f32 %v6916, %v7284
          %v7286 = vpop.f32.mrb[0].mxu0
          %7287 = vmatprep.mubr.f32.mxu0 0.0
          %7288 = vmatmul.mubr.f32.gmra.mrb[0].mxu0 %v7050
          %v7289 = vpop.f32.mrb[0].mxu0
          %v7290 = vadd.f32 %v6921, %v7289
          %v7291 = vpop.f32.mrb[0].mxu0
          %7292 = vmatprep.mubr.f32.mxu0 0.0
          %7293 = vmatmul.mubr.f32.gmra.mrb[0].mxu0 %v7053
          %v7294 = vpop.f32.mrb[0].mxu0
          %v7295 = vadd.f32 %v6926, %v7294
          %v7296 = vpop.f32.mrb[0].mxu0
          %7297 = vmatprep.mubr.f32.mxu0 0.0
          %7298 = vmatmul.mubr.f32.gmra.mrb[0].mxu0 %v7056
          %v7299 = vpop.f32.mrb[0].mxu0
          %v7300 = vadd.f32 %v6931, %v7299
          %v7301 = vpop.f32.mrb[0].mxu0
          %7302 = vmatprep.mubr.f32.mxu0 0.0
          %7303 = vmatmul.mubr.f32.gmra.mrb[0].mxu0 %v7059
          %v7304 = vpop.f32.mrb[0].mxu0
          %v7305 = vadd.f32 %v6936, %v7304
          %v7306 = vpop.f32.mrb[0].mxu0
          %7307 = vmatprep.mubr.f32.mxu0 0.0
          %7308 = vmatmul.mubr.f32.gmra.mrb[0].mxu0 %v7062
          %v7309 = vpop.f32.mrb[0].mxu0
          %v7310 = vadd.f32 %v6941, %v7309
          %v7311 = vpop.f32.mrb[0].mxu0
          %7312 = vmatprep.mubr.f32.mxu0 0.0
          %7313 = vmatmul.mubr.f32.gmra.mrb[0].mxu0 %v7065
          %v7314 = vpop.f32.mrb[0].mxu0
          %v7315 = vadd.f32 %v6946, %v7314
          %v7316 = vpop.f32.mrb[0].mxu0
          %7317 = vmatprep.mubr.f32.mxu0 0.0
          %7318 = vmatmul.mubr.f32.gmra.mrb[0].mxu0 %v7068
          %v7319 = vpop.f32.mrb[0].mxu0
          %v7320 = vadd.f32 %v6951, %v7319
          %v7321 = vpop.f32.mrb[0].mxu0
          %7322 = vmatprep.mubr.f32.mxu0 0.0
          %7323 = vmatmul.mubr.f32.gmra.mrb[0].mxu0 %v7071
          %v7324 = vpop.f32.mrb[0].mxu0
          %v7325 = vadd.f32 %v6956, %v7324
          %v7326 = vpop.f32.mrb[0].mxu0
          %7327 = vdwg.mxu0
          %v7328 = vld [vmem:[#allocation4 + $0x2] sm:$0xff]
          %v7329 = vld [vmem:[#allocation4 + $0xa] sm:$0xff]
          %v7330 = vld [vmem:[#allocation4 + $0x12] sm:$0xff]
          %v7331 = vld [vmem:[#allocation4 + $0x1a] sm:$0xff]
          %v7332 = vld [vmem:[#allocation4 + $0x22] sm:$0xff]
          %v7333 = vld [vmem:[#allocation4 + $0x2a] sm:$0xff]
          %v7334 = vld [vmem:[#allocation4 + $0x32] sm:$0xff]
          %v7335 = vld [vmem:[#allocation4 + $0x3a] sm:$0xff]
          %v7336 = vld [vmem:[#allocation4 + $0x42] sm:$0xff]
          %v7337 = vld [vmem:[#allocation4 + $0x4a] sm:$0xff]
          %v7338 = vld [vmem:[#allocation4 + $0x52] sm:$0xff]
          %v7339 = vld [vmem:[#allocation4 + $0x5a] sm:$0xff]
          %v7340 = vld [vmem:[#allocation4 + $0x62] sm:$0xff]
          %v7341 = vld [vmem:[#allocation4 + $0x6a] sm:$0xff]
          %v7342 = vld [vmem:[#allocation4 + $0x72] sm:$0xff]
          %v7343 = vld [vmem:[#allocation4 + $0x7a] sm:$0xff]
          %v7344 = vld [vmem:[#allocation4 + $0x82] sm:$0xff]
          %v7345 = vld [vmem:[#allocation4 + $0x8a] sm:$0xff]
          %v7346 = vld [vmem:[#allocation4 + $0x92] sm:$0xff]
          %v7347 = vld [vmem:[#allocation4 + $0x9a] sm:$0xff]
          %v7348 = vld [vmem:[#allocation4 + $0xa2] sm:$0xff]
          %v7349 = vld [vmem:[#allocation4 + $0xaa] sm:$0xff]
          %v7350 = vld [vmem:[#allocation4 + $0xb2] sm:$0xff]
          %v7351 = vld [vmem:[#allocation4 + $0xba] sm:$0xff]
          %v7352 = vld [vmem:[#allocation4 + $0xc2] sm:$0xff]
          %v7353 = vld [vmem:[#allocation4 + $0xca] sm:$0xff]
          %v7354 = vld [vmem:[#allocation4 + $0xd2] sm:$0xff]
          %v7355 = vld [vmem:[#allocation4 + $0xda] sm:$0xff]
          %v7356 = vld [vmem:[#allocation4 + $0xe2] sm:$0xff]
          %v7357 = vld [vmem:[#allocation4 + $0xea] sm:$0xff]
          %v7358 = vld [vmem:[#allocation4 + $0xf2] sm:$0xff]
          %v7359 = vld [vmem:[#allocation4 + $0xfa] sm:$0xff]
          %v7360 = vld [vmem:[#allocation4 + $0x102] sm:$0xff]
          %v7361 = vld [vmem:[#allocation4 + $0x10a] sm:$0xff]
          %v7362 = vld [vmem:[#allocation4 + $0x112] sm:$0xff]
          %v7363 = vld [vmem:[#allocation4 + $0x11a] sm:$0xff]
          %v7364 = vld [vmem:[#allocation4 + $0x122] sm:$0xff]
          %v7365 = vld [vmem:[#allocation4 + $0x12a] sm:$0xf]
          %v7367 = vsel %vm2823, %v7328, 0
          %v7370 = vsel %vm2823, %v7329, 0
          %v7373 = vsel %vm2823, %v7330, 0
          %v7376 = vsel %vm2823, %v7331, 0
          %v7379 = vsel %vm2823, %v7332, 0
          %v7382 = vsel %vm2823, %v7333, 0
          %v7385 = vsel %vm2823, %v7334, 0
          %v7388 = vsel %vm2823, %v7335, 0
          %v7391 = vsel %vm2823, %v7336, 0
          %v7394 = vsel %vm2823, %v7337, 0
          %v7397 = vsel %vm2823, %v7338, 0
          %v7400 = vsel %vm2823, %v7339, 0
          %v7403 = vsel %vm2823, %v7340, 0
          %v7406 = vsel %vm2823, %v7341, 0
          %v7409 = vsel %vm2823, %v7342, 0
          %v7412 = vsel %vm2823, %v7343, 0
          %v7415 = vsel %vm2823, %v7344, 0
          %v7418 = vsel %vm2823, %v7345, 0
          %v7421 = vsel %vm2823, %v7346, 0
          %v7424 = vsel %vm2823, %v7347, 0
          %v7427 = vsel %vm2823, %v7348, 0
          %v7430 = vsel %vm2823, %v7349, 0
          %v7433 = vsel %vm2823, %v7350, 0
          %v7436 = vsel %vm2823, %v7351, 0
          %v7439 = vsel %vm2823, %v7352, 0
          %v7442 = vsel %vm2823, %v7353, 0
          %v7445 = vsel %vm2823, %v7354, 0
          %v7448 = vsel %vm2823, %v7355, 0
          %v7451 = vsel %vm2823, %v7356, 0
          %v7454 = vsel %vm2823, %v7357, 0
          %v7457 = vsel %vm2823, %v7358, 0
          %v7460 = vsel %vm2823, %v7359, 0
          %v7463 = vsel %vm2823, %v7360, 0
          %v7466 = vsel %vm2823, %v7361, 0
          %v7469 = vsel %vm2823, %v7362, 0
          %v7472 = vsel %vm2823, %v7363, 0
          %v7475 = vsel %vm2823, %v7364, 0
          %v7478 = vsel %vm2823, %v7365, 0
          %7480 = vmatprep.subr.mxu0 0.0
          %7481 = vmatpush1.msra.mxu0 %v2685
          %7482 = vmatprep.subr.mxu0 0.0
          %7483 = vmatpush1.msra.mxu0 0.0
          %7484 = vmatprep.subr.mxu0 0.0
          %7485 = vmatpush1.msra.mxu0 0.0
          %7486 = vmatprep.subr.mxu0 0.0
          %7487 = vmatpush1.msra.mxu0 0.0
          %7488 = vmatprep.subr.mxu0 0.0
          %7489 = vmatpush1.msra.mxu0 0.0
          %7490 = vmatprep.subr.mxu0 0.0
          %7491 = vmatpush1.msra.mxu0 0.0
          %7492 = vmatprep.subr.mxu0 0.0
          %7493 = vmatpush1.msra.mxu0 0.0
          %7494 = vmatprep.subr.mxu0 0.0
          %7495 = vmatpush1.msra.mxu0 0.0
          %7496 = vmatprep.subr.mxu0 0.0
          %7497 = vmatpush1.msra.mxu0 0.0
          %7498 = vmatprep.subr.mxu0 0.0
          %7499 = vmatpush1.msra.mxu0 0.0
          %7500 = vmatprep.subr.mxu0 0.0
          %7501 = vmatpush1.msra.mxu0 0.0
          %7502 = vmatprep.subr.mxu0 0.0
          %7503 = vmatpush1.msra.mxu0 0.0
          %7504 = vmatprep.subr.mxu0 0.0
          %7505 = vmatpush1.msra.mxu0 0.0
          %7506 = vmatprep.subr.mxu0 0.0
          %7507 = vmatpush1.msra.mxu0 0.0
          %7508 = vmatprep.subr.mxu0 0.0
          %7509 = vmatpush1.msra.mxu0 0.0
          %7510 = vmatprep.subr.mxu0 0.0
          %7511 = vmatpush1.msra.mxu0 0.0
          %7512 = vmatprep.subr.mxu0 0.0
          %7513 = vmatpush1.msra.mxu0 0.0
          %7514 = vmatprep.subr.mxu0 0.0
          %7515 = vmatpush1.msra.mxu0 0.0
          %7516 = vmatprep.subr.mxu0 0.0
          %7517 = vmatpush1.msra.mxu0 0.0
          %7518 = vmatprep.subr.mxu0 0.0
          %7519 = vmatpush1.msra.mxu0 0.0
          %7520 = vmatprep.subr.mxu0 0.0
          %7521 = vmatpush1.msra.mxu0 0.0
          %7522 = vmatprep.subr.mxu0 0.0
          %7523 = vmatpush1.msra.mxu0 0.0
          %7524 = vmatprep.subr.mxu0 0.0
          %7525 = vmatpush1.msra.mxu0 0.0
          %7526 = vmatprep.subr.mxu0 0.0
          %7527 = vmatpush1.msra.mxu0 0.0
          %7528 = vmatprep.subr.mxu0 0.0
          %7529 = vmatpush1.msra.mxu0 0.0
          %7530 = vmatprep.subr.mxu0 0.0
          %7531 = vmatpush1.msra.mxu0 0.0
          %7532 = vmatprep.subr.mxu0 0.0
          %7533 = vmatpush1.msra.mxu0 0.0
          %7534 = vmatprep.subr.mxu0 0.0
          %7535 = vmatpush1.msra.mxu0 0.0
          %7536 = vmatprep.subr.mxu0 0.0
          %7537 = vmatpush1.msra.mxu0 0.0
          %7538 = vmatprep.subr.mxu0 0.0
          %7539 = vmatpush1.msra.mxu0 0.0
          %7540 = vmatprep.subr.mxu0 0.0
          %7541 = vmatpush1.msra.mxu0 0.0
          %7542 = vmatprep.subr.mxu0 0.0
          %7543 = vmatpush1.msra.mxu0 0.0
          %7544 = vmatprep.mubr.f32.mxu0 0.0
          %7545 = vmatmul.mubr.f32.gmra.mrb[0].mxu0 %v7367
          %v7546 = vpop.f32.mrb[0].mxu0
          %v7547 = vadd.f32 0.0, %v7546
          %v7548 = vpop.f32.mrb[0].mxu0
          %7549 = vmatprep.mubr.f32.mxu0 0.0
          %7550 = vmatmul.mubr.f32.gmra.mrb[0].mxu0 %v7370
          %v7551 = vpop.f32.mrb[0].mxu0
          %v7552 = vadd.f32 0.0, %v7551
          %v7553 = vpop.f32.mrb[0].mxu0
          %7554 = vmatprep.mubr.f32.mxu0 0.0
          %7555 = vmatmul.mubr.f32.gmra.mrb[0].mxu0 %v7373
          %v7556 = vpop.f32.mrb[0].mxu0
          %v7557 = vadd.f32 0.0, %v7556
          %v7558 = vpop.f32.mrb[0].mxu0
          %7559 = vmatprep.mubr.f32.mxu0 0.0
          %7560 = vmatmul.mubr.f32.gmra.mrb[0].mxu0 %v7376
          %v7561 = vpop.f32.mrb[0].mxu0
          %v7562 = vadd.f32 0.0, %v7561
          %v7563 = vpop.f32.mrb[0].mxu0
          %7564 = vmatprep.mubr.f32.mxu0 0.0
          %7565 = vmatmul.mubr.f32.gmra.mrb[0].mxu0 %v7379
          %v7566 = vpop.f32.mrb[0].mxu0
          %v7567 = vadd.f32 0.0, %v7566
          %v7568 = vpop.f32.mrb[0].mxu0
          %7569 = vmatprep.mubr.f32.mxu0 0.0
          %7570 = vmatmul.mubr.f32.gmra.mrb[0].mxu0 %v7382
          %v7571 = vpop.f32.mrb[0].mxu0
          %v7572 = vadd.f32 0.0, %v7571
          %v7573 = vpop.f32.mrb[0].mxu0
          %7574 = vmatprep.mubr.f32.mxu0 0.0
          %7575 = vmatmul.mubr.f32.gmra.mrb[0].mxu0 %v7385
          %v7576 = vpop.f32.mrb[0].mxu0
          %v7577 = vadd.f32 0.0, %v7576
          %v7578 = vpop.f32.mrb[0].mxu0
          %7579 = vmatprep.mubr.f32.mxu0 0.0
          %7580 = vmatmul.mubr.f32.gmra.mrb[0].mxu0 %v7388
          %v7581 = vpop.f32.mrb[0].mxu0
          %v7582 = vadd.f32 0.0, %v7581
          %v7583 = vpop.f32.mrb[0].mxu0
          %7584 = vmatprep.mubr.f32.mxu0 0.0
          %7585 = vmatmul.mubr.f32.gmra.mrb[0].mxu0 %v7391
          %v7586 = vpop.f32.mrb[0].mxu0
          %v7587 = vadd.f32 0.0, %v7586
          %v7588 = vpop.f32.mrb[0].mxu0
          %7589 = vmatprep.mubr.f32.mxu0 0.0
          %7590 = vmatmul.mubr.f32.gmra.mrb[0].mxu0 %v7394
          %v7591 = vpop.f32.mrb[0].mxu0
          %v7592 = vadd.f32 0.0, %v7591
          %v7593 = vpop.f32.mrb[0].mxu0
          %7594 = vmatprep.mubr.f32.mxu0 0.0
          %7595 = vmatmul.mubr.f32.gmra.mrb[0].mxu0 %v7397
          %v7596 = vpop.f32.mrb[0].mxu0
          %v7597 = vadd.f32 0.0, %v7596
          %v7598 = vpop.f32.mrb[0].mxu0
          %7599 = vmatprep.mubr.f32.mxu0 0.0
          %7600 = vmatmul.mubr.f32.gmra.mrb[0].mxu0 %v7400
          %v7601 = vpop.f32.mrb[0].mxu0
          %v7602 = vadd.f32 0.0, %v7601
          %v7603 = vpop.f32.mrb[0].mxu0
          %7604 = vmatprep.mubr.f32.mxu0 0.0
          %7605 = vmatmul.mubr.f32.gmra.mrb[0].mxu0 %v7403
          %v7606 = vpop.f32.mrb[0].mxu0
          %v7607 = vadd.f32 0.0, %v7606
          %v7608 = vpop.f32.mrb[0].mxu0
          %7609 = vmatprep.mubr.f32.mxu0 0.0
          %7610 = vmatmul.mubr.f32.gmra.mrb[0].mxu0 %v7406
          %v7611 = vpop.f32.mrb[0].mxu0
          %v7612 = vadd.f32 0.0, %v7611
          %v7613 = vpop.f32.mrb[0].mxu0
          %7614 = vmatprep.mubr.f32.mxu0 0.0
          %7615 = vmatmul.mubr.f32.gmra.mrb[0].mxu0 %v7409
          %v7616 = vpop.f32.mrb[0].mxu0
          %v7617 = vadd.f32 0.0, %v7616
          %v7618 = vpop.f32.mrb[0].mxu0
          %7619 = vmatprep.mubr.f32.mxu0 0.0
          %7620 = vmatmul.mubr.f32.gmra.mrb[0].mxu0 %v7412
          %v7621 = vpop.f32.mrb[0].mxu0
          %v7622 = vadd.f32 0.0, %v7621
          %v7623 = vpop.f32.mrb[0].mxu0
          %7624 = vmatprep.mubr.f32.mxu0 0.0
          %7625 = vmatmul.mubr.f32.gmra.mrb[0].mxu0 %v7415
          %v7626 = vpop.f32.mrb[0].mxu0
          %v7627 = vadd.f32 0.0, %v7626
          %v7628 = vpop.f32.mrb[0].mxu0
          %7629 = vmatprep.mubr.f32.mxu0 0.0
          %7630 = vmatmul.mubr.f32.gmra.mrb[0].mxu0 %v7418
          %v7631 = vpop.f32.mrb[0].mxu0
          %v7632 = vadd.f32 0.0, %v7631
          %v7633 = vpop.f32.mrb[0].mxu0
          %7634 = vmatprep.mubr.f32.mxu0 0.0
          %7635 = vmatmul.mubr.f32.gmra.mrb[0].mxu0 %v7421
          %v7636 = vpop.f32.mrb[0].mxu0
          %v7637 = vadd.f32 0.0, %v7636
          %v7638 = vpop.f32.mrb[0].mxu0
          %7639 = vmatprep.mubr.f32.mxu0 0.0
          %7640 = vmatmul.mubr.f32.gmra.mrb[0].mxu0 %v7424
          %v7641 = vpop.f32.mrb[0].mxu0
          %v7642 = vadd.f32 0.0, %v7641
          %v7643 = vpop.f32.mrb[0].mxu0
          %7644 = vmatprep.mubr.f32.mxu0 0.0
          %7645 = vmatmul.mubr.f32.gmra.mrb[0].mxu0 %v7427
          %v7646 = vpop.f32.mrb[0].mxu0
          %v7647 = vadd.f32 0.0, %v7646
          %v7648 = vpop.f32.mrb[0].mxu0
          %7649 = vmatprep.mubr.f32.mxu0 0.0
          %7650 = vmatmul.mubr.f32.gmra.mrb[0].mxu0 %v7430
          %v7651 = vpop.f32.mrb[0].mxu0
          %v7652 = vadd.f32 0.0, %v7651
          %v7653 = vpop.f32.mrb[0].mxu0
          %7654 = vmatprep.mubr.f32.mxu0 0.0
          %7655 = vmatmul.mubr.f32.gmra.mrb[0].mxu0 %v7433
          %v7656 = vpop.f32.mrb[0].mxu0
          %v7657 = vadd.f32 0.0, %v7656
          %v7658 = vpop.f32.mrb[0].mxu0
          %7659 = vmatprep.mubr.f32.mxu0 0.0
          %7660 = vmatmul.mubr.f32.gmra.mrb[0].mxu0 %v7436
          %v7661 = vpop.f32.mrb[0].mxu0
          %v7662 = vadd.f32 0.0, %v7661
          %v7663 = vpop.f32.mrb[0].mxu0
          %7664 = vmatprep.mubr.f32.mxu0 0.0
          %7665 = vmatmul.mubr.f32.gmra.mrb[0].mxu0 %v7439
          %v7666 = vpop.f32.mrb[0].mxu0
          %v7667 = vadd.f32 0.0, %v7666
          %v7668 = vpop.f32.mrb[0].mxu0
          %7669 = vmatprep.mubr.f32.mxu0 0.0
          %7670 = vmatmul.mubr.f32.gmra.mrb[0].mxu0 %v7442
          %v7671 = vpop.f32.mrb[0].mxu0
          %v7672 = vadd.f32 0.0, %v7671
          %v7673 = vpop.f32.mrb[0].mxu0
          %7674 = vmatprep.mubr.f32.mxu0 0.0
          %7675 = vmatmul.mubr.f32.gmra.mrb[0].mxu0 %v7445
          %v7676 = vpop.f32.mrb[0].mxu0
          %v7677 = vadd.f32 0.0, %v7676
          %v7678 = vpop.f32.mrb[0].mxu0
          %7679 = vmatprep.mubr.f32.mxu0 0.0
          %7680 = vmatmul.mubr.f32.gmra.mrb[0].mxu0 %v7448
          %v7681 = vpop.f32.mrb[0].mxu0
          %v7682 = vadd.f32 0.0, %v7681
          %v7683 = vpop.f32.mrb[0].mxu0
          %7684 = vmatprep.mubr.f32.mxu0 0.0
          %7685 = vmatmul.mubr.f32.gmra.mrb[0].mxu0 %v7451
          %v7686 = vpop.f32.mrb[0].mxu0
          %v7687 = vadd.f32 0.0, %v7686
          %v7688 = vpop.f32.mrb[0].mxu0
          %7689 = vmatprep.mubr.f32.mxu0 0.0
          %7690 = vmatmul.mubr.f32.gmra.mrb[0].mxu0 %v7454
          %v7691 = vpop.f32.mrb[0].mxu0
          %v7692 = vadd.f32 0.0, %v7691
          %v7693 = vpop.f32.mrb[0].mxu0
          %7694 = vmatprep.mubr.f32.mxu0 0.0
          %7695 = vmatmul.mubr.f32.gmra.mrb[0].mxu0 %v7457
          %v7696 = vpop.f32.mrb[0].mxu0
          %v7697 = vadd.f32 0.0, %v7696
          %v7698 = vpop.f32.mrb[0].mxu0
          %7699 = vmatprep.mubr.f32.mxu0 0.0
          %7700 = vmatmul.mubr.f32.gmra.mrb[0].mxu0 %v7460
          %v7701 = vpop.f32.mrb[0].mxu0
          %v7702 = vadd.f32 0.0, %v7701
          %v7703 = vpop.f32.mrb[0].mxu0
          %7704 = vmatprep.mubr.f32.mxu0 0.0
          %7705 = vmatmul.mubr.f32.gmra.mrb[0].mxu0 %v7463
          %v7706 = vpop.f32.mrb[0].mxu0
          %v7707 = vadd.f32 0.0, %v7706
          %v7708 = vpop.f32.mrb[0].mxu0
          %7709 = vmatprep.mubr.f32.mxu0 0.0
          %7710 = vmatmul.mubr.f32.gmra.mrb[0].mxu0 %v7466
          %v7711 = vpop.f32.mrb[0].mxu0
          %v7712 = vadd.f32 0.0, %v7711
          %v7713 = vpop.f32.mrb[0].mxu0
          %7714 = vmatprep.mubr.f32.mxu0 0.0
          %7715 = vmatmul.mubr.f32.gmra.mrb[0].mxu0 %v7469
          %v7716 = vpop.f32.mrb[0].mxu0
          %v7717 = vadd.f32 0.0, %v7716
          %v7718 = vpop.f32.mrb[0].mxu0
          %7719 = vmatprep.mubr.f32.mxu0 0.0
          %7720 = vmatmul.mubr.f32.gmra.mrb[0].mxu0 %v7472
          %v7721 = vpop.f32.mrb[0].mxu0
          %v7722 = vadd.f32 0.0, %v7721
          %v7723 = vpop.f32.mrb[0].mxu0
          %7724 = vmatprep.mubr.f32.mxu0 0.0
          %7725 = vmatmul.mubr.f32.gmra.mrb[0].mxu0 %v7475
          %v7726 = vpop.f32.mrb[0].mxu0
          %v7727 = vadd.f32 0.0, %v7726
          %v7728 = vpop.f32.mrb[0].mxu0
          %7729 = vmatprep.mubr.f32.mxu0 0.0
          %7730 = vmatmul.mubr.f32.gmra.mrb[0].mxu0 %v7478
          %v7731 = vpop.f32.mrb[0].mxu0
          %v7732 = vadd.f32 0.0, %v7731
          %v7733 = vpop.f32.mrb[0].mxu0
          %7734 = vdwg.mxu0
          %v7735 = vadd.f32 %v7140, %v7547
          %v7736 = vadd.f32 %v7145, %v7552
          %v7737 = vadd.f32 %v7150, %v7557
          %v7738 = vadd.f32 %v7155, %v7562
          %v7739 = vadd.f32 %v7160, %v7567
          %v7740 = vadd.f32 %v7165, %v7572
          %v7741 = vadd.f32 %v7170, %v7577
          %v7742 = vadd.f32 %v7175, %v7582
          %v7743 = vadd.f32 %v7180, %v7587
          %v7744 = vadd.f32 %v7185, %v7592
          %v7745 = vadd.f32 %v7190, %v7597
          %v7746 = vadd.f32 %v7195, %v7602
          %v7747 = vadd.f32 %v7200, %v7607
          %v7748 = vadd.f32 %v7205, %v7612
          %v7749 = vadd.f32 %v7210, %v7617
          %v7750 = vadd.f32 %v7215, %v7622
          %v7751 = vadd.f32 %v7220, %v7627
          %v7752 = vadd.f32 %v7225, %v7632
          %v7753 = vadd.f32 %v7230, %v7637
          %v7754 = vadd.f32 %v7235, %v7642
          %v7755 = vadd.f32 %v7240, %v7647
          %v7756 = vadd.f32 %v7245, %v7652
          %v7757 = vadd.f32 %v7250, %v7657
          %v7758 = vadd.f32 %v7255, %v7662
          %v7759 = vadd.f32 %v7260, %v7667
          %v7760 = vadd.f32 %v7265, %v7672
          %v7761 = vadd.f32 %v7270, %v7677
          %v7762 = vadd.f32 %v7275, %v7682
          %v7763 = vadd.f32 %v7280, %v7687
          %v7764 = vadd.f32 %v7285, %v7692
          %v7765 = vadd.f32 %v7290, %v7697
          %v7766 = vadd.f32 %v7295, %v7702
          %v7767 = vadd.f32 %v7300, %v7707
          %v7768 = vadd.f32 %v7305, %v7712
          %v7769 = vadd.f32 %v7310, %v7717
          %v7770 = vadd.f32 %v7315, %v7722
          %v7771 = vadd.f32 %v7320, %v7727
          %v7772 = vadd.f32 %v7325, %v7732
          %v7773 = vadd.f32 %v7735, %v4138
          %v7774 = vadd.f32 %v7736, %v4138
          %v7775 = vadd.f32 %v7737, %v4138
          %v7776 = vadd.f32 %v7738, %v4138
          %v7777 = vadd.f32 %v7739, %v4138
          %v7778 = vadd.f32 %v7740, %v4138
          %v7779 = vadd.f32 %v7741, %v4138
          %v7780 = vadd.f32 %v7742, %v4138
          %v7781 = vadd.f32 %v7743, %v4138
          %v7782 = vadd.f32 %v7744, %v4138
          %v7783 = vadd.f32 %v7745, %v4138
          %v7784 = vadd.f32 %v7746, %v4138
          %v7785 = vadd.f32 %v7747, %v4138
          %v7786 = vadd.f32 %v7748, %v4138
          %v7787 = vadd.f32 %v7749, %v4138
          %v7788 = vadd.f32 %v7750, %v4138
          %v7789 = vadd.f32 %v7751, %v4138
          %v7790 = vadd.f32 %v7752, %v4138
          %v7791 = vadd.f32 %v7753, %v4138
          %v7792 = vadd.f32 %v7754, %v4138
          %v7793 = vadd.f32 %v7755, %v4138
          %v7794 = vadd.f32 %v7756, %v4138
          %v7795 = vadd.f32 %v7757, %v4138
          %v7796 = vadd.f32 %v7758, %v4138
          %v7797 = vadd.f32 %v7759, %v4138
          %v7798 = vadd.f32 %v7760, %v4138
          %v7799 = vadd.f32 %v7761, %v4138
          %v7800 = vadd.f32 %v7762, %v4138
          %v7801 = vadd.f32 %v7763, %v4138
          %v7802 = vadd.f32 %v7764, %v4138
          %v7803 = vadd.f32 %v7765, %v4138
          %v7804 = vadd.f32 %v7766, %v4138
          %v7805 = vadd.f32 %v7767, %v4138
          %v7806 = vadd.f32 %v7768, %v4138
          %v7807 = vadd.f32 %v7769, %v4138
          %v7808 = vadd.f32 %v7770, %v4138
          %v7809 = vadd.f32 %v7771, %v4138
          %v7810 = vadd.f32 %v7772, %v4138
          %v7811 = vmax.f32 %v7773, 0.0
          %v7812 = vmax.f32 %v7774, 0.0
          %v7813 = vmax.f32 %v7775, 0.0
          %v7814 = vmax.f32 %v7776, 0.0
          %v7815 = vmax.f32 %v7777, 0.0
          %v7816 = vmax.f32 %v7778, 0.0
          %v7817 = vmax.f32 %v7779, 0.0
          %v7818 = vmax.f32 %v7780, 0.0
          %v7819 = vmax.f32 %v7781, 0.0
          %v7820 = vmax.f32 %v7782, 0.0
          %v7821 = vmax.f32 %v7783, 0.0
          %v7822 = vmax.f32 %v7784, 0.0
          %v7823 = vmax.f32 %v7785, 0.0
          %v7824 = vmax.f32 %v7786, 0.0
          %v7825 = vmax.f32 %v7787, 0.0
          %v7826 = vmax.f32 %v7788, 0.0
          %v7827 = vmax.f32 %v7789, 0.0
          %v7828 = vmax.f32 %v7790, 0.0
          %v7829 = vmax.f32 %v7791, 0.0
          %v7830 = vmax.f32 %v7792, 0.0
          %v7831 = vmax.f32 %v7793, 0.0
          %v7832 = vmax.f32 %v7794, 0.0
          %v7833 = vmax.f32 %v7795, 0.0
          %v7834 = vmax.f32 %v7796, 0.0
          %v7835 = vmax.f32 %v7797, 0.0
          %v7836 = vmax.f32 %v7798, 0.0
          %v7837 = vmax.f32 %v7799, 0.0
          %v7838 = vmax.f32 %v7800, 0.0
          %v7839 = vmax.f32 %v7801, 0.0
          %v7840 = vmax.f32 %v7802, 0.0
          %v7841 = vmax.f32 %v7803, 0.0
          %v7842 = vmax.f32 %v7804, 0.0
          %v7843 = vmax.f32 %v7805, 0.0
          %v7844 = vmax.f32 %v7806, 0.0
          %v7845 = vmax.f32 %v7807, 0.0
          %v7846 = vmax.f32 %v7808, 0.0
          %v7847 = vmax.f32 %v7809, 0.0
          %v7848 = vmax.f32 %v7810, 0.0
          %7849 = vst [vmem:[#allocation5] sm:$0xff] %v7811
          %7850 = vst [vmem:[#allocation5 + $0x8] sm:$0xff] %v7812
          %7851 = vst [vmem:[#allocation5 + $0x10] sm:$0xff] %v7813
          %7852 = vst [vmem:[#allocation5 + $0x18] sm:$0xff] %v7814
          %7853 = vst [vmem:[#allocation5 + $0x20] sm:$0xff] %v7815
          %7854 = vst [vmem:[#allocation5 + $0x28] sm:$0xff] %v7816
          %7855 = vst [vmem:[#allocation5 + $0x30] sm:$0xff] %v7817
          %7856 = vst [vmem:[#allocation5 + $0x38] sm:$0xff] %v7818
          %7857 = vst [vmem:[#allocation5 + $0x40] sm:$0xff] %v7819
          %7858 = vst [vmem:[#allocation5 + $0x48] sm:$0xff] %v7820
          %7859 = vst [vmem:[#allocation5 + $0x50] sm:$0xff] %v7821
          %7860 = vst [vmem:[#allocation5 + $0x58] sm:$0xff] %v7822
          %7861 = vst [vmem:[#allocation5 + $0x60] sm:$0xff] %v7823
          %7862 = vst [vmem:[#allocation5 + $0x68] sm:$0xff] %v7824
          %7863 = vst [vmem:[#allocation5 + $0x70] sm:$0xff] %v7825
          %7864 = vst [vmem:[#allocation5 + $0x78] sm:$0xff] %v7826
          %7865 = vst [vmem:[#allocation5 + $0x80] sm:$0xff] %v7827
          %7866 = vst [vmem:[#allocation5 + $0x88] sm:$0xff] %v7828
          %7867 = vst [vmem:[#allocation5 + $0x90] sm:$0xff] %v7829
          %7868 = vst [vmem:[#allocation5 + $0x98] sm:$0xff] %v7830
          %7869 = vst [vmem:[#allocation5 + $0xa0] sm:$0xff] %v7831
          %7870 = vst [vmem:[#allocation5 + $0xa8] sm:$0xff] %v7832
          %7871 = vst [vmem:[#allocation5 + $0xb0] sm:$0xff] %v7833
          %7872 = vst [vmem:[#allocation5 + $0xb8] sm:$0xff] %v7834
          %7873 = vst [vmem:[#allocation5 + $0xc0] sm:$0xff] %v7835
          %7874 = vst [vmem:[#allocation5 + $0xc8] sm:$0xff] %v7836
          %7875 = vst [vmem:[#allocation5 + $0xd0] sm:$0xff] %v7837
          %7876 = vst [vmem:[#allocation5 + $0xd8] sm:$0xff] %v7838
          %7877 = vst [vmem:[#allocation5 + $0xe0] sm:$0xff] %v7839
          %7878 = vst [vmem:[#allocation5 + $0xe8] sm:$0xff] %v7840
          %7879 = vst [vmem:[#allocation5 + $0xf0] sm:$0xff] %v7841
          %7880 = vst [vmem:[#allocation5 + $0xf8] sm:$0xff] %v7842
          %7881 = vst [vmem:[#allocation5 + $0x100] sm:$0xff] %v7843
          %7882 = vst [vmem:[#allocation5 + $0x108] sm:$0xff] %v7844
          %7883 = vst [vmem:[#allocation5 + $0x110] sm:$0xff] %v7845
          %7884 = vst [vmem:[#allocation5 + $0x118] sm:$0xff] %v7846
          %7885 = vst [vmem:[#allocation5 + $0x120] sm:$0xff] %v7847
          %7886 = vst [vmem:[#allocation5 + $0x128] sm:$0xf] %v7848
          %v7887 = vld [vmem:[#allocation5] ss:$2 sm:$0xff]
          %v7888 = vld [vmem:[%s4255] ss:$2 sm:$0xff]
          %v7889 = vld [vmem:[%s4257] ss:$2 sm:$0xff]
          %v7890 = vld [vmem:[%s4259] ss:$2 sm:$0xff]
          %v7891 = vld [vmem:[%s4261] ss:$2 sm:$0xff]
          %v7892 = vld [vmem:[%s4263] ss:$2 sm:$0xff]
          %v7893 = vld [vmem:[%s4265] ss:$2 sm:$0xff]
          %v7894 = vld [vmem:[%s4267] ss:$2 sm:$0xff]
          %v7895 = vld [vmem:[%s4269] ss:$2 sm:$0xff]
          %v7896 = vld [vmem:[%s4271] ss:$2 sm:$0xff]
          %v7897 = vld [vmem:[%s4273] ss:$2 sm:$0xff]
          %v7898 = vld [vmem:[%s4275] ss:$2 sm:$0xff]
          %v7899 = vld [vmem:[%s4277] ss:$2 sm:$0xff]
          %v7900 = vld [vmem:[%s4279] ss:$2 sm:$0xff]
          %v7901 = vld [vmem:[%s4281] ss:$2 sm:$0xff]
          %v7902 = vld [vmem:[%s4283] ss:$2 sm:$0xff]
          %v7903 = vld [vmem:[%s4285] ss:$2 sm:$0xff]
          %v7904 = vld [vmem:[%s4287] ss:$2 sm:$0xff]
          %v7905 = vld [vmem:[%s4289] ss:$2 sm:$0x1f]
          %v7906 = vld [vmem:[%s4291] ss:$2 sm:$0xff]
          %v7907 = vld [vmem:[%s4293] ss:$2 sm:$0xff]
          %v7908 = vld [vmem:[%s4295] ss:$2 sm:$0xff]
          %v7909 = vld [vmem:[%s4297] ss:$2 sm:$0xff]
          %v7910 = vld [vmem:[%s4299] ss:$2 sm:$0xff]
          %v7911 = vld [vmem:[%s4301] ss:$2 sm:$0xff]
          %v7912 = vld [vmem:[%s4303] ss:$2 sm:$0xff]
          %v7913 = vld [vmem:[%s4305] ss:$2 sm:$0xff]
          %v7914 = vld [vmem:[%s4307] ss:$2 sm:$0xff]
          %v7915 = vld [vmem:[%s4309] ss:$2 sm:$0xff]
          %v7916 = vld [vmem:[%s4311] ss:$2 sm:$0xff]
          %v7917 = vld [vmem:[%s4313] ss:$2 sm:$0xff]
          %v7918 = vld [vmem:[%s4315] ss:$2 sm:$0xff]
          %v7919 = vld [vmem:[%s4317] ss:$2 sm:$0xff]
          %v7920 = vld [vmem:[%s4319] ss:$2 sm:$0xff]
          %v7921 = vld [vmem:[%s4321] ss:$2 sm:$0xff]
          %v7922 = vld [vmem:[%s4323] ss:$2 sm:$0xff]
          %v7923 = vld [vmem:[%s4325] ss:$2 sm:$0xff]
          %v7924 = vld [vmem:[%s4327] ss:$2 sm:$0x1f]
          %v7925 = vmax.f32 %v7887, %v7906
          %v7926 = vmax.f32 %v7888, %v7907
          %v7927 = vmax.f32 %v7889, %v7908
          %v7928 = vmax.f32 %v7890, %v7909
          %v7929 = vmax.f32 %v7891, %v7910
          %v7930 = vmax.f32 %v7892, %v7911
          %v7931 = vmax.f32 %v7893, %v7912
          %v7932 = vmax.f32 %v7894, %v7913
          %v7933 = vmax.f32 %v7895, %v7914
          %v7934 = vmax.f32 %v7896, %v7915
          %v7935 = vmax.f32 %v7897, %v7916
          %v7936 = vmax.f32 %v7898, %v7917
          %v7937 = vmax.f32 %v7899, %v7918
          %v7938 = vmax.f32 %v7900, %v7919
          %v7939 = vmax.f32 %v7901, %v7920
          %v7940 = vmax.f32 %v7902, %v7921
          %v7941 = vmax.f32 %v7903, %v7922
          %v7942 = vmax.f32 %v7904, %v7923
          %v7943 = vmax.f32 %v7905, %v7924
          %v7944 = vld [vmem:[%s4348] ss:$2 sm:$0xff]
          %v7945 = vld [vmem:[%s4350] ss:$2 sm:$0xff]
          %v7946 = vld [vmem:[%s4352] ss:$2 sm:$0xff]
          %v7947 = vld [vmem:[%s4354] ss:$2 sm:$0xff]
          %v7948 = vld [vmem:[%s4356] ss:$2 sm:$0xff]
          %v7949 = vld [vmem:[%s4358] ss:$2 sm:$0xff]
          %v7950 = vld [vmem:[%s4360] ss:$2 sm:$0xff]
          %v7951 = vld [vmem:[%s4362] ss:$2 sm:$0xff]
          %v7952 = vld [vmem:[%s4364] ss:$2 sm:$0xff]
          %v7953 = vld [vmem:[%s4366] ss:$2 sm:$0xff]
          %v7954 = vld [vmem:[%s4368] ss:$2 sm:$0xff]
          %v7955 = vld [vmem:[%s4370] ss:$2 sm:$0xff]
          %v7956 = vld [vmem:[%s4372] ss:$2 sm:$0xff]
          %v7957 = vld [vmem:[%s4374] ss:$2 sm:$0xff]
          %v7958 = vld [vmem:[%s4376] ss:$2 sm:$0xff]
          %v7959 = vld [vmem:[%s4378] ss:$2 sm:$0xff]
          %v7960 = vld [vmem:[%s4380] ss:$2 sm:$0xff]
          %v7961 = vld [vmem:[%s4382] ss:$2 sm:$0xff]
          %v7962 = vld [vmem:[%s4384] ss:$2 sm:$0x1f]
          %v7963 = vmax.f32 %v7925, %v7944
          %v7964 = vmax.f32 %v7926, %v7945
          %v7965 = vmax.f32 %v7927, %v7946
          %v7966 = vmax.f32 %v7928, %v7947
          %v7967 = vmax.f32 %v7929, %v7948
          %v7968 = vmax.f32 %v7930, %v7949
          %v7969 = vmax.f32 %v7931, %v7950
          %v7970 = vmax.f32 %v7932, %v7951
          %v7971 = vmax.f32 %v7933, %v7952
          %v7972 = vmax.f32 %v7934, %v7953
          %v7973 = vmax.f32 %v7935, %v7954
          %v7974 = vmax.f32 %v7936, %v7955
          %v7975 = vmax.f32 %v7937, %v7956
          %v7976 = vmax.f32 %v7938, %v7957
          %v7977 = vmax.f32 %v7939, %v7958
          %v7978 = vmax.f32 %v7940, %v7959
          %v7979 = vmax.f32 %v7941, %v7960
          %v7980 = vmax.f32 %v7942, %v7961
          %v7981 = vmax.f32 %v7943, %v7962
          %7982 = vst [vmem:[#allocation6] sm:$0x1] 0.0
          %7983 = vst [vmem:[#allocation6 + $0x96] sm:$0x1] 0.0
          %7984 = vst [vmem:[#allocation6 + $0x1] sm:$0xff] %v7963
          %7985 = vst [vmem:[#allocation6 + $0x9] sm:$0xff] %v7964
          %7986 = vst [vmem:[#allocation6 + $0x11] sm:$0xff] %v7965
          %7987 = vst [vmem:[#allocation6 + $0x19] sm:$0xff] %v7966
          %7988 = vst [vmem:[#allocation6 + $0x21] sm:$0xff] %v7967
          %7989 = vst [vmem:[#allocation6 + $0x29] sm:$0xff] %v7968
          %7990 = vst [vmem:[#allocation6 + $0x31] sm:$0xff] %v7969
          %7991 = vst [vmem:[#allocation6 + $0x39] sm:$0xff] %v7970
          %7992 = vst [vmem:[#allocation6 + $0x41] sm:$0xff] %v7971
          %7993 = vst [vmem:[#allocation6 + $0x49] sm:$0xff] %v7972
          %7994 = vst [vmem:[#allocation6 + $0x51] sm:$0xff] %v7973
          %7995 = vst [vmem:[#allocation6 + $0x59] sm:$0xff] %v7974
          %7996 = vst [vmem:[#allocation6 + $0x61] sm:$0xff] %v7975
          %7997 = vst [vmem:[#allocation6 + $0x69] sm:$0xff] %v7976
          %7998 = vst [vmem:[#allocation6 + $0x71] sm:$0xff] %v7977
          %7999 = vst [vmem:[#allocation6 + $0x79] sm:$0xff] %v7978
          %8000 = vst [vmem:[#allocation6 + $0x81] sm:$0xff] %v7979
          %8001 = vst [vmem:[#allocation6 + $0x89] sm:$0xff] %v7980
          %8002 = vst [vmem:[#allocation6 + $0x91] sm:$0x1f] %v7981
          %v8003 = vld [vmem:[#allocation6] sm:$0xff]
          %v8004 = vld [vmem:[#allocation6 + $0x8] sm:$0xff]
          %v8005 = vld [vmem:[#allocation6 + $0x10] sm:$0xff]
          %v8006 = vld [vmem:[#allocation6 + $0x18] sm:$0xff]
          %v8007 = vld [vmem:[#allocation6 + $0x20] sm:$0xff]
          %v8008 = vld [vmem:[#allocation6 + $0x28] sm:$0xff]
          %v8009 = vld [vmem:[#allocation6 + $0x30] sm:$0xff]
          %v8010 = vld [vmem:[#allocation6 + $0x38] sm:$0xff]
          %v8011 = vld [vmem:[#allocation6 + $0x40] sm:$0xff]
          %v8012 = vld [vmem:[#allocation6 + $0x48] sm:$0xff]
          %v8013 = vld [vmem:[#allocation6 + $0x50] sm:$0xff]
          %v8014 = vld [vmem:[#allocation6 + $0x58] sm:$0xff]
          %v8015 = vld [vmem:[#allocation6 + $0x60] sm:$0xff]
          %v8016 = vld [vmem:[#allocation6 + $0x68] sm:$0xff]
          %v8017 = vld [vmem:[#allocation6 + $0x70] sm:$0xff]
          %v8018 = vld [vmem:[#allocation6 + $0x78] sm:$0xff]
          %v8019 = vld [vmem:[#allocation6 + $0x80] sm:$0xff]
          %v8020 = vld [vmem:[#allocation6 + $0x88] sm:$0xff]
          %v8021 = vld [vmem:[#allocation6 + $0x90] sm:$0x3f]
          %v8022 = vld [vmem:[#allocation6 + $0x1] sm:$0xff]
          %v8023 = vld [vmem:[#allocation6 + $0x9] sm:$0xff]
          %v8024 = vld [vmem:[#allocation6 + $0x11] sm:$0xff]
          %v8025 = vld [vmem:[#allocation6 + $0x19] sm:$0xff]
          %v8026 = vld [vmem:[#allocation6 + $0x21] sm:$0xff]
          %v8027 = vld [vmem:[#allocation6 + $0x29] sm:$0xff]
          %v8028 = vld [vmem:[#allocation6 + $0x31] sm:$0xff]
          %v8029 = vld [vmem:[#allocation6 + $0x39] sm:$0xff]
          %v8030 = vld [vmem:[#allocation6 + $0x41] sm:$0xff]
          %v8031 = vld [vmem:[#allocation6 + $0x49] sm:$0xff]
          %v8032 = vld [vmem:[#allocation6 + $0x51] sm:$0xff]
          %v8033 = vld [vmem:[#allocation6 + $0x59] sm:$0xff]
          %v8034 = vld [vmem:[#allocation6 + $0x61] sm:$0xff]
          %v8035 = vld [vmem:[#allocation6 + $0x69] sm:$0xff]
          %v8036 = vld [vmem:[#allocation6 + $0x71] sm:$0xff]
          %v8037 = vld [vmem:[#allocation6 + $0x79] sm:$0xff]
          %v8038 = vld [vmem:[#allocation6 + $0x81] sm:$0xff]
          %v8039 = vld [vmem:[#allocation6 + $0x89] sm:$0xff]
          %v8040 = vld [vmem:[#allocation6 + $0x91] sm:$0x3f]
          %8041 = vmatprep.subr.mxu0 0.0
          %8042 = vmatpush1.msra.mxu0 %v2703
          %8043 = vmatprep.subr.mxu0 0.0
          %8044 = vmatpush1.msra.mxu0 %v2704
          %8045 = vmatprep.subr.mxu0 0.0
          %8046 = vmatpush1.msra.mxu0 %v2705
          %8047 = vmatprep.subr.mxu0 0.0
          %8048 = vmatpush1.msra.mxu0 %v2706
          %8049 = vmatprep.subr.mxu0 0.0
          %8050 = vmatpush1.msra.mxu0 %v2707
          %8051 = vmatprep.subr.mxu0 0.0
          %8052 = vmatpush1.msra.mxu0 %v2708
          %8053 = vmatprep.subr.mxu0 0.0
          %8054 = vmatpush1.msra.mxu0 %v2709
          %8055 = vmatprep.subr.mxu0 0.0
          %8056 = vmatpush1.msra.mxu0 %v2710
          %8057 = vmatprep.subr.mxu0 0.0
          %8058 = vmatpush1.msra.mxu0 %v2711
          %8059 = vmatprep.subr.mxu0 0.0
          %8060 = vmatpush1.msra.mxu0 %v2712
          %8061 = vmatprep.subr.mxu0 0.0
          %8062 = vmatpush1.msra.mxu0 %v2713
          %8063 = vmatprep.subr.mxu0 0.0
          %8064 = vmatpush1.msra.mxu0 %v2714
          %8065 = vmatprep.subr.mxu0 0.0
          %8066 = vmatpush1.msra.mxu0 %v2715
          %8067 = vmatprep.subr.mxu0 0.0
          %8068 = vmatpush1.msra.mxu0 %v2716
          %8069 = vmatprep.subr.mxu0 0.0
          %8070 = vmatpush1.msra.mxu0 %v2717
          %8071 = vmatprep.subr.mxu0 0.0
          %8072 = vmatpush1.msra.mxu0 %v2718
          %8073 = vmatprep.subr.mxu0 0.0
          %8074 = vmatpush1.msra.mxu0 0.0
          %8075 = vmatprep.subr.mxu0 0.0
          %8076 = vmatpush1.msra.mxu0 0.0
          %8077 = vmatprep.subr.mxu0 0.0
          %8078 = vmatpush1.msra.mxu0 0.0
          %8079 = vmatprep.subr.mxu0 0.0
          %8080 = vmatpush1.msra.mxu0 0.0
          %8081 = vmatprep.subr.mxu0 0.0
          %8082 = vmatpush1.msra.mxu0 0.0
          %8083 = vmatprep.subr.mxu0 0.0
          %8084 = vmatpush1.msra.mxu0 0.0
          %8085 = vmatprep.subr.mxu0 0.0
          %8086 = vmatpush1.msra.mxu0 0.0
          %8087 = vmatprep.subr.mxu0 0.0
          %8088 = vmatpush1.msra.mxu0 0.0
          %8089 = vmatprep.subr.mxu0 0.0
          %8090 = vmatpush1.msra.mxu0 0.0
          %8091 = vmatprep.subr.mxu0 0.0
          %8092 = vmatpush1.msra.mxu0 0.0
          %8093 = vmatprep.subr.mxu0 0.0
          %8094 = vmatpush1.msra.mxu0 0.0
          %8095 = vmatprep.subr.mxu0 0.0
          %8096 = vmatpush1.msra.mxu0 0.0
          %8097 = vmatprep.subr.mxu0 0.0
          %8098 = vmatpush1.msra.mxu0 0.0
          %8099 = vmatprep.subr.mxu0 0.0
          %8100 = vmatpush1.msra.mxu0 0.0
          %8101 = vmatprep.subr.mxu0 0.0
          %8102 = vmatpush1.msra.mxu0 0.0
          %8103 = vmatprep.subr.mxu0 0.0
          %8104 = vmatpush1.msra.mxu0 0.0
          %8105 = vmatprep.mubr.f32.mxu0 0.0
          %8106 = vmatmul.mubr.f32.gmra.mrb[0].mxu0 %v8022
          %v8107 = vpop.f32.mrb[0].mxu0
          %v8108 = vadd.f32 0.0, %v8107
          %v8109 = vpop.f32.mrb[0].mxu0
          %8110 = vmatprep.mubr.f32.mxu0 0.0
          %8111 = vmatmul.mubr.f32.gmra.mrb[0].mxu0 %v8023
          %v8112 = vpop.f32.mrb[0].mxu0
          %v8113 = vadd.f32 0.0, %v8112
          %v8114 = vpop.f32.mrb[0].mxu0
          %8115 = vmatprep.mubr.f32.mxu0 0.0
          %8116 = vmatmul.mubr.f32.gmra.mrb[0].mxu0 %v8024
          %v8117 = vpop.f32.mrb[0].mxu0
          %v8118 = vadd.f32 0.0, %v8117
          %v8119 = vpop.f32.mrb[0].mxu0
          %8120 = vmatprep.mubr.f32.mxu0 0.0
          %8121 = vmatmul.mubr.f32.gmra.mrb[0].mxu0 %v8025
          %v8122 = vpop.f32.mrb[0].mxu0
          %v8123 = vadd.f32 0.0, %v8122
          %v8124 = vpop.f32.mrb[0].mxu0
          %8125 = vmatprep.mubr.f32.mxu0 0.0
          %8126 = vmatmul.mubr.f32.gmra.mrb[0].mxu0 %v8026
          %v8127 = vpop.f32.mrb[0].mxu0
          %v8128 = vadd.f32 0.0, %v8127
          %v8129 = vpop.f32.mrb[0].mxu0
          %8130 = vmatprep.mubr.f32.mxu0 0.0
          %8131 = vmatmul.mubr.f32.gmra.mrb[0].mxu0 %v8027
          %v8132 = vpop.f32.mrb[0].mxu0
          %v8133 = vadd.f32 0.0, %v8132
          %v8134 = vpop.f32.mrb[0].mxu0
          %8135 = vmatprep.mubr.f32.mxu0 0.0
          %8136 = vmatmul.mubr.f32.gmra.mrb[0].mxu0 %v8028
          %v8137 = vpop.f32.mrb[0].mxu0
          %v8138 = vadd.f32 0.0, %v8137
          %v8139 = vpop.f32.mrb[0].mxu0
          %8140 = vmatprep.mubr.f32.mxu0 0.0
          %8141 = vmatmul.mubr.f32.gmra.mrb[0].mxu0 %v8029
          %v8142 = vpop.f32.mrb[0].mxu0
          %v8143 = vadd.f32 0.0, %v8142
          %v8144 = vpop.f32.mrb[0].mxu0
          %8145 = vmatprep.mubr.f32.mxu0 0.0
          %8146 = vmatmul.mubr.f32.gmra.mrb[0].mxu0 %v8030
          %v8147 = vpop.f32.mrb[0].mxu0
          %v8148 = vadd.f32 0.0, %v8147
          %v8149 = vpop.f32.mrb[0].mxu0
          %8150 = vmatprep.mubr.f32.mxu0 0.0
          %8151 = vmatmul.mubr.f32.gmra.mrb[0].mxu0 %v8031
          %v8152 = vpop.f32.mrb[0].mxu0
          %v8153 = vadd.f32 0.0, %v8152
          %v8154 = vpop.f32.mrb[0].mxu0
          %8155 = vmatprep.mubr.f32.mxu0 0.0
          %8156 = vmatmul.mubr.f32.gmra.mrb[0].mxu0 %v8032
          %v8157 = vpop.f32.mrb[0].mxu0
          %v8158 = vadd.f32 0.0, %v8157
          %v8159 = vpop.f32.mrb[0].mxu0
          %8160 = vmatprep.mubr.f32.mxu0 0.0
          %8161 = vmatmul.mubr.f32.gmra.mrb[0].mxu0 %v8033
          %v8162 = vpop.f32.mrb[0].mxu0
          %v8163 = vadd.f32 0.0, %v8162
          %v8164 = vpop.f32.mrb[0].mxu0
          %8165 = vmatprep.mubr.f32.mxu0 0.0
          %8166 = vmatmul.mubr.f32.gmra.mrb[0].mxu0 %v8034
          %v8167 = vpop.f32.mrb[0].mxu0
          %v8168 = vadd.f32 0.0, %v8167
          %v8169 = vpop.f32.mrb[0].mxu0
          %8170 = vmatprep.mubr.f32.mxu0 0.0
          %8171 = vmatmul.mubr.f32.gmra.mrb[0].mxu0 %v8035
          %v8172 = vpop.f32.mrb[0].mxu0
          %v8173 = vadd.f32 0.0, %v8172
          %v8174 = vpop.f32.mrb[0].mxu0
          %8175 = vmatprep.mubr.f32.mxu0 0.0
          %8176 = vmatmul.mubr.f32.gmra.mrb[0].mxu0 %v8036
          %v8177 = vpop.f32.mrb[0].mxu0
          %v8178 = vadd.f32 0.0, %v8177
          %v8179 = vpop.f32.mrb[0].mxu0
          %8180 = vmatprep.mubr.f32.mxu0 0.0
          %8181 = vmatmul.mubr.f32.gmra.mrb[0].mxu0 %v8037
          %v8182 = vpop.f32.mrb[0].mxu0
          %v8183 = vadd.f32 0.0, %v8182
          %v8184 = vpop.f32.mrb[0].mxu0
          %8185 = vmatprep.mubr.f32.mxu0 0.0
          %8186 = vmatmul.mubr.f32.gmra.mrb[0].mxu0 %v8038
          %v8187 = vpop.f32.mrb[0].mxu0
          %v8188 = vadd.f32 0.0, %v8187
          %v8189 = vpop.f32.mrb[0].mxu0
          %8190 = vmatprep.mubr.f32.mxu0 0.0
          %8191 = vmatmul.mubr.f32.gmra.mrb[0].mxu0 %v8039
          %v8192 = vpop.f32.mrb[0].mxu0
          %v8193 = vadd.f32 0.0, %v8192
          %v8194 = vpop.f32.mrb[0].mxu0
          %8195 = vmatprep.mubr.f32.mxu0 0.0
          %8196 = vmatmul.mubr.f32.gmra.mrb[0].mxu0 %v8040
          %v8197 = vpop.f32.mrb[0].mxu0
          %v8198 = vadd.f32 0.0, %v8197
          %v8199 = vpop.f32.mrb[0].mxu0
          %8200 = vdwg.mxu0
          %8201 = vmatprep.subr.mxu0 0.0
          %8202 = vmatpush1.msra.mxu0 %v2687
          %8203 = vmatprep.subr.mxu0 0.0
          %8204 = vmatpush1.msra.mxu0 %v2688
          %8205 = vmatprep.subr.mxu0 0.0
          %8206 = vmatpush1.msra.mxu0 %v2689
          %8207 = vmatprep.subr.mxu0 0.0
          %8208 = vmatpush1.msra.mxu0 %v2690
          %8209 = vmatprep.subr.mxu0 0.0
          %8210 = vmatpush1.msra.mxu0 %v2691
          %8211 = vmatprep.subr.mxu0 0.0
          %8212 = vmatpush1.msra.mxu0 %v2692
          %8213 = vmatprep.subr.mxu0 0.0
          %8214 = vmatpush1.msra.mxu0 %v2693
          %8215 = vmatprep.subr.mxu0 0.0
          %8216 = vmatpush1.msra.mxu0 %v2694
          %8217 = vmatprep.subr.mxu0 0.0
          %8218 = vmatpush1.msra.mxu0 %v2695
          %8219 = vmatprep.subr.mxu0 0.0
          %8220 = vmatpush1.msra.mxu0 %v2696
          %8221 = vmatprep.subr.mxu0 0.0
          %8222 = vmatpush1.msra.mxu0 %v2697
          %8223 = vmatprep.subr.mxu0 0.0
          %8224 = vmatpush1.msra.mxu0 %v2698
          %8225 = vmatprep.subr.mxu0 0.0
          %8226 = vmatpush1.msra.mxu0 %v2699
          %8227 = vmatprep.subr.mxu0 0.0
          %8228 = vmatpush1.msra.mxu0 %v2700
          %8229 = vmatprep.subr.mxu0 0.0
          %8230 = vmatpush1.msra.mxu0 %v2701
          %8231 = vmatprep.subr.mxu0 0.0
          %8232 = vmatpush1.msra.mxu0 %v2702
          %8233 = vmatprep.subr.mxu0 0.0
          %8234 = vmatpush1.msra.mxu0 0.0
          %8235 = vmatprep.subr.mxu0 0.0
          %8236 = vmatpush1.msra.mxu0 0.0
          %8237 = vmatprep.subr.mxu0 0.0
          %8238 = vmatpush1.msra.mxu0 0.0
          %8239 = vmatprep.subr.mxu0 0.0
          %8240 = vmatpush1.msra.mxu0 0.0
          %8241 = vmatprep.subr.mxu0 0.0
          %8242 = vmatpush1.msra.mxu0 0.0
          %8243 = vmatprep.subr.mxu0 0.0
          %8244 = vmatpush1.msra.mxu0 0.0
          %8245 = vmatprep.subr.mxu0 0.0
          %8246 = vmatpush1.msra.mxu0 0.0
          %8247 = vmatprep.subr.mxu0 0.0
          %8248 = vmatpush1.msra.mxu0 0.0
          %8249 = vmatprep.subr.mxu0 0.0
          %8250 = vmatpush1.msra.mxu0 0.0
          %8251 = vmatprep.subr.mxu0 0.0
          %8252 = vmatpush1.msra.mxu0 0.0
          %8253 = vmatprep.subr.mxu0 0.0
          %8254 = vmatpush1.msra.mxu0 0.0
          %8255 = vmatprep.subr.mxu0 0.0
          %8256 = vmatpush1.msra.mxu0 0.0
          %8257 = vmatprep.subr.mxu0 0.0
          %8258 = vmatpush1.msra.mxu0 0.0
          %8259 = vmatprep.subr.mxu0 0.0
          %8260 = vmatpush1.msra.mxu0 0.0
          %8261 = vmatprep.subr.mxu0 0.0
          %8262 = vmatpush1.msra.mxu0 0.0
          %8263 = vmatprep.subr.mxu0 0.0
          %8264 = vmatpush1.msra.mxu0 0.0
          %8265 = vmatprep.mubr.f32.mxu0 0.0
          %8266 = vmatmul.mubr.f32.gmra.mrb[0].mxu0 %v8003
          %v8267 = vpop.f32.mrb[0].mxu0
          %v8268 = vadd.f32 %v8108, %v8267
          %v8269 = vpop.f32.mrb[0].mxu0
          %8270 = vmatprep.mubr.f32.mxu0 0.0
          %8271 = vmatmul.mubr.f32.gmra.mrb[0].mxu0 %v8004
          %v8272 = vpop.f32.mrb[0].mxu0
          %v8273 = vadd.f32 %v8113, %v8272
          %v8274 = vpop.f32.mrb[0].mxu0
          %8275 = vmatprep.mubr.f32.mxu0 0.0
          %8276 = vmatmul.mubr.f32.gmra.mrb[0].mxu0 %v8005
          %v8277 = vpop.f32.mrb[0].mxu0
          %v8278 = vadd.f32 %v8118, %v8277
          %v8279 = vpop.f32.mrb[0].mxu0
          %8280 = vmatprep.mubr.f32.mxu0 0.0
          %8281 = vmatmul.mubr.f32.gmra.mrb[0].mxu0 %v8006
          %v8282 = vpop.f32.mrb[0].mxu0
          %v8283 = vadd.f32 %v8123, %v8282
          %v8284 = vpop.f32.mrb[0].mxu0
          %8285 = vmatprep.mubr.f32.mxu0 0.0
          %8286 = vmatmul.mubr.f32.gmra.mrb[0].mxu0 %v8007
          %v8287 = vpop.f32.mrb[0].mxu0
          %v8288 = vadd.f32 %v8128, %v8287
          %v8289 = vpop.f32.mrb[0].mxu0
          %8290 = vmatprep.mubr.f32.mxu0 0.0
          %8291 = vmatmul.mubr.f32.gmra.mrb[0].mxu0 %v8008
          %v8292 = vpop.f32.mrb[0].mxu0
          %v8293 = vadd.f32 %v8133, %v8292
          %v8294 = vpop.f32.mrb[0].mxu0
          %8295 = vmatprep.mubr.f32.mxu0 0.0
          %8296 = vmatmul.mubr.f32.gmra.mrb[0].mxu0 %v8009
          %v8297 = vpop.f32.mrb[0].mxu0
          %v8298 = vadd.f32 %v8138, %v8297
          %v8299 = vpop.f32.mrb[0].mxu0
          %8300 = vmatprep.mubr.f32.mxu0 0.0
          %8301 = vmatmul.mubr.f32.gmra.mrb[0].mxu0 %v8010
          %v8302 = vpop.f32.mrb[0].mxu0
          %v8303 = vadd.f32 %v8143, %v8302
          %v8304 = vpop.f32.mrb[0].mxu0
          %8305 = vmatprep.mubr.f32.mxu0 0.0
          %8306 = vmatmul.mubr.f32.gmra.mrb[0].mxu0 %v8011
          %v8307 = vpop.f32.mrb[0].mxu0
          %v8308 = vadd.f32 %v8148, %v8307
          %v8309 = vpop.f32.mrb[0].mxu0
          %8310 = vmatprep.mubr.f32.mxu0 0.0
          %8311 = vmatmul.mubr.f32.gmra.mrb[0].mxu0 %v8012
          %v8312 = vpop.f32.mrb[0].mxu0
          %v8313 = vadd.f32 %v8153, %v8312
          %v8314 = vpop.f32.mrb[0].mxu0
          %8315 = vmatprep.mubr.f32.mxu0 0.0
          %8316 = vmatmul.mubr.f32.gmra.mrb[0].mxu0 %v8013
          %v8317 = vpop.f32.mrb[0].mxu0
          %v8318 = vadd.f32 %v8158, %v8317
          %v8319 = vpop.f32.mrb[0].mxu0
          %8320 = vmatprep.mubr.f32.mxu0 0.0
          %8321 = vmatmul.mubr.f32.gmra.mrb[0].mxu0 %v8014
          %v8322 = vpop.f32.mrb[0].mxu0
          %v8323 = vadd.f32 %v8163, %v8322
          %v8324 = vpop.f32.mrb[0].mxu0
          %8325 = vmatprep.mubr.f32.mxu0 0.0
          %8326 = vmatmul.mubr.f32.gmra.mrb[0].mxu0 %v8015
          %v8327 = vpop.f32.mrb[0].mxu0
          %v8328 = vadd.f32 %v8168, %v8327
          %v8329 = vpop.f32.mrb[0].mxu0
          %8330 = vmatprep.mubr.f32.mxu0 0.0
          %8331 = vmatmul.mubr.f32.gmra.mrb[0].mxu0 %v8016
          %v8332 = vpop.f32.mrb[0].mxu0
          %v8333 = vadd.f32 %v8173, %v8332
          %v8334 = vpop.f32.mrb[0].mxu0
          %8335 = vmatprep.mubr.f32.mxu0 0.0
          %8336 = vmatmul.mubr.f32.gmra.mrb[0].mxu0 %v8017
          %v8337 = vpop.f32.mrb[0].mxu0
          %v8338 = vadd.f32 %v8178, %v8337
          %v8339 = vpop.f32.mrb[0].mxu0
          %8340 = vmatprep.mubr.f32.mxu0 0.0
          %8341 = vmatmul.mubr.f32.gmra.mrb[0].mxu0 %v8018
          %v8342 = vpop.f32.mrb[0].mxu0
          %v8343 = vadd.f32 %v8183, %v8342
          %v8344 = vpop.f32.mrb[0].mxu0
          %8345 = vmatprep.mubr.f32.mxu0 0.0
          %8346 = vmatmul.mubr.f32.gmra.mrb[0].mxu0 %v8019
          %v8347 = vpop.f32.mrb[0].mxu0
          %v8348 = vadd.f32 %v8188, %v8347
          %v8349 = vpop.f32.mrb[0].mxu0
          %8350 = vmatprep.mubr.f32.mxu0 0.0
          %8351 = vmatmul.mubr.f32.gmra.mrb[0].mxu0 %v8020
          %v8352 = vpop.f32.mrb[0].mxu0
          %v8353 = vadd.f32 %v8193, %v8352
          %v8354 = vpop.f32.mrb[0].mxu0
          %8355 = vmatprep.mubr.f32.mxu0 0.0
          %8356 = vmatmul.mubr.f32.gmra.mrb[0].mxu0 %v8021
          %v8357 = vpop.f32.mrb[0].mxu0
          %v8358 = vadd.f32 %v8198, %v8357
          %v8359 = vpop.f32.mrb[0].mxu0
          %8360 = vdwg.mxu0
          %v8361 = vadd.f32 %v8268, %v4788
          %v8362 = vadd.f32 %v8273, %v4788
          %v8363 = vadd.f32 %v8278, %v4788
          %v8364 = vadd.f32 %v8283, %v4788
          %v8365 = vadd.f32 %v8288, %v4788
          %v8366 = vadd.f32 %v8293, %v4788
          %v8367 = vadd.f32 %v8298, %v4788
          %v8368 = vadd.f32 %v8303, %v4788
          %v8369 = vadd.f32 %v8308, %v4788
          %v8370 = vadd.f32 %v8313, %v4788
          %v8371 = vadd.f32 %v8318, %v4788
          %v8372 = vadd.f32 %v8323, %v4788
          %v8373 = vadd.f32 %v8328, %v4788
          %v8374 = vadd.f32 %v8333, %v4788
          %v8375 = vadd.f32 %v8338, %v4788
          %v8376 = vadd.f32 %v8343, %v4788
          %v8377 = vadd.f32 %v8348, %v4788
          %v8378 = vadd.f32 %v8353, %v4788
          %v8379 = vadd.f32 %v8358, %v4788
          %v8380 = vmax.f32 %v8361, 0.0
          %v8381 = vmax.f32 %v8362, 0.0
          %v8382 = vmax.f32 %v8363, 0.0
          %v8383 = vmax.f32 %v8364, 0.0
          %v8384 = vmax.f32 %v8365, 0.0
          %v8385 = vmax.f32 %v8366, 0.0
          %v8386 = vmax.f32 %v8367, 0.0
          %v8387 = vmax.f32 %v8368, 0.0
          %v8388 = vmax.f32 %v8369, 0.0
          %v8389 = vmax.f32 %v8370, 0.0
          %v8390 = vmax.f32 %v8371, 0.0
          %v8391 = vmax.f32 %v8372, 0.0
          %v8392 = vmax.f32 %v8373, 0.0
          %v8393 = vmax.f32 %v8374, 0.0
          %v8394 = vmax.f32 %v8375, 0.0
          %v8395 = vmax.f32 %v8376, 0.0
          %v8396 = vmax.f32 %v8377, 0.0
          %v8397 = vmax.f32 %v8378, 0.0
          %v8398 = vmax.f32 %v8379, 0.0
          %8399 = vst [vmem:[#allocation5] sm:$0xff] %v8380
          %8400 = vst [vmem:[#allocation5 + $0x8] sm:$0xff] %v8381
          %8401 = vst [vmem:[#allocation5 + $0x10] sm:$0xff] %v8382
          %8402 = vst [vmem:[#allocation5 + $0x18] sm:$0xff] %v8383
          %8403 = vst [vmem:[#allocation5 + $0x20] sm:$0xff] %v8384
          %8404 = vst [vmem:[#allocation5 + $0x28] sm:$0xff] %v8385
          %8405 = vst [vmem:[#allocation5 + $0x30] sm:$0xff] %v8386
          %8406 = vst [vmem:[#allocation5 + $0x38] sm:$0xff] %v8387
          %8407 = vst [vmem:[#allocation5 + $0x40] sm:$0xff] %v8388
          %8408 = vst [vmem:[#allocation5 + $0x48] sm:$0xff] %v8389
          %8409 = vst [vmem:[#allocation5 + $0x50] sm:$0xff] %v8390
          %8410 = vst [vmem:[#allocation5 + $0x58] sm:$0xff] %v8391
          %8411 = vst [vmem:[#allocation5 + $0x60] sm:$0xff] %v8392
          %8412 = vst [vmem:[#allocation5 + $0x68] sm:$0xff] %v8393
          %8413 = vst [vmem:[#allocation5 + $0x70] sm:$0xff] %v8394
          %8414 = vst [vmem:[#allocation5 + $0x78] sm:$0xff] %v8395
          %8415 = vst [vmem:[#allocation5 + $0x80] sm:$0xff] %v8396
          %8416 = vst [vmem:[#allocation5 + $0x88] sm:$0xff] %v8397
          %8417 = vst [vmem:[#allocation5 + $0x90] sm:$0x3f] %v8398
          %v8418 = vld [vmem:[#allocation5] ss:$2 sm:$0xff]
          %v8419 = vld [vmem:[%s4255] ss:$2 sm:$0xff]
          %v8420 = vld [vmem:[%s4257] ss:$2 sm:$0xff]
          %v8421 = vld [vmem:[%s4259] ss:$2 sm:$0xff]
          %v8422 = vld [vmem:[%s4261] ss:$2 sm:$0xff]
          %v8423 = vld [vmem:[%s4263] ss:$2 sm:$0xff]
          %v8424 = vld [vmem:[%s4265] ss:$2 sm:$0xff]
          %v8425 = vld [vmem:[%s4267] ss:$2 sm:$0xff]
          %v8426 = vld [vmem:[%s4269] ss:$2 sm:$0xff]
          %v8427 = vld [vmem:[%s4271] ss:$2 sm:$0x7]
          %v8428 = vld [vmem:[%s4291] ss:$2 sm:$0xff]
          %v8429 = vld [vmem:[%s4293] ss:$2 sm:$0xff]
          %v8430 = vld [vmem:[%s4295] ss:$2 sm:$0xff]
          %v8431 = vld [vmem:[%s4297] ss:$2 sm:$0xff]
          %v8432 = vld [vmem:[%s4299] ss:$2 sm:$0xff]
          %v8433 = vld [vmem:[%s4301] ss:$2 sm:$0xff]
          %v8434 = vld [vmem:[%s4303] ss:$2 sm:$0xff]
          %v8435 = vld [vmem:[%s4305] ss:$2 sm:$0xff]
          %v8436 = vld [vmem:[%s4307] ss:$2 sm:$0xff]
          %v8437 = vld [vmem:[%s4309] ss:$2 sm:$0x7]
          %v8438 = vmax.f32 %v8418, %v8428
          %v8439 = vmax.f32 %v8419, %v8429
          %v8440 = vmax.f32 %v8420, %v8430
          %v8441 = vmax.f32 %v8421, %v8431
          %v8442 = vmax.f32 %v8422, %v8432
          %v8443 = vmax.f32 %v8423, %v8433
          %v8444 = vmax.f32 %v8424, %v8434
          %v8445 = vmax.f32 %v8425, %v8435
          %v8446 = vmax.f32 %v8426, %v8436
          %v8447 = vmax.f32 %v8427, %v8437
          %v8448 = vmul.f32 %v8438, %v6503
          %v8449 = vmul.f32 %v8439, %v6504
          %v8450 = vmul.f32 %v8440, %v6505
          %v8451 = vmul.f32 %v8441, %v6506
          %v8452 = vmul.f32 %v8442, %v6507
          %v8453 = vmul.f32 %v8443, %v6508
          %v8454 = vmul.f32 %v8444, %v6509
          %v8455 = vmul.f32 %v8445, %v6510
          %v8456 = vmul.f32 %v8446, %v6511
          %v8457 = vmul.f32 %v8447, %v6512
          %v8458 = vadd.f32 %v8448, %v8449
          %v8459 = vadd.f32 %v8458, %v8450
          %v8460 = vadd.f32 %v8459, %v8451
          %v8461 = vadd.f32 %v8460, %v8452
          %v8462 = vadd.f32 %v8461, %v8453
          %v8463 = vadd.f32 %v8462, %v8454
          %v8464 = vadd.f32 %v8463, %v8455
          %v8465 = vadd.f32 %v8464, %v8456
          %v8466 = vsel %vm4895, %v8457, 0.0
          %v8467 = vadd.f32 %v8465, %v8466
          %v8468 = vrot.slane %v8467, 4
          %v8469 = vadd.f32 %v8467, %v8468
          %v8470 = vrot.slane %v8469, 2
          %v8471 = vadd.f32 %v8469, %v8470
          %v8472 = vrot.slane %v8471, 1
          %v8473 = vadd.f32 %v8471, %v8472
          %8474 = vadd.xlane.f32.xlu0 %v8473
          %v8475 = vpop.xlane.xlu0 %8474
          %v8476 = vadd.f32 %v8475, %v6513
          %8477 = vst.msk [vmem:[#allocation4 + $0xc9] sm:$0x1] %vm2821, 0.0
          %v8478 = vld [vmem:[#allocation24] sm:$0xff]
          %v8479 = vld [vmem:[#allocation24 + $0x8] sm:$0xff]
          %v8480 = vld [vmem:[#allocation24 + $0x10] sm:$0xff]
          %v8481 = vld [vmem:[#allocation24 + $0x18] sm:$0xff]
          %v8482 = vld [vmem:[#allocation24 + $0x20] sm:$0xff]
          %v8483 = vld [vmem:[#allocation24 + $0x28] sm:$0xff]
          %v8484 = vld [vmem:[#allocation24 + $0x30] sm:$0x3]
          %v8485 = vld [vmem:[#allocation9] sm:$0x1]
          %v8486 = vld [vmem:[#allocation4] sm:$0xff]
          %v8487 = vld [vmem:[#allocation4 + $0x8] sm:$0xff]
          %v8488 = vld [vmem:[#allocation4 + $0x10] sm:$0xff]
          %v8489 = vld [vmem:[#allocation4 + $0x18] sm:$0xff]
          %v8490 = vld [vmem:[#allocation4 + $0x20] sm:$0xff]
          %v8491 = vld [vmem:[#allocation4 + $0x28] sm:$0xff]
          %v8492 = vld [vmem:[#allocation4 + $0x30] sm:$0xff]
          %v8493 = vld [vmem:[#allocation4 + $0x38] sm:$0xff]
          %v8494 = vld [vmem:[#allocation4 + $0x40] sm:$0xff]
          %v8495 = vld [vmem:[#allocation4 + $0x48] sm:$0xff]
          %v8496 = vld [vmem:[#allocation4 + $0x50] sm:$0xff]
          %v8497 = vld [vmem:[#allocation4 + $0x58] sm:$0xff]
          %v8498 = vld [vmem:[#allocation4 + $0x60] sm:$0xff]
          %v8499 = vld [vmem:[#allocation4 + $0x68] sm:$0xff]
          %v8500 = vld [vmem:[#allocation4 + $0x70] sm:$0xff]
          %v8501 = vld [vmem:[#allocation4 + $0x78] sm:$0xff]
          %v8502 = vld [vmem:[#allocation4 + $0x80] sm:$0xff]
          %v8503 = vld [vmem:[#allocation4 + $0x88] sm:$0xff]
          %v8504 = vld [vmem:[#allocation4 + $0x90] sm:$0xff]
          %v8505 = vld [vmem:[#allocation4 + $0x98] sm:$0xff]
          %v8506 = vld [vmem:[#allocation4 + $0xa0] sm:$0xff]
          %v8507 = vld [vmem:[#allocation4 + $0xa8] sm:$0xff]
          %v8508 = vld [vmem:[#allocation4 + $0xb0] sm:$0xff]
          %v8509 = vld [vmem:[#allocation4 + $0xb8] sm:$0xff]
          %v8510 = vld [vmem:[#allocation4 + $0xc0] sm:$0xff]
          %v8511 = vld [vmem:[#allocation4 + $0x1] sm:$0xff]
          %v8512 = vld [vmem:[#allocation4 + $0x9] sm:$0xff]
          %v8513 = vld [vmem:[#allocation4 + $0x11] sm:$0xff]
          %v8514 = vld [vmem:[#allocation4 + $0x19] sm:$0xff]
          %v8515 = vld [vmem:[#allocation4 + $0x21] sm:$0xff]
          %v8516 = vld [vmem:[#allocation4 + $0x29] sm:$0xff]
          %v8517 = vld [vmem:[#allocation4 + $0x31] sm:$0xff]
          %v8518 = vld [vmem:[#allocation4 + $0x39] sm:$0xff]
          %v8519 = vld [vmem:[#allocation4 + $0x41] sm:$0xff]
          %v8520 = vld [vmem:[#allocation4 + $0x49] sm:$0xff]
          %v8521 = vld [vmem:[#allocation4 + $0x51] sm:$0xff]
          %v8522 = vld [vmem:[#allocation4 + $0x59] sm:$0xff]
          %v8523 = vld [vmem:[#allocation4 + $0x61] sm:$0xff]
          %v8524 = vld [vmem:[#allocation4 + $0x69] sm:$0xff]
          %v8525 = vld [vmem:[#allocation4 + $0x71] sm:$0xff]
          %v8526 = vld [vmem:[#allocation4 + $0x79] sm:$0xff]
          %v8527 = vld [vmem:[#allocation4 + $0x81] sm:$0xff]
          %v8528 = vld [vmem:[#allocation4 + $0x89] sm:$0xff]
          %v8529 = vld [vmem:[#allocation4 + $0x91] sm:$0xff]
          %v8530 = vld [vmem:[#allocation4 + $0x99] sm:$0xff]
          %v8531 = vld [vmem:[#allocation4 + $0xa1] sm:$0xff]
          %v8532 = vld [vmem:[#allocation4 + $0xa9] sm:$0xff]
          %v8533 = vld [vmem:[#allocation4 + $0xb1] sm:$0xff]
          %v8534 = vld [vmem:[#allocation4 + $0xb9] sm:$0xff]
          %v8535 = vld [vmem:[#allocation4 + $0xc1] sm:$0xff]
          %v8537 = vsel %vm2823, %v8511, 0
          %v8540 = vsel %vm2823, %v8512, 0
          %v8543 = vsel %vm2823, %v8513, 0
          %v8546 = vsel %vm2823, %v8514, 0
          %v8549 = vsel %vm2823, %v8515, 0
          %v8552 = vsel %vm2823, %v8516, 0
          %v8555 = vsel %vm2823, %v8517, 0
          %v8558 = vsel %vm2823, %v8518, 0
          %v8561 = vsel %vm2823, %v8519, 0
          %v8564 = vsel %vm2823, %v8520, 0
          %v8567 = vsel %vm2823, %v8521, 0
          %v8570 = vsel %vm2823, %v8522, 0
          %v8573 = vsel %vm2823, %v8523, 0
          %v8576 = vsel %vm2823, %v8524, 0
          %v8579 = vsel %vm2823, %v8525, 0
          %v8582 = vsel %vm2823, %v8526, 0
          %v8585 = vsel %vm2823, %v8527, 0
          %v8588 = vsel %vm2823, %v8528, 0
          %v8591 = vsel %vm2823, %v8529, 0
          %v8594 = vsel %vm2823, %v8530, 0
          %v8597 = vsel %vm2823, %v8531, 0
          %v8600 = vsel %vm2823, %v8532, 0
          %v8603 = vsel %vm2823, %v8533, 0
          %v8606 = vsel %vm2823, %v8534, 0
          %v8609 = vsel %vm2823, %v8535, 0
          %8611 = vmatprep.subr.mxu0 0.0
          %8612 = vmatpush1.msra.mxu0 %v2684
          %8613 = vmatprep.subr.mxu0 0.0
          %8614 = vmatpush1.msra.mxu0 0.0
          %8615 = vmatprep.subr.mxu0 0.0
          %8616 = vmatpush1.msra.mxu0 0.0
          %8617 = vmatprep.subr.mxu0 0.0
          %8618 = vmatpush1.msra.mxu0 0.0
          %8619 = vmatprep.subr.mxu0 0.0
          %8620 = vmatpush1.msra.mxu0 0.0
          %8621 = vmatprep.subr.mxu0 0.0
          %8622 = vmatpush1.msra.mxu0 0.0
          %8623 = vmatprep.subr.mxu0 0.0
          %8624 = vmatpush1.msra.mxu0 0.0
          %8625 = vmatprep.subr.mxu0 0.0
          %8626 = vmatpush1.msra.mxu0 0.0
          %8627 = vmatprep.subr.mxu0 0.0
          %8628 = vmatpush1.msra.mxu0 0.0
          %8629 = vmatprep.subr.mxu0 0.0
          %8630 = vmatpush1.msra.mxu0 0.0
          %8631 = vmatprep.subr.mxu0 0.0
          %8632 = vmatpush1.msra.mxu0 0.0
          %8633 = vmatprep.subr.mxu0 0.0
          %8634 = vmatpush1.msra.mxu0 0.0
          %8635 = vmatprep.subr.mxu0 0.0
          %8636 = vmatpush1.msra.mxu0 0.0
          %8637 = vmatprep.subr.mxu0 0.0
          %8638 = vmatpush1.msra.mxu0 0.0
          %8639 = vmatprep.subr.mxu0 0.0
          %8640 = vmatpush1.msra.mxu0 0.0
          %8641 = vmatprep.subr.mxu0 0.0
          %8642 = vmatpush1.msra.mxu0 0.0
          %8643 = vmatprep.subr.mxu0 0.0
          %8644 = vmatpush1.msra.mxu0 0.0
          %8645 = vmatprep.subr.mxu0 0.0
          %8646 = vmatpush1.msra.mxu0 0.0
          %8647 = vmatprep.subr.mxu0 0.0
          %8648 = vmatpush1.msra.mxu0 0.0
          %8649 = vmatprep.subr.mxu0 0.0
          %8650 = vmatpush1.msra.mxu0 0.0
          %8651 = vmatprep.subr.mxu0 0.0
          %8652 = vmatpush1.msra.mxu0 0.0
          %8653 = vmatprep.subr.mxu0 0.0
          %8654 = vmatpush1.msra.mxu0 0.0
          %8655 = vmatprep.subr.mxu0 0.0
          %8656 = vmatpush1.msra.mxu0 0.0
          %8657 = vmatprep.subr.mxu0 0.0
          %8658 = vmatpush1.msra.mxu0 0.0
          %8659 = vmatprep.subr.mxu0 0.0
          %8660 = vmatpush1.msra.mxu0 0.0
          %8661 = vmatprep.subr.mxu0 0.0
          %8662 = vmatpush1.msra.mxu0 0.0
          %8663 = vmatprep.subr.mxu0 0.0
          %8664 = vmatpush1.msra.mxu0 0.0
          %8665 = vmatprep.subr.mxu0 0.0
          %8666 = vmatpush1.msra.mxu0 0.0
          %8667 = vmatprep.subr.mxu0 0.0
          %8668 = vmatpush1.msra.mxu0 0.0
          %8669 = vmatprep.subr.mxu0 0.0
          %8670 = vmatpush1.msra.mxu0 0.0
          %8671 = vmatprep.subr.mxu0 0.0
          %8672 = vmatpush1.msra.mxu0 0.0
          %8673 = vmatprep.subr.mxu0 0.0
          %8674 = vmatpush1.msra.mxu0 0.0
          %8675 = vmatprep.mubr.f32.mxu0 0.0
          %8676 = vmatmul.mubr.f32.gmra.mrb[0].mxu0 %v8537
          %v8677 = vpop.f32.mrb[0].mxu0
          %v8678 = vadd.f32 0.0, %v8677
          %v8679 = vpop.f32.mrb[0].mxu0
          %8680 = vmatprep.mubr.f32.mxu0 0.0
          %8681 = vmatmul.mubr.f32.gmra.mrb[0].mxu0 %v8540
          %v8682 = vpop.f32.mrb[0].mxu0
          %v8683 = vadd.f32 0.0, %v8682
          %v8684 = vpop.f32.mrb[0].mxu0
          %8685 = vmatprep.mubr.f32.mxu0 0.0
          %8686 = vmatmul.mubr.f32.gmra.mrb[0].mxu0 %v8543
          %v8687 = vpop.f32.mrb[0].mxu0
          %v8688 = vadd.f32 0.0, %v8687
          %v8689 = vpop.f32.mrb[0].mxu0
          %8690 = vmatprep.mubr.f32.mxu0 0.0
          %8691 = vmatmul.mubr.f32.gmra.mrb[0].mxu0 %v8546
          %v8692 = vpop.f32.mrb[0].mxu0
          %v8693 = vadd.f32 0.0, %v8692
          %v8694 = vpop.f32.mrb[0].mxu0
          %8695 = vmatprep.mubr.f32.mxu0 0.0
          %8696 = vmatmul.mubr.f32.gmra.mrb[0].mxu0 %v8549
          %v8697 = vpop.f32.mrb[0].mxu0
          %v8698 = vadd.f32 0.0, %v8697
          %v8699 = vpop.f32.mrb[0].mxu0
          %8700 = vmatprep.mubr.f32.mxu0 0.0
          %8701 = vmatmul.mubr.f32.gmra.mrb[0].mxu0 %v8552
          %v8702 = vpop.f32.mrb[0].mxu0
          %v8703 = vadd.f32 0.0, %v8702
          %v8704 = vpop.f32.mrb[0].mxu0
          %8705 = vmatprep.mubr.f32.mxu0 0.0
          %8706 = vmatmul.mubr.f32.gmra.mrb[0].mxu0 %v8555
          %v8707 = vpop.f32.mrb[0].mxu0
          %v8708 = vadd.f32 0.0, %v8707
          %v8709 = vpop.f32.mrb[0].mxu0
          %8710 = vmatprep.mubr.f32.mxu0 0.0
          %8711 = vmatmul.mubr.f32.gmra.mrb[0].mxu0 %v8558
          %v8712 = vpop.f32.mrb[0].mxu0
          %v8713 = vadd.f32 0.0, %v8712
          %v8714 = vpop.f32.mrb[0].mxu0
          %8715 = vmatprep.mubr.f32.mxu0 0.0
          %8716 = vmatmul.mubr.f32.gmra.mrb[0].mxu0 %v8561
          %v8717 = vpop.f32.mrb[0].mxu0
          %v8718 = vadd.f32 0.0, %v8717
          %v8719 = vpop.f32.mrb[0].mxu0
          %8720 = vmatprep.mubr.f32.mxu0 0.0
          %8721 = vmatmul.mubr.f32.gmra.mrb[0].mxu0 %v8564
          %v8722 = vpop.f32.mrb[0].mxu0
          %v8723 = vadd.f32 0.0, %v8722
          %v8724 = vpop.f32.mrb[0].mxu0
          %8725 = vmatprep.mubr.f32.mxu0 0.0
          %8726 = vmatmul.mubr.f32.gmra.mrb[0].mxu0 %v8567
          %v8727 = vpop.f32.mrb[0].mxu0
          %v8728 = vadd.f32 0.0, %v8727
          %v8729 = vpop.f32.mrb[0].mxu0
          %8730 = vmatprep.mubr.f32.mxu0 0.0
          %8731 = vmatmul.mubr.f32.gmra.mrb[0].mxu0 %v8570
          %v8732 = vpop.f32.mrb[0].mxu0
          %v8733 = vadd.f32 0.0, %v8732
          %v8734 = vpop.f32.mrb[0].mxu0
          %8735 = vmatprep.mubr.f32.mxu0 0.0
          %8736 = vmatmul.mubr.f32.gmra.mrb[0].mxu0 %v8573
          %v8737 = vpop.f32.mrb[0].mxu0
          %v8738 = vadd.f32 0.0, %v8737
          %v8739 = vpop.f32.mrb[0].mxu0
          %8740 = vmatprep.mubr.f32.mxu0 0.0
          %8741 = vmatmul.mubr.f32.gmra.mrb[0].mxu0 %v8576
          %v8742 = vpop.f32.mrb[0].mxu0
          %v8743 = vadd.f32 0.0, %v8742
          %v8744 = vpop.f32.mrb[0].mxu0
          %8745 = vmatprep.mubr.f32.mxu0 0.0
          %8746 = vmatmul.mubr.f32.gmra.mrb[0].mxu0 %v8579
          %v8747 = vpop.f32.mrb[0].mxu0
          %v8748 = vadd.f32 0.0, %v8747
          %v8749 = vpop.f32.mrb[0].mxu0
          %8750 = vmatprep.mubr.f32.mxu0 0.0
          %8751 = vmatmul.mubr.f32.gmra.mrb[0].mxu0 %v8582
          %v8752 = vpop.f32.mrb[0].mxu0
          %v8753 = vadd.f32 0.0, %v8752
          %v8754 = vpop.f32.mrb[0].mxu0
          %8755 = vmatprep.mubr.f32.mxu0 0.0
          %8756 = vmatmul.mubr.f32.gmra.mrb[0].mxu0 %v8585
          %v8757 = vpop.f32.mrb[0].mxu0
          %v8758 = vadd.f32 0.0, %v8757
          %v8759 = vpop.f32.mrb[0].mxu0
          %8760 = vmatprep.mubr.f32.mxu0 0.0
          %8761 = vmatmul.mubr.f32.gmra.mrb[0].mxu0 %v8588
          %v8762 = vpop.f32.mrb[0].mxu0
          %v8763 = vadd.f32 0.0, %v8762
          %v8764 = vpop.f32.mrb[0].mxu0
          %8765 = vmatprep.mubr.f32.mxu0 0.0
          %8766 = vmatmul.mubr.f32.gmra.mrb[0].mxu0 %v8591
          %v8767 = vpop.f32.mrb[0].mxu0
          %v8768 = vadd.f32 0.0, %v8767
          %v8769 = vpop.f32.mrb[0].mxu0
          %8770 = vmatprep.mubr.f32.mxu0 0.0
          %8771 = vmatmul.mubr.f32.gmra.mrb[0].mxu0 %v8594
          %v8772 = vpop.f32.mrb[0].mxu0
          %v8773 = vadd.f32 0.0, %v8772
          %v8774 = vpop.f32.mrb[0].mxu0
          %8775 = vmatprep.mubr.f32.mxu0 0.0
          %8776 = vmatmul.mubr.f32.gmra.mrb[0].mxu0 %v8597
          %v8777 = vpop.f32.mrb[0].mxu0
          %v8778 = vadd.f32 0.0, %v8777
          %v8779 = vpop.f32.mrb[0].mxu0
          %8780 = vmatprep.mubr.f32.mxu0 0.0
          %8781 = vmatmul.mubr.f32.gmra.mrb[0].mxu0 %v8600
          %v8782 = vpop.f32.mrb[0].mxu0
          %v8783 = vadd.f32 0.0, %v8782
          %v8784 = vpop.f32.mrb[0].mxu0
          %8785 = vmatprep.mubr.f32.mxu0 0.0
          %8786 = vmatmul.mubr.f32.gmra.mrb[0].mxu0 %v8603
          %v8787 = vpop.f32.mrb[0].mxu0
          %v8788 = vadd.f32 0.0, %v8787
          %v8789 = vpop.f32.mrb[0].mxu0
          %8790 = vmatprep.mubr.f32.mxu0 0.0
          %8791 = vmatmul.mubr.f32.gmra.mrb[0].mxu0 %v8606
          %v8792 = vpop.f32.mrb[0].mxu0
          %v8793 = vadd.f32 0.0, %v8792
          %v8794 = vpop.f32.mrb[0].mxu0
          %8795 = vmatprep.mubr.f32.mxu0 0.0
          %8796 = vmatmul.mubr.f32.gmra.mrb[0].mxu0 %v8609
          %v8797 = vpop.f32.mrb[0].mxu0
          %v8798 = vadd.f32 0.0, %v8797
          %v8799 = vpop.f32.mrb[0].mxu0
          %8800 = vdwg.mxu0
          %v8802 = vsel %vm2823, %v8486, 0
          %v8805 = vsel %vm2823, %v8487, 0
          %v8808 = vsel %vm2823, %v8488, 0
          %v8811 = vsel %vm2823, %v8489, 0
          %v8814 = vsel %vm2823, %v8490, 0
          %v8817 = vsel %vm2823, %v8491, 0
          %v8820 = vsel %vm2823, %v8492, 0
          %v8823 = vsel %vm2823, %v8493, 0
          %v8826 = vsel %vm2823, %v8494, 0
          %v8829 = vsel %vm2823, %v8495, 0
          %v8832 = vsel %vm2823, %v8496, 0
          %v8835 = vsel %vm2823, %v8497, 0
          %v8838 = vsel %vm2823, %v8498, 0
          %v8841 = vsel %vm2823, %v8499, 0
          %v8844 = vsel %vm2823, %v8500, 0
          %v8847 = vsel %vm2823, %v8501, 0
          %v8850 = vsel %vm2823, %v8502, 0
          %v8853 = vsel %vm2823, %v8503, 0
          %v8856 = vsel %vm2823, %v8504, 0
          %v8859 = vsel %vm2823, %v8505, 0
          %v8862 = vsel %vm2823, %v8506, 0
          %v8865 = vsel %vm2823, %v8507, 0
          %v8868 = vsel %vm2823, %v8508, 0
          %v8871 = vsel %vm2823, %v8509, 0
          %v8874 = vsel %vm2823, %v8510, 0
          %8876 = vmatprep.subr.mxu0 0.0
          %8877 = vmatpush1.msra.mxu0 %v2683
          %8878 = vmatprep.subr.mxu0 0.0
          %8879 = vmatpush1.msra.mxu0 0.0
          %8880 = vmatprep.subr.mxu0 0.0
          %8881 = vmatpush1.msra.mxu0 0.0
          %8882 = vmatprep.subr.mxu0 0.0
          %8883 = vmatpush1.msra.mxu0 0.0
          %8884 = vmatprep.subr.mxu0 0.0
          %8885 = vmatpush1.msra.mxu0 0.0
          %8886 = vmatprep.subr.mxu0 0.0
          %8887 = vmatpush1.msra.mxu0 0.0
          %8888 = vmatprep.subr.mxu0 0.0
          %8889 = vmatpush1.msra.mxu0 0.0
          %8890 = vmatprep.subr.mxu0 0.0
          %8891 = vmatpush1.msra.mxu0 0.0
          %8892 = vmatprep.subr.mxu0 0.0
          %8893 = vmatpush1.msra.mxu0 0.0
          %8894 = vmatprep.subr.mxu0 0.0
          %8895 = vmatpush1.msra.mxu0 0.0
          %8896 = vmatprep.subr.mxu0 0.0
          %8897 = vmatpush1.msra.mxu0 0.0
          %8898 = vmatprep.subr.mxu0 0.0
          %8899 = vmatpush1.msra.mxu0 0.0
          %8900 = vmatprep.subr.mxu0 0.0
          %8901 = vmatpush1.msra.mxu0 0.0
          %8902 = vmatprep.subr.mxu0 0.0
          %8903 = vmatpush1.msra.mxu0 0.0
          %8904 = vmatprep.subr.mxu0 0.0
          %8905 = vmatpush1.msra.mxu0 0.0
          %8906 = vmatprep.subr.mxu0 0.0
          %8907 = vmatpush1.msra.mxu0 0.0
          %8908 = vmatprep.subr.mxu0 0.0
          %8909 = vmatpush1.msra.mxu0 0.0
          %8910 = vmatprep.subr.mxu0 0.0
          %8911 = vmatpush1.msra.mxu0 0.0
          %8912 = vmatprep.subr.mxu0 0.0
          %8913 = vmatpush1.msra.mxu0 0.0
          %8914 = vmatprep.subr.mxu0 0.0
          %8915 = vmatpush1.msra.mxu0 0.0
          %8916 = vmatprep.subr.mxu0 0.0
          %8917 = vmatpush1.msra.mxu0 0.0
          %8918 = vmatprep.subr.mxu0 0.0
          %8919 = vmatpush1.msra.mxu0 0.0
          %8920 = vmatprep.subr.mxu0 0.0
          %8921 = vmatpush1.msra.mxu0 0.0
          %8922 = vmatprep.subr.mxu0 0.0
          %8923 = vmatpush1.msra.mxu0 0.0
          %8924 = vmatprep.subr.mxu0 0.0
          %8925 = vmatpush1.msra.mxu0 0.0
          %8926 = vmatprep.subr.mxu0 0.0
          %8927 = vmatpush1.msra.mxu0 0.0
          %8928 = vmatprep.subr.mxu0 0.0
          %8929 = vmatpush1.msra.mxu0 0.0
          %8930 = vmatprep.subr.mxu0 0.0
          %8931 = vmatpush1.msra.mxu0 0.0
          %8932 = vmatprep.subr.mxu0 0.0
          %8933 = vmatpush1.msra.mxu0 0.0
          %8934 = vmatprep.subr.mxu0 0.0
          %8935 = vmatpush1.msra.mxu0 0.0
          %8936 = vmatprep.subr.mxu0 0.0
          %8937 = vmatpush1.msra.mxu0 0.0
          %8938 = vmatprep.subr.mxu0 0.0
          %8939 = vmatpush1.msra.mxu0 0.0
          %8940 = vmatprep.mubr.f32.mxu0 0.0
          %8941 = vmatmul.mubr.f32.gmra.mrb[0].mxu0 %v8802
          %v8942 = vpop.f32.mrb[0].mxu0
          %v8943 = vadd.f32 %v8678, %v8942
          %v8944 = vpop.f32.mrb[0].mxu0
          %8945 = vmatprep.mubr.f32.mxu0 0.0
          %8946 = vmatmul.mubr.f32.gmra.mrb[0].mxu0 %v8805
          %v8947 = vpop.f32.mrb[0].mxu0
          %v8948 = vadd.f32 %v8683, %v8947
          %v8949 = vpop.f32.mrb[0].mxu0
          %8950 = vmatprep.mubr.f32.mxu0 0.0
          %8951 = vmatmul.mubr.f32.gmra.mrb[0].mxu0 %v8808
          %v8952 = vpop.f32.mrb[0].mxu0
          %v8953 = vadd.f32 %v8688, %v8952
          %v8954 = vpop.f32.mrb[0].mxu0
          %8955 = vmatprep.mubr.f32.mxu0 0.0
          %8956 = vmatmul.mubr.f32.gmra.mrb[0].mxu0 %v8811
          %v8957 = vpop.f32.mrb[0].mxu0
          %v8958 = vadd.f32 %v8693, %v8957
          %v8959 = vpop.f32.mrb[0].mxu0
          %8960 = vmatprep.mubr.f32.mxu0 0.0
          %8961 = vmatmul.mubr.f32.gmra.mrb[0].mxu0 %v8814
          %v8962 = vpop.f32.mrb[0].mxu0
          %v8963 = vadd.f32 %v8698, %v8962
          %v8964 = vpop.f32.mrb[0].mxu0
          %8965 = vmatprep.mubr.f32.mxu0 0.0
          %8966 = vmatmul.mubr.f32.gmra.mrb[0].mxu0 %v8817
          %v8967 = vpop.f32.mrb[0].mxu0
          %v8968 = vadd.f32 %v8703, %v8967
          %v8969 = vpop.f32.mrb[0].mxu0
          %8970 = vmatprep.mubr.f32.mxu0 0.0
          %8971 = vmatmul.mubr.f32.gmra.mrb[0].mxu0 %v8820
          %v8972 = vpop.f32.mrb[0].mxu0
          %v8973 = vadd.f32 %v8708, %v8972
          %v8974 = vpop.f32.mrb[0].mxu0
          %8975 = vmatprep.mubr.f32.mxu0 0.0
          %8976 = vmatmul.mubr.f32.gmra.mrb[0].mxu0 %v8823
          %v8977 = vpop.f32.mrb[0].mxu0
          %v8978 = vadd.f32 %v8713, %v8977
          %v8979 = vpop.f32.mrb[0].mxu0
          %8980 = vmatprep.mubr.f32.mxu0 0.0
          %8981 = vmatmul.mubr.f32.gmra.mrb[0].mxu0 %v8826
          %v8982 = vpop.f32.mrb[0].mxu0
          %v8983 = vadd.f32 %v8718, %v8982
          %v8984 = vpop.f32.mrb[0].mxu0
          %8985 = vmatprep.mubr.f32.mxu0 0.0
          %8986 = vmatmul.mubr.f32.gmra.mrb[0].mxu0 %v8829
          %v8987 = vpop.f32.mrb[0].mxu0
          %v8988 = vadd.f32 %v8723, %v8987
          %v8989 = vpop.f32.mrb[0].mxu0
          %8990 = vmatprep.mubr.f32.mxu0 0.0
          %8991 = vmatmul.mubr.f32.gmra.mrb[0].mxu0 %v8832
          %v8992 = vpop.f32.mrb[0].mxu0
          %v8993 = vadd.f32 %v8728, %v8992
          %v8994 = vpop.f32.mrb[0].mxu0
          %8995 = vmatprep.mubr.f32.mxu0 0.0
          %8996 = vmatmul.mubr.f32.gmra.mrb[0].mxu0 %v8835
          %v8997 = vpop.f32.mrb[0].mxu0
          %v8998 = vadd.f32 %v8733, %v8997
          %v8999 = vpop.f32.mrb[0].mxu0
          %9000 = vmatprep.mubr.f32.mxu0 0.0
          %9001 = vmatmul.mubr.f32.gmra.mrb[0].mxu0 %v8838
          %v9002 = vpop.f32.mrb[0].mxu0
          %v9003 = vadd.f32 %v8738, %v9002
          %v9004 = vpop.f32.mrb[0].mxu0
          %9005 = vmatprep.mubr.f32.mxu0 0.0
          %9006 = vmatmul.mubr.f32.gmra.mrb[0].mxu0 %v8841
          %v9007 = vpop.f32.mrb[0].mxu0
          %v9008 = vadd.f32 %v8743, %v9007
          %v9009 = vpop.f32.mrb[0].mxu0
          %9010 = vmatprep.mubr.f32.mxu0 0.0
          %9011 = vmatmul.mubr.f32.gmra.mrb[0].mxu0 %v8844
          %v9012 = vpop.f32.mrb[0].mxu0
          %v9013 = vadd.f32 %v8748, %v9012
          %v9014 = vpop.f32.mrb[0].mxu0
          %9015 = vmatprep.mubr.f32.mxu0 0.0
          %9016 = vmatmul.mubr.f32.gmra.mrb[0].mxu0 %v8847
          %v9017 = vpop.f32.mrb[0].mxu0
          %v9018 = vadd.f32 %v8753, %v9017
          %v9019 = vpop.f32.mrb[0].mxu0
          %9020 = vmatprep.mubr.f32.mxu0 0.0
          %9021 = vmatmul.mubr.f32.gmra.mrb[0].mxu0 %v8850
          %v9022 = vpop.f32.mrb[0].mxu0
          %v9023 = vadd.f32 %v8758, %v9022
          %v9024 = vpop.f32.mrb[0].mxu0
          %9025 = vmatprep.mubr.f32.mxu0 0.0
          %9026 = vmatmul.mubr.f32.gmra.mrb[0].mxu0 %v8853
          %v9027 = vpop.f32.mrb[0].mxu0
          %v9028 = vadd.f32 %v8763, %v9027
          %v9029 = vpop.f32.mrb[0].mxu0
          %9030 = vmatprep.mubr.f32.mxu0 0.0
          %9031 = vmatmul.mubr.f32.gmra.mrb[0].mxu0 %v8856
          %v9032 = vpop.f32.mrb[0].mxu0
          %v9033 = vadd.f32 %v8768, %v9032
          %v9034 = vpop.f32.mrb[0].mxu0
          %9035 = vmatprep.mubr.f32.mxu0 0.0
          %9036 = vmatmul.mubr.f32.gmra.mrb[0].mxu0 %v8859
          %v9037 = vpop.f32.mrb[0].mxu0
          %v9038 = vadd.f32 %v8773, %v9037
          %v9039 = vpop.f32.mrb[0].mxu0
          %9040 = vmatprep.mubr.f32.mxu0 0.0
          %9041 = vmatmul.mubr.f32.gmra.mrb[0].mxu0 %v8862
          %v9042 = vpop.f32.mrb[0].mxu0
          %v9043 = vadd.f32 %v8778, %v9042
          %v9044 = vpop.f32.mrb[0].mxu0
          %9045 = vmatprep.mubr.f32.mxu0 0.0
          %9046 = vmatmul.mubr.f32.gmra.mrb[0].mxu0 %v8865
          %v9047 = vpop.f32.mrb[0].mxu0
          %v9048 = vadd.f32 %v8783, %v9047
          %v9049 = vpop.f32.mrb[0].mxu0
          %9050 = vmatprep.mubr.f32.mxu0 0.0
          %9051 = vmatmul.mubr.f32.gmra.mrb[0].mxu0 %v8868
          %v9052 = vpop.f32.mrb[0].mxu0
          %v9053 = vadd.f32 %v8788, %v9052
          %v9054 = vpop.f32.mrb[0].mxu0
          %9055 = vmatprep.mubr.f32.mxu0 0.0
          %9056 = vmatmul.mubr.f32.gmra.mrb[0].mxu0 %v8871
          %v9057 = vpop.f32.mrb[0].mxu0
          %v9058 = vadd.f32 %v8793, %v9057
          %v9059 = vpop.f32.mrb[0].mxu0
          %9060 = vmatprep.mubr.f32.mxu0 0.0
          %9061 = vmatmul.mubr.f32.gmra.mrb[0].mxu0 %v8874
          %v9062 = vpop.f32.mrb[0].mxu0
          %v9063 = vadd.f32 %v8798, %v9062
          %v9064 = vpop.f32.mrb[0].mxu0
          %9065 = vdwg.mxu0
          %v9066 = vld [vmem:[#allocation4 + $0x2] sm:$0xff]
          %v9067 = vld [vmem:[#allocation4 + $0xa] sm:$0xff]
          %v9068 = vld [vmem:[#allocation4 + $0x12] sm:$0xff]
          %v9069 = vld [vmem:[#allocation4 + $0x1a] sm:$0xff]
          %v9070 = vld [vmem:[#allocation4 + $0x22] sm:$0xff]
          %v9071 = vld [vmem:[#allocation4 + $0x2a] sm:$0xff]
          %v9072 = vld [vmem:[#allocation4 + $0x32] sm:$0xff]
          %v9073 = vld [vmem:[#allocation4 + $0x3a] sm:$0xff]
          %v9074 = vld [vmem:[#allocation4 + $0x42] sm:$0xff]
          %v9075 = vld [vmem:[#allocation4 + $0x4a] sm:$0xff]
          %v9076 = vld [vmem:[#allocation4 + $0x52] sm:$0xff]
          %v9077 = vld [vmem:[#allocation4 + $0x5a] sm:$0xff]
          %v9078 = vld [vmem:[#allocation4 + $0x62] sm:$0xff]
          %v9079 = vld [vmem:[#allocation4 + $0x6a] sm:$0xff]
          %v9080 = vld [vmem:[#allocation4 + $0x72] sm:$0xff]
          %v9081 = vld [vmem:[#allocation4 + $0x7a] sm:$0xff]
          %v9082 = vld [vmem:[#allocation4 + $0x82] sm:$0xff]
          %v9083 = vld [vmem:[#allocation4 + $0x8a] sm:$0xff]
          %v9084 = vld [vmem:[#allocation4 + $0x92] sm:$0xff]
          %v9085 = vld [vmem:[#allocation4 + $0x9a] sm:$0xff]
          %v9086 = vld [vmem:[#allocation4 + $0xa2] sm:$0xff]
          %v9087 = vld [vmem:[#allocation4 + $0xaa] sm:$0xff]
          %v9088 = vld [vmem:[#allocation4 + $0xb2] sm:$0xff]
          %v9089 = vld [vmem:[#allocation4 + $0xba] sm:$0xff]
          %v9090 = vld [vmem:[#allocation4 + $0xc2] sm:$0xff]
          %v9092 = vsel %vm2823, %v9066, 0
          %v9095 = vsel %vm2823, %v9067, 0
          %v9098 = vsel %vm2823, %v9068, 0
          %v9101 = vsel %vm2823, %v9069, 0
          %v9104 = vsel %vm2823, %v9070, 0
          %v9107 = vsel %vm2823, %v9071, 0
          %v9110 = vsel %vm2823, %v9072, 0
          %v9113 = vsel %vm2823, %v9073, 0
          %v9116 = vsel %vm2823, %v9074, 0
          %v9119 = vsel %vm2823, %v9075, 0
          %v9122 = vsel %vm2823, %v9076, 0
          %v9125 = vsel %vm2823, %v9077, 0
          %v9128 = vsel %vm2823, %v9078, 0
          %v9131 = vsel %vm2823, %v9079, 0
          %v9134 = vsel %vm2823, %v9080, 0
          %v9137 = vsel %vm2823, %v9081, 0
          %v9140 = vsel %vm2823, %v9082, 0
          %v9143 = vsel %vm2823, %v9083, 0
          %v9146 = vsel %vm2823, %v9084, 0
          %v9149 = vsel %vm2823, %v9085, 0
          %v9152 = vsel %vm2823, %v9086, 0
          %v9155 = vsel %vm2823, %v9087, 0
          %v9158 = vsel %vm2823, %v9088, 0
          %v9161 = vsel %vm2823, %v9089, 0
          %v9164 = vsel %vm2823, %v9090, 0
          %9166 = vmatprep.subr.mxu0 0.0
          %9167 = vmatpush1.msra.mxu0 %v2685
          %9168 = vmatprep.subr.mxu0 0.0
          %9169 = vmatpush1.msra.mxu0 0.0
          %9170 = vmatprep.subr.mxu0 0.0
          %9171 = vmatpush1.msra.mxu0 0.0
          %9172 = vmatprep.subr.mxu0 0.0
          %9173 = vmatpush1.msra.mxu0 0.0
          %9174 = vmatprep.subr.mxu0 0.0
          %9175 = vmatpush1.msra.mxu0 0.0
          %9176 = vmatprep.subr.mxu0 0.0
          %9177 = vmatpush1.msra.mxu0 0.0
          %9178 = vmatprep.subr.mxu0 0.0
          %9179 = vmatpush1.msra.mxu0 0.0
          %9180 = vmatprep.subr.mxu0 0.0
          %9181 = vmatpush1.msra.mxu0 0.0
          %9182 = vmatprep.subr.mxu0 0.0
          %9183 = vmatpush1.msra.mxu0 0.0
          %9184 = vmatprep.subr.mxu0 0.0
          %9185 = vmatpush1.msra.mxu0 0.0
          %9186 = vmatprep.subr.mxu0 0.0
          %9187 = vmatpush1.msra.mxu0 0.0
          %9188 = vmatprep.subr.mxu0 0.0
          %9189 = vmatpush1.msra.mxu0 0.0
          %9190 = vmatprep.subr.mxu0 0.0
          %9191 = vmatpush1.msra.mxu0 0.0
          %9192 = vmatprep.subr.mxu0 0.0
          %9193 = vmatpush1.msra.mxu0 0.0
          %9194 = vmatprep.subr.mxu0 0.0
          %9195 = vmatpush1.msra.mxu0 0.0
          %9196 = vmatprep.subr.mxu0 0.0
          %9197 = vmatpush1.msra.mxu0 0.0
          %9198 = vmatprep.subr.mxu0 0.0
          %9199 = vmatpush1.msra.mxu0 0.0
          %9200 = vmatprep.subr.mxu0 0.0
          %9201 = vmatpush1.msra.mxu0 0.0
          %9202 = vmatprep.subr.mxu0 0.0
          %9203 = vmatpush1.msra.mxu0 0.0
          %9204 = vmatprep.subr.mxu0 0.0
          %9205 = vmatpush1.msra.mxu0 0.0
          %9206 = vmatprep.subr.mxu0 0.0
          %9207 = vmatpush1.msra.mxu0 0.0
          %9208 = vmatprep.subr.mxu0 0.0
          %9209 = vmatpush1.msra.mxu0 0.0
          %9210 = vmatprep.subr.mxu0 0.0
          %9211 = vmatpush1.msra.mxu0 0.0
          %9212 = vmatprep.subr.mxu0 0.0
          %9213 = vmatpush1.msra.mxu0 0.0
          %9214 = vmatprep.subr.mxu0 0.0
          %9215 = vmatpush1.msra.mxu0 0.0
          %9216 = vmatprep.subr.mxu0 0.0
          %9217 = vmatpush1.msra.mxu0 0.0
          %9218 = vmatprep.subr.mxu0 0.0
          %9219 = vmatpush1.msra.mxu0 0.0
          %9220 = vmatprep.subr.mxu0 0.0
          %9221 = vmatpush1.msra.mxu0 0.0
          %9222 = vmatprep.subr.mxu0 0.0
          %9223 = vmatpush1.msra.mxu0 0.0
          %9224 = vmatprep.subr.mxu0 0.0
          %9225 = vmatpush1.msra.mxu0 0.0
          %9226 = vmatprep.subr.mxu0 0.0
          %9227 = vmatpush1.msra.mxu0 0.0
          %9228 = vmatprep.subr.mxu0 0.0
          %9229 = vmatpush1.msra.mxu0 0.0
          %9230 = vmatprep.mubr.f32.mxu0 0.0
          %9231 = vmatmul.mubr.f32.gmra.mrb[0].mxu0 %v9092
          %v9232 = vpop.f32.mrb[0].mxu0
          %v9233 = vadd.f32 0.0, %v9232
          %v9234 = vpop.f32.mrb[0].mxu0
          %9235 = vmatprep.mubr.f32.mxu0 0.0
          %9236 = vmatmul.mubr.f32.gmra.mrb[0].mxu0 %v9095
          %v9237 = vpop.f32.mrb[0].mxu0
          %v9238 = vadd.f32 0.0, %v9237
          %v9239 = vpop.f32.mrb[0].mxu0
          %9240 = vmatprep.mubr.f32.mxu0 0.0
          %9241 = vmatmul.mubr.f32.gmra.mrb[0].mxu0 %v9098
          %v9242 = vpop.f32.mrb[0].mxu0
          %v9243 = vadd.f32 0.0, %v9242
          %v9244 = vpop.f32.mrb[0].mxu0
          %9245 = vmatprep.mubr.f32.mxu0 0.0
          %9246 = vmatmul.mubr.f32.gmra.mrb[0].mxu0 %v9101
          %v9247 = vpop.f32.mrb[0].mxu0
          %v9248 = vadd.f32 0.0, %v9247
          %v9249 = vpop.f32.mrb[0].mxu0
          %9250 = vmatprep.mubr.f32.mxu0 0.0
          %9251 = vmatmul.mubr.f32.gmra.mrb[0].mxu0 %v9104
          %v9252 = vpop.f32.mrb[0].mxu0
          %v9253 = vadd.f32 0.0, %v9252
          %v9254 = vpop.f32.mrb[0].mxu0
          %9255 = vmatprep.mubr.f32.mxu0 0.0
          %9256 = vmatmul.mubr.f32.gmra.mrb[0].mxu0 %v9107
          %v9257 = vpop.f32.mrb[0].mxu0
          %v9258 = vadd.f32 0.0, %v9257
          %v9259 = vpop.f32.mrb[0].mxu0
          %9260 = vmatprep.mubr.f32.mxu0 0.0
          %9261 = vmatmul.mubr.f32.gmra.mrb[0].mxu0 %v9110
          %v9262 = vpop.f32.mrb[0].mxu0
          %v9263 = vadd.f32 0.0, %v9262
          %v9264 = vpop.f32.mrb[0].mxu0
          %9265 = vmatprep.mubr.f32.mxu0 0.0
          %9266 = vmatmul.mubr.f32.gmra.mrb[0].mxu0 %v9113
          %v9267 = vpop.f32.mrb[0].mxu0
          %v9268 = vadd.f32 0.0, %v9267
          %v9269 = vpop.f32.mrb[0].mxu0
          %9270 = vmatprep.mubr.f32.mxu0 0.0
          %9271 = vmatmul.mubr.f32.gmra.mrb[0].mxu0 %v9116
          %v9272 = vpop.f32.mrb[0].mxu0
          %v9273 = vadd.f32 0.0, %v9272
          %v9274 = vpop.f32.mrb[0].mxu0
          %9275 = vmatprep.mubr.f32.mxu0 0.0
          %9276 = vmatmul.mubr.f32.gmra.mrb[0].mxu0 %v9119
          %v9277 = vpop.f32.mrb[0].mxu0
          %v9278 = vadd.f32 0.0, %v9277
          %v9279 = vpop.f32.mrb[0].mxu0
          %9280 = vmatprep.mubr.f32.mxu0 0.0
          %9281 = vmatmul.mubr.f32.gmra.mrb[0].mxu0 %v9122
          %v9282 = vpop.f32.mrb[0].mxu0
          %v9283 = vadd.f32 0.0, %v9282
          %v9284 = vpop.f32.mrb[0].mxu0
          %9285 = vmatprep.mubr.f32.mxu0 0.0
          %9286 = vmatmul.mubr.f32.gmra.mrb[0].mxu0 %v9125
          %v9287 = vpop.f32.mrb[0].mxu0
          %v9288 = vadd.f32 0.0, %v9287
          %v9289 = vpop.f32.mrb[0].mxu0
          %9290 = vmatprep.mubr.f32.mxu0 0.0
          %9291 = vmatmul.mubr.f32.gmra.mrb[0].mxu0 %v9128
          %v9292 = vpop.f32.mrb[0].mxu0
          %v9293 = vadd.f32 0.0, %v9292
          %v9294 = vpop.f32.mrb[0].mxu0
          %9295 = vmatprep.mubr.f32.mxu0 0.0
          %9296 = vmatmul.mubr.f32.gmra.mrb[0].mxu0 %v9131
          %v9297 = vpop.f32.mrb[0].mxu0
          %v9298 = vadd.f32 0.0, %v9297
          %v9299 = vpop.f32.mrb[0].mxu0
          %9300 = vmatprep.mubr.f32.mxu0 0.0
          %9301 = vmatmul.mubr.f32.gmra.mrb[0].mxu0 %v9134
          %v9302 = vpop.f32.mrb[0].mxu0
          %v9303 = vadd.f32 0.0, %v9302
          %v9304 = vpop.f32.mrb[0].mxu0
          %9305 = vmatprep.mubr.f32.mxu0 0.0
          %9306 = vmatmul.mubr.f32.gmra.mrb[0].mxu0 %v9137
          %v9307 = vpop.f32.mrb[0].mxu0
          %v9308 = vadd.f32 0.0, %v9307
          %v9309 = vpop.f32.mrb[0].mxu0
          %9310 = vmatprep.mubr.f32.mxu0 0.0
          %9311 = vmatmul.mubr.f32.gmra.mrb[0].mxu0 %v9140
          %v9312 = vpop.f32.mrb[0].mxu0
          %v9313 = vadd.f32 0.0, %v9312
          %v9314 = vpop.f32.mrb[0].mxu0
          %9315 = vmatprep.mubr.f32.mxu0 0.0
          %9316 = vmatmul.mubr.f32.gmra.mrb[0].mxu0 %v9143
          %v9317 = vpop.f32.mrb[0].mxu0
          %v9318 = vadd.f32 0.0, %v9317
          %v9319 = vpop.f32.mrb[0].mxu0
          %9320 = vmatprep.mubr.f32.mxu0 0.0
          %9321 = vmatmul.mubr.f32.gmra.mrb[0].mxu0 %v9146
          %v9322 = vpop.f32.mrb[0].mxu0
          %v9323 = vadd.f32 0.0, %v9322
          %v9324 = vpop.f32.mrb[0].mxu0
          %9325 = vmatprep.mubr.f32.mxu0 0.0
          %9326 = vmatmul.mubr.f32.gmra.mrb[0].mxu0 %v9149
          %v9327 = vpop.f32.mrb[0].mxu0
          %v9328 = vadd.f32 0.0, %v9327
          %v9329 = vpop.f32.mrb[0].mxu0
          %9330 = vmatprep.mubr.f32.mxu0 0.0
          %9331 = vmatmul.mubr.f32.gmra.mrb[0].mxu0 %v9152
          %v9332 = vpop.f32.mrb[0].mxu0
          %v9333 = vadd.f32 0.0, %v9332
          %v9334 = vpop.f32.mrb[0].mxu0
          %9335 = vmatprep.mubr.f32.mxu0 0.0
          %9336 = vmatmul.mubr.f32.gmra.mrb[0].mxu0 %v9155
          %v9337 = vpop.f32.mrb[0].mxu0
          %v9338 = vadd.f32 0.0, %v9337
          %v9339 = vpop.f32.mrb[0].mxu0
          %9340 = vmatprep.mubr.f32.mxu0 0.0
          %9341 = vmatmul.mubr.f32.gmra.mrb[0].mxu0 %v9158
          %v9342 = vpop.f32.mrb[0].mxu0
          %v9343 = vadd.f32 0.0, %v9342
          %v9344 = vpop.f32.mrb[0].mxu0
          %9345 = vmatprep.mubr.f32.mxu0 0.0
          %9346 = vmatmul.mubr.f32.gmra.mrb[0].mxu0 %v9161
          %v9347 = vpop.f32.mrb[0].mxu0
          %v9348 = vadd.f32 0.0, %v9347
          %v9349 = vpop.f32.mrb[0].mxu0
          %9350 = vmatprep.mubr.f32.mxu0 0.0
          %9351 = vmatmul.mubr.f32.gmra.mrb[0].mxu0 %v9164
          %v9352 = vpop.f32.mrb[0].mxu0
          %v9353 = vadd.f32 0.0, %v9352
          %v9354 = vpop.f32.mrb[0].mxu0
          %9355 = vdwg.mxu0
          %v9356 = vadd.f32 %v8943, %v9233
          %v9357 = vadd.f32 %v8948, %v9238
          %v9358 = vadd.f32 %v8953, %v9243
          %v9359 = vadd.f32 %v8958, %v9248
          %v9360 = vadd.f32 %v8963, %v9253
          %v9361 = vadd.f32 %v8968, %v9258
          %v9362 = vadd.f32 %v8973, %v9263
          %v9363 = vadd.f32 %v8978, %v9268
          %v9364 = vadd.f32 %v8983, %v9273
          %v9365 = vadd.f32 %v8988, %v9278
          %v9366 = vadd.f32 %v8993, %v9283
          %v9367 = vadd.f32 %v8998, %v9288
          %v9368 = vadd.f32 %v9003, %v9293
          %v9369 = vadd.f32 %v9008, %v9298
          %v9370 = vadd.f32 %v9013, %v9303
          %v9371 = vadd.f32 %v9018, %v9308
          %v9372 = vadd.f32 %v9023, %v9313
          %v9373 = vadd.f32 %v9028, %v9318
          %v9374 = vadd.f32 %v9033, %v9323
          %v9375 = vadd.f32 %v9038, %v9328
          %v9376 = vadd.f32 %v9043, %v9333
          %v9377 = vadd.f32 %v9048, %v9338
          %v9378 = vadd.f32 %v9053, %v9343
          %v9379 = vadd.f32 %v9058, %v9348
          %v9380 = vadd.f32 %v9063, %v9353
          %v9381 = vadd.f32 %v9356, %v4138
          %v9382 = vadd.f32 %v9357, %v4138
          %v9383 = vadd.f32 %v9358, %v4138
          %v9384 = vadd.f32 %v9359, %v4138
          %v9385 = vadd.f32 %v9360, %v4138
          %v9386 = vadd.f32 %v9361, %v4138
          %v9387 = vadd.f32 %v9362, %v4138
          %v9388 = vadd.f32 %v9363, %v4138
          %v9389 = vadd.f32 %v9364, %v4138
          %v9390 = vadd.f32 %v9365, %v4138
          %v9391 = vadd.f32 %v9366, %v4138
          %v9392 = vadd.f32 %v9367, %v4138
          %v9393 = vadd.f32 %v9368, %v4138
          %v9394 = vadd.f32 %v9369, %v4138
          %v9395 = vadd.f32 %v9370, %v4138
          %v9396 = vadd.f32 %v9371, %v4138
          %v9397 = vadd.f32 %v9372, %v4138
          %v9398 = vadd.f32 %v9373, %v4138
          %v9399 = vadd.f32 %v9374, %v4138
          %v9400 = vadd.f32 %v9375, %v4138
          %v9401 = vadd.f32 %v9376, %v4138
          %v9402 = vadd.f32 %v9377, %v4138
          %v9403 = vadd.f32 %v9378, %v4138
          %v9404 = vadd.f32 %v9379, %v4138
          %v9405 = vadd.f32 %v9380, %v4138
          %v9406 = vmax.f32 %v9381, 0.0
          %v9407 = vmax.f32 %v9382, 0.0
          %v9408 = vmax.f32 %v9383, 0.0
          %v9409 = vmax.f32 %v9384, 0.0
          %v9410 = vmax.f32 %v9385, 0.0
          %v9411 = vmax.f32 %v9386, 0.0
          %v9412 = vmax.f32 %v9387, 0.0
          %v9413 = vmax.f32 %v9388, 0.0
          %v9414 = vmax.f32 %v9389, 0.0
          %v9415 = vmax.f32 %v9390, 0.0
          %v9416 = vmax.f32 %v9391, 0.0
          %v9417 = vmax.f32 %v9392, 0.0
          %v9418 = vmax.f32 %v9393, 0.0
          %v9419 = vmax.f32 %v9394, 0.0
          %v9420 = vmax.f32 %v9395, 0.0
          %v9421 = vmax.f32 %v9396, 0.0
          %v9422 = vmax.f32 %v9397, 0.0
          %v9423 = vmax.f32 %v9398, 0.0
          %v9424 = vmax.f32 %v9399, 0.0
          %v9425 = vmax.f32 %v9400, 0.0
          %v9426 = vmax.f32 %v9401, 0.0
          %v9427 = vmax.f32 %v9402, 0.0
          %v9428 = vmax.f32 %v9403, 0.0
          %v9429 = vmax.f32 %v9404, 0.0
          %v9430 = vmax.f32 %v9405, 0.0
          %9431 = vst [vmem:[#allocation5] sm:$0xff] %v9406
          %9432 = vst [vmem:[#allocation5 + $0x8] sm:$0xff] %v9407
          %9433 = vst [vmem:[#allocation5 + $0x10] sm:$0xff] %v9408
          %9434 = vst [vmem:[#allocation5 + $0x18] sm:$0xff] %v9409
          %9435 = vst [vmem:[#allocation5 + $0x20] sm:$0xff] %v9410
          %9436 = vst [vmem:[#allocation5 + $0x28] sm:$0xff] %v9411
          %9437 = vst [vmem:[#allocation5 + $0x30] sm:$0xff] %v9412
          %9438 = vst [vmem:[#allocation5 + $0x38] sm:$0xff] %v9413
          %9439 = vst [vmem:[#allocation5 + $0x40] sm:$0xff] %v9414
          %9440 = vst [vmem:[#allocation5 + $0x48] sm:$0xff] %v9415
          %9441 = vst [vmem:[#allocation5 + $0x50] sm:$0xff] %v9416
          %9442 = vst [vmem:[#allocation5 + $0x58] sm:$0xff] %v9417
          %9443 = vst [vmem:[#allocation5 + $0x60] sm:$0xff] %v9418
          %9444 = vst [vmem:[#allocation5 + $0x68] sm:$0xff] %v9419
          %9445 = vst [vmem:[#allocation5 + $0x70] sm:$0xff] %v9420
          %9446 = vst [vmem:[#allocation5 + $0x78] sm:$0xff] %v9421
          %9447 = vst [vmem:[#allocation5 + $0x80] sm:$0xff] %v9422
          %9448 = vst [vmem:[#allocation5 + $0x88] sm:$0xff] %v9423
          %9449 = vst [vmem:[#allocation5 + $0x90] sm:$0xff] %v9424
          %9450 = vst [vmem:[#allocation5 + $0x98] sm:$0xff] %v9425
          %9451 = vst [vmem:[#allocation5 + $0xa0] sm:$0xff] %v9426
          %9452 = vst [vmem:[#allocation5 + $0xa8] sm:$0xff] %v9427
          %9453 = vst [vmem:[#allocation5 + $0xb0] sm:$0xff] %v9428
          %9454 = vst [vmem:[#allocation5 + $0xb8] sm:$0xff] %v9429
          %9455 = vst [vmem:[#allocation5 + $0xc0] sm:$0xff] %v9430
          %v9456 = vld [vmem:[#allocation5] ss:$2 sm:$0xff]
          %v9457 = vld [vmem:[%s4255] ss:$2 sm:$0xff]
          %v9458 = vld [vmem:[%s4257] ss:$2 sm:$0xff]
          %v9459 = vld [vmem:[%s4259] ss:$2 sm:$0xff]
          %v9460 = vld [vmem:[%s4261] ss:$2 sm:$0xff]
          %v9461 = vld [vmem:[%s4263] ss:$2 sm:$0xff]
          %v9462 = vld [vmem:[%s4265] ss:$2 sm:$0xff]
          %v9463 = vld [vmem:[%s4267] ss:$2 sm:$0xff]
          %v9464 = vld [vmem:[%s4269] ss:$2 sm:$0xff]
          %v9465 = vld [vmem:[%s4271] ss:$2 sm:$0xff]
          %v9466 = vld [vmem:[%s4273] ss:$2 sm:$0xff]
          %v9467 = vld [vmem:[%s4275] ss:$2 sm:$0xff]
          %v9468 = vld [vmem:[%s4277] ss:$2 sm:$0x7]
          %v9469 = vld [vmem:[%s4291] ss:$2 sm:$0xff]
          %v9470 = vld [vmem:[%s4293] ss:$2 sm:$0xff]
          %v9471 = vld [vmem:[%s4295] ss:$2 sm:$0xff]
          %v9472 = vld [vmem:[%s4297] ss:$2 sm:$0xff]
          %v9473 = vld [vmem:[%s4299] ss:$2 sm:$0xff]
          %v9474 = vld [vmem:[%s4301] ss:$2 sm:$0xff]
          %v9475 = vld [vmem:[%s4303] ss:$2 sm:$0xff]
          %v9476 = vld [vmem:[%s4305] ss:$2 sm:$0xff]
          %v9477 = vld [vmem:[%s4307] ss:$2 sm:$0xff]
          %v9478 = vld [vmem:[%s4309] ss:$2 sm:$0xff]
          %v9479 = vld [vmem:[%s4311] ss:$2 sm:$0xff]
          %v9480 = vld [vmem:[%s4313] ss:$2 sm:$0xff]
          %v9481 = vld [vmem:[%s4315] ss:$2 sm:$0x7]
          %v9482 = vmax.f32 %v9456, %v9469
          %v9483 = vmax.f32 %v9457, %v9470
          %v9484 = vmax.f32 %v9458, %v9471
          %v9485 = vmax.f32 %v9459, %v9472
          %v9486 = vmax.f32 %v9460, %v9473
          %v9487 = vmax.f32 %v9461, %v9474
          %v9488 = vmax.f32 %v9462, %v9475
          %v9489 = vmax.f32 %v9463, %v9476
          %v9490 = vmax.f32 %v9464, %v9477
          %v9491 = vmax.f32 %v9465, %v9478
          %v9492 = vmax.f32 %v9466, %v9479
          %v9493 = vmax.f32 %v9467, %v9480
          %v9494 = vmax.f32 %v9468, %v9481
          %v9495 = vld [vmem:[%s5925] ss:$2 sm:$0xff]
          %v9496 = vld [vmem:[%s5927] ss:$2 sm:$0xff]
          %v9497 = vld [vmem:[%s5929] ss:$2 sm:$0xff]
          %v9498 = vld [vmem:[%s5931] ss:$2 sm:$0xff]
          %v9499 = vld [vmem:[%s5933] ss:$2 sm:$0xff]
          %v9500 = vld [vmem:[%s5935] ss:$2 sm:$0xff]
          %v9501 = vld [vmem:[%s5937] ss:$2 sm:$0xff]
          %v9502 = vld [vmem:[%s5939] ss:$2 sm:$0xff]
          %v9503 = vld [vmem:[%s5941] ss:$2 sm:$0xff]
          %v9504 = vld [vmem:[%s5943] ss:$2 sm:$0xff]
          %v9505 = vld [vmem:[%s5945] ss:$2 sm:$0xff]
          %v9506 = vld [vmem:[%s5947] ss:$2 sm:$0xff]
          %v9507 = vld [vmem:[%s5949] ss:$2 sm:$0x7]
          %v9508 = vmax.f32 %v9482, %v9495
          %v9509 = vmax.f32 %v9483, %v9496
          %v9510 = vmax.f32 %v9484, %v9497
          %v9511 = vmax.f32 %v9485, %v9498
          %v9512 = vmax.f32 %v9486, %v9499
          %v9513 = vmax.f32 %v9487, %v9500
          %v9514 = vmax.f32 %v9488, %v9501
          %v9515 = vmax.f32 %v9489, %v9502
          %v9516 = vmax.f32 %v9490, %v9503
          %v9517 = vmax.f32 %v9491, %v9504
          %v9518 = vmax.f32 %v9492, %v9505
          %v9519 = vmax.f32 %v9493, %v9506
          %v9520 = vmax.f32 %v9494, %v9507
          %9521 = vst [vmem:[#allocation7] sm:$0x1] 0.0
          %9522 = vst [vmem:[#allocation7 + $0x64] sm:$0x1] 0.0
          %9523 = vst [vmem:[#allocation7 + $0x1] sm:$0xff] %v9508
          %9524 = vst [vmem:[#allocation7 + $0x9] sm:$0xff] %v9509
          %9525 = vst [vmem:[#allocation7 + $0x11] sm:$0xff] %v9510
          %9526 = vst [vmem:[#allocation7 + $0x19] sm:$0xff] %v9511
          %9527 = vst [vmem:[#allocation7 + $0x21] sm:$0xff] %v9512
          %9528 = vst [vmem:[#allocation7 + $0x29] sm:$0xff] %v9513
          %9529 = vst [vmem:[#allocation7 + $0x31] sm:$0xff] %v9514
          %9530 = vst [vmem:[#allocation7 + $0x39] sm:$0xff] %v9515
          %9531 = vst [vmem:[#allocation7 + $0x41] sm:$0xff] %v9516
          %9532 = vst [vmem:[#allocation7 + $0x49] sm:$0xff] %v9517
          %9533 = vst [vmem:[#allocation7 + $0x51] sm:$0xff] %v9518
          %9534 = vst [vmem:[#allocation7 + $0x59] sm:$0xff] %v9519
          %9535 = vst [vmem:[#allocation7 + $0x61] sm:$0x7] %v9520
          %v9536 = vld [vmem:[#allocation7] sm:$0xff]
          %v9537 = vld [vmem:[#allocation7 + $0x8] sm:$0xff]
          %v9538 = vld [vmem:[#allocation7 + $0x10] sm:$0xff]
          %v9539 = vld [vmem:[#allocation7 + $0x18] sm:$0xff]
          %v9540 = vld [vmem:[#allocation7 + $0x20] sm:$0xff]
          %v9541 = vld [vmem:[#allocation7 + $0x28] sm:$0xff]
          %v9542 = vld [vmem:[#allocation7 + $0x30] sm:$0xff]
          %v9543 = vld [vmem:[#allocation7 + $0x38] sm:$0xff]
          %v9544 = vld [vmem:[#allocation7 + $0x40] sm:$0xff]
          %v9545 = vld [vmem:[#allocation7 + $0x48] sm:$0xff]
          %v9546 = vld [vmem:[#allocation7 + $0x50] sm:$0xff]
          %v9547 = vld [vmem:[#allocation7 + $0x58] sm:$0xff]
          %v9548 = vld [vmem:[#allocation7 + $0x60] sm:$0xf]
          %v9549 = vld [vmem:[#allocation7 + $0x1] sm:$0xff]
          %v9550 = vld [vmem:[#allocation7 + $0x9] sm:$0xff]
          %v9551 = vld [vmem:[#allocation7 + $0x11] sm:$0xff]
          %v9552 = vld [vmem:[#allocation7 + $0x19] sm:$0xff]
          %v9553 = vld [vmem:[#allocation7 + $0x21] sm:$0xff]
          %v9554 = vld [vmem:[#allocation7 + $0x29] sm:$0xff]
          %v9555 = vld [vmem:[#allocation7 + $0x31] sm:$0xff]
          %v9556 = vld [vmem:[#allocation7 + $0x39] sm:$0xff]
          %v9557 = vld [vmem:[#allocation7 + $0x41] sm:$0xff]
          %v9558 = vld [vmem:[#allocation7 + $0x49] sm:$0xff]
          %v9559 = vld [vmem:[#allocation7 + $0x51] sm:$0xff]
          %v9560 = vld [vmem:[#allocation7 + $0x59] sm:$0xff]
          %v9561 = vld [vmem:[#allocation7 + $0x61] sm:$0xf]
          %9562 = vmatprep.subr.mxu0 0.0
          %9563 = vmatpush1.msra.mxu0 %v2703
          %9564 = vmatprep.subr.mxu0 0.0
          %9565 = vmatpush1.msra.mxu0 %v2704
          %9566 = vmatprep.subr.mxu0 0.0
          %9567 = vmatpush1.msra.mxu0 %v2705
          %9568 = vmatprep.subr.mxu0 0.0
          %9569 = vmatpush1.msra.mxu0 %v2706
          %9570 = vmatprep.subr.mxu0 0.0
          %9571 = vmatpush1.msra.mxu0 %v2707
          %9572 = vmatprep.subr.mxu0 0.0
          %9573 = vmatpush1.msra.mxu0 %v2708
          %9574 = vmatprep.subr.mxu0 0.0
          %9575 = vmatpush1.msra.mxu0 %v2709
          %9576 = vmatprep.subr.mxu0 0.0
          %9577 = vmatpush1.msra.mxu0 %v2710
          %9578 = vmatprep.subr.mxu0 0.0
          %9579 = vmatpush1.msra.mxu0 %v2711
          %9580 = vmatprep.subr.mxu0 0.0
          %9581 = vmatpush1.msra.mxu0 %v2712
          %9582 = vmatprep.subr.mxu0 0.0
          %9583 = vmatpush1.msra.mxu0 %v2713
          %9584 = vmatprep.subr.mxu0 0.0
          %9585 = vmatpush1.msra.mxu0 %v2714
          %9586 = vmatprep.subr.mxu0 0.0
          %9587 = vmatpush1.msra.mxu0 %v2715
          %9588 = vmatprep.subr.mxu0 0.0
          %9589 = vmatpush1.msra.mxu0 %v2716
          %9590 = vmatprep.subr.mxu0 0.0
          %9591 = vmatpush1.msra.mxu0 %v2717
          %9592 = vmatprep.subr.mxu0 0.0
          %9593 = vmatpush1.msra.mxu0 %v2718
          %9594 = vmatprep.subr.mxu0 0.0
          %9595 = vmatpush1.msra.mxu0 0.0
          %9596 = vmatprep.subr.mxu0 0.0
          %9597 = vmatpush1.msra.mxu0 0.0
          %9598 = vmatprep.subr.mxu0 0.0
          %9599 = vmatpush1.msra.mxu0 0.0
          %9600 = vmatprep.subr.mxu0 0.0
          %9601 = vmatpush1.msra.mxu0 0.0
          %9602 = vmatprep.subr.mxu0 0.0
          %9603 = vmatpush1.msra.mxu0 0.0
          %9604 = vmatprep.subr.mxu0 0.0
          %9605 = vmatpush1.msra.mxu0 0.0
          %9606 = vmatprep.subr.mxu0 0.0
          %9607 = vmatpush1.msra.mxu0 0.0
          %9608 = vmatprep.subr.mxu0 0.0
          %9609 = vmatpush1.msra.mxu0 0.0
          %9610 = vmatprep.subr.mxu0 0.0
          %9611 = vmatpush1.msra.mxu0 0.0
          %9612 = vmatprep.subr.mxu0 0.0
          %9613 = vmatpush1.msra.mxu0 0.0
          %9614 = vmatprep.subr.mxu0 0.0
          %9615 = vmatpush1.msra.mxu0 0.0
          %9616 = vmatprep.subr.mxu0 0.0
          %9617 = vmatpush1.msra.mxu0 0.0
          %9618 = vmatprep.subr.mxu0 0.0
          %9619 = vmatpush1.msra.mxu0 0.0
          %9620 = vmatprep.subr.mxu0 0.0
          %9621 = vmatpush1.msra.mxu0 0.0
          %9622 = vmatprep.subr.mxu0 0.0
          %9623 = vmatpush1.msra.mxu0 0.0
          %9624 = vmatprep.subr.mxu0 0.0
          %9625 = vmatpush1.msra.mxu0 0.0
          %9626 = vmatprep.mubr.f32.mxu0 0.0
          %9627 = vmatmul.mubr.f32.gmra.mrb[0].mxu0 %v9549
          %v9628 = vpop.f32.mrb[0].mxu0
          %v9629 = vadd.f32 0.0, %v9628
          %v9630 = vpop.f32.mrb[0].mxu0
          %9631 = vmatprep.mubr.f32.mxu0 0.0
          %9632 = vmatmul.mubr.f32.gmra.mrb[0].mxu0 %v9550
          %v9633 = vpop.f32.mrb[0].mxu0
          %v9634 = vadd.f32 0.0, %v9633
          %v9635 = vpop.f32.mrb[0].mxu0
          %9636 = vmatprep.mubr.f32.mxu0 0.0
          %9637 = vmatmul.mubr.f32.gmra.mrb[0].mxu0 %v9551
          %v9638 = vpop.f32.mrb[0].mxu0
          %v9639 = vadd.f32 0.0, %v9638
          %v9640 = vpop.f32.mrb[0].mxu0
          %9641 = vmatprep.mubr.f32.mxu0 0.0
          %9642 = vmatmul.mubr.f32.gmra.mrb[0].mxu0 %v9552
          %v9643 = vpop.f32.mrb[0].mxu0
          %v9644 = vadd.f32 0.0, %v9643
          %v9645 = vpop.f32.mrb[0].mxu0
          %9646 = vmatprep.mubr.f32.mxu0 0.0
          %9647 = vmatmul.mubr.f32.gmra.mrb[0].mxu0 %v9553
          %v9648 = vpop.f32.mrb[0].mxu0
          %v9649 = vadd.f32 0.0, %v9648
          %v9650 = vpop.f32.mrb[0].mxu0
          %9651 = vmatprep.mubr.f32.mxu0 0.0
          %9652 = vmatmul.mubr.f32.gmra.mrb[0].mxu0 %v9554
          %v9653 = vpop.f32.mrb[0].mxu0
          %v9654 = vadd.f32 0.0, %v9653
          %v9655 = vpop.f32.mrb[0].mxu0
          %9656 = vmatprep.mubr.f32.mxu0 0.0
          %9657 = vmatmul.mubr.f32.gmra.mrb[0].mxu0 %v9555
          %v9658 = vpop.f32.mrb[0].mxu0
          %v9659 = vadd.f32 0.0, %v9658
          %v9660 = vpop.f32.mrb[0].mxu0
          %9661 = vmatprep.mubr.f32.mxu0 0.0
          %9662 = vmatmul.mubr.f32.gmra.mrb[0].mxu0 %v9556
          %v9663 = vpop.f32.mrb[0].mxu0
          %v9664 = vadd.f32 0.0, %v9663
          %v9665 = vpop.f32.mrb[0].mxu0
          %9666 = vmatprep.mubr.f32.mxu0 0.0
          %9667 = vmatmul.mubr.f32.gmra.mrb[0].mxu0 %v9557
          %v9668 = vpop.f32.mrb[0].mxu0
          %v9669 = vadd.f32 0.0, %v9668
          %v9670 = vpop.f32.mrb[0].mxu0
          %9671 = vmatprep.mubr.f32.mxu0 0.0
          %9672 = vmatmul.mubr.f32.gmra.mrb[0].mxu0 %v9558
          %v9673 = vpop.f32.mrb[0].mxu0
          %v9674 = vadd.f32 0.0, %v9673
          %v9675 = vpop.f32.mrb[0].mxu0
          %9676 = vmatprep.mubr.f32.mxu0 0.0
          %9677 = vmatmul.mubr.f32.gmra.mrb[0].mxu0 %v9559
          %v9678 = vpop.f32.mrb[0].mxu0
          %v9679 = vadd.f32 0.0, %v9678
          %v9680 = vpop.f32.mrb[0].mxu0
          %9681 = vmatprep.mubr.f32.mxu0 0.0
          %9682 = vmatmul.mubr.f32.gmra.mrb[0].mxu0 %v9560
          %v9683 = vpop.f32.mrb[0].mxu0
          %v9684 = vadd.f32 0.0, %v9683
          %v9685 = vpop.f32.mrb[0].mxu0
          %9686 = vmatprep.mubr.f32.mxu0 0.0
          %9687 = vmatmul.mubr.f32.gmra.mrb[0].mxu0 %v9561
          %v9688 = vpop.f32.mrb[0].mxu0
          %v9689 = vadd.f32 0.0, %v9688
          %v9690 = vpop.f32.mrb[0].mxu0
          %9691 = vdwg.mxu0
          %9692 = vmatprep.subr.mxu0 0.0
          %9693 = vmatpush1.msra.mxu0 %v2687
          %9694 = vmatprep.subr.mxu0 0.0
          %9695 = vmatpush1.msra.mxu0 %v2688
          %9696 = vmatprep.subr.mxu0 0.0
          %9697 = vmatpush1.msra.mxu0 %v2689
          %9698 = vmatprep.subr.mxu0 0.0
          %9699 = vmatpush1.msra.mxu0 %v2690
          %9700 = vmatprep.subr.mxu0 0.0
          %9701 = vmatpush1.msra.mxu0 %v2691
          %9702 = vmatprep.subr.mxu0 0.0
          %9703 = vmatpush1.msra.mxu0 %v2692
          %9704 = vmatprep.subr.mxu0 0.0
          %9705 = vmatpush1.msra.mxu0 %v2693
          %9706 = vmatprep.subr.mxu0 0.0
          %9707 = vmatpush1.msra.mxu0 %v2694
          %9708 = vmatprep.subr.mxu0 0.0
          %9709 = vmatpush1.msra.mxu0 %v2695
          %9710 = vmatprep.subr.mxu0 0.0
          %9711 = vmatpush1.msra.mxu0 %v2696
          %9712 = vmatprep.subr.mxu0 0.0
          %9713 = vmatpush1.msra.mxu0 %v2697
          %9714 = vmatprep.subr.mxu0 0.0
          %9715 = vmatpush1.msra.mxu0 %v2698
          %9716 = vmatprep.subr.mxu0 0.0
          %9717 = vmatpush1.msra.mxu0 %v2699
          %9718 = vmatprep.subr.mxu0 0.0
          %9719 = vmatpush1.msra.mxu0 %v2700
          %9720 = vmatprep.subr.mxu0 0.0
          %9721 = vmatpush1.msra.mxu0 %v2701
          %9722 = vmatprep.subr.mxu0 0.0
          %9723 = vmatpush1.msra.mxu0 %v2702
          %9724 = vmatprep.subr.mxu0 0.0
          %9725 = vmatpush1.msra.mxu0 0.0
          %9726 = vmatprep.subr.mxu0 0.0
          %9727 = vmatpush1.msra.mxu0 0.0
          %9728 = vmatprep.subr.mxu0 0.0
          %9729 = vmatpush1.msra.mxu0 0.0
          %9730 = vmatprep.subr.mxu0 0.0
          %9731 = vmatpush1.msra.mxu0 0.0
          %9732 = vmatprep.subr.mxu0 0.0
          %9733 = vmatpush1.msra.mxu0 0.0
          %9734 = vmatprep.subr.mxu0 0.0
          %9735 = vmatpush1.msra.mxu0 0.0
          %9736 = vmatprep.subr.mxu0 0.0
          %9737 = vmatpush1.msra.mxu0 0.0
          %9738 = vmatprep.subr.mxu0 0.0
          %9739 = vmatpush1.msra.mxu0 0.0
          %9740 = vmatprep.subr.mxu0 0.0
          %9741 = vmatpush1.msra.mxu0 0.0
          %9742 = vmatprep.subr.mxu0 0.0
          %9743 = vmatpush1.msra.mxu0 0.0
          %9744 = vmatprep.subr.mxu0 0.0
          %9745 = vmatpush1.msra.mxu0 0.0
          %9746 = vmatprep.subr.mxu0 0.0
          %9747 = vmatpush1.msra.mxu0 0.0
          %9748 = vmatprep.subr.mxu0 0.0
          %9749 = vmatpush1.msra.mxu0 0.0
          %9750 = vmatprep.subr.mxu0 0.0
          %9751 = vmatpush1.msra.mxu0 0.0
          %9752 = vmatprep.subr.mxu0 0.0
          %9753 = vmatpush1.msra.mxu0 0.0
          %9754 = vmatprep.subr.mxu0 0.0
          %9755 = vmatpush1.msra.mxu0 0.0
          %9756 = vmatprep.mubr.f32.mxu0 0.0
          %9757 = vmatmul.mubr.f32.gmra.mrb[0].mxu0 %v9536
          %v9758 = vpop.f32.mrb[0].mxu0
          %v9759 = vadd.f32 %v9629, %v9758
          %v9760 = vpop.f32.mrb[0].mxu0
          %9761 = vmatprep.mubr.f32.mxu0 0.0
          %9762 = vmatmul.mubr.f32.gmra.mrb[0].mxu0 %v9537
          %v9763 = vpop.f32.mrb[0].mxu0
          %v9764 = vadd.f32 %v9634, %v9763
          %v9765 = vpop.f32.mrb[0].mxu0
          %9766 = vmatprep.mubr.f32.mxu0 0.0
          %9767 = vmatmul.mubr.f32.gmra.mrb[0].mxu0 %v9538
          %v9768 = vpop.f32.mrb[0].mxu0
          %v9769 = vadd.f32 %v9639, %v9768
          %v9770 = vpop.f32.mrb[0].mxu0
          %9771 = vmatprep.mubr.f32.mxu0 0.0
          %9772 = vmatmul.mubr.f32.gmra.mrb[0].mxu0 %v9539
          %v9773 = vpop.f32.mrb[0].mxu0
          %v9774 = vadd.f32 %v9644, %v9773
          %v9775 = vpop.f32.mrb[0].mxu0
          %9776 = vmatprep.mubr.f32.mxu0 0.0
          %9777 = vmatmul.mubr.f32.gmra.mrb[0].mxu0 %v9540
          %v9778 = vpop.f32.mrb[0].mxu0
          %v9779 = vadd.f32 %v9649, %v9778
          %v9780 = vpop.f32.mrb[0].mxu0
          %9781 = vmatprep.mubr.f32.mxu0 0.0
          %9782 = vmatmul.mubr.f32.gmra.mrb[0].mxu0 %v9541
          %v9783 = vpop.f32.mrb[0].mxu0
          %v9784 = vadd.f32 %v9654, %v9783
          %v9785 = vpop.f32.mrb[0].mxu0
          %9786 = vmatprep.mubr.f32.mxu0 0.0
          %9787 = vmatmul.mubr.f32.gmra.mrb[0].mxu0 %v9542
          %v9788 = vpop.f32.mrb[0].mxu0
          %v9789 = vadd.f32 %v9659, %v9788
          %v9790 = vpop.f32.mrb[0].mxu0
          %9791 = vmatprep.mubr.f32.mxu0 0.0
          %9792 = vmatmul.mubr.f32.gmra.mrb[0].mxu0 %v9543
          %v9793 = vpop.f32.mrb[0].mxu0
          %v9794 = vadd.f32 %v9664, %v9793
          %v9795 = vpop.f32.mrb[0].mxu0
          %9796 = vmatprep.mubr.f32.mxu0 0.0
          %9797 = vmatmul.mubr.f32.gmra.mrb[0].mxu0 %v9544
          %v9798 = vpop.f32.mrb[0].mxu0
          %v9799 = vadd.f32 %v9669, %v9798
          %v9800 = vpop.f32.mrb[0].mxu0
          %9801 = vmatprep.mubr.f32.mxu0 0.0
          %9802 = vmatmul.mubr.f32.gmra.mrb[0].mxu0 %v9545
          %v9803 = vpop.f32.mrb[0].mxu0
          %v9804 = vadd.f32 %v9674, %v9803
          %v9805 = vpop.f32.mrb[0].mxu0
          %9806 = vmatprep.mubr.f32.mxu0 0.0
          %9807 = vmatmul.mubr.f32.gmra.mrb[0].mxu0 %v9546
          %v9808 = vpop.f32.mrb[0].mxu0
          %v9809 = vadd.f32 %v9679, %v9808
          %v9810 = vpop.f32.mrb[0].mxu0
          %9811 = vmatprep.mubr.f32.mxu0 0.0
          %9812 = vmatmul.mubr.f32.gmra.mrb[0].mxu0 %v9547
          %v9813 = vpop.f32.mrb[0].mxu0
          %v9814 = vadd.f32 %v9684, %v9813
          %v9815 = vpop.f32.mrb[0].mxu0
          %9816 = vmatprep.mubr.f32.mxu0 0.0
          %9817 = vmatmul.mubr.f32.gmra.mrb[0].mxu0 %v9548
          %v9818 = vpop.f32.mrb[0].mxu0
          %v9819 = vadd.f32 %v9689, %v9818
          %v9820 = vpop.f32.mrb[0].mxu0
          %9821 = vdwg.mxu0
          %v9822 = vadd.f32 %v9759, %v4788
          %v9823 = vadd.f32 %v9764, %v4788
          %v9824 = vadd.f32 %v9769, %v4788
          %v9825 = vadd.f32 %v9774, %v4788
          %v9826 = vadd.f32 %v9779, %v4788
          %v9827 = vadd.f32 %v9784, %v4788
          %v9828 = vadd.f32 %v9789, %v4788
          %v9829 = vadd.f32 %v9794, %v4788
          %v9830 = vadd.f32 %v9799, %v4788
          %v9831 = vadd.f32 %v9804, %v4788
          %v9832 = vadd.f32 %v9809, %v4788
          %v9833 = vadd.f32 %v9814, %v4788
          %v9834 = vadd.f32 %v9819, %v4788
          %v9835 = vmax.f32 %v9822, 0.0
          %v9836 = vmax.f32 %v9823, 0.0
          %v9837 = vmax.f32 %v9824, 0.0
          %v9838 = vmax.f32 %v9825, 0.0
          %v9839 = vmax.f32 %v9826, 0.0
          %v9840 = vmax.f32 %v9827, 0.0
          %v9841 = vmax.f32 %v9828, 0.0
          %v9842 = vmax.f32 %v9829, 0.0
          %v9843 = vmax.f32 %v9830, 0.0
          %v9844 = vmax.f32 %v9831, 0.0
          %v9845 = vmax.f32 %v9832, 0.0
          %v9846 = vmax.f32 %v9833, 0.0
          %v9847 = vmax.f32 %v9834, 0.0
          %9848 = vst [vmem:[#allocation5] sm:$0xff] %v9835
          %9849 = vst [vmem:[#allocation5 + $0x8] sm:$0xff] %v9836
          %9850 = vst [vmem:[#allocation5 + $0x10] sm:$0xff] %v9837
          %9851 = vst [vmem:[#allocation5 + $0x18] sm:$0xff] %v9838
          %9852 = vst [vmem:[#allocation5 + $0x20] sm:$0xff] %v9839
          %9853 = vst [vmem:[#allocation5 + $0x28] sm:$0xff] %v9840
          %9854 = vst [vmem:[#allocation5 + $0x30] sm:$0xff] %v9841
          %9855 = vst [vmem:[#allocation5 + $0x38] sm:$0xff] %v9842
          %9856 = vst [vmem:[#allocation5 + $0x40] sm:$0xff] %v9843
          %9857 = vst [vmem:[#allocation5 + $0x48] sm:$0xff] %v9844
          %9858 = vst [vmem:[#allocation5 + $0x50] sm:$0xff] %v9845
          %9859 = vst [vmem:[#allocation5 + $0x58] sm:$0xff] %v9846
          %9860 = vst [vmem:[#allocation5 + $0x60] sm:$0xf] %v9847
          %v9861 = vld [vmem:[#allocation5] ss:$2 sm:$0xff]
          %v9862 = vld [vmem:[%s4255] ss:$2 sm:$0xff]
          %v9863 = vld [vmem:[%s4257] ss:$2 sm:$0xff]
          %v9864 = vld [vmem:[%s4259] ss:$2 sm:$0xff]
          %v9865 = vld [vmem:[%s4261] ss:$2 sm:$0xff]
          %v9866 = vld [vmem:[%s4263] ss:$2 sm:$0xff]
          %v9867 = vld [vmem:[%s4265] ss:$2 sm:$0x3]
          %v9868 = vld [vmem:[%s4291] ss:$2 sm:$0xff]
          %v9869 = vld [vmem:[%s4293] ss:$2 sm:$0xff]
          %v9870 = vld [vmem:[%s4295] ss:$2 sm:$0xff]
          %v9871 = vld [vmem:[%s4297] ss:$2 sm:$0xff]
          %v9872 = vld [vmem:[%s4299] ss:$2 sm:$0xff]
          %v9873 = vld [vmem:[%s4301] ss:$2 sm:$0xff]
          %v9874 = vld [vmem:[%s4303] ss:$2 sm:$0x3]
          %v9875 = vmax.f32 %v9861, %v9868
          %v9876 = vmax.f32 %v9862, %v9869
          %v9877 = vmax.f32 %v9863, %v9870
          %v9878 = vmax.f32 %v9864, %v9871
          %v9879 = vmax.f32 %v9865, %v9872
          %v9880 = vmax.f32 %v9866, %v9873
          %v9881 = vmax.f32 %v9867, %v9874
          %v9882 = vmul.f32 %v9875, %v8478
          %v9883 = vmul.f32 %v9876, %v8479
          %v9884 = vmul.f32 %v9877, %v8480
          %v9885 = vmul.f32 %v9878, %v8481
          %v9886 = vmul.f32 %v9879, %v8482
          %v9887 = vmul.f32 %v9880, %v8483
          %v9888 = vmul.f32 %v9881, %v8484
          %v9889 = vadd.f32 %v9882, %v9883
          %v9890 = vadd.f32 %v9889, %v9884
          %v9891 = vadd.f32 %v9890, %v9885
          %v9892 = vadd.f32 %v9891, %v9886
          %v9893 = vadd.f32 %v9892, %v9887
          %v9894 = vsel %vm6337, %v9888, 0.0
          %v9895 = vadd.f32 %v9893, %v9894
          %v9896 = vrot.slane %v9895, 4
          %v9897 = vadd.f32 %v9895, %v9896
          %v9898 = vrot.slane %v9897, 2
          %v9899 = vadd.f32 %v9897, %v9898
          %v9900 = vrot.slane %v9899, 1
          %v9901 = vadd.f32 %v9899, %v9900
          %9902 = vadd.xlane.f32.xlu0 %v9901
          %v9903 = vpop.xlane.xlu0 %9902
          %v9904 = vadd.f32 %v9903, %v8485
          %v9905 = vmul.f32 %v8476, %v9904
          %v9906 = vsub.f32 0.0, %v9905
          %v9907 = vmul.f32 %v9906, 1.442695
          %v9908 = vpow.pop %v9907
          %v9909 = vadd.f32 %v9908, 1.0
          %v9910 = vrcp.pop %v9909
          %v9911 = vmul.f32 1.0, %v9910
          %9913 = vset.pattern.permute.xlu0 0
          %9914 = vperm.xlu0 %9913, %v9911
          %v9915 = vpop.permute.xlu0 %9914
          %v9917 = vlaneseq
          %v9918 = vshrl.u32 %v9917, 7
          %v9919 = vsub.s32 0, %v9918
          %v9920 = vrot.slane %v9915, %v9919
          %9921 = vst [vmem:[%s15 + $0x1] sm:$0x1] %v9920
        $region128: #{net_forward.1} parent=79 // pred_fallthru
          _
        // Predicated region
        $region129: #{net_forward.1} parent=79 // pred_check
          %p9922 = pneg %p371
        $region130: #{net_forward.1} parent=79 // pred_check_branch
          %9924 = sbr.rel (%p9922) target = $region132
        $region131: #{net_forward.1} parent=79 // pred_region
          _
        $region132: #{net_forward.1} parent=79 // pred_fallthru
          _
        // Predicated region
        $region133: #{net_forward.1} parent=79 // pred_check
          %p9925 = pneg %p371
        $region134: #{net_forward.1} parent=79 // pred_check_branch
          %9927 = sbr.rel (%p9925) target = $region136
        $region135: #{net_forward.1} parent=79 // pred_region
          _
        $region136: #{net_forward.1} parent=79 // pred_fallthru
          _
      $region80: #{net_forward.1} parent=5 // pred_fallthru
        _
      %p9928 = scmp.le.s32.totalorder 2, %s33
      // Predicated region
      $region137: #{net_forward.1} parent=5 // pred_check
        %p9929 = pneg %p9928
      $region138: #{net_forward.1} parent=5 // pred_check_branch
        %9931 = sbr.rel (%p9929) target = $region140
      $region139: #{net_forward.1} parent=5 // pred_region
        %s9932 = ssub.s32 %s33, 2
      $region140: #{net_forward.1} parent=5 // pred_fallthru
        _
    $region6: #{net_forward.1} parent=1 // loop_footer
      %s37 = sadd.s32 1, %s33
    $region7: #{net_forward.1} parent=1 // loop_footer_branch
      %32 = sbr.rel target = $region3
    $region8: #{net_forward.1} parent=1 // loop_exit
      _
    %9933 = vsyncpa [#allocation11], 1
    %s9934 = scalar_lea.sflag [#allocation11], 1
    %9935 = vsyncpa %s9934, 1
    %9936 = vsyncpa [#allocation13], 1
    %9937 = vsyncpa [#allocation16], 1
    %9938 = vsyncpa [#allocation19], 1
    %9939 = vsyncpa [#allocation22], 1
    %9940 = vsyncpa [#allocation25], 1

</llo_original>
